<compile_context>
chip_gen: v6e
topology: v6e:2x2x1
jax: 0.10.0
libtpu: 0.0.40
codegen_flags: <defaults>
</compile_context>

<pallas_src>
import jax
import jax.numpy as jnp
from jax.experimental import pallas as pl
from jax.experimental.pallas import tpu as pltpu


# ----------------------------------------------------------------------------
# Shapes / padded tile sizes
# ----------------------------------------------------------------------------
NUM_VERTS_FULL = 6890
NUM_VERTS_SUB = 1723
NUM_VERTS_SUB2 = 431
NUM_JOINTS = 14                       # H36M J17 -> J14
NUM_TOKENS = NUM_VERTS_SUB2 + NUM_JOINTS   # 445
IMG_FEAT_DIM = 2048
GRID_TOKENS = 49                      # 7x7 backbone feature map
HIDDEN = 64                           # trans_encoder stand-in hidden size
FEAT_DIM = 3 + IMG_FEAT_DIM           # 2051

TOK_PAD = 448                         # 445 -> mult of 8  (matmul M)
GRID_PAD = 64                         # 49  -> 64          (token contraction)
OUT_PAD = 128                         # 3   -> 128 lane-dense encoder output
SUB2_PAD = 448                        # 431 -> 448         (upsampling contraction)
V_SUB_PAD = 1792                      # 1723 -> 14*128
V_FULL_PAD = 6912                     # 6890 -> 54*128
UPCAT_N = V_SUB_PAD + V_FULL_PAD      # 8704 = concat(up1 cols, composed W12 cols)
TN_UP = 2176                          # 8704 / 4 grid steps, 17*128 lanes

# Real METRO config values (metro/modeling/_smpl.py):
H36M_PELVIS_IDX = 0
H36M_J17_TO_J14 = [3, 2, 1, 4, 5, 6, 16, 15, 14, 11, 12, 13, 8, 10]


def _round_up(x, m):
    return ((x + m - 1) // m) * m


def _pad2d(a, rows, cols, dtype):
    out = jnp.zeros((rows, cols), dtype)
    return out.at[: a.shape[0], : a.shape[1]].set(a.astype(dtype))


# ----------------------------------------------------------------------------
# Kernel 1: fused conv_learn_tokens (Conv1d 49->445, k=1)  +  trans_encoder
#           stand-in (Linear 2051->64, ReLU, Linear 64->3), one grid step per
#           batch item.  Reassociated:  t = feat @ W1b  (64x64), h = CW @ t.
#           ref_vertices @ W1[:3] + b1 + cb*colsum(W1b) is pre-folded into
#           `ref_bias`, so neither the K=3 slice nor the conv bias ever touches
#           the MXU path.
# ----------------------------------------------------------------------------
def _token_encoder_kernel(feat_ref, w1_ref, cw_ref, refb_ref, w2_ref, b2_ref,
                          o_ref):
    feat = feat_ref[0]                                              # (64, 2048) bf16
    # t[g, h] = sum_p feat[g, p] * W1b[p, h]
    t = jnp.dot(feat, w1_ref[...],
                preferred_element_type=jnp.float32)                 # (64, 64) f32
    # h[tok, h] = ref_bias[tok, h] + sum_g CW[tok, g] * t[g, h]
    h = refb_ref[...] + jnp.dot(cw_ref[...], t.astype(jnp.bfloat16),
                                preferred_element_type=jnp.float32)  # (448, 64)
    h = jnp.maximum(h, 0.0).astype(jnp.bfloat16)
    # te2: out = h @ W2 + b2     (N padded 3 -> 128: lane-dense output slab)
    out = jnp.dot(h, w2_ref[...],
                  preferred_element_type=jnp.float32) + b2_ref[...]  # (448, 128)
    o_ref[0] = out.astype(o_ref.dtype)


def token_encoder(params, feat_pad):
    """feat_pad: (B, 64, 2048) bf16 -> (B, 448, 128) f32 (valid: [:, :445, :3])."""
    B = feat_pad.shape[0]
    return pl.pallas_call(
        _token_encoder_kernel,
        out_shape=jax.ShapeDtypeStruct((B, TOK_PAD, OUT_PAD), jnp.float32),
        grid_spec=pltpu.PrefetchScalarGridSpec(
            num_scalar_prefetch=0,
            grid=(B,),
            in_specs=[
                pl.BlockSpec((1, GRID_PAD, IMG_FEAT_DIM), lambda b: (b, 0, 0)),
                pl.BlockSpec((IMG_FEAT_DIM, HIDDEN), lambda b: (0, 0)),
                pl.BlockSpec((TOK_PAD, GRID_PAD), lambda b: (0, 0)),
                pl.BlockSpec((TOK_PAD, HIDDEN), lambda b: (0, 0)),
                pl.BlockSpec((HIDDEN, OUT_PAD), lambda b: (0, 0)),
                pl.BlockSpec((1, OUT_PAD), lambda b: (0, 0)),
            ],
            out_specs=pl.BlockSpec((1, TOK_PAD, OUT_PAD), lambda b: (b, 0, 0)),
        ),
        compiler_params=pltpu.CompilerParams(
            dimension_semantics=("parallel",),
            vmem_limit_bytes=32 * 1024 * 1024),
    )(feat_pad, params["te_w1b"], params["conv_tok_w"], params["ref_bias"],
      params["te_w2"], params["te_b2"])


# ----------------------------------------------------------------------------
# Kernel 2: mesh upsampling as ONE matmul against the column-concatenated
#           weight  [ up1_w(448,1792) | W12(448,6912) ]  ->  (M, 8704).
#           Pure weight streaming at M = B*3; column tiles of 2176 lanes,
#           every grid step independent ("parallel").
# ----------------------------------------------------------------------------
def _up_kernel(x_ref, w_ref, b_ref, o_ref):
    o_ref[...] = (jnp.dot(x_ref[...], w_ref[...],
                          preferred_element_type=jnp.float32)
                  + b_ref[...]).astype(o_ref.dtype)


def mesh_upsample(params, pred_vertices_sub2):
    """(B, 431, 3) -> ((B, 1723, 3), (B, 6890, 3))."""
    B = pred_vertices_sub2.shape[0]
    M = B * 3
    Mp = _round_up(M, 8)
    xt = jnp.swapaxes(pred_vertices_sub2, 1, 2).reshape(M, NUM_VERTS_SUB2)
    xp = jnp.zeros((Mp, SUB2_PAD), jnp.bfloat16)
    xp = xp.at[:M, :NUM_VERTS_SUB2].set(xt.astype(jnp.bfloat16))

    out = pl.pallas_call(
        _up_kernel,
        out_shape=jax.ShapeDtypeStruct((Mp, UPCAT_N), jnp.float32),
        grid_spec=pltpu.PrefetchScalarGridSpec(
            num_scalar_prefetch=0,
            grid=(UPCAT_N // TN_UP,),
            in_specs=[
                pl.BlockSpec((Mp, SUB2_PAD), lambda j: (0, 0)),
                pl.BlockSpec((SUB2_PAD, TN_UP), lambda j: (0, j)),
                pl.BlockSpec((1, TN_UP), lambda j: (0, j)),
            ],
            out_specs=pl.BlockSpec((Mp, TN_UP), lambda j: (0, j)),
        ),
        compiler_params=pltpu.CompilerParams(
            dimension_semantics=("parallel",),
            vmem_limit_bytes=32 * 1024 * 1024),
    )(xp, params["upcat_w"], params["upcat_b"])

    # Cheap layout fix-ups back to (B, V, 3); valid slices drop all padding.
    sub = jnp.swapaxes(
        out[:M, :NUM_VERTS_SUB].reshape(B, 3, NUM_VERTS_SUB), 1, 2)
    full = jnp.swapaxes(
        out[:M, V_SUB_PAD:V_SUB_PAD + NUM_VERTS_FULL]
        .reshape(B, 3, NUM_VERTS_FULL), 1, 2)
    return sub, full


# ----------------------------------------------------------------------------
# Deterministic parameters (shapes follow METRO_Body_Network.__init__),
# pre-padded / bf16-cast / composed once, plus the hoisted template path.
# ----------------------------------------------------------------------------
def _mesh_downsample(vertices, n_out):
    idx = jnp.round(jnp.linspace(0, vertices.shape[1] - 1, n_out)).astype(jnp.int32)
    return jnp.take(vertices, idx, axis=1)


def make_params(key):
    ks = jax.random.split(key, 20)
    std = 0.02

    def w(k, shape):
        return jax.random.normal(k, shape, jnp.float32) * std

    # --- raw (PyTorch-layout) weights ---------------------------------------
    conv_tok_w = w(ks[0], (NUM_TOKENS, GRID_TOKENS))   # Conv1d(49,445,1).weight[:,:,0]
    conv_tok_b = w(ks[11], (NUM_TOKENS,))
    up1_w = w(ks[1], (NUM_VERTS_SUB2, NUM_VERTS_SUB))  # Linear(431,1723), stored (in,out)
    up1_b = w(ks[12], (NUM_VERTS_SUB,))
    up2_w = w(ks[2], (NUM_VERTS_SUB, NUM_VERTS_FULL))  # Linear(1723,6890)
    up2_b = w(ks[13], (NUM_VERTS_FULL,))
    cam1_w = w(ks[3], (3, 1));                cam1_b = jnp.zeros((1,), jnp.float32)
    cam2_w = w(ks[4], (NUM_VERTS_SUB2, 250)); cam2_b = jnp.zeros((250,), jnp.float32)
    cam3_w = w(ks[5], (250, 3));              cam3_b = jnp.zeros((3,), jnp.float32)
    bb_w = w(ks[6], (3, IMG_FEAT_DIM));       bb_b = jnp.zeros((IMG_FEAT_DIM,), jnp.float32)
    te1_w = w(ks[7], (FEAT_DIM, HIDDEN));     te1_b = w(ks[14], (HIDDEN,))
    te2_w = w(ks[8], (HIDDEN, 3));            te2_b = w(ks[15], (3,))
    smpl_template = jax.random.normal(ks[9], (1, NUM_VERTS_FULL, 3), jnp.float32) * 0.1
    joint_regressor = jax.nn.softmax(
        jax.random.normal(ks[10], (17, NUM_VERTS_FULL), jnp.float32), axis=-1)

    # --- template / ref-vertex path: depends only on params, hoisted out of
    #     the per-image forward (runs once, plain jnp).
    # TODO(synk): real SMPL body model and mesh_sampler are external modules;
    #             deterministic stand-ins used here.
    template_pose = jnp.zeros((1, 72), jnp.float32).at[:, 0].set(3.1416)
    template_betas = jnp.zeros((1, 10), jnp.float32)
    scale = (1.0 + 0.01 * jnp.tanh(jnp.sum(template_pose))
             + 0.01 * jnp.tanh(jnp.sum(template_betas)))
    template_vertices = smpl_template * scale                         # (1,6890,3)
    template_vertices_sub = _mesh_downsample(template_vertices, NUM_VERTS_SUB)
    template_vertices_sub2 = _mesh_downsample(template_vertices_sub, NUM_VERTS_SUB2)
    template_3d_joints = jnp.einsum('jv,vc->jc', joint_regressor,
                                    template_vertices[0])[None]       # (1,17,3)
    pelvis = template_3d_joints[:, H36M_PELVIS_IDX, :]
    template_3d_joints = (template_3d_joints[:, H36M_J17_TO_J14, :]
                          - pelvis[:, None, :])
    template_vertices_sub2 = template_vertices_sub2 - pelvis[:, None, :]
    ref_vertices = jnp.concatenate([template_3d_joints, template_vertices_sub2],
                                   axis=1)                            # (1,445,3)

    # Fold ref_vertices @ te1_w[:3] + te1_b  AND  conv bias * colsum(W1b) into
    # one per-token bias; neither the K=3 slice nor cb hits the padded MXU path.
    w1b = te1_w[3:, :]                                                # (2048,64)
    ref_bias = ref_vertices[0] @ te1_w[:3, :] + te1_b[None, :]        # (445,64)
    ref_bias = ref_bias + conv_tok_b[:, None] * jnp.sum(w1b, axis=0)[None, :]

    # Compose the two upsampling linears once:
    #   y2 = (x @ W1 + b1) @ W2 + b2 = x @ (W1 @ W2) + (b1 @ W2 + b2)
    up12_w = up1_w @ up2_w                                            # (431,6890)
    up12_b = up1_b @ up2_w + up2_b                                    # (6890,)
    upcat_w = jnp.zeros((SUB2_PAD, UPCAT_N), jnp.bfloat16)
    upcat_w = upcat_w.at[:NUM_VERTS_SUB2, :NUM_VERTS_SUB].set(
        up1_w.astype(jnp.bfloat16))
    upcat_w = upcat_w.at[:NUM_VERTS_SUB2,
                         V_SUB_PAD:V_SUB_PAD + NUM_VERTS_FULL].set(
        up12_w.astype(jnp.bfloat16))
    upcat_b = jnp.zeros((1, UPCAT_N), jnp.float32)
    upcat_b = upcat_b.at[0, :NUM_VERTS_SUB].set(up1_b)
    upcat_b = upcat_b.at[0, V_SUB_PAD:V_SUB_PAD + NUM_VERTS_FULL].set(up12_b)

    # --- kernel-ready, pre-padded, bf16 weights (padded exactly once) -------
    return {
        # backbone stand-in (plain jnp, K=3)
        "bb_w": bb_w, "bb_b": bb_b,
        # fused conv_learn_tokens + encoder kernel
        "conv_tok_w": _pad2d(conv_tok_w, TOK_PAD, GRID_PAD, jnp.bfloat16),
        "ref_bias": _pad2d(ref_bias, TOK_PAD, HIDDEN, jnp.float32),
        "te_w1b": w1b.astype(jnp.bfloat16),                           # (2048,64)
        "te_w2": _pad2d(te2_w, HIDDEN, OUT_PAD, jnp.bfloat16),
        "te_b2": _pad2d(te2_b[None, :], 1, OUT_PAD, jnp.float32),
        # composed + concatenated upsampling kernel
        "upcat_w": upcat_w,
        "upcat_b": upcat_b,
        # camera head (plain jnp)
        "cam1_w": cam1_w, "cam1_b": cam1_b,
        "cam2_w": cam2_w, "cam2_b": cam2_b,
        "cam3_w": cam3_w, "cam3_b": cam3_b,
    }


# ----------------------------------------------------------------------------
# METRO_Body_Network forward (inference path: is_train=False)
# ----------------------------------------------------------------------------
def metro_body_forward(params, images):
    B, C, H, W = images.shape

    # --- backbone (external module stand-in): pool to 7x7 + 1x1 conv (K=3 on
    #     the VPU / XLA path; padding K=3 -> 128 onto the MXU is pure waste).
    # TODO(synk): real CNN backbone is an external module; stand-in only.
    pooled = images.reshape(B, C, 7, H // 7, 7, W // 7).mean(axis=(3, 5))   # (B,3,7,7)
    feat = jnp.transpose(pooled, (0, 2, 3, 1)) @ params["bb_w"] + params["bb_b"]
    feat = feat.reshape(B, GRID_TOKENS, IMG_FEAT_DIM)                       # (B,49,2048)
    feat_pad = jnp.zeros((B, GRID_PAD, IMG_FEAT_DIM), jnp.bfloat16)
    feat_pad = feat_pad.at[:, :GRID_TOKENS, :].set(feat.astype(jnp.bfloat16))

    # --- fused conv_learn_tokens + trans_encoder stand-in (Pallas) ----------
    # TODO(synk): real METRO transformer encoder stack is an external module;
    #             a 2-layer MLP (2051->64->3) stands in for it.
    enc = token_encoder(params, feat_pad)                 # (B, 448, 128) f32
    feats = enc[:, :NUM_TOKENS, :3]                       # (B, 445, 3)
    pred_3d_joints = feats[:, :NUM_JOINTS, :]             # (B, 14, 3)
    pred_vertices_sub2 = feats[:, NUM_JOINTS:, :]         # (B, 431, 3)

    # --- camera-parameter head: < 1 MFLOP, left to XLA ----------------------
    x = pred_vertices_sub2 @ params["cam1_w"] + params["cam1_b"]   # (B,431,1)
    x = jnp.swapaxes(x, 1, 2)                                      # (B,1,431)
    x = x @ params["cam2_w"] + params["cam2_b"]                    # (B,1,250)
    x = x @ params["cam3_w"] + params["cam3_b"]                    # (B,1,3)
    cam_param = jnp.swapaxes(x, 1, 2)                              # (B,3,1)
    # PyTorch uses .squeeze() with no axis; axis=-1 keeps batch dim when B==1.
    cam_param = jnp.squeeze(cam_param, axis=-1)                    # (B,3)

    # --- composed mesh upsampling (Pallas) -----------------------------------
    pred_vertices_sub, pred_vertices_full = mesh_upsample(params, pred_vertices_sub2)

    # TODO(synk): is_train branches (meta_masks mixing, UDA joint/vertex/backbone
    #             domain MLP heads + GradientReversal) and output_attentions are
    #             inactive on the inference path and not emitted.
    return (cam_param, pred_3d_joints, pred_vertices_sub2,
            pred_vertices_sub, pred_vertices_full)


# ----------------------------------------------------------------------------
if __name__ == "__main__":
    key = jax.random.PRNGKey(0)
    pkey, ikey = jax.random.split(key)

    params = make_params(pkey)
    images = jax.random.normal(ikey, (2, 3, 14, 14), jnp.float32)   # NCHW input

    fwd = jax.jit(metro_body_forward)
    outs = jax.block_until_ready(fwd(params, images))

    cam_param, pred_3d_joints, pred_v_sub2, pred_v_sub, pred_v_full = outs
    assert cam_param.shape == (2, 3)
    assert pred_3d_joints.shape == (2, 14, 3)
    assert pred_v_sub2.shape == (2, 431, 3)
    assert pred_v_sub.shape == (2, 1723, 3)
    assert pred_v_full.shape == (2, 6890, 3)
    assert all(bool(jnp.all(jnp.isfinite(o))) for o in outs)

    print("KERNEL_OK")
</pallas_src>

<mosaic_0001>
module attributes {stable_mosaic.version = 11 : i64} {
  func.func @_token_encoder_kernel(%arg0: i32, %arg1: memref<1x64x2048xbf16, #tpu.memory_space<vmem>>, %arg2: memref<2048x64xbf16, #tpu.memory_space<vmem>>, %arg3: memref<448x64xbf16, #tpu.memory_space<vmem>>, %arg4: memref<448x64xf32, #tpu.memory_space<vmem>>, %arg5: memref<64x128xbf16, #tpu.memory_space<vmem>>, %arg6: memref<1x128xf32, #tpu.memory_space<vmem>>, %arg7: memref<1x448x128xf32, #tpu.memory_space<vmem>>) attributes {dimension_semantics = [#tpu.dimension_semantics<parallel>], iteration_bounds = array<i64: 2>, scalar_prefetch = 0 : i64, scratch_operands = 0 : i64, tpu.core_type = #tpu.core_type<tc>, window_params = [{transform_indices = @transform_0, window_bounds = array<i64: 1, 64, 2048>}, {pipeline_mode = #tpu.pipeline_mode<synchronous>, transform_indices = @transform_1, window_bounds = array<i64: 2048, 64>}, {pipeline_mode = #tpu.pipeline_mode<synchronous>, transform_indices = @transform_2, window_bounds = array<i64: 448, 64>}, {pipeline_mode = #tpu.pipeline_mode<synchronous>, transform_indices = @transform_3, window_bounds = array<i64: 448, 64>}, {pipeline_mode = #tpu.pipeline_mode<synchronous>, transform_indices = @transform_4, window_bounds = array<i64: 64, 128>}, {pipeline_mode = #tpu.pipeline_mode<synchronous>, transform_indices = @transform_5, window_bounds = array<i64: 1, 128>}, {transform_indices = @transform_6, window_bounds = array<i64: 1, 448, 128>}]} {
    %c0 = arith.constant 0 : index
    %c0_0 = arith.constant 0 : index
    %c0_1 = arith.constant 0 : index
    %0 = vector.load %arg1[%c0, %c0_0, %c0_1] : memref<1x64x2048xbf16, #tpu.memory_space<vmem>>, vector<1x64x2048xbf16>
    %1 = vector.shape_cast %0 : vector<1x64x2048xbf16> to vector<64x2048xbf16>
    %c0_2 = arith.constant 0 : index
    %c0_3 = arith.constant 0 : index
    %2 = vector.load %arg2[%c0_2, %c0_3] : memref<2048x64xbf16, #tpu.memory_space<vmem>>, vector<2048x64xbf16>
    %cst = arith.constant dense<0.000000e+00> : vector<64x64xf32>
    %3 = tpu.matmul %1, %2, %cst {dimension_numbers = #tpu.dot_dimension_numbers<[1], [0], [0], [1], [0, 0, 1, 1], [], []>} : vector<64x2048xbf16>, vector<2048x64xbf16>, vector<64x64xf32> -> vector<64x64xf32>
    %c0_4 = arith.constant 0 : index
    %c0_5 = arith.constant 0 : index
    %4 = vector.load %arg4[%c0_4, %c0_5] : memref<448x64xf32, #tpu.memory_space<vmem>>, vector<448x64xf32>
    %c0_6 = arith.constant 0 : index
    %c0_7 = arith.constant 0 : index
    %5 = vector.load %arg3[%c0_6, %c0_7] : memref<448x64xbf16, #tpu.memory_space<vmem>>, vector<448x64xbf16>
    %6 = arith.truncf %3 : vector<64x64xf32> to vector<64x64xbf16>
    %cst_8 = arith.constant dense<0.000000e+00> : vector<448x64xf32>
    %7 = tpu.matmul %5, %6, %cst_8 {dimension_numbers = #tpu.dot_dimension_numbers<[1], [0], [0], [1], [0, 0, 1, 1], [], []>} : vector<448x64xbf16>, vector<64x64xbf16>, vector<448x64xf32> -> vector<448x64xf32>
    %8 = arith.addf %4, %7 : vector<448x64xf32>
    %cst_9 = arith.constant 0.000000e+00 : f32
    %9 = vector.broadcast %cst_9 : f32 to vector<448x64xf32>
    %10 = arith.maximumf %8, %9 : vector<448x64xf32>
    %11 = arith.truncf %10 : vector<448x64xf32> to vector<448x64xbf16>
    %c0_10 = arith.constant 0 : index
    %c0_11 = arith.constant 0 : index
    %12 = vector.load %arg5[%c0_10, %c0_11] : memref<64x128xbf16, #tpu.memory_space<vmem>>, vector<64x128xbf16>
    %cst_12 = arith.constant dense<0.000000e+00> : vector<448x128xf32>
    %13 = tpu.matmul %11, %12, %cst_12 {dimension_numbers = #tpu.dot_dimension_numbers<[1], [0], [0], [1], [0, 0, 1, 1], [], []>} : vector<448x64xbf16>, vector<64x128xbf16>, vector<448x128xf32> -> vector<448x128xf32>
    %c0_13 = arith.constant 0 : index
    %c0_14 = arith.constant 0 : index
    %14 = vector.load %arg6[%c0_13, %c0_14] : memref<1x128xf32, #tpu.memory_space<vmem>>, vector<1x128xf32>
    %15 = vector.broadcast %14 : vector<1x128xf32> to vector<448x128xf32>
    %16 = arith.addf %13, %15 : vector<448x128xf32>
    %c0_15 = arith.constant 0 : index
    %c0_16 = arith.constant 0 : index
    %c0_17 = arith.constant 0 : index
    %17 = vector.load %arg7[%c0_15, %c0_16, %c0_17] : memref<1x448x128xf32, #tpu.memory_space<vmem>>, vector<1x448x128xf32>
    %18 = vector.shape_cast %17 : vector<1x448x128xf32> to vector<448x128xf32>
    %19 = vector.shape_cast %16 : vector<448x128xf32> to vector<1x448x128xf32>
    tpu.vector_store %arg7[%c0_15, %c0_16, %c0_17], %19 {strides = array<i32>} : memref<1x448x128xf32, #tpu.memory_space<vmem>>, vector<1x448x128xf32>,
    return
  }
  func.func @transform_0(%arg0: i32) -> (i32, i32, i32) {
    %c0_i32 = arith.constant 0 : i32
    %c0_i32_0 = arith.constant 0 : i32
    %c0_i32_1 = arith.constant 0 : i32
    return %arg0, %c0_i32, %c0_i32_0 : i32, i32, i32
  }
  func.func @transform_1(%arg0: i32) -> (i32, i32) {
    %c0_i32 = arith.constant 0 : i32
    %c0_i32_0 = arith.constant 0 : i32
    %c0_i32_1 = arith.constant 0 : i32
    return %c0_i32, %c0_i32_0 : i32, i32
  }
  func.func @transform_2(%arg0: i32) -> (i32, i32) {
    %c0_i32 = arith.constant 0 : i32
    %c0_i32_0 = arith.constant 0 : i32
    %c0_i32_1 = arith.constant 0 : i32
    return %c0_i32, %c0_i32_0 : i32, i32
  }
  func.func @transform_3(%arg0: i32) -> (i32, i32) {
    %c0_i32 = arith.constant 0 : i32
    %c0_i32_0 = arith.constant 0 : i32
    %c0_i32_1 = arith.constant 0 : i32
    return %c0_i32, %c0_i32_0 : i32, i32
  }
  func.func @transform_4(%arg0: i32) -> (i32, i32) {
    %c0_i32 = arith.constant 0 : i32
    %c0_i32_0 = arith.constant 0 : i32
    %c0_i32_1 = arith.constant 0 : i32
    return %c0_i32, %c0_i32_0 : i32, i32
  }
  func.func @transform_5(%arg0: i32) -> (i32, i32) {
    %c0_i32 = arith.constant 0 : i32
    %c0_i32_0 = arith.constant 0 : i32
    %c0_i32_1 = arith.constant 0 : i32
    return %c0_i32, %c0_i32_0 : i32, i32
  }
  func.func @transform_6(%arg0: i32) -> (i32, i32, i32) {
    %c0_i32 = arith.constant 0 : i32
    %c0_i32_0 = arith.constant 0 : i32
    %c0_i32_1 = arith.constant 0 : i32
    return %arg0, %c0_i32, %c0_i32_0 : i32, i32, i32
  }
}

module attributes {stable_mosaic.version = 11 : i64} {
  func.func @_up_kernel(%arg0: i32, %arg1: memref<8x448xbf16, #tpu.memory_space<vmem>>, %arg2: memref<448x2176xbf16, #tpu.memory_space<vmem>>, %arg3: memref<1x2176xf32, #tpu.memory_space<vmem>>, %arg4: memref<8x2176xf32, #tpu.memory_space<vmem>>) attributes {dimension_semantics = [#tpu.dimension_semantics<parallel>], iteration_bounds = array<i64: 4>, scalar_prefetch = 0 : i64, scratch_operands = 0 : i64, tpu.core_type = #tpu.core_type<tc>, window_params = [{pipeline_mode = #tpu.pipeline_mode<synchronous>, transform_indices = @transform_0, window_bounds = array<i64: 8, 448>}, {transform_indices = @transform_1, window_bounds = array<i64: 448, 2176>}, {transform_indices = @transform_2, window_bounds = array<i64: 1, 2176>}, {transform_indices = @transform_3, window_bounds = array<i64: 8, 2176>}]} {
    %c0 = arith.constant 0 : index
    %c0_0 = arith.constant 0 : index
    %0 = vector.load %arg1[%c0, %c0_0] : memref<8x448xbf16, #tpu.memory_space<vmem>>, vector<8x448xbf16>
    %c0_1 = arith.constant 0 : index
    %c0_2 = arith.constant 0 : index
    %1 = vector.load %arg2[%c0_1, %c0_2] : memref<448x2176xbf16, #tpu.memory_space<vmem>>, vector<448x2176xbf16>
    %cst = arith.constant dense<0.000000e+00> : vector<8x2176xf32>
    %2 = tpu.matmul %0, %1, %cst {dimension_numbers = #tpu.dot_dimension_numbers<[1], [0], [0], [1], [0, 0, 1, 1], [], []>} : vector<8x448xbf16>, vector<448x2176xbf16>, vector<8x2176xf32> -> vector<8x2176xf32>
    %c0_3 = arith.constant 0 : index
    %c0_4 = arith.constant 0 : index
    %3 = vector.load %arg3[%c0_3, %c0_4] : memref<1x2176xf32, #tpu.memory_space<vmem>>, vector<1x2176xf32>
    %4 = vector.broadcast %3 : vector<1x2176xf32> to vector<8x2176xf32>
    %5 = arith.addf %2, %4 : vector<8x2176xf32>
    %c0_5 = arith.constant 0 : index
    %c0_6 = arith.constant 0 : index
    %6 = vector.load %arg4[%c0_5, %c0_6] : memref<8x2176xf32, #tpu.memory_space<vmem>>, vector<8x2176xf32>
    tpu.vector_store %arg4[%c0_5, %c0_6], %5 {strides = array<i32>} : memref<8x2176xf32, #tpu.memory_space<vmem>>, vector<8x2176xf32>,
    return
  }
  func.func @transform_0(%arg0: i32) -> (i32, i32) {
    %c0_i32 = arith.constant 0 : i32
    %c0_i32_0 = arith.constant 0 : i32
    %c0_i32_1 = arith.constant 0 : i32
    return %c0_i32, %c0_i32_0 : i32, i32
  }
  func.func @transform_1(%arg0: i32) -> (i32, i32) {
    %c0_i32 = arith.constant 0 : i32
    %c0_i32_0 = arith.constant 0 : i32
    return %c0_i32, %arg0 : i32, i32
  }
  func.func @transform_2(%arg0: i32) -> (i32, i32) {
    %c0_i32 = arith.constant 0 : i32
    %c0_i32_0 = arith.constant 0 : i32
    return %c0_i32, %arg0 : i32, i32
  }
  func.func @transform_3(%arg0: i32) -> (i32, i32) {
    %c0_i32 = arith.constant 0 : i32
    %c0_i32_0 = arith.constant 0 : i32
    return %c0_i32, %arg0 : i32, i32
  }
}

</mosaic_0001>

<llo_original>
// kernel: metro_body_forward.3
$region0: #{metro_body_forward.3}
  #allocation0 [shape = 'u32[]', space=smem, size = 0x4, offset = 0x4, fixed_abs, tag = 'smem constant byte address 0x4 - core index']
  #allocation1 [shape = 'u32[144,128]{1,0:T(1,128)}', space=vmem, size = 0x12000, scoped, tag = 'internal scratch']
  %s0 = inlined_call_operand.vmem [shape: bf16[8,448], index: 0, kind: input, shape index: {}]
  %s1 = inlined_call_operand.vmem [shape: bf16[448,8704], index: 1, kind: input, shape index: {}]
  %s2 = inlined_call_operand.vmem [shape: f32[1,8704], index: 2, kind: input, shape index: {}]
  %s3 = inlined_call_operand.vmem [shape: f32[8,8704], index: 3, kind: output, shape index: {}]
  %s4 = sld [smem:[#allocation0]]
  $region71: #{metro_body_forward.3} parent=0
    _
  %s6 = ssub.s32 1, %s4
  %s7 = scalar_select 0, %s6, %s4
  $region1: #{metro_body_forward.3} parent=0
    #allocation2 [shape = 'u8[3899392]{0}', space=vmem, size = 0x3b8000, scoped, tag = 'input window, operand 1']
    loop: start=0, step=1, limit=6
    $region2: #{metro_body_forward.3} parent=1 // loop_pre_header
      _
    $region3: #{metro_body_forward.3} parent=1 // loop_header
      %s9 = sphi 0, %s13
      %p10 = scmp.ge.s32.totalorder %s9, 6
      %s17 = sphi 0, %s17
      %s19 = sphi 0, %s17
      %s20 = sphi 0, %s19
      %s34 = sphi 0, %s20
      %s40 = sphi 0, %s42
      %s43 = sphi 0, %s40
      %s44 = sphi 0, %s43
      %s60 = sphi 0, %s44
      %s66 = sphi 0, %s68
      %s69 = sphi 0, %s66
      %s70 = sphi 0, %s69
      %s86 = sphi 0, %s70
      %s92 = sphi 0, %s94
      %s95 = sphi 0, %s92
      %s96 = sphi 0, %s95
      %s112 = sphi 0, %s96
    $region4: #{metro_body_forward.3} parent=1 // loop_header_branch
      %12 = sbr.rel (%p10) target = $region8
    $region5: #{metro_body_forward.3} parent=1 // loop_body
      %s14 = ssub.s32 %s9, 1
      %s15 = ssub.s32 %s9, 2
      %s16 = sadd.s32 %s9, 1
      %s18 = sadd.s32 %s17, 1
      %p21 = scmp.eq.s32.totalorder %s9, 3
      %p22 = scmp.ne.s32.totalorder %s17, %s19
      %p23 = scmp.eq.s32.totalorder %s9, 0
      %p24 = por %p22, %p23
      %p25 = scmp.ne.s32.totalorder %s17, %s19
      %p26 = scmp.eq.s32.totalorder %s14, 3
      %p27 = por %p25, %p26
      %p28 = scmp.ne.s32.totalorder %s19, %s20
      %p29 = scmp.eq.s32.totalorder %s14, 0
      %p30 = por %p28, %p29
      %p31 = scmp.ne.s32.totalorder %s19, %s20
      %p32 = scmp.eq.s32.totalorder %s15, 3
      %p33 = por %p31, %p32
      %p35 = scmp.ne.s32.totalorder %s20, %s34
      %p36 = scmp.eq.s32.totalorder %s15, 0
      %p37 = por %p35, %p36
      %s38 = ssub.s32 %s9, %s16
      %p39 = scmp.eq.s32.totalorder %s38, 0
      %s41 = sadd.s32 %s40, 1
      %s42 = scalar_select %p39, %s40, %s41
      %p45 = pneg %p39
      %p46 = scmp.eq.s32.totalorder %s9, 3
      %p47 = por %p45, %p46
      %p48 = scmp.ne.s32.totalorder %s40, %s43
      %p49 = scmp.eq.s32.totalorder %s9, 0
      %p50 = por %p48, %p49
      %p51 = scmp.ne.s32.totalorder %s40, %s43
      %p52 = scmp.eq.s32.totalorder %s14, 3
      %p53 = por %p51, %p52
      %p54 = scmp.ne.s32.totalorder %s43, %s44
      %p55 = scmp.eq.s32.totalorder %s14, 0
      %p56 = por %p54, %p55
      %p57 = scmp.ne.s32.totalorder %s43, %s44
      %p58 = scmp.eq.s32.totalorder %s15, 3
      %p59 = por %p57, %p58
      %p61 = scmp.ne.s32.totalorder %s44, %s60
      %p62 = scmp.eq.s32.totalorder %s15, 0
      %p63 = por %p61, %p62
      %s64 = ssub.s32 %s9, %s16
      %p65 = scmp.eq.s32.totalorder %s64, 0
      %s67 = sadd.s32 %s66, 1
      %s68 = scalar_select %p65, %s66, %s67
      %p71 = pneg %p65
      %p72 = scmp.eq.s32.totalorder %s9, 3
      %p73 = por %p71, %p72
      %p74 = scmp.ne.s32.totalorder %s66, %s69
      %p75 = scmp.eq.s32.totalorder %s9, 0
      %p76 = por %p74, %p75
      %p77 = scmp.ne.s32.totalorder %s66, %s69
      %p78 = scmp.eq.s32.totalorder %s14, 3
      %p79 = por %p77, %p78
      %p80 = scmp.ne.s32.totalorder %s69, %s70
      %p81 = scmp.eq.s32.totalorder %s14, 0
      %p82 = por %p80, %p81
      %p83 = scmp.ne.s32.totalorder %s69, %s70
      %p84 = scmp.eq.s32.totalorder %s15, 3
      %p85 = por %p83, %p84
      %p87 = scmp.ne.s32.totalorder %s70, %s86
      %p88 = scmp.eq.s32.totalorder %s15, 0
      %p89 = por %p87, %p88
      %s90 = ssub.s32 %s9, %s16
      %p91 = scmp.eq.s32.totalorder %s90, 0
      %s93 = sadd.s32 %s92, 1
      %s94 = scalar_select %p91, %s92, %s93
      %p97 = pneg %p91
      %p98 = scmp.eq.s32.totalorder %s9, 3
      %p99 = por %p97, %p98
      %p100 = scmp.ne.s32.totalorder %s92, %s95
      %p101 = scmp.eq.s32.totalorder %s9, 0
      %p102 = por %p100, %p101
      %p103 = scmp.ne.s32.totalorder %s92, %s95
      %p104 = scmp.eq.s32.totalorder %s14, 3
      %p105 = por %p103, %p104
      %p106 = scmp.ne.s32.totalorder %s95, %s96
      %p107 = scmp.eq.s32.totalorder %s14, 0
      %p108 = por %p106, %p107
      %p109 = scmp.ne.s32.totalorder %s95, %s96
      %p110 = scmp.eq.s32.totalorder %s15, 3
      %p111 = por %p109, %p110
      %p113 = scmp.ne.s32.totalorder %s96, %s112
      %p114 = scmp.eq.s32.totalorder %s15, 0
      %p115 = por %p113, %p114
      %p116 = scmp.le.s32.totalorder 1, %s9
      %p117 = scmp.lt.s32.totalorder %s9, 5
      %p118 = pnand %p116, %p117
      %p119 = pneg %p118
      // Predicated region
      $region9: #{metro_body_forward.3} parent=5 // pred_check
        _
      $region10: #{metro_body_forward.3} parent=5 // pred_check_branch
        %121 = sbr.rel (%p118) target = $region12
      $region11: #{metro_body_forward.3} parent=5 // pred_region
        %s122 = ssub.s32 %s9, 1
        // Predicated region
        $region13: #{metro_body_forward.3} parent=11 // pred_check
          %p123 = pneg %p30
        $region14: #{metro_body_forward.3} parent=11 // pred_check_branch
          %125 = sbr.rel (%p123) target = $region16
        $region15: #{metro_body_forward.3} parent=11 // pred_region
          _
        $region16: #{metro_body_forward.3} parent=11 // pred_fallthru
          _
      $region12: #{metro_body_forward.3} parent=5 // pred_fallthru
        _
      %p126 = scmp.lt.s32.totalorder %s9, 4
      // Predicated region
      $region17: #{metro_body_forward.3} parent=5 // pred_check
        %p127 = pneg %p126
      $region18: #{metro_body_forward.3} parent=5 // pred_check_branch
        %129 = sbr.rel (%p127) target = $region20
      $region19: #{metro_body_forward.3} parent=5 // pred_region
        // Predicated region
        $region21: #{metro_body_forward.3} parent=19 // pred_check
          %p130 = pneg %p50
        $region22: #{metro_body_forward.3} parent=19 // pred_check_branch
          %132 = sbr.rel (%p130) target = $region24
        $region23: #{metro_body_forward.3} parent=19 // pred_region
          %s133 = sand.u32 %s40, 1
          %s134 = sand.u32 %s40, 1
          %s135 = smul.addr %s134, 3808
          %s136 = scalar_lea.vmem [#allocation2], %s135
          %s137 = smul.u32 17, %s9
          %s138 = smul.addr %s137, 4
          %s139 = scalar_lea.vmem %s1, %s138
          // Predicated region
          $region25: #{metro_body_forward.3} parent=23 // pred_check
            _
          $region26: #{metro_body_forward.3} parent=23 // pred_check_branch
            %141 = sbr.rel (0) target = $region28
          $region27: #{metro_body_forward.3} parent=23 // pred_region
            // Predicated region
            $region29: #{metro_body_forward.3} parent=27 // pred_check
              _
            $region30: #{metro_body_forward.3} parent=27 // pred_check_branch
              %143 = sbr.rel (0) target = $region32
            $region31: #{metro_body_forward.3} parent=27 // pred_region
              %s144 = scalar_lea.vmem %s139, 64
              %s145 = scalar_lea.vmem %s136, 64 [#allocation2]
              loop: start=0, step=1, limit=1
              $region33: #{metro_body_forward.3} parent=31 // loop_pre_header
                _
              $region34: #{metro_body_forward.3} parent=31 // loop_header
                %s147 = sphi 0, %s151
                %p148 = scmp.ge.s32.totalorder %s147, 1
                %s152 = sphi %s139, %s139
                %s153 = sphi %s136, %s136
              $region35: #{metro_body_forward.3} parent=31 // loop_header_branch
                %150 = sbr.rel (%p148) target = $region39
              $region36: #{metro_body_forward.3} parent=31 // loop_body
                %v154 = vld [vmem:[%s152] sm:$0xff]
                %155 = vst [vmem:[%s153] sm:$0xff] %v154
                %v156 = vld [vmem:[%s152 + $0x8] sm:$0xff]
                %157 = vst [vmem:[%s153 + $0x8] sm:$0xff] %v156
                %v158 = vld [vmem:[%s152 + $0x10] sm:$0xff]
                %159 = vst [vmem:[%s153 + $0x10] sm:$0xff] %v158
                %v160 = vld [vmem:[%s152 + $0x18] sm:$0xff]
                %161 = vst [vmem:[%s153 + $0x18] sm:$0xff] %v160
                %v162 = vld [vmem:[%s152 + $0x20] sm:$0xff]
                %163 = vst [vmem:[%s153 + $0x20] sm:$0xff] %v162
                %v164 = vld [vmem:[%s152 + $0x28] sm:$0xff]
                %165 = vst [vmem:[%s153 + $0x28] sm:$0xff] %v164
                %v166 = vld [vmem:[%s152 + $0x30] sm:$0xff]
                %167 = vst [vmem:[%s153 + $0x30] sm:$0xff] %v166
                %v168 = vld [vmem:[%s152 + $0x38] sm:$0xff]
                %169 = vst [vmem:[%s153 + $0x38] sm:$0xff] %v168
                %v170 = vld [vmem:[%s152 + $0x110] sm:$0xff]
                %171 = vst [vmem:[%s153 + $0x44] sm:$0xff] %v170
                %v172 = vld [vmem:[%s152 + $0x118] sm:$0xff]
                %173 = vst [vmem:[%s153 + $0x4c] sm:$0xff] %v172
                %v174 = vld [vmem:[%s152 + $0x120] sm:$0xff]
                %175 = vst [vmem:[%s153 + $0x54] sm:$0xff] %v174
                %v176 = vld [vmem:[%s152 + $0x128] sm:$0xff]
                %177 = vst [vmem:[%s153 + $0x5c] sm:$0xff] %v176
                %v178 = vld [vmem:[%s152 + $0x130] sm:$0xff]
                %179 = vst [vmem:[%s153 + $0x64] sm:$0xff] %v178
                %v180 = vld [vmem:[%s152 + $0x138] sm:$0xff]
                %181 = vst [vmem:[%s153 + $0x6c] sm:$0xff] %v180
                %v182 = vld [vmem:[%s152 + $0x140] sm:$0xff]
                %183 = vst [vmem:[%s153 + $0x74] sm:$0xff] %v182
                %v184 = vld [vmem:[%s152 + $0x148] sm:$0xff]
                %185 = vst [vmem:[%s153 + $0x7c] sm:$0xff] %v184
                %v186 = vld [vmem:[%s152 + $0x220] sm:$0xff]
                %187 = vst [vmem:[%s153 + $0x88] sm:$0xff] %v186
                %v188 = vld [vmem:[%s152 + $0x228] sm:$0xff]
                %189 = vst [vmem:[%s153 + $0x90] sm:$0xff] %v188
                %v190 = vld [vmem:[%s152 + $0x230] sm:$0xff]
                %191 = vst [vmem:[%s153 + $0x98] sm:$0xff] %v190
                %v192 = vld [vmem:[%s152 + $0x238] sm:$0xff]
                %193 = vst [vmem:[%s153 + $0xa0] sm:$0xff] %v192
                %v194 = vld [vmem:[%s152 + $0x240] sm:$0xff]
                %195 = vst [vmem:[%s153 + $0xa8] sm:$0xff] %v194
                %v196 = vld [vmem:[%s152 + $0x248] sm:$0xff]
                %197 = vst [vmem:[%s153 + $0xb0] sm:$0xff] %v196
                %v198 = vld [vmem:[%s152 + $0x250] sm:$0xff]
                %199 = vst [vmem:[%s153 + $0xb8] sm:$0xff] %v198
                %v200 = vld [vmem:[%s152 + $0x258] sm:$0xff]
                %201 = vst [vmem:[%s153 + $0xc0] sm:$0xff] %v200
                %v202 = vld [vmem:[%s152 + $0x330] sm:$0xff]
                %203 = vst [vmem:[%s153 + $0xcc] sm:$0xff] %v202
                %v204 = vld [vmem:[%s152 + $0x338] sm:$0xff]
                %205 = vst [vmem:[%s153 + $0xd4] sm:$0xff] %v204
                %v206 = vld [vmem:[%s152 + $0x340] sm:$0xff]
                %207 = vst [vmem:[%s153 + $0xdc] sm:$0xff] %v206
                %v208 = vld [vmem:[%s152 + $0x348] sm:$0xff]
                %209 = vst [vmem:[%s153 + $0xe4] sm:$0xff] %v208
                %v210 = vld [vmem:[%s152 + $0x350] sm:$0xff]
                %211 = vst [vmem:[%s153 + $0xec] sm:$0xff] %v210
                %v212 = vld [vmem:[%s152 + $0x358] sm:$0xff]
                %213 = vst [vmem:[%s153 + $0xf4] sm:$0xff] %v212
                %v214 = vld [vmem:[%s152 + $0x360] sm:$0xff]
                %215 = vst [vmem:[%s153 + $0xfc] sm:$0xff] %v214
                %v216 = vld [vmem:[%s152 + $0x368] sm:$0xff]
                %217 = vst [vmem:[%s153 + $0x104] sm:$0xff] %v216
                %v218 = vld [vmem:[%s152 + $0x440] sm:$0xff]
                %219 = vst [vmem:[%s153 + $0x110] sm:$0xff] %v218
                %v220 = vld [vmem:[%s152 + $0x448] sm:$0xff]
                %221 = vst [vmem:[%s153 + $0x118] sm:$0xff] %v220
                %v222 = vld [vmem:[%s152 + $0x450] sm:$0xff]
                %223 = vst [vmem:[%s153 + $0x120] sm:$0xff] %v222
                %v224 = vld [vmem:[%s152 + $0x458] sm:$0xff]
                %225 = vst [vmem:[%s153 + $0x128] sm:$0xff] %v224
                %v226 = vld [vmem:[%s152 + $0x460] sm:$0xff]
                %227 = vst [vmem:[%s153 + $0x130] sm:$0xff] %v226
                %v228 = vld [vmem:[%s152 + $0x468] sm:$0xff]
                %229 = vst [vmem:[%s153 + $0x138] sm:$0xff] %v228
                %v230 = vld [vmem:[%s152 + $0x470] sm:$0xff]
                %231 = vst [vmem:[%s153 + $0x140] sm:$0xff] %v230
                %v232 = vld [vmem:[%s152 + $0x478] sm:$0xff]
                %233 = vst [vmem:[%s153 + $0x148] sm:$0xff] %v232
                %v234 = vld [vmem:[%s152 + $0x550] sm:$0xff]
                %235 = vst [vmem:[%s153 + $0x154] sm:$0xff] %v234
                %v236 = vld [vmem:[%s152 + $0x558] sm:$0xff]
                %237 = vst [vmem:[%s153 + $0x15c] sm:$0xff] %v236
                %v238 = vld [vmem:[%s152 + $0x560] sm:$0xff]
                %239 = vst [vmem:[%s153 + $0x164] sm:$0xff] %v238
                %v240 = vld [vmem:[%s152 + $0x568] sm:$0xff]
                %241 = vst [vmem:[%s153 + $0x16c] sm:$0xff] %v240
                %v242 = vld [vmem:[%s152 + $0x570] sm:$0xff]
                %243 = vst [vmem:[%s153 + $0x174] sm:$0xff] %v242
                %v244 = vld [vmem:[%s152 + $0x578] sm:$0xff]
                %245 = vst [vmem:[%s153 + $0x17c] sm:$0xff] %v244
                %v246 = vld [vmem:[%s152 + $0x580] sm:$0xff]
                %247 = vst [vmem:[%s153 + $0x184] sm:$0xff] %v246
                %v248 = vld [vmem:[%s152 + $0x588] sm:$0xff]
                %249 = vst [vmem:[%s153 + $0x18c] sm:$0xff] %v248
                %v250 = vld [vmem:[%s152 + $0x660] sm:$0xff]
                %251 = vst [vmem:[%s153 + $0x198] sm:$0xff] %v250
                %v252 = vld [vmem:[%s152 + $0x668] sm:$0xff]
                %253 = vst [vmem:[%s153 + $0x1a0] sm:$0xff] %v252
                %v254 = vld [vmem:[%s152 + $0x670] sm:$0xff]
                %255 = vst [vmem:[%s153 + $0x1a8] sm:$0xff] %v254
                %v256 = vld [vmem:[%s152 + $0x678] sm:$0xff]
                %257 = vst [vmem:[%s153 + $0x1b0] sm:$0xff] %v256
                %v258 = vld [vmem:[%s152 + $0x680] sm:$0xff]
                %259 = vst [vmem:[%s153 + $0x1b8] sm:$0xff] %v258
                %v260 = vld [vmem:[%s152 + $0x688] sm:$0xff]
                %261 = vst [vmem:[%s153 + $0x1c0] sm:$0xff] %v260
                %v262 = vld [vmem:[%s152 + $0x690] sm:$0xff]
                %263 = vst [vmem:[%s153 + $0x1c8] sm:$0xff] %v262
                %v264 = vld [vmem:[%s152 + $0x698] sm:$0xff]
                %265 = vst [vmem:[%s153 + $0x1d0] sm:$0xff] %v264
                %v266 = vld [vmem:[%s152 + $0x770] sm:$0xff]
                %267 = vst [vmem:[%s153 + $0x1dc] sm:$0xff] %v266
                %v268 = vld [vmem:[%s152 + $0x778] sm:$0xff]
                %269 = vst [vmem:[%s153 + $0x1e4] sm:$0xff] %v268
                %v270 = vld [vmem:[%s152 + $0x780] sm:$0xff]
                %271 = vst [vmem:[%s153 + $0x1ec] sm:$0xff] %v270
                %v272 = vld [vmem:[%s152 + $0x788] sm:$0xff]
                %273 = vst [vmem:[%s153 + $0x1f4] sm:$0xff] %v272
                %v274 = vld [vmem:[%s152 + $0x790] sm:$0xff]
                %275 = vst [vmem:[%s153 + $0x1fc] sm:$0xff] %v274
                %v276 = vld [vmem:[%s152 + $0x798] sm:$0xff]
                %277 = vst [vmem:[%s153 + $0x204] sm:$0xff] %v276
                %v278 = vld [vmem:[%s152 + $0x7a0] sm:$0xff]
                %279 = vst [vmem:[%s153 + $0x20c] sm:$0xff] %v278
                %v280 = vld [vmem:[%s152 + $0x7a8] sm:$0xff]
                %281 = vst [vmem:[%s153 + $0x214] sm:$0xff] %v280
                %v282 = vld [vmem:[%s152 + $0x880] sm:$0xff]
                %283 = vst [vmem:[%s153 + $0x220] sm:$0xff] %v282
                %v284 = vld [vmem:[%s152 + $0x888] sm:$0xff]
                %285 = vst [vmem:[%s153 + $0x228] sm:$0xff] %v284
                %v286 = vld [vmem:[%s152 + $0x890] sm:$0xff]
                %287 = vst [vmem:[%s153 + $0x230] sm:$0xff] %v286
                %v288 = vld [vmem:[%s152 + $0x898] sm:$0xff]
                %289 = vst [vmem:[%s153 + $0x238] sm:$0xff] %v288
                %v290 = vld [vmem:[%s152 + $0x8a0] sm:$0xff]
                %291 = vst [vmem:[%s153 + $0x240] sm:$0xff] %v290
                %v292 = vld [vmem:[%s152 + $0x8a8] sm:$0xff]
                %293 = vst [vmem:[%s153 + $0x248] sm:$0xff] %v292
                %v294 = vld [vmem:[%s152 + $0x8b0] sm:$0xff]
                %295 = vst [vmem:[%s153 + $0x250] sm:$0xff] %v294
                %v296 = vld [vmem:[%s152 + $0x8b8] sm:$0xff]
                %297 = vst [vmem:[%s153 + $0x258] sm:$0xff] %v296
                %v298 = vld [vmem:[%s152 + $0x990] sm:$0xff]
                %299 = vst [vmem:[%s153 + $0x264] sm:$0xff] %v298
                %v300 = vld [vmem:[%s152 + $0x998] sm:$0xff]
                %301 = vst [vmem:[%s153 + $0x26c] sm:$0xff] %v300
                %v302 = vld [vmem:[%s152 + $0x9a0] sm:$0xff]
                %303 = vst [vmem:[%s153 + $0x274] sm:$0xff] %v302
                %v304 = vld [vmem:[%s152 + $0x9a8] sm:$0xff]
                %305 = vst [vmem:[%s153 + $0x27c] sm:$0xff] %v304
                %v306 = vld [vmem:[%s152 + $0x9b0] sm:$0xff]
                %307 = vst [vmem:[%s153 + $0x284] sm:$0xff] %v306
                %v308 = vld [vmem:[%s152 + $0x9b8] sm:$0xff]
                %309 = vst [vmem:[%s153 + $0x28c] sm:$0xff] %v308
                %v310 = vld [vmem:[%s152 + $0x9c0] sm:$0xff]
                %311 = vst [vmem:[%s153 + $0x294] sm:$0xff] %v310
                %v312 = vld [vmem:[%s152 + $0x9c8] sm:$0xff]
                %313 = vst [vmem:[%s153 + $0x29c] sm:$0xff] %v312
                %v314 = vld [vmem:[%s152 + $0xaa0] sm:$0xff]
                %315 = vst [vmem:[%s153 + $0x2a8] sm:$0xff] %v314
                %v316 = vld [vmem:[%s152 + $0xaa8] sm:$0xff]
                %317 = vst [vmem:[%s153 + $0x2b0] sm:$0xff] %v316
                %v318 = vld [vmem:[%s152 + $0xab0] sm:$0xff]
                %319 = vst [vmem:[%s153 + $0x2b8] sm:$0xff] %v318
                %v320 = vld [vmem:[%s152 + $0xab8] sm:$0xff]
                %321 = vst [vmem:[%s153 + $0x2c0] sm:$0xff] %v320
                %v322 = vld [vmem:[%s152 + $0xac0] sm:$0xff]
                %323 = vst [vmem:[%s153 + $0x2c8] sm:$0xff] %v322
                %v324 = vld [vmem:[%s152 + $0xac8] sm:$0xff]
                %325 = vst [vmem:[%s153 + $0x2d0] sm:$0xff] %v324
                %v326 = vld [vmem:[%s152 + $0xad0] sm:$0xff]
                %327 = vst [vmem:[%s153 + $0x2d8] sm:$0xff] %v326
                %v328 = vld [vmem:[%s152 + $0xad8] sm:$0xff]
                %329 = vst [vmem:[%s153 + $0x2e0] sm:$0xff] %v328
                %v330 = vld [vmem:[%s152 + $0xbb0] sm:$0xff]
                %331 = vst [vmem:[%s153 + $0x2ec] sm:$0xff] %v330
                %v332 = vld [vmem:[%s152 + $0xbb8] sm:$0xff]
                %333 = vst [vmem:[%s153 + $0x2f4] sm:$0xff] %v332
                %v334 = vld [vmem:[%s152 + $0xbc0] sm:$0xff]
                %335 = vst [vmem:[%s153 + $0x2fc] sm:$0xff] %v334
                %v336 = vld [vmem:[%s152 + $0xbc8] sm:$0xff]
                %337 = vst [vmem:[%s153 + $0x304] sm:$0xff] %v336
                %v338 = vld [vmem:[%s152 + $0xbd0] sm:$0xff]
                %339 = vst [vmem:[%s153 + $0x30c] sm:$0xff] %v338
                %v340 = vld [vmem:[%s152 + $0xbd8] sm:$0xff]
                %341 = vst [vmem:[%s153 + $0x314] sm:$0xff] %v340
                %v342 = vld [vmem:[%s152 + $0xbe0] sm:$0xff]
                %343 = vst [vmem:[%s153 + $0x31c] sm:$0xff] %v342
                %v344 = vld [vmem:[%s152 + $0xbe8] sm:$0xff]
                %345 = vst [vmem:[%s153 + $0x324] sm:$0xff] %v344
                %v346 = vld [vmem:[%s152 + $0xcc0] sm:$0xff]
                %347 = vst [vmem:[%s153 + $0x330] sm:$0xff] %v346
                %v348 = vld [vmem:[%s152 + $0xcc8] sm:$0xff]
                %349 = vst [vmem:[%s153 + $0x338] sm:$0xff] %v348
                %v350 = vld [vmem:[%s152 + $0xcd0] sm:$0xff]
                %351 = vst [vmem:[%s153 + $0x340] sm:$0xff] %v350
                %v352 = vld [vmem:[%s152 + $0xcd8] sm:$0xff]
                %353 = vst [vmem:[%s153 + $0x348] sm:$0xff] %v352
                %v354 = vld [vmem:[%s152 + $0xce0] sm:$0xff]
                %355 = vst [vmem:[%s153 + $0x350] sm:$0xff] %v354
                %v356 = vld [vmem:[%s152 + $0xce8] sm:$0xff]
                %357 = vst [vmem:[%s153 + $0x358] sm:$0xff] %v356
                %v358 = vld [vmem:[%s152 + $0xcf0] sm:$0xff]
                %359 = vst [vmem:[%s153 + $0x360] sm:$0xff] %v358
                %v360 = vld [vmem:[%s152 + $0xcf8] sm:$0xff]
                %361 = vst [vmem:[%s153 + $0x368] sm:$0xff] %v360
                %v362 = vld [vmem:[%s152 + $0xdd0] sm:$0xff]
                %363 = vst [vmem:[%s153 + $0x374] sm:$0xff] %v362
                %v364 = vld [vmem:[%s152 + $0xdd8] sm:$0xff]
                %365 = vst [vmem:[%s153 + $0x37c] sm:$0xff] %v364
                %v366 = vld [vmem:[%s152 + $0xde0] sm:$0xff]
                %367 = vst [vmem:[%s153 + $0x384] sm:$0xff] %v366
                %v368 = vld [vmem:[%s152 + $0xde8] sm:$0xff]
                %369 = vst [vmem:[%s153 + $0x38c] sm:$0xff] %v368
                %v370 = vld [vmem:[%s152 + $0xdf0] sm:$0xff]
                %371 = vst [vmem:[%s153 + $0x394] sm:$0xff] %v370
                %v372 = vld [vmem:[%s152 + $0xdf8] sm:$0xff]
                %373 = vst [vmem:[%s153 + $0x39c] sm:$0xff] %v372
                %v374 = vld [vmem:[%s152 + $0xe00] sm:$0xff]
                %375 = vst [vmem:[%s153 + $0x3a4] sm:$0xff] %v374
                %v376 = vld [vmem:[%s152 + $0xe08] sm:$0xff]
                %377 = vst [vmem:[%s153 + $0x3ac] sm:$0xff] %v376
                %v378 = vld [vmem:[%s152 + $0xee0] sm:$0xff]
                %379 = vst [vmem:[%s153 + $0x3b8] sm:$0xff] %v378
                %v380 = vld [vmem:[%s152 + $0xee8] sm:$0xff]
                %381 = vst [vmem:[%s153 + $0x3c0] sm:$0xff] %v380
                %v382 = vld [vmem:[%s152 + $0xef0] sm:$0xff]
                %383 = vst [vmem:[%s153 + $0x3c8] sm:$0xff] %v382
                %v384 = vld [vmem:[%s152 + $0xef8] sm:$0xff]
                %385 = vst [vmem:[%s153 + $0x3d0] sm:$0xff] %v384
                %v386 = vld [vmem:[%s152 + $0xf00] sm:$0xff]
                %387 = vst [vmem:[%s153 + $0x3d8] sm:$0xff] %v386
                %v388 = vld [vmem:[%s152 + $0xf08] sm:$0xff]
                %389 = vst [vmem:[%s153 + $0x3e0] sm:$0xff] %v388
                %v390 = vld [vmem:[%s152 + $0xf10] sm:$0xff]
                %391 = vst [vmem:[%s153 + $0x3e8] sm:$0xff] %v390
                %v392 = vld [vmem:[%s152 + $0xf18] sm:$0xff]
                %393 = vst [vmem:[%s153 + $0x3f0] sm:$0xff] %v392
                %v394 = vld [vmem:[%s152 + $0xff0] sm:$0xff]
                %395 = vst [vmem:[%s153 + $0x3fc] sm:$0xff] %v394
                %v396 = vld [vmem:[%s152 + $0xff8] sm:$0xff]
                %397 = vst [vmem:[%s153 + $0x404] sm:$0xff] %v396
                %v398 = vld [vmem:[%s152 + $0x1000] sm:$0xff]
                %399 = vst [vmem:[%s153 + $0x40c] sm:$0xff] %v398
                %v400 = vld [vmem:[%s152 + $0x1008] sm:$0xff]
                %401 = vst [vmem:[%s153 + $0x414] sm:$0xff] %v400
                %v402 = vld [vmem:[%s152 + $0x1010] sm:$0xff]
                %403 = vst [vmem:[%s153 + $0x41c] sm:$0xff] %v402
                %v404 = vld [vmem:[%s152 + $0x1018] sm:$0xff]
                %405 = vst [vmem:[%s153 + $0x424] sm:$0xff] %v404
                %v406 = vld [vmem:[%s152 + $0x1020] sm:$0xff]
                %407 = vst [vmem:[%s153 + $0x42c] sm:$0xff] %v406
                %v408 = vld [vmem:[%s152 + $0x1028] sm:$0xff]
                %409 = vst [vmem:[%s153 + $0x434] sm:$0xff] %v408
                %v410 = vld [vmem:[%s152 + $0x1100] sm:$0xff]
                %411 = vst [vmem:[%s153 + $0x440] sm:$0xff] %v410
                %v412 = vld [vmem:[%s152 + $0x1108] sm:$0xff]
                %413 = vst [vmem:[%s153 + $0x448] sm:$0xff] %v412
                %v414 = vld [vmem:[%s152 + $0x1110] sm:$0xff]
                %415 = vst [vmem:[%s153 + $0x450] sm:$0xff] %v414
                %v416 = vld [vmem:[%s152 + $0x1118] sm:$0xff]
                %417 = vst [vmem:[%s153 + $0x458] sm:$0xff] %v416
                %v418 = vld [vmem:[%s152 + $0x1120] sm:$0xff]
                %419 = vst [vmem:[%s153 + $0x460] sm:$0xff] %v418
                %v420 = vld [vmem:[%s152 + $0x1128] sm:$0xff]
                %421 = vst [vmem:[%s153 + $0x468] sm:$0xff] %v420
                %v422 = vld [vmem:[%s152 + $0x1130] sm:$0xff]
                %423 = vst [vmem:[%s153 + $0x470] sm:$0xff] %v422
                %v424 = vld [vmem:[%s152 + $0x1138] sm:$0xff]
                %425 = vst [vmem:[%s153 + $0x478] sm:$0xff] %v424
                %v426 = vld [vmem:[%s152 + $0x1210] sm:$0xff]
                %427 = vst [vmem:[%s153 + $0x484] sm:$0xff] %v426
                %v428 = vld [vmem:[%s152 + $0x1218] sm:$0xff]
                %429 = vst [vmem:[%s153 + $0x48c] sm:$0xff] %v428
                %v430 = vld [vmem:[%s152 + $0x1220] sm:$0xff]
                %431 = vst [vmem:[%s153 + $0x494] sm:$0xff] %v430
                %v432 = vld [vmem:[%s152 + $0x1228] sm:$0xff]
                %433 = vst [vmem:[%s153 + $0x49c] sm:$0xff] %v432
                %v434 = vld [vmem:[%s152 + $0x1230] sm:$0xff]
                %435 = vst [vmem:[%s153 + $0x4a4] sm:$0xff] %v434
                %v436 = vld [vmem:[%s152 + $0x1238] sm:$0xff]
                %437 = vst [vmem:[%s153 + $0x4ac] sm:$0xff] %v436
                %v438 = vld [vmem:[%s152 + $0x1240] sm:$0xff]
                %439 = vst [vmem:[%s153 + $0x4b4] sm:$0xff] %v438
                %v440 = vld [vmem:[%s152 + $0x1248] sm:$0xff]
                %441 = vst [vmem:[%s153 + $0x4bc] sm:$0xff] %v440
                %v442 = vld [vmem:[%s152 + $0x1320] sm:$0xff]
                %443 = vst [vmem:[%s153 + $0x4c8] sm:$0xff] %v442
                %v444 = vld [vmem:[%s152 + $0x1328] sm:$0xff]
                %445 = vst [vmem:[%s153 + $0x4d0] sm:$0xff] %v444
                %v446 = vld [vmem:[%s152 + $0x1330] sm:$0xff]
                %447 = vst [vmem:[%s153 + $0x4d8] sm:$0xff] %v446
                %v448 = vld [vmem:[%s152 + $0x1338] sm:$0xff]
                %449 = vst [vmem:[%s153 + $0x4e0] sm:$0xff] %v448
                %v450 = vld [vmem:[%s152 + $0x1340] sm:$0xff]
                %451 = vst [vmem:[%s153 + $0x4e8] sm:$0xff] %v450
                %v452 = vld [vmem:[%s152 + $0x1348] sm:$0xff]
                %453 = vst [vmem:[%s153 + $0x4f0] sm:$0xff] %v452
                %v454 = vld [vmem:[%s152 + $0x1350] sm:$0xff]
                %455 = vst [vmem:[%s153 + $0x4f8] sm:$0xff] %v454
                %v456 = vld [vmem:[%s152 + $0x1358] sm:$0xff]
                %457 = vst [vmem:[%s153 + $0x500] sm:$0xff] %v456
                %v458 = vld [vmem:[%s152 + $0x1430] sm:$0xff]
                %459 = vst [vmem:[%s153 + $0x50c] sm:$0xff] %v458
                %v460 = vld [vmem:[%s152 + $0x1438] sm:$0xff]
                %461 = vst [vmem:[%s153 + $0x514] sm:$0xff] %v460
                %v462 = vld [vmem:[%s152 + $0x1440] sm:$0xff]
                %463 = vst [vmem:[%s153 + $0x51c] sm:$0xff] %v462
                %v464 = vld [vmem:[%s152 + $0x1448] sm:$0xff]
                %465 = vst [vmem:[%s153 + $0x524] sm:$0xff] %v464
                %v466 = vld [vmem:[%s152 + $0x1450] sm:$0xff]
                %467 = vst [vmem:[%s153 + $0x52c] sm:$0xff] %v466
                %v468 = vld [vmem:[%s152 + $0x1458] sm:$0xff]
                %469 = vst [vmem:[%s153 + $0x534] sm:$0xff] %v468
                %v470 = vld [vmem:[%s152 + $0x1460] sm:$0xff]
                %471 = vst [vmem:[%s153 + $0x53c] sm:$0xff] %v470
                %v472 = vld [vmem:[%s152 + $0x1468] sm:$0xff]
                %473 = vst [vmem:[%s153 + $0x544] sm:$0xff] %v472
                %v474 = vld [vmem:[%s152 + $0x1540] sm:$0xff]
                %475 = vst [vmem:[%s153 + $0x550] sm:$0xff] %v474
                %v476 = vld [vmem:[%s152 + $0x1548] sm:$0xff]
                %477 = vst [vmem:[%s153 + $0x558] sm:$0xff] %v476
                %v478 = vld [vmem:[%s152 + $0x1550] sm:$0xff]
                %479 = vst [vmem:[%s153 + $0x560] sm:$0xff] %v478
                %v480 = vld [vmem:[%s152 + $0x1558] sm:$0xff]
                %481 = vst [vmem:[%s153 + $0x568] sm:$0xff] %v480
                %v482 = vld [vmem:[%s152 + $0x1560] sm:$0xff]
                %483 = vst [vmem:[%s153 + $0x570] sm:$0xff] %v482
                %v484 = vld [vmem:[%s152 + $0x1568] sm:$0xff]
                %485 = vst [vmem:[%s153 + $0x578] sm:$0xff] %v484
                %v486 = vld [vmem:[%s152 + $0x1570] sm:$0xff]
                %487 = vst [vmem:[%s153 + $0x580] sm:$0xff] %v486
                %v488 = vld [vmem:[%s152 + $0x1578] sm:$0xff]
                %489 = vst [vmem:[%s153 + $0x588] sm:$0xff] %v488
                %v490 = vld [vmem:[%s152 + $0x1650] sm:$0xff]
                %491 = vst [vmem:[%s153 + $0x594] sm:$0xff] %v490
                %v492 = vld [vmem:[%s152 + $0x1658] sm:$0xff]
                %493 = vst [vmem:[%s153 + $0x59c] sm:$0xff] %v492
                %v494 = vld [vmem:[%s152 + $0x1660] sm:$0xff]
                %495 = vst [vmem:[%s153 + $0x5a4] sm:$0xff] %v494
                %v496 = vld [vmem:[%s152 + $0x1668] sm:$0xff]
                %497 = vst [vmem:[%s153 + $0x5ac] sm:$0xff] %v496
                %v498 = vld [vmem:[%s152 + $0x1670] sm:$0xff]
                %499 = vst [vmem:[%s153 + $0x5b4] sm:$0xff] %v498
                %v500 = vld [vmem:[%s152 + $0x1678] sm:$0xff]
                %501 = vst [vmem:[%s153 + $0x5bc] sm:$0xff] %v500
                %v502 = vld [vmem:[%s152 + $0x1680] sm:$0xff]
                %503 = vst [vmem:[%s153 + $0x5c4] sm:$0xff] %v502
                %v504 = vld [vmem:[%s152 + $0x1688] sm:$0xff]
                %505 = vst [vmem:[%s153 + $0x5cc] sm:$0xff] %v504
                %v506 = vld [vmem:[%s152 + $0x1760] sm:$0xff]
                %507 = vst [vmem:[%s153 + $0x5d8] sm:$0xff] %v506
                %v508 = vld [vmem:[%s152 + $0x1768] sm:$0xff]
                %509 = vst [vmem:[%s153 + $0x5e0] sm:$0xff] %v508
                %v510 = vld [vmem:[%s152 + $0x1770] sm:$0xff]
                %511 = vst [vmem:[%s153 + $0x5e8] sm:$0xff] %v510
                %v512 = vld [vmem:[%s152 + $0x1778] sm:$0xff]
                %513 = vst [vmem:[%s153 + $0x5f0] sm:$0xff] %v512
                %v514 = vld [vmem:[%s152 + $0x1780] sm:$0xff]
                %515 = vst [vmem:[%s153 + $0x5f8] sm:$0xff] %v514
                %v516 = vld [vmem:[%s152 + $0x1788] sm:$0xff]
                %517 = vst [vmem:[%s153 + $0x600] sm:$0xff] %v516
                %v518 = vld [vmem:[%s152 + $0x1790] sm:$0xff]
                %519 = vst [vmem:[%s153 + $0x608] sm:$0xff] %v518
                %v520 = vld [vmem:[%s152 + $0x1798] sm:$0xff]
                %521 = vst [vmem:[%s153 + $0x610] sm:$0xff] %v520
                %v522 = vld [vmem:[%s152 + $0x1870] sm:$0xff]
                %523 = vst [vmem:[%s153 + $0x61c] sm:$0xff] %v522
                %v524 = vld [vmem:[%s152 + $0x1878] sm:$0xff]
                %525 = vst [vmem:[%s153 + $0x624] sm:$0xff] %v524
                %v526 = vld [vmem:[%s152 + $0x1880] sm:$0xff]
                %527 = vst [vmem:[%s153 + $0x62c] sm:$0xff] %v526
                %v528 = vld [vmem:[%s152 + $0x1888] sm:$0xff]
                %529 = vst [vmem:[%s153 + $0x634] sm:$0xff] %v528
                %v530 = vld [vmem:[%s152 + $0x1890] sm:$0xff]
                %531 = vst [vmem:[%s153 + $0x63c] sm:$0xff] %v530
                %v532 = vld [vmem:[%s152 + $0x1898] sm:$0xff]
                %533 = vst [vmem:[%s153 + $0x644] sm:$0xff] %v532
                %v534 = vld [vmem:[%s152 + $0x18a0] sm:$0xff]
                %535 = vst [vmem:[%s153 + $0x64c] sm:$0xff] %v534
                %v536 = vld [vmem:[%s152 + $0x18a8] sm:$0xff]
                %537 = vst [vmem:[%s153 + $0x654] sm:$0xff] %v536
                %v538 = vld [vmem:[%s152 + $0x1980] sm:$0xff]
                %539 = vst [vmem:[%s153 + $0x660] sm:$0xff] %v538
                %v540 = vld [vmem:[%s152 + $0x1988] sm:$0xff]
                %541 = vst [vmem:[%s153 + $0x668] sm:$0xff] %v540
                %v542 = vld [vmem:[%s152 + $0x1990] sm:$0xff]
                %543 = vst [vmem:[%s153 + $0x670] sm:$0xff] %v542
                %v544 = vld [vmem:[%s152 + $0x1998] sm:$0xff]
                %545 = vst [vmem:[%s153 + $0x678] sm:$0xff] %v544
                %v546 = vld [vmem:[%s152 + $0x19a0] sm:$0xff]
                %547 = vst [vmem:[%s153 + $0x680] sm:$0xff] %v546
                %v548 = vld [vmem:[%s152 + $0x19a8] sm:$0xff]
                %549 = vst [vmem:[%s153 + $0x688] sm:$0xff] %v548
                %v550 = vld [vmem:[%s152 + $0x19b0] sm:$0xff]
                %551 = vst [vmem:[%s153 + $0x690] sm:$0xff] %v550
                %v552 = vld [vmem:[%s152 + $0x19b8] sm:$0xff]
                %553 = vst [vmem:[%s153 + $0x698] sm:$0xff] %v552
                %v554 = vld [vmem:[%s152 + $0x1a90] sm:$0xff]
                %555 = vst [vmem:[%s153 + $0x6a4] sm:$0xff] %v554
                %v556 = vld [vmem:[%s152 + $0x1a98] sm:$0xff]
                %557 = vst [vmem:[%s153 + $0x6ac] sm:$0xff] %v556
                %v558 = vld [vmem:[%s152 + $0x1aa0] sm:$0xff]
                %559 = vst [vmem:[%s153 + $0x6b4] sm:$0xff] %v558
                %v560 = vld [vmem:[%s152 + $0x1aa8] sm:$0xff]
                %561 = vst [vmem:[%s153 + $0x6bc] sm:$0xff] %v560
                %v562 = vld [vmem:[%s152 + $0x1ab0] sm:$0xff]
                %563 = vst [vmem:[%s153 + $0x6c4] sm:$0xff] %v562
                %v564 = vld [vmem:[%s152 + $0x1ab8] sm:$0xff]
                %565 = vst [vmem:[%s153 + $0x6cc] sm:$0xff] %v564
                %v566 = vld [vmem:[%s152 + $0x1ac0] sm:$0xff]
                %567 = vst [vmem:[%s153 + $0x6d4] sm:$0xff] %v566
                %v568 = vld [vmem:[%s152 + $0x1ac8] sm:$0xff]
                %569 = vst [vmem:[%s153 + $0x6dc] sm:$0xff] %v568
                %v570 = vld [vmem:[%s152 + $0x1ba0] sm:$0xff]
                %571 = vst [vmem:[%s153 + $0x6e8] sm:$0xff] %v570
                %v572 = vld [vmem:[%s152 + $0x1ba8] sm:$0xff]
                %573 = vst [vmem:[%s153 + $0x6f0] sm:$0xff] %v572
                %v574 = vld [vmem:[%s152 + $0x1bb0] sm:$0xff]
                %575 = vst [vmem:[%s153 + $0x6f8] sm:$0xff] %v574
                %v576 = vld [vmem:[%s152 + $0x1bb8] sm:$0xff]
                %577 = vst [vmem:[%s153 + $0x700] sm:$0xff] %v576
                %v578 = vld [vmem:[%s152 + $0x1bc0] sm:$0xff]
                %579 = vst [vmem:[%s153 + $0x708] sm:$0xff] %v578
                %v580 = vld [vmem:[%s152 + $0x1bc8] sm:$0xff]
                %581 = vst [vmem:[%s153 + $0x710] sm:$0xff] %v580
                %v582 = vld [vmem:[%s152 + $0x1bd0] sm:$0xff]
                %583 = vst [vmem:[%s153 + $0x718] sm:$0xff] %v582
                %v584 = vld [vmem:[%s152 + $0x1bd8] sm:$0xff]
                %585 = vst [vmem:[%s153 + $0x720] sm:$0xff] %v584
                %v586 = vld [vmem:[%s152 + $0x1cb0] sm:$0xff]
                %587 = vst [vmem:[%s153 + $0x72c] sm:$0xff] %v586
                %v588 = vld [vmem:[%s152 + $0x1cb8] sm:$0xff]
                %589 = vst [vmem:[%s153 + $0x734] sm:$0xff] %v588
                %v590 = vld [vmem:[%s152 + $0x1cc0] sm:$0xff]
                %591 = vst [vmem:[%s153 + $0x73c] sm:$0xff] %v590
                %v592 = vld [vmem:[%s152 + $0x1cc8] sm:$0xff]
                %593 = vst [vmem:[%s153 + $0x744] sm:$0xff] %v592
                %v594 = vld [vmem:[%s152 + $0x1cd0] sm:$0xff]
                %595 = vst [vmem:[%s153 + $0x74c] sm:$0xff] %v594
                %v596 = vld [vmem:[%s152 + $0x1cd8] sm:$0xff]
                %597 = vst [vmem:[%s153 + $0x754] sm:$0xff] %v596
                %v598 = vld [vmem:[%s152 + $0x1ce0] sm:$0xff]
                %599 = vst [vmem:[%s153 + $0x75c] sm:$0xff] %v598
                %v600 = vld [vmem:[%s152 + $0x1ce8] sm:$0xff]
                %601 = vst [vmem:[%s153 + $0x764] sm:$0xff] %v600
                %v602 = vld [vmem:[%s152 + $0x1dc0] sm:$0xff]
                %603 = vst [vmem:[%s153 + $0x770] sm:$0xff] %v602
                %v604 = vld [vmem:[%s152 + $0x1dc8] sm:$0xff]
                %605 = vst [vmem:[%s153 + $0x778] sm:$0xff] %v604
                %v606 = vld [vmem:[%s152 + $0x1dd0] sm:$0xff]
                %607 = vst [vmem:[%s153 + $0x780] sm:$0xff] %v606
                %v608 = vld [vmem:[%s152 + $0x1dd8] sm:$0xff]
                %609 = vst [vmem:[%s153 + $0x788] sm:$0xff] %v608
                %v610 = vld [vmem:[%s152 + $0x1de0] sm:$0xff]
                %611 = vst [vmem:[%s153 + $0x790] sm:$0xff] %v610
                %v612 = vld [vmem:[%s152 + $0x1de8] sm:$0xff]
                %613 = vst [vmem:[%s153 + $0x798] sm:$0xff] %v612
                %v614 = vld [vmem:[%s152 + $0x1df0] sm:$0xff]
                %615 = vst [vmem:[%s153 + $0x7a0] sm:$0xff] %v614
                %v616 = vld [vmem:[%s152 + $0x1df8] sm:$0xff]
                %617 = vst [vmem:[%s153 + $0x7a8] sm:$0xff] %v616
                %v618 = vld [vmem:[%s152 + $0x1ed0] sm:$0xff]
                %619 = vst [vmem:[%s153 + $0x7b4] sm:$0xff] %v618
                %v620 = vld [vmem:[%s152 + $0x1ed8] sm:$0xff]
                %621 = vst [vmem:[%s153 + $0x7bc] sm:$0xff] %v620
                %v622 = vld [vmem:[%s152 + $0x1ee0] sm:$0xff]
                %623 = vst [vmem:[%s153 + $0x7c4] sm:$0xff] %v622
                %v624 = vld [vmem:[%s152 + $0x1ee8] sm:$0xff]
                %625 = vst [vmem:[%s153 + $0x7cc] sm:$0xff] %v624
                %v626 = vld [vmem:[%s152 + $0x1ef0] sm:$0xff]
                %627 = vst [vmem:[%s153 + $0x7d4] sm:$0xff] %v626
                %v628 = vld [vmem:[%s152 + $0x1ef8] sm:$0xff]
                %629 = vst [vmem:[%s153 + $0x7dc] sm:$0xff] %v628
                %v630 = vld [vmem:[%s152 + $0x1f00] sm:$0xff]
                %631 = vst [vmem:[%s153 + $0x7e4] sm:$0xff] %v630
                %v632 = vld [vmem:[%s152 + $0x1f08] sm:$0xff]
                %633 = vst [vmem:[%s153 + $0x7ec] sm:$0xff] %v632
                %v634 = vld [vmem:[%s152 + $0x1fe0] sm:$0xff]
                %635 = vst [vmem:[%s153 + $0x7f8] sm:$0xff] %v634
                %v636 = vld [vmem:[%s152 + $0x1fe8] sm:$0xff]
                %637 = vst [vmem:[%s153 + $0x800] sm:$0xff] %v636
                %v638 = vld [vmem:[%s152 + $0x1ff0] sm:$0xff]
                %639 = vst [vmem:[%s153 + $0x808] sm:$0xff] %v638
                %v640 = vld [vmem:[%s152 + $0x1ff8] sm:$0xff]
                %641 = vst [vmem:[%s153 + $0x810] sm:$0xff] %v640
                %v642 = vld [vmem:[%s152 + $0x2000] sm:$0xff]
                %643 = vst [vmem:[%s153 + $0x818] sm:$0xff] %v642
                %v644 = vld [vmem:[%s152 + $0x2008] sm:$0xff]
                %645 = vst [vmem:[%s153 + $0x820] sm:$0xff] %v644
                %v646 = vld [vmem:[%s152 + $0x2010] sm:$0xff]
                %647 = vst [vmem:[%s153 + $0x828] sm:$0xff] %v646
                %v648 = vld [vmem:[%s152 + $0x2018] sm:$0xff]
                %649 = vst [vmem:[%s153 + $0x830] sm:$0xff] %v648
                %v650 = vld [vmem:[%s152 + $0x20f0] sm:$0xff]
                %651 = vst [vmem:[%s153 + $0x83c] sm:$0xff] %v650
                %v652 = vld [vmem:[%s152 + $0x20f8] sm:$0xff]
                %653 = vst [vmem:[%s153 + $0x844] sm:$0xff] %v652
                %v654 = vld [vmem:[%s152 + $0x2100] sm:$0xff]
                %655 = vst [vmem:[%s153 + $0x84c] sm:$0xff] %v654
                %v656 = vld [vmem:[%s152 + $0x2108] sm:$0xff]
                %657 = vst [vmem:[%s153 + $0x854] sm:$0xff] %v656
                %v658 = vld [vmem:[%s152 + $0x2110] sm:$0xff]
                %659 = vst [vmem:[%s153 + $0x85c] sm:$0xff] %v658
                %v660 = vld [vmem:[%s152 + $0x2118] sm:$0xff]
                %661 = vst [vmem:[%s153 + $0x864] sm:$0xff] %v660
                %v662 = vld [vmem:[%s152 + $0x2120] sm:$0xff]
                %663 = vst [vmem:[%s153 + $0x86c] sm:$0xff] %v662
                %v664 = vld [vmem:[%s152 + $0x2128] sm:$0xff]
                %665 = vst [vmem:[%s153 + $0x874] sm:$0xff] %v664
                %v666 = vld [vmem:[%s152 + $0x2200] sm:$0xff]
                %667 = vst [vmem:[%s153 + $0x880] sm:$0xff] %v666
                %v668 = vld [vmem:[%s152 + $0x2208] sm:$0xff]
                %669 = vst [vmem:[%s153 + $0x888] sm:$0xff] %v668
                %v670 = vld [vmem:[%s152 + $0x2210] sm:$0xff]
                %671 = vst [vmem:[%s153 + $0x890] sm:$0xff] %v670
                %v672 = vld [vmem:[%s152 + $0x2218] sm:$0xff]
                %673 = vst [vmem:[%s153 + $0x898] sm:$0xff] %v672
                %v674 = vld [vmem:[%s152 + $0x2220] sm:$0xff]
                %675 = vst [vmem:[%s153 + $0x8a0] sm:$0xff] %v674
                %v676 = vld [vmem:[%s152 + $0x2228] sm:$0xff]
                %677 = vst [vmem:[%s153 + $0x8a8] sm:$0xff] %v676
                %v678 = vld [vmem:[%s152 + $0x2230] sm:$0xff]
                %679 = vst [vmem:[%s153 + $0x8b0] sm:$0xff] %v678
                %v680 = vld [vmem:[%s152 + $0x2238] sm:$0xff]
                %681 = vst [vmem:[%s153 + $0x8b8] sm:$0xff] %v680
                %v682 = vld [vmem:[%s152 + $0x2310] sm:$0xff]
                %683 = vst [vmem:[%s153 + $0x8c4] sm:$0xff] %v682
                %v684 = vld [vmem:[%s152 + $0x2318] sm:$0xff]
                %685 = vst [vmem:[%s153 + $0x8cc] sm:$0xff] %v684
                %v686 = vld [vmem:[%s152 + $0x2320] sm:$0xff]
                %687 = vst [vmem:[%s153 + $0x8d4] sm:$0xff] %v686
                %v688 = vld [vmem:[%s152 + $0x2328] sm:$0xff]
                %689 = vst [vmem:[%s153 + $0x8dc] sm:$0xff] %v688
                %v690 = vld [vmem:[%s152 + $0x2330] sm:$0xff]
                %691 = vst [vmem:[%s153 + $0x8e4] sm:$0xff] %v690
                %v692 = vld [vmem:[%s152 + $0x2338] sm:$0xff]
                %693 = vst [vmem:[%s153 + $0x8ec] sm:$0xff] %v692
                %v694 = vld [vmem:[%s152 + $0x2340] sm:$0xff]
                %695 = vst [vmem:[%s153 + $0x8f4] sm:$0xff] %v694
                %v696 = vld [vmem:[%s152 + $0x2348] sm:$0xff]
                %697 = vst [vmem:[%s153 + $0x8fc] sm:$0xff] %v696
                %v698 = vld [vmem:[%s152 + $0x2420] sm:$0xff]
                %699 = vst [vmem:[%s153 + $0x908] sm:$0xff] %v698
                %v700 = vld [vmem:[%s152 + $0x2428] sm:$0xff]
                %701 = vst [vmem:[%s153 + $0x910] sm:$0xff] %v700
                %v702 = vld [vmem:[%s152 + $0x2430] sm:$0xff]
                %703 = vst [vmem:[%s153 + $0x918] sm:$0xff] %v702
                %v704 = vld [vmem:[%s152 + $0x2438] sm:$0xff]
                %705 = vst [vmem:[%s153 + $0x920] sm:$0xff] %v704
                %v706 = vld [vmem:[%s152 + $0x2440] sm:$0xff]
                %707 = vst [vmem:[%s153 + $0x928] sm:$0xff] %v706
                %v708 = vld [vmem:[%s152 + $0x2448] sm:$0xff]
                %709 = vst [vmem:[%s153 + $0x930] sm:$0xff] %v708
                %v710 = vld [vmem:[%s152 + $0x2450] sm:$0xff]
                %711 = vst [vmem:[%s153 + $0x938] sm:$0xff] %v710
                %v712 = vld [vmem:[%s152 + $0x2458] sm:$0xff]
                %713 = vst [vmem:[%s153 + $0x940] sm:$0xff] %v712
                %v714 = vld [vmem:[%s152 + $0x2530] sm:$0xff]
                %715 = vst [vmem:[%s153 + $0x94c] sm:$0xff] %v714
                %v716 = vld [vmem:[%s152 + $0x2538] sm:$0xff]
                %717 = vst [vmem:[%s153 + $0x954] sm:$0xff] %v716
                %v718 = vld [vmem:[%s152 + $0x2540] sm:$0xff]
                %719 = vst [vmem:[%s153 + $0x95c] sm:$0xff] %v718
                %v720 = vld [vmem:[%s152 + $0x2548] sm:$0xff]
                %721 = vst [vmem:[%s153 + $0x964] sm:$0xff] %v720
                %v722 = vld [vmem:[%s152 + $0x2550] sm:$0xff]
                %723 = vst [vmem:[%s153 + $0x96c] sm:$0xff] %v722
                %v724 = vld [vmem:[%s152 + $0x2558] sm:$0xff]
                %725 = vst [vmem:[%s153 + $0x974] sm:$0xff] %v724
                %v726 = vld [vmem:[%s152 + $0x2560] sm:$0xff]
                %727 = vst [vmem:[%s153 + $0x97c] sm:$0xff] %v726
                %v728 = vld [vmem:[%s152 + $0x2568] sm:$0xff]
                %729 = vst [vmem:[%s153 + $0x984] sm:$0xff] %v728
                %v730 = vld [vmem:[%s152 + $0x2640] sm:$0xff]
                %731 = vst [vmem:[%s153 + $0x990] sm:$0xff] %v730
                %v732 = vld [vmem:[%s152 + $0x2648] sm:$0xff]
                %733 = vst [vmem:[%s153 + $0x998] sm:$0xff] %v732
                %v734 = vld [vmem:[%s152 + $0x2650] sm:$0xff]
                %735 = vst [vmem:[%s153 + $0x9a0] sm:$0xff] %v734
                %v736 = vld [vmem:[%s152 + $0x2658] sm:$0xff]
                %737 = vst [vmem:[%s153 + $0x9a8] sm:$0xff] %v736
                %v738 = vld [vmem:[%s152 + $0x2660] sm:$0xff]
                %739 = vst [vmem:[%s153 + $0x9b0] sm:$0xff] %v738
                %v740 = vld [vmem:[%s152 + $0x2668] sm:$0xff]
                %741 = vst [vmem:[%s153 + $0x9b8] sm:$0xff] %v740
                %v742 = vld [vmem:[%s152 + $0x2670] sm:$0xff]
                %743 = vst [vmem:[%s153 + $0x9c0] sm:$0xff] %v742
                %v744 = vld [vmem:[%s152 + $0x2678] sm:$0xff]
                %745 = vst [vmem:[%s153 + $0x9c8] sm:$0xff] %v744
                %v746 = vld [vmem:[%s152 + $0x2750] sm:$0xff]
                %747 = vst [vmem:[%s153 + $0x9d4] sm:$0xff] %v746
                %v748 = vld [vmem:[%s152 + $0x2758] sm:$0xff]
                %749 = vst [vmem:[%s153 + $0x9dc] sm:$0xff] %v748
                %v750 = vld [vmem:[%s152 + $0x2760] sm:$0xff]
                %751 = vst [vmem:[%s153 + $0x9e4] sm:$0xff] %v750
                %v752 = vld [vmem:[%s152 + $0x2768] sm:$0xff]
                %753 = vst [vmem:[%s153 + $0x9ec] sm:$0xff] %v752
                %v754 = vld [vmem:[%s152 + $0x2770] sm:$0xff]
                %755 = vst [vmem:[%s153 + $0x9f4] sm:$0xff] %v754
                %v756 = vld [vmem:[%s152 + $0x2778] sm:$0xff]
                %757 = vst [vmem:[%s153 + $0x9fc] sm:$0xff] %v756
                %v758 = vld [vmem:[%s152 + $0x2780] sm:$0xff]
                %759 = vst [vmem:[%s153 + $0xa04] sm:$0xff] %v758
                %v760 = vld [vmem:[%s152 + $0x2788] sm:$0xff]
                %761 = vst [vmem:[%s153 + $0xa0c] sm:$0xff] %v760
                %v762 = vld [vmem:[%s152 + $0x2860] sm:$0xff]
                %763 = vst [vmem:[%s153 + $0xa18] sm:$0xff] %v762
                %v764 = vld [vmem:[%s152 + $0x2868] sm:$0xff]
                %765 = vst [vmem:[%s153 + $0xa20] sm:$0xff] %v764
                %v766 = vld [vmem:[%s152 + $0x2870] sm:$0xff]
                %767 = vst [vmem:[%s153 + $0xa28] sm:$0xff] %v766
                %v768 = vld [vmem:[%s152 + $0x2878] sm:$0xff]
                %769 = vst [vmem:[%s153 + $0xa30] sm:$0xff] %v768
                %v770 = vld [vmem:[%s152 + $0x2880] sm:$0xff]
                %771 = vst [vmem:[%s153 + $0xa38] sm:$0xff] %v770
                %v772 = vld [vmem:[%s152 + $0x2888] sm:$0xff]
                %773 = vst [vmem:[%s153 + $0xa40] sm:$0xff] %v772
                %v774 = vld [vmem:[%s152 + $0x2890] sm:$0xff]
                %775 = vst [vmem:[%s153 + $0xa48] sm:$0xff] %v774
                %v776 = vld [vmem:[%s152 + $0x2898] sm:$0xff]
                %777 = vst [vmem:[%s153 + $0xa50] sm:$0xff] %v776
                %v778 = vld [vmem:[%s152 + $0x2970] sm:$0xff]
                %779 = vst [vmem:[%s153 + $0xa5c] sm:$0xff] %v778
                %v780 = vld [vmem:[%s152 + $0x2978] sm:$0xff]
                %781 = vst [vmem:[%s153 + $0xa64] sm:$0xff] %v780
                %v782 = vld [vmem:[%s152 + $0x2980] sm:$0xff]
                %783 = vst [vmem:[%s153 + $0xa6c] sm:$0xff] %v782
                %v784 = vld [vmem:[%s152 + $0x2988] sm:$0xff]
                %785 = vst [vmem:[%s153 + $0xa74] sm:$0xff] %v784
                %v786 = vld [vmem:[%s152 + $0x2990] sm:$0xff]
                %787 = vst [vmem:[%s153 + $0xa7c] sm:$0xff] %v786
                %v788 = vld [vmem:[%s152 + $0x2998] sm:$0xff]
                %789 = vst [vmem:[%s153 + $0xa84] sm:$0xff] %v788
                %v790 = vld [vmem:[%s152 + $0x29a0] sm:$0xff]
                %791 = vst [vmem:[%s153 + $0xa8c] sm:$0xff] %v790
                %v792 = vld [vmem:[%s152 + $0x29a8] sm:$0xff]
                %793 = vst [vmem:[%s153 + $0xa94] sm:$0xff] %v792
                %v794 = vld [vmem:[%s152 + $0x2a80] sm:$0xff]
                %795 = vst [vmem:[%s153 + $0xaa0] sm:$0xff] %v794
                %v796 = vld [vmem:[%s152 + $0x2a88] sm:$0xff]
                %797 = vst [vmem:[%s153 + $0xaa8] sm:$0xff] %v796
                %v798 = vld [vmem:[%s152 + $0x2a90] sm:$0xff]
                %799 = vst [vmem:[%s153 + $0xab0] sm:$0xff] %v798
                %v800 = vld [vmem:[%s152 + $0x2a98] sm:$0xff]
                %801 = vst [vmem:[%s153 + $0xab8] sm:$0xff] %v800
                %v802 = vld [vmem:[%s152 + $0x2aa0] sm:$0xff]
                %803 = vst [vmem:[%s153 + $0xac0] sm:$0xff] %v802
                %v804 = vld [vmem:[%s152 + $0x2aa8] sm:$0xff]
                %805 = vst [vmem:[%s153 + $0xac8] sm:$0xff] %v804
                %v806 = vld [vmem:[%s152 + $0x2ab0] sm:$0xff]
                %807 = vst [vmem:[%s153 + $0xad0] sm:$0xff] %v806
                %v808 = vld [vmem:[%s152 + $0x2ab8] sm:$0xff]
                %809 = vst [vmem:[%s153 + $0xad8] sm:$0xff] %v808
                %v810 = vld [vmem:[%s152 + $0x2b90] sm:$0xff]
                %811 = vst [vmem:[%s153 + $0xae4] sm:$0xff] %v810
                %v812 = vld [vmem:[%s152 + $0x2b98] sm:$0xff]
                %813 = vst [vmem:[%s153 + $0xaec] sm:$0xff] %v812
                %v814 = vld [vmem:[%s152 + $0x2ba0] sm:$0xff]
                %815 = vst [vmem:[%s153 + $0xaf4] sm:$0xff] %v814
                %v816 = vld [vmem:[%s152 + $0x2ba8] sm:$0xff]
                %817 = vst [vmem:[%s153 + $0xafc] sm:$0xff] %v816
                %v818 = vld [vmem:[%s152 + $0x2bb0] sm:$0xff]
                %819 = vst [vmem:[%s153 + $0xb04] sm:$0xff] %v818
                %v820 = vld [vmem:[%s152 + $0x2bb8] sm:$0xff]
                %821 = vst [vmem:[%s153 + $0xb0c] sm:$0xff] %v820
                %v822 = vld [vmem:[%s152 + $0x2bc0] sm:$0xff]
                %823 = vst [vmem:[%s153 + $0xb14] sm:$0xff] %v822
                %v824 = vld [vmem:[%s152 + $0x2bc8] sm:$0xff]
                %825 = vst [vmem:[%s153 + $0xb1c] sm:$0xff] %v824
                %v826 = vld [vmem:[%s152 + $0x2ca0] sm:$0xff]
                %827 = vst [vmem:[%s153 + $0xb28] sm:$0xff] %v826
                %v828 = vld [vmem:[%s152 + $0x2ca8] sm:$0xff]
                %829 = vst [vmem:[%s153 + $0xb30] sm:$0xff] %v828
                %v830 = vld [vmem:[%s152 + $0x2cb0] sm:$0xff]
                %831 = vst [vmem:[%s153 + $0xb38] sm:$0xff] %v830
                %v832 = vld [vmem:[%s152 + $0x2cb8] sm:$0xff]
                %833 = vst [vmem:[%s153 + $0xb40] sm:$0xff] %v832
                %v834 = vld [vmem:[%s152 + $0x2cc0] sm:$0xff]
                %835 = vst [vmem:[%s153 + $0xb48] sm:$0xff] %v834
                %v836 = vld [vmem:[%s152 + $0x2cc8] sm:$0xff]
                %837 = vst [vmem:[%s153 + $0xb50] sm:$0xff] %v836
                %v838 = vld [vmem:[%s152 + $0x2cd0] sm:$0xff]
                %839 = vst [vmem:[%s153 + $0xb58] sm:$0xff] %v838
                %v840 = vld [vmem:[%s152 + $0x2cd8] sm:$0xff]
                %841 = vst [vmem:[%s153 + $0xb60] sm:$0xff] %v840
                %v842 = vld [vmem:[%s152 + $0x2db0] sm:$0xff]
                %843 = vst [vmem:[%s153 + $0xb6c] sm:$0xff] %v842
                %v844 = vld [vmem:[%s152 + $0x2db8] sm:$0xff]
                %845 = vst [vmem:[%s153 + $0xb74] sm:$0xff] %v844
                %v846 = vld [vmem:[%s152 + $0x2dc0] sm:$0xff]
                %847 = vst [vmem:[%s153 + $0xb7c] sm:$0xff] %v846
                %v848 = vld [vmem:[%s152 + $0x2dc8] sm:$0xff]
                %849 = vst [vmem:[%s153 + $0xb84] sm:$0xff] %v848
                %v850 = vld [vmem:[%s152 + $0x2dd0] sm:$0xff]
                %851 = vst [vmem:[%s153 + $0xb8c] sm:$0xff] %v850
                %v852 = vld [vmem:[%s152 + $0x2dd8] sm:$0xff]
                %853 = vst [vmem:[%s153 + $0xb94] sm:$0xff] %v852
                %v854 = vld [vmem:[%s152 + $0x2de0] sm:$0xff]
                %855 = vst [vmem:[%s153 + $0xb9c] sm:$0xff] %v854
                %v856 = vld [vmem:[%s152 + $0x2de8] sm:$0xff]
                %857 = vst [vmem:[%s153 + $0xba4] sm:$0xff] %v856
                %v858 = vld [vmem:[%s152 + $0x2ec0] sm:$0xff]
                %859 = vst [vmem:[%s153 + $0xbb0] sm:$0xff] %v858
                %v860 = vld [vmem:[%s152 + $0x2ec8] sm:$0xff]
                %861 = vst [vmem:[%s153 + $0xbb8] sm:$0xff] %v860
                %v862 = vld [vmem:[%s152 + $0x2ed0] sm:$0xff]
                %863 = vst [vmem:[%s153 + $0xbc0] sm:$0xff] %v862
                %v864 = vld [vmem:[%s152 + $0x2ed8] sm:$0xff]
                %865 = vst [vmem:[%s153 + $0xbc8] sm:$0xff] %v864
                %v866 = vld [vmem:[%s152 + $0x2ee0] sm:$0xff]
                %867 = vst [vmem:[%s153 + $0xbd0] sm:$0xff] %v866
                %v868 = vld [vmem:[%s152 + $0x2ee8] sm:$0xff]
                %869 = vst [vmem:[%s153 + $0xbd8] sm:$0xff] %v868
                %v870 = vld [vmem:[%s152 + $0x2ef0] sm:$0xff]
                %871 = vst [vmem:[%s153 + $0xbe0] sm:$0xff] %v870
                %v872 = vld [vmem:[%s152 + $0x2ef8] sm:$0xff]
                %873 = vst [vmem:[%s153 + $0xbe8] sm:$0xff] %v872
                %v874 = vld [vmem:[%s152 + $0x2fd0] sm:$0xff]
                %875 = vst [vmem:[%s153 + $0xbf4] sm:$0xff] %v874
                %v876 = vld [vmem:[%s152 + $0x2fd8] sm:$0xff]
                %877 = vst [vmem:[%s153 + $0xbfc] sm:$0xff] %v876
                %v878 = vld [vmem:[%s152 + $0x2fe0] sm:$0xff]
                %879 = vst [vmem:[%s153 + $0xc04] sm:$0xff] %v878
                %v880 = vld [vmem:[%s152 + $0x2fe8] sm:$0xff]
                %881 = vst [vmem:[%s153 + $0xc0c] sm:$0xff] %v880
                %v882 = vld [vmem:[%s152 + $0x2ff0] sm:$0xff]
                %883 = vst [vmem:[%s153 + $0xc14] sm:$0xff] %v882
                %v884 = vld [vmem:[%s152 + $0x2ff8] sm:$0xff]
                %885 = vst [vmem:[%s153 + $0xc1c] sm:$0xff] %v884
                %v886 = vld [vmem:[%s152 + $0x3000] sm:$0xff]
                %887 = vst [vmem:[%s153 + $0xc24] sm:$0xff] %v886
                %v888 = vld [vmem:[%s152 + $0x3008] sm:$0xff]
                %889 = vst [vmem:[%s153 + $0xc2c] sm:$0xff] %v888
                %v890 = vld [vmem:[%s152 + $0x30e0] sm:$0xff]
                %891 = vst [vmem:[%s153 + $0xc38] sm:$0xff] %v890
                %v892 = vld [vmem:[%s152 + $0x30e8] sm:$0xff]
                %893 = vst [vmem:[%s153 + $0xc40] sm:$0xff] %v892
                %v894 = vld [vmem:[%s152 + $0x30f0] sm:$0xff]
                %895 = vst [vmem:[%s153 + $0xc48] sm:$0xff] %v894
                %v896 = vld [vmem:[%s152 + $0x30f8] sm:$0xff]
                %897 = vst [vmem:[%s153 + $0xc50] sm:$0xff] %v896
                %v898 = vld [vmem:[%s152 + $0x3100] sm:$0xff]
                %899 = vst [vmem:[%s153 + $0xc58] sm:$0xff] %v898
                %v900 = vld [vmem:[%s152 + $0x3108] sm:$0xff]
                %901 = vst [vmem:[%s153 + $0xc60] sm:$0xff] %v900
                %v902 = vld [vmem:[%s152 + $0x3110] sm:$0xff]
                %903 = vst [vmem:[%s153 + $0xc68] sm:$0xff] %v902
                %v904 = vld [vmem:[%s152 + $0x3118] sm:$0xff]
                %905 = vst [vmem:[%s153 + $0xc70] sm:$0xff] %v904
                %v906 = vld [vmem:[%s152 + $0x31f0] sm:$0xff]
                %907 = vst [vmem:[%s153 + $0xc7c] sm:$0xff] %v906
                %v908 = vld [vmem:[%s152 + $0x31f8] sm:$0xff]
                %909 = vst [vmem:[%s153 + $0xc84] sm:$0xff] %v908
                %v910 = vld [vmem:[%s152 + $0x3200] sm:$0xff]
                %911 = vst [vmem:[%s153 + $0xc8c] sm:$0xff] %v910
                %v912 = vld [vmem:[%s152 + $0x3208] sm:$0xff]
                %913 = vst [vmem:[%s153 + $0xc94] sm:$0xff] %v912
                %v914 = vld [vmem:[%s152 + $0x3210] sm:$0xff]
                %915 = vst [vmem:[%s153 + $0xc9c] sm:$0xff] %v914
                %v916 = vld [vmem:[%s152 + $0x3218] sm:$0xff]
                %917 = vst [vmem:[%s153 + $0xca4] sm:$0xff] %v916
                %v918 = vld [vmem:[%s152 + $0x3220] sm:$0xff]
                %919 = vst [vmem:[%s153 + $0xcac] sm:$0xff] %v918
                %v920 = vld [vmem:[%s152 + $0x3228] sm:$0xff]
                %921 = vst [vmem:[%s153 + $0xcb4] sm:$0xff] %v920
                %v922 = vld [vmem:[%s152 + $0x3300] sm:$0xff]
                %923 = vst [vmem:[%s153 + $0xcc0] sm:$0xff] %v922
                %v924 = vld [vmem:[%s152 + $0x3308] sm:$0xff]
                %925 = vst [vmem:[%s153 + $0xcc8] sm:$0xff] %v924
                %v926 = vld [vmem:[%s152 + $0x3310] sm:$0xff]
                %927 = vst [vmem:[%s153 + $0xcd0] sm:$0xff] %v926
                %v928 = vld [vmem:[%s152 + $0x3318] sm:$0xff]
                %929 = vst [vmem:[%s153 + $0xcd8] sm:$0xff] %v928
                %v930 = vld [vmem:[%s152 + $0x3320] sm:$0xff]
                %931 = vst [vmem:[%s153 + $0xce0] sm:$0xff] %v930
                %v932 = vld [vmem:[%s152 + $0x3328] sm:$0xff]
                %933 = vst [vmem:[%s153 + $0xce8] sm:$0xff] %v932
                %v934 = vld [vmem:[%s152 + $0x3330] sm:$0xff]
                %935 = vst [vmem:[%s153 + $0xcf0] sm:$0xff] %v934
                %v936 = vld [vmem:[%s152 + $0x3338] sm:$0xff]
                %937 = vst [vmem:[%s153 + $0xcf8] sm:$0xff] %v936
                %v938 = vld [vmem:[%s152 + $0x3410] sm:$0xff]
                %939 = vst [vmem:[%s153 + $0xd04] sm:$0xff] %v938
                %v940 = vld [vmem:[%s152 + $0x3418] sm:$0xff]
                %941 = vst [vmem:[%s153 + $0xd0c] sm:$0xff] %v940
                %v942 = vld [vmem:[%s152 + $0x3420] sm:$0xff]
                %943 = vst [vmem:[%s153 + $0xd14] sm:$0xff] %v942
                %v944 = vld [vmem:[%s152 + $0x3428] sm:$0xff]
                %945 = vst [vmem:[%s153 + $0xd1c] sm:$0xff] %v944
                %v946 = vld [vmem:[%s152 + $0x3430] sm:$0xff]
                %947 = vst [vmem:[%s153 + $0xd24] sm:$0xff] %v946
                %v948 = vld [vmem:[%s152 + $0x3438] sm:$0xff]
                %949 = vst [vmem:[%s153 + $0xd2c] sm:$0xff] %v948
                %v950 = vld [vmem:[%s152 + $0x3440] sm:$0xff]
                %951 = vst [vmem:[%s153 + $0xd34] sm:$0xff] %v950
                %v952 = vld [vmem:[%s152 + $0x3448] sm:$0xff]
                %953 = vst [vmem:[%s153 + $0xd3c] sm:$0xff] %v952
                %v954 = vld [vmem:[%s152 + $0x3520] sm:$0xff]
                %955 = vst [vmem:[%s153 + $0xd48] sm:$0xff] %v954
                %v956 = vld [vmem:[%s152 + $0x3528] sm:$0xff]
                %957 = vst [vmem:[%s153 + $0xd50] sm:$0xff] %v956
                %v958 = vld [vmem:[%s152 + $0x3530] sm:$0xff]
                %959 = vst [vmem:[%s153 + $0xd58] sm:$0xff] %v958
                %v960 = vld [vmem:[%s152 + $0x3538] sm:$0xff]
                %961 = vst [vmem:[%s153 + $0xd60] sm:$0xff] %v960
                %v962 = vld [vmem:[%s152 + $0x3540] sm:$0xff]
                %963 = vst [vmem:[%s153 + $0xd68] sm:$0xff] %v962
                %v964 = vld [vmem:[%s152 + $0x3548] sm:$0xff]
                %965 = vst [vmem:[%s153 + $0xd70] sm:$0xff] %v964
                %v966 = vld [vmem:[%s152 + $0x3550] sm:$0xff]
                %967 = vst [vmem:[%s153 + $0xd78] sm:$0xff] %v966
                %v968 = vld [vmem:[%s152 + $0x3558] sm:$0xff]
                %969 = vst [vmem:[%s153 + $0xd80] sm:$0xff] %v968
                %v970 = vld [vmem:[%s152 + $0x3630] sm:$0xff]
                %971 = vst [vmem:[%s153 + $0xd8c] sm:$0xff] %v970
                %v972 = vld [vmem:[%s152 + $0x3638] sm:$0xff]
                %973 = vst [vmem:[%s153 + $0xd94] sm:$0xff] %v972
                %v974 = vld [vmem:[%s152 + $0x3640] sm:$0xff]
                %975 = vst [vmem:[%s153 + $0xd9c] sm:$0xff] %v974
                %v976 = vld [vmem:[%s152 + $0x3648] sm:$0xff]
                %977 = vst [vmem:[%s153 + $0xda4] sm:$0xff] %v976
                %v978 = vld [vmem:[%s152 + $0x3650] sm:$0xff]
                %979 = vst [vmem:[%s153 + $0xdac] sm:$0xff] %v978
                %v980 = vld [vmem:[%s152 + $0x3658] sm:$0xff]
                %981 = vst [vmem:[%s153 + $0xdb4] sm:$0xff] %v980
                %v982 = vld [vmem:[%s152 + $0x3660] sm:$0xff]
                %983 = vst [vmem:[%s153 + $0xdbc] sm:$0xff] %v982
                %v984 = vld [vmem:[%s152 + $0x3668] sm:$0xff]
                %985 = vst [vmem:[%s153 + $0xdc4] sm:$0xff] %v984
                %v986 = vld [vmem:[%s152 + $0x3740] sm:$0xff]
                %987 = vst [vmem:[%s153 + $0xdd0] sm:$0xff] %v986
                %v988 = vld [vmem:[%s152 + $0x3748] sm:$0xff]
                %989 = vst [vmem:[%s153 + $0xdd8] sm:$0xff] %v988
                %v990 = vld [vmem:[%s152 + $0x3750] sm:$0xff]
                %991 = vst [vmem:[%s153 + $0xde0] sm:$0xff] %v990
                %v992 = vld [vmem:[%s152 + $0x3758] sm:$0xff]
                %993 = vst [vmem:[%s153 + $0xde8] sm:$0xff] %v992
                %v994 = vld [vmem:[%s152 + $0x3760] sm:$0xff]
                %995 = vst [vmem:[%s153 + $0xdf0] sm:$0xff] %v994
                %v996 = vld [vmem:[%s152 + $0x3768] sm:$0xff]
                %997 = vst [vmem:[%s153 + $0xdf8] sm:$0xff] %v996
                %v998 = vld [vmem:[%s152 + $0x3770] sm:$0xff]
                %999 = vst [vmem:[%s153 + $0xe00] sm:$0xff] %v998
                %v1000 = vld [vmem:[%s152 + $0x3778] sm:$0xff]
                %1001 = vst [vmem:[%s153 + $0xe08] sm:$0xff] %v1000
                %v1002 = vld [vmem:[%s152 + $0x3850] sm:$0xff]
                %1003 = vst [vmem:[%s153 + $0xe14] sm:$0xff] %v1002
                %v1004 = vld [vmem:[%s152 + $0x3858] sm:$0xff]
                %1005 = vst [vmem:[%s153 + $0xe1c] sm:$0xff] %v1004
                %v1006 = vld [vmem:[%s152 + $0x3860] sm:$0xff]
                %1007 = vst [vmem:[%s153 + $0xe24] sm:$0xff] %v1006
                %v1008 = vld [vmem:[%s152 + $0x3868] sm:$0xff]
                %1009 = vst [vmem:[%s153 + $0xe2c] sm:$0xff] %v1008
                %v1010 = vld [vmem:[%s152 + $0x3870] sm:$0xff]
                %1011 = vst [vmem:[%s153 + $0xe34] sm:$0xff] %v1010
                %v1012 = vld [vmem:[%s152 + $0x3878] sm:$0xff]
                %1013 = vst [vmem:[%s153 + $0xe3c] sm:$0xff] %v1012
                %v1014 = vld [vmem:[%s152 + $0x3880] sm:$0xff]
                %1015 = vst [vmem:[%s153 + $0xe44] sm:$0xff] %v1014
                %v1016 = vld [vmem:[%s152 + $0x3888] sm:$0xff]
                %1017 = vst [vmem:[%s153 + $0xe4c] sm:$0xff] %v1016
                %v1018 = vld [vmem:[%s152 + $0x3960] sm:$0xff]
                %1019 = vst [vmem:[%s153 + $0xe58] sm:$0xff] %v1018
                %v1020 = vld [vmem:[%s152 + $0x3968] sm:$0xff]
                %1021 = vst [vmem:[%s153 + $0xe60] sm:$0xff] %v1020
                %v1022 = vld [vmem:[%s152 + $0x3970] sm:$0xff]
                %1023 = vst [vmem:[%s153 + $0xe68] sm:$0xff] %v1022
                %v1024 = vld [vmem:[%s152 + $0x3978] sm:$0xff]
                %1025 = vst [vmem:[%s153 + $0xe70] sm:$0xff] %v1024
                %v1026 = vld [vmem:[%s152 + $0x3980] sm:$0xff]
                %1027 = vst [vmem:[%s153 + $0xe78] sm:$0xff] %v1026
                %v1028 = vld [vmem:[%s152 + $0x3988] sm:$0xff]
                %1029 = vst [vmem:[%s153 + $0xe80] sm:$0xff] %v1028
                %v1030 = vld [vmem:[%s152 + $0x3990] sm:$0xff]
                %1031 = vst [vmem:[%s153 + $0xe88] sm:$0xff] %v1030
                %v1032 = vld [vmem:[%s152 + $0x3998] sm:$0xff]
                %1033 = vst [vmem:[%s153 + $0xe90] sm:$0xff] %v1032
                %v1034 = vld [vmem:[%s152 + $0x3a70] sm:$0xff]
                %1035 = vst [vmem:[%s153 + $0xe9c] sm:$0xff] %v1034
                %v1036 = vld [vmem:[%s152 + $0x3a78] sm:$0xff]
                %1037 = vst [vmem:[%s153 + $0xea4] sm:$0xff] %v1036
                %v1038 = vld [vmem:[%s152 + $0x3a80] sm:$0xff]
                %1039 = vst [vmem:[%s153 + $0xeac] sm:$0xff] %v1038
                %v1040 = vld [vmem:[%s152 + $0x3a88] sm:$0xff]
                %1041 = vst [vmem:[%s153 + $0xeb4] sm:$0xff] %v1040
                %v1042 = vld [vmem:[%s152 + $0x3a90] sm:$0xff]
                %1043 = vst [vmem:[%s153 + $0xebc] sm:$0xff] %v1042
                %v1044 = vld [vmem:[%s152 + $0x3a98] sm:$0xff]
                %1045 = vst [vmem:[%s153 + $0xec4] sm:$0xff] %v1044
                %v1046 = vld [vmem:[%s152 + $0x3aa0] sm:$0xff]
                %1047 = vst [vmem:[%s153 + $0xecc] sm:$0xff] %v1046
                %v1048 = vld [vmem:[%s152 + $0x3aa8] sm:$0xff]
                %1049 = vst [vmem:[%s153 + $0xed4] sm:$0xff] %v1048
              $region37: #{metro_body_forward.3} parent=31 // loop_footer
                %s151 = sadd.s32 1, %s147
              $region38: #{metro_body_forward.3} parent=31 // loop_footer_branch
                %146 = sbr.rel target = $region34
              $region39: #{metro_body_forward.3} parent=31 // loop_exit
                _
              %s1051 = ssub.s32 16, 1
              loop: start=0, step=1, limit=1
              $region40: #{metro_body_forward.3} parent=31 // loop_pre_header
                _
              $region41: #{metro_body_forward.3} parent=31 // loop_header
                %s1053 = sphi 0, %s1057
                %p1054 = scmp.ge.s32.totalorder %s1053, 1
                %s1058 = sphi %s144, %s144
                %s1059 = sphi %s145, %s145
              $region42: #{metro_body_forward.3} parent=31 // loop_header_branch
                %1056 = sbr.rel (%p1054) target = $region46
              $region43: #{metro_body_forward.3} parent=31 // loop_body
                %v1060 = vld [vmem:[%s1058] sm:%s1051]
                %1061 = vst [vmem:[%s1059] sm:%s1051] %v1060
                %v1062 = vld [vmem:[%s1058 + $0x110] sm:%s1051]
                %1063 = vst [vmem:[%s1059 + $0x44] sm:%s1051] %v1062
                %v1064 = vld [vmem:[%s1058 + $0x220] sm:%s1051]
                %1065 = vst [vmem:[%s1059 + $0x88] sm:%s1051] %v1064
                %v1066 = vld [vmem:[%s1058 + $0x330] sm:%s1051]
                %1067 = vst [vmem:[%s1059 + $0xcc] sm:%s1051] %v1066
                %v1068 = vld [vmem:[%s1058 + $0x440] sm:%s1051]
                %1069 = vst [vmem:[%s1059 + $0x110] sm:%s1051] %v1068
                %v1070 = vld [vmem:[%s1058 + $0x550] sm:%s1051]
                %1071 = vst [vmem:[%s1059 + $0x154] sm:%s1051] %v1070
                %v1072 = vld [vmem:[%s1058 + $0x660] sm:%s1051]
                %1073 = vst [vmem:[%s1059 + $0x198] sm:%s1051] %v1072
                %v1074 = vld [vmem:[%s1058 + $0x770] sm:%s1051]
                %1075 = vst [vmem:[%s1059 + $0x1dc] sm:%s1051] %v1074
                %v1076 = vld [vmem:[%s1058 + $0x880] sm:%s1051]
                %1077 = vst [vmem:[%s1059 + $0x220] sm:%s1051] %v1076
                %v1078 = vld [vmem:[%s1058 + $0x990] sm:%s1051]
                %1079 = vst [vmem:[%s1059 + $0x264] sm:%s1051] %v1078
                %v1080 = vld [vmem:[%s1058 + $0xaa0] sm:%s1051]
                %1081 = vst [vmem:[%s1059 + $0x2a8] sm:%s1051] %v1080
                %v1082 = vld [vmem:[%s1058 + $0xbb0] sm:%s1051]
                %1083 = vst [vmem:[%s1059 + $0x2ec] sm:%s1051] %v1082
                %v1084 = vld [vmem:[%s1058 + $0xcc0] sm:%s1051]
                %1085 = vst [vmem:[%s1059 + $0x330] sm:%s1051] %v1084
                %v1086 = vld [vmem:[%s1058 + $0xdd0] sm:%s1051]
                %1087 = vst [vmem:[%s1059 + $0x374] sm:%s1051] %v1086
                %v1088 = vld [vmem:[%s1058 + $0xee0] sm:%s1051]
                %1089 = vst [vmem:[%s1059 + $0x3b8] sm:%s1051] %v1088
                %v1090 = vld [vmem:[%s1058 + $0xff0] sm:%s1051]
                %1091 = vst [vmem:[%s1059 + $0x3fc] sm:%s1051] %v1090
                %v1092 = vld [vmem:[%s1058 + $0x1100] sm:%s1051]
                %1093 = vst [vmem:[%s1059 + $0x440] sm:%s1051] %v1092
                %v1094 = vld [vmem:[%s1058 + $0x1210] sm:%s1051]
                %1095 = vst [vmem:[%s1059 + $0x484] sm:%s1051] %v1094
                %v1096 = vld [vmem:[%s1058 + $0x1320] sm:%s1051]
                %1097 = vst [vmem:[%s1059 + $0x4c8] sm:%s1051] %v1096
                %v1098 = vld [vmem:[%s1058 + $0x1430] sm:%s1051]
                %1099 = vst [vmem:[%s1059 + $0x50c] sm:%s1051] %v1098
                %v1100 = vld [vmem:[%s1058 + $0x1540] sm:%s1051]
                %1101 = vst [vmem:[%s1059 + $0x550] sm:%s1051] %v1100
                %v1102 = vld [vmem:[%s1058 + $0x1650] sm:%s1051]
                %1103 = vst [vmem:[%s1059 + $0x594] sm:%s1051] %v1102
                %v1104 = vld [vmem:[%s1058 + $0x1760] sm:%s1051]
                %1105 = vst [vmem:[%s1059 + $0x5d8] sm:%s1051] %v1104
                %v1106 = vld [vmem:[%s1058 + $0x1870] sm:%s1051]
                %1107 = vst [vmem:[%s1059 + $0x61c] sm:%s1051] %v1106
                %v1108 = vld [vmem:[%s1058 + $0x1980] sm:%s1051]
                %1109 = vst [vmem:[%s1059 + $0x660] sm:%s1051] %v1108
                %v1110 = vld [vmem:[%s1058 + $0x1a90] sm:%s1051]
                %1111 = vst [vmem:[%s1059 + $0x6a4] sm:%s1051] %v1110
                %v1112 = vld [vmem:[%s1058 + $0x1ba0] sm:%s1051]
                %1113 = vst [vmem:[%s1059 + $0x6e8] sm:%s1051] %v1112
                %v1114 = vld [vmem:[%s1058 + $0x1cb0] sm:%s1051]
                %1115 = vst [vmem:[%s1059 + $0x72c] sm:%s1051] %v1114
                %v1116 = vld [vmem:[%s1058 + $0x1dc0] sm:%s1051]
                %1117 = vst [vmem:[%s1059 + $0x770] sm:%s1051] %v1116
                %v1118 = vld [vmem:[%s1058 + $0x1ed0] sm:%s1051]
                %1119 = vst [vmem:[%s1059 + $0x7b4] sm:%s1051] %v1118
                %v1120 = vld [vmem:[%s1058 + $0x1fe0] sm:%s1051]
                %1121 = vst [vmem:[%s1059 + $0x7f8] sm:%s1051] %v1120
                %v1122 = vld [vmem:[%s1058 + $0x20f0] sm:%s1051]
                %1123 = vst [vmem:[%s1059 + $0x83c] sm:%s1051] %v1122
                %v1124 = vld [vmem:[%s1058 + $0x2200] sm:%s1051]
                %1125 = vst [vmem:[%s1059 + $0x880] sm:%s1051] %v1124
                %v1126 = vld [vmem:[%s1058 + $0x2310] sm:%s1051]
                %1127 = vst [vmem:[%s1059 + $0x8c4] sm:%s1051] %v1126
                %v1128 = vld [vmem:[%s1058 + $0x2420] sm:%s1051]
                %1129 = vst [vmem:[%s1059 + $0x908] sm:%s1051] %v1128
                %v1130 = vld [vmem:[%s1058 + $0x2530] sm:%s1051]
                %1131 = vst [vmem:[%s1059 + $0x94c] sm:%s1051] %v1130
                %v1132 = vld [vmem:[%s1058 + $0x2640] sm:%s1051]
                %1133 = vst [vmem:[%s1059 + $0x990] sm:%s1051] %v1132
                %v1134 = vld [vmem:[%s1058 + $0x2750] sm:%s1051]
                %1135 = vst [vmem:[%s1059 + $0x9d4] sm:%s1051] %v1134
                %v1136 = vld [vmem:[%s1058 + $0x2860] sm:%s1051]
                %1137 = vst [vmem:[%s1059 + $0xa18] sm:%s1051] %v1136
                %v1138 = vld [vmem:[%s1058 + $0x2970] sm:%s1051]
                %1139 = vst [vmem:[%s1059 + $0xa5c] sm:%s1051] %v1138
                %v1140 = vld [vmem:[%s1058 + $0x2a80] sm:%s1051]
                %1141 = vst [vmem:[%s1059 + $0xaa0] sm:%s1051] %v1140
                %v1142 = vld [vmem:[%s1058 + $0x2b90] sm:%s1051]
                %1143 = vst [vmem:[%s1059 + $0xae4] sm:%s1051] %v1142
                %v1144 = vld [vmem:[%s1058 + $0x2ca0] sm:%s1051]
                %1145 = vst [vmem:[%s1059 + $0xb28] sm:%s1051] %v1144
                %v1146 = vld [vmem:[%s1058 + $0x2db0] sm:%s1051]
                %1147 = vst [vmem:[%s1059 + $0xb6c] sm:%s1051] %v1146
                %v1148 = vld [vmem:[%s1058 + $0x2ec0] sm:%s1051]
                %1149 = vst [vmem:[%s1059 + $0xbb0] sm:%s1051] %v1148
                %v1150 = vld [vmem:[%s1058 + $0x2fd0] sm:%s1051]
                %1151 = vst [vmem:[%s1059 + $0xbf4] sm:%s1051] %v1150
                %v1152 = vld [vmem:[%s1058 + $0x30e0] sm:%s1051]
                %1153 = vst [vmem:[%s1059 + $0xc38] sm:%s1051] %v1152
                %v1154 = vld [vmem:[%s1058 + $0x31f0] sm:%s1051]
                %1155 = vst [vmem:[%s1059 + $0xc7c] sm:%s1051] %v1154
                %v1156 = vld [vmem:[%s1058 + $0x3300] sm:%s1051]
                %1157 = vst [vmem:[%s1059 + $0xcc0] sm:%s1051] %v1156
                %v1158 = vld [vmem:[%s1058 + $0x3410] sm:%s1051]
                %1159 = vst [vmem:[%s1059 + $0xd04] sm:%s1051] %v1158
                %v1160 = vld [vmem:[%s1058 + $0x3520] sm:%s1051]
                %1161 = vst [vmem:[%s1059 + $0xd48] sm:%s1051] %v1160
                %v1162 = vld [vmem:[%s1058 + $0x3630] sm:%s1051]
                %1163 = vst [vmem:[%s1059 + $0xd8c] sm:%s1051] %v1162
                %v1164 = vld [vmem:[%s1058 + $0x3740] sm:%s1051]
                %1165 = vst [vmem:[%s1059 + $0xdd0] sm:%s1051] %v1164
                %v1166 = vld [vmem:[%s1058 + $0x3850] sm:%s1051]
                %1167 = vst [vmem:[%s1059 + $0xe14] sm:%s1051] %v1166
                %v1168 = vld [vmem:[%s1058 + $0x3960] sm:%s1051]
                %1169 = vst [vmem:[%s1059 + $0xe58] sm:%s1051] %v1168
                %v1170 = vld [vmem:[%s1058 + $0x3a70] sm:%s1051]
                %1171 = vst [vmem:[%s1059 + $0xe9c] sm:%s1051] %v1170
              $region44: #{metro_body_forward.3} parent=31 // loop_footer
                %s1057 = sadd.s32 1, %s1053
              $region45: #{metro_body_forward.3} parent=31 // loop_footer_branch
                %1052 = sbr.rel target = $region41
              $region46: #{metro_body_forward.3} parent=31 // loop_exit
                _
            $region32: #{metro_body_forward.3} parent=27 // pred_fallthru
              _
          $region28: #{metro_body_forward.3} parent=23 // pred_fallthru
            _
          %1172 = vnop
        $region24: #{metro_body_forward.3} parent=19 // pred_fallthru
          _
        // Predicated region
        $region47: #{metro_body_forward.3} parent=19 // pred_check
          %p1173 = pneg %p76
        $region48: #{metro_body_forward.3} parent=19 // pred_check_branch
          %1175 = sbr.rel (%p1173) target = $region50
        $region49: #{metro_body_forward.3} parent=19 // pred_region
          %s1176 = smul.u32 17, %s9
          %p1177 = scmp.lt.s32.totalorder %s1176, 67
          %s1178 = scalar_select %p1177, %s1176, 67
          %s1179 = scalar_lea.vmem %s2, %s1178
          %s1180 = smul.u32 17, %s9
        $region50: #{metro_body_forward.3} parent=19 // pred_fallthru
          _
      $region20: #{metro_body_forward.3} parent=5 // pred_fallthru
        _
      %p1181 = scmp.le.s32.totalorder 1, %s9
      %p1182 = scmp.lt.s32.totalorder %s9, 5
      %p1183 = pnand %p1181, %p1182
      %p1184 = pneg %p1183
      // Predicated region
      $region51: #{metro_body_forward.3} parent=5 // pred_check
        _
      $region52: #{metro_body_forward.3} parent=5 // pred_check_branch
        %1186 = sbr.rel (%p1183) target = $region54
      $region53: #{metro_body_forward.3} parent=5 // pred_region
        %s1187 = ssub.s32 %s9, 1
        %s1188 = sand.u32 %s43, 1
        %s1189 = sand.u32 %s43, 1
        %s1190 = smul.addr %s1189, 3808
        %s1191 = scalar_lea.vmem [#allocation2], %s1190
        // Predicated region
        $region55: #{metro_body_forward.3} parent=53 // pred_check
          %p1192 = pneg %p56
        $region56: #{metro_body_forward.3} parent=53 // pred_check_branch
          %1194 = sbr.rel (%p1192) target = $region58
        $region57: #{metro_body_forward.3} parent=53 // pred_region
          _
        $region58: #{metro_body_forward.3} parent=53 // pred_fallthru
          _
        %p1195 = pneg %p30
        %p1196 = pneg %p27
        %s1197 = sand.u32 %s43, 1
        %s1198 = sand.u32 %s43, 1
        %s1199 = smul.addr %s1198, 3808
        %s1200 = scalar_lea.vmem [#allocation2], %s1199
        %p1201 = pneg %p56
        %p1202 = pneg %p53
        %s1203 = smul.u32 17, %s14
        %p1204 = scmp.lt.s32.totalorder %s1203, 67
        %s1205 = scalar_select %p1204, %s1203, 67
        %s1206 = scalar_lea.vmem %s2, %s1205
        %p1207 = pneg %p82
        %p1208 = pneg %p79
        %p1209 = pneg %p108
        %p1210 = pneg %p105
        %s1211 = smul.u32 17, %s14
        %p1212 = scmp.lt.s32.totalorder %s1211, 67
        %s1213 = scalar_select %p1212, %s1211, 67
        %s1214 = smul.addr %s1213, 8
        %s1215 = scalar_lea.vmem %s3, %s1214
        %s1216 = smul.u32 17, %s14
        %s1217 = smul.u32 17, %s14
        %p1218 = scmp.lt.s32.totalorder %s1217, 67
        %s1219 = scalar_select %p1218, %s1217, 67
        %s1220 = scalar_lea.vmem %s2, %s1219
        %s1221 = smul.u32 17, %s14
        %s1222 = smul.u32 17, %s14
        %p1223 = scmp.lt.s32.totalorder %s1222, 67
        %s1224 = scalar_select %p1223, %s1222, 67
        %s1225 = smul.addr %s1224, 8
        %s1226 = scalar_lea.vmem %s3, %s1225
        %s1227 = smul.u32 17, %s14
        %v1229 = vld [vmem:[%s0] sm:$0xff]
        %v1230 = vld [vmem:[%s0 + $0x8] sm:$0xff]
        %v1231 = vld [vmem:[%s1191] sm:$0xff]
        %v1232 = vld [vmem:[%s1191 + $0x8] sm:$0xff]
        %v1233 = vld [vmem:[%s1191 + $0x10] sm:$0xff]
        %v1234 = vld [vmem:[%s1191 + $0x18] sm:$0xff]
        %v1235 = vld [vmem:[%s1191 + $0x20] sm:$0xff]
        %v1236 = vld [vmem:[%s1191 + $0x28] sm:$0xff]
        %v1237 = vld [vmem:[%s1191 + $0x30] sm:$0xff]
        %v1238 = vld [vmem:[%s1191 + $0x38] sm:$0xff]
        %v1239 = vld [vmem:[%s1191 + $0x40] sm:$0xf]
        %v1240 = vld [vmem:[%s1191 + $0x44] sm:$0xff]
        %v1241 = vld [vmem:[%s1191 + $0x4c] sm:$0xff]
        %v1242 = vld [vmem:[%s1191 + $0x54] sm:$0xff]
        %v1243 = vld [vmem:[%s1191 + $0x5c] sm:$0xff]
        %v1244 = vld [vmem:[%s1191 + $0x64] sm:$0xff]
        %v1245 = vld [vmem:[%s1191 + $0x6c] sm:$0xff]
        %v1246 = vld [vmem:[%s1191 + $0x74] sm:$0xff]
        %v1247 = vld [vmem:[%s1191 + $0x7c] sm:$0xff]
        %v1248 = vld [vmem:[%s1191 + $0x84] sm:$0xf]
        %v1249 = vld [vmem:[%s1191 + $0x88] sm:$0xff]
        %v1250 = vld [vmem:[%s1191 + $0x90] sm:$0xff]
        %v1251 = vld [vmem:[%s1191 + $0x98] sm:$0xff]
        %v1252 = vld [vmem:[%s1191 + $0xa0] sm:$0xff]
        %v1253 = vld [vmem:[%s1191 + $0xa8] sm:$0xff]
        %v1254 = vld [vmem:[%s1191 + $0xb0] sm:$0xff]
        %v1255 = vld [vmem:[%s1191 + $0xb8] sm:$0xff]
        %v1256 = vld [vmem:[%s1191 + $0xc0] sm:$0xff]
        %v1257 = vld [vmem:[%s1191 + $0xc8] sm:$0xf]
        %v1258 = vld [vmem:[%s1191 + $0xcc] sm:$0xff]
        %v1259 = vld [vmem:[%s1191 + $0xd4] sm:$0xff]
        %v1260 = vld [vmem:[%s1191 + $0xdc] sm:$0xff]
        %v1261 = vld [vmem:[%s1191 + $0xe4] sm:$0xff]
        %v1262 = vld [vmem:[%s1191 + $0xec] sm:$0xff]
        %v1263 = vld [vmem:[%s1191 + $0xf4] sm:$0xff]
        %v1264 = vld [vmem:[%s1191 + $0xfc] sm:$0xff]
        %v1265 = vld [vmem:[%s1191 + $0x104] sm:$0xff]
        %v1266 = vld [vmem:[%s1191 + $0x10c] sm:$0xf]
        %v1267 = vld [vmem:[%s1191 + $0x110] sm:$0xff]
        %v1268 = vld [vmem:[%s1191 + $0x118] sm:$0xff]
        %v1269 = vld [vmem:[%s1191 + $0x120] sm:$0xff]
        %v1270 = vld [vmem:[%s1191 + $0x128] sm:$0xff]
        %v1271 = vld [vmem:[%s1191 + $0x130] sm:$0xff]
        %v1272 = vld [vmem:[%s1191 + $0x138] sm:$0xff]
        %v1273 = vld [vmem:[%s1191 + $0x140] sm:$0xff]
        %v1274 = vld [vmem:[%s1191 + $0x148] sm:$0xff]
        %v1275 = vld [vmem:[%s1191 + $0x150] sm:$0xf]
        %v1276 = vld [vmem:[%s1191 + $0x154] sm:$0xff]
        %v1277 = vld [vmem:[%s1191 + $0x15c] sm:$0xff]
        %v1278 = vld [vmem:[%s1191 + $0x164] sm:$0xff]
        %v1279 = vld [vmem:[%s1191 + $0x16c] sm:$0xff]
        %v1280 = vld [vmem:[%s1191 + $0x174] sm:$0xff]
        %v1281 = vld [vmem:[%s1191 + $0x17c] sm:$0xff]
        %v1282 = vld [vmem:[%s1191 + $0x184] sm:$0xff]
        %v1283 = vld [vmem:[%s1191 + $0x18c] sm:$0xff]
        %v1284 = vld [vmem:[%s1191 + $0x194] sm:$0xf]
        %v1285 = vld [vmem:[%s1191 + $0x198] sm:$0xff]
        %v1286 = vld [vmem:[%s1191 + $0x1a0] sm:$0xff]
        %v1287 = vld [vmem:[%s1191 + $0x1a8] sm:$0xff]
        %v1288 = vld [vmem:[%s1191 + $0x1b0] sm:$0xff]
        %v1289 = vld [vmem:[%s1191 + $0x1b8] sm:$0xff]
        %v1290 = vld [vmem:[%s1191 + $0x1c0] sm:$0xff]
        %v1291 = vld [vmem:[%s1191 + $0x1c8] sm:$0xff]
        %v1292 = vld [vmem:[%s1191 + $0x1d0] sm:$0xff]
        %v1293 = vld [vmem:[%s1191 + $0x1d8] sm:$0xf]
        %v1294 = vld [vmem:[%s1191 + $0x1dc] sm:$0xff]
        %v1295 = vld [vmem:[%s1191 + $0x1e4] sm:$0xff]
        %v1296 = vld [vmem:[%s1191 + $0x1ec] sm:$0xff]
        %v1297 = vld [vmem:[%s1191 + $0x1f4] sm:$0xff]
        %v1298 = vld [vmem:[%s1191 + $0x1fc] sm:$0xff]
        %v1299 = vld [vmem:[%s1191 + $0x204] sm:$0xff]
        %v1300 = vld [vmem:[%s1191 + $0x20c] sm:$0xff]
        %v1301 = vld [vmem:[%s1191 + $0x214] sm:$0xff]
        %v1302 = vld [vmem:[%s1191 + $0x21c] sm:$0xf]
        %v1303 = vld [vmem:[%s1191 + $0x220] sm:$0xff]
        %v1304 = vld [vmem:[%s1191 + $0x228] sm:$0xff]
        %v1305 = vld [vmem:[%s1191 + $0x230] sm:$0xff]
        %v1306 = vld [vmem:[%s1191 + $0x238] sm:$0xff]
        %v1307 = vld [vmem:[%s1191 + $0x240] sm:$0xff]
        %v1308 = vld [vmem:[%s1191 + $0x248] sm:$0xff]
        %v1309 = vld [vmem:[%s1191 + $0x250] sm:$0xff]
        %v1310 = vld [vmem:[%s1191 + $0x258] sm:$0xff]
        %v1311 = vld [vmem:[%s1191 + $0x260] sm:$0xf]
        %v1312 = vld [vmem:[%s1191 + $0x264] sm:$0xff]
        %v1313 = vld [vmem:[%s1191 + $0x26c] sm:$0xff]
        %v1314 = vld [vmem:[%s1191 + $0x274] sm:$0xff]
        %v1315 = vld [vmem:[%s1191 + $0x27c] sm:$0xff]
        %v1316 = vld [vmem:[%s1191 + $0x284] sm:$0xff]
        %v1317 = vld [vmem:[%s1191 + $0x28c] sm:$0xff]
        %v1318 = vld [vmem:[%s1191 + $0x294] sm:$0xff]
        %v1319 = vld [vmem:[%s1191 + $0x29c] sm:$0xff]
        %v1320 = vld [vmem:[%s1191 + $0x2a4] sm:$0xf]
        %v1321 = vld [vmem:[%s1191 + $0x2a8] sm:$0xff]
        %v1322 = vld [vmem:[%s1191 + $0x2b0] sm:$0xff]
        %v1323 = vld [vmem:[%s1191 + $0x2b8] sm:$0xff]
        %v1324 = vld [vmem:[%s1191 + $0x2c0] sm:$0xff]
        %v1325 = vld [vmem:[%s1191 + $0x2c8] sm:$0xff]
        %v1326 = vld [vmem:[%s1191 + $0x2d0] sm:$0xff]
        %v1327 = vld [vmem:[%s1191 + $0x2d8] sm:$0xff]
        %v1328 = vld [vmem:[%s1191 + $0x2e0] sm:$0xff]
        %v1329 = vld [vmem:[%s1191 + $0x2e8] sm:$0xf]
        %v1330 = vld [vmem:[%s1191 + $0x2ec] sm:$0xff]
        %v1331 = vld [vmem:[%s1191 + $0x2f4] sm:$0xff]
        %v1332 = vld [vmem:[%s1191 + $0x2fc] sm:$0xff]
        %v1333 = vld [vmem:[%s1191 + $0x304] sm:$0xff]
        %v1334 = vld [vmem:[%s1191 + $0x30c] sm:$0xff]
        %v1335 = vld [vmem:[%s1191 + $0x314] sm:$0xff]
        %v1336 = vld [vmem:[%s1191 + $0x31c] sm:$0xff]
        %v1337 = vld [vmem:[%s1191 + $0x324] sm:$0xff]
        %v1338 = vld [vmem:[%s1191 + $0x32c] sm:$0xf]
        %v1339 = vld [vmem:[%s1191 + $0x330] sm:$0xff]
        %v1340 = vld [vmem:[%s1191 + $0x338] sm:$0xff]
        %v1341 = vld [vmem:[%s1191 + $0x340] sm:$0xff]
        %v1342 = vld [vmem:[%s1191 + $0x348] sm:$0xff]
        %v1343 = vld [vmem:[%s1191 + $0x350] sm:$0xff]
        %v1344 = vld [vmem:[%s1191 + $0x358] sm:$0xff]
        %v1345 = vld [vmem:[%s1191 + $0x360] sm:$0xff]
        %v1346 = vld [vmem:[%s1191 + $0x368] sm:$0xff]
        %v1347 = vld [vmem:[%s1191 + $0x370] sm:$0xf]
        %v1348 = vld [vmem:[%s1191 + $0x374] sm:$0xff]
        %v1349 = vld [vmem:[%s1191 + $0x37c] sm:$0xff]
        %v1350 = vld [vmem:[%s1191 + $0x384] sm:$0xff]
        %v1351 = vld [vmem:[%s1191 + $0x38c] sm:$0xff]
        %v1352 = vld [vmem:[%s1191 + $0x394] sm:$0xff]
        %v1353 = vld [vmem:[%s1191 + $0x39c] sm:$0xff]
        %v1354 = vld [vmem:[%s1191 + $0x3a4] sm:$0xff]
        %v1355 = vld [vmem:[%s1191 + $0x3ac] sm:$0xff]
        %v1356 = vld [vmem:[%s1191 + $0x3b4] sm:$0xf]
        %v1357 = vld [vmem:[%s1191 + $0x3b8] sm:$0xff]
        %v1358 = vld [vmem:[%s1191 + $0x3c0] sm:$0xff]
        %v1359 = vld [vmem:[%s1191 + $0x3c8] sm:$0xff]
        %v1360 = vld [vmem:[%s1191 + $0x3d0] sm:$0xff]
        %v1361 = vld [vmem:[%s1191 + $0x3d8] sm:$0xff]
        %v1362 = vld [vmem:[%s1191 + $0x3e0] sm:$0xff]
        %v1363 = vld [vmem:[%s1191 + $0x3e8] sm:$0xff]
        %v1364 = vld [vmem:[%s1191 + $0x3f0] sm:$0xff]
        %v1365 = vld [vmem:[%s1191 + $0x3f8] sm:$0xf]
        %v1366 = vld [vmem:[%s1191 + $0x3fc] sm:$0xff]
        %v1367 = vld [vmem:[%s1191 + $0x404] sm:$0xff]
        %v1368 = vld [vmem:[%s1191 + $0x40c] sm:$0xff]
        %v1369 = vld [vmem:[%s1191 + $0x414] sm:$0xff]
        %v1370 = vld [vmem:[%s1191 + $0x41c] sm:$0xff]
        %v1371 = vld [vmem:[%s1191 + $0x424] sm:$0xff]
        %v1372 = vld [vmem:[%s1191 + $0x42c] sm:$0xff]
        %v1373 = vld [vmem:[%s1191 + $0x434] sm:$0xff]
        %v1374 = vld [vmem:[%s1191 + $0x43c] sm:$0xf]
        %v1375 = vld [vmem:[%s1191 + $0x440] sm:$0xff]
        %v1376 = vld [vmem:[%s1191 + $0x448] sm:$0xff]
        %v1377 = vld [vmem:[%s1191 + $0x450] sm:$0xff]
        %v1378 = vld [vmem:[%s1191 + $0x458] sm:$0xff]
        %v1379 = vld [vmem:[%s1191 + $0x460] sm:$0xff]
        %v1380 = vld [vmem:[%s1191 + $0x468] sm:$0xff]
        %v1381 = vld [vmem:[%s1191 + $0x470] sm:$0xff]
        %v1382 = vld [vmem:[%s1191 + $0x478] sm:$0xff]
        %v1383 = vld [vmem:[%s1191 + $0x480] sm:$0xf]
        %v1384 = vld [vmem:[%s1191 + $0x484] sm:$0xff]
        %v1385 = vld [vmem:[%s1191 + $0x48c] sm:$0xff]
        %v1386 = vld [vmem:[%s1191 + $0x494] sm:$0xff]
        %v1387 = vld [vmem:[%s1191 + $0x49c] sm:$0xff]
        %v1388 = vld [vmem:[%s1191 + $0x4a4] sm:$0xff]
        %v1389 = vld [vmem:[%s1191 + $0x4ac] sm:$0xff]
        %v1390 = vld [vmem:[%s1191 + $0x4b4] sm:$0xff]
        %v1391 = vld [vmem:[%s1191 + $0x4bc] sm:$0xff]
        %v1392 = vld [vmem:[%s1191 + $0x4c4] sm:$0xf]
        %v1393 = vld [vmem:[%s1191 + $0x4c8] sm:$0xff]
        %v1394 = vld [vmem:[%s1191 + $0x4d0] sm:$0xff]
        %v1395 = vld [vmem:[%s1191 + $0x4d8] sm:$0xff]
        %v1396 = vld [vmem:[%s1191 + $0x4e0] sm:$0xff]
        %v1397 = vld [vmem:[%s1191 + $0x4e8] sm:$0xff]
        %v1398 = vld [vmem:[%s1191 + $0x4f0] sm:$0xff]
        %v1399 = vld [vmem:[%s1191 + $0x4f8] sm:$0xff]
        %v1400 = vld [vmem:[%s1191 + $0x500] sm:$0xff]
        %v1401 = vld [vmem:[%s1191 + $0x508] sm:$0xf]
        %v1402 = vld [vmem:[%s1191 + $0x50c] sm:$0xff]
        %v1403 = vld [vmem:[%s1191 + $0x514] sm:$0xff]
        %v1404 = vld [vmem:[%s1191 + $0x51c] sm:$0xff]
        %v1405 = vld [vmem:[%s1191 + $0x524] sm:$0xff]
        %v1406 = vld [vmem:[%s1191 + $0x52c] sm:$0xff]
        %v1407 = vld [vmem:[%s1191 + $0x534] sm:$0xff]
        %v1408 = vld [vmem:[%s1191 + $0x53c] sm:$0xff]
        %v1409 = vld [vmem:[%s1191 + $0x544] sm:$0xff]
        %v1410 = vld [vmem:[%s1191 + $0x54c] sm:$0xf]
        %v1411 = vld [vmem:[%s1191 + $0x550] sm:$0xff]
        %v1412 = vld [vmem:[%s1191 + $0x558] sm:$0xff]
        %v1413 = vld [vmem:[%s1191 + $0x560] sm:$0xff]
        %v1414 = vld [vmem:[%s1191 + $0x568] sm:$0xff]
        %v1415 = vld [vmem:[%s1191 + $0x570] sm:$0xff]
        %v1416 = vld [vmem:[%s1191 + $0x578] sm:$0xff]
        %v1417 = vld [vmem:[%s1191 + $0x580] sm:$0xff]
        %v1418 = vld [vmem:[%s1191 + $0x588] sm:$0xff]
        %v1419 = vld [vmem:[%s1191 + $0x590] sm:$0xf]
        %v1420 = vld [vmem:[%s1191 + $0x594] sm:$0xff]
        %v1421 = vld [vmem:[%s1191 + $0x59c] sm:$0xff]
        %v1422 = vld [vmem:[%s1191 + $0x5a4] sm:$0xff]
        %v1423 = vld [vmem:[%s1191 + $0x5ac] sm:$0xff]
        %v1424 = vld [vmem:[%s1191 + $0x5b4] sm:$0xff]
        %v1425 = vld [vmem:[%s1191 + $0x5bc] sm:$0xff]
        %v1426 = vld [vmem:[%s1191 + $0x5c4] sm:$0xff]
        %v1427 = vld [vmem:[%s1191 + $0x5cc] sm:$0xff]
        %v1428 = vld [vmem:[%s1191 + $0x5d4] sm:$0xf]
        %v1429 = vld [vmem:[%s1191 + $0x5d8] sm:$0xff]
        %v1430 = vld [vmem:[%s1191 + $0x5e0] sm:$0xff]
        %v1431 = vld [vmem:[%s1191 + $0x5e8] sm:$0xff]
        %v1432 = vld [vmem:[%s1191 + $0x5f0] sm:$0xff]
        %v1433 = vld [vmem:[%s1191 + $0x5f8] sm:$0xff]
        %v1434 = vld [vmem:[%s1191 + $0x600] sm:$0xff]
        %v1435 = vld [vmem:[%s1191 + $0x608] sm:$0xff]
        %v1436 = vld [vmem:[%s1191 + $0x610] sm:$0xff]
        %v1437 = vld [vmem:[%s1191 + $0x618] sm:$0xf]
        %v1438 = vld [vmem:[%s1191 + $0x61c] sm:$0xff]
        %v1439 = vld [vmem:[%s1191 + $0x624] sm:$0xff]
        %v1440 = vld [vmem:[%s1191 + $0x62c] sm:$0xff]
        %v1441 = vld [vmem:[%s1191 + $0x634] sm:$0xff]
        %v1442 = vld [vmem:[%s1191 + $0x63c] sm:$0xff]
        %v1443 = vld [vmem:[%s1191 + $0x644] sm:$0xff]
        %v1444 = vld [vmem:[%s1191 + $0x64c] sm:$0xff]
        %v1445 = vld [vmem:[%s1191 + $0x654] sm:$0xff]
        %v1446 = vld [vmem:[%s1191 + $0x65c] sm:$0xf]
        %v1447 = vld [vmem:[%s1191 + $0x660] sm:$0xff]
        %v1448 = vld [vmem:[%s1191 + $0x668] sm:$0xff]
        %v1449 = vld [vmem:[%s1191 + $0x670] sm:$0xff]
        %v1450 = vld [vmem:[%s1191 + $0x678] sm:$0xff]
        %v1451 = vld [vmem:[%s1191 + $0x680] sm:$0xff]
        %v1452 = vld [vmem:[%s1191 + $0x688] sm:$0xff]
        %v1453 = vld [vmem:[%s1191 + $0x690] sm:$0xff]
        %v1454 = vld [vmem:[%s1191 + $0x698] sm:$0xff]
        %v1455 = vld [vmem:[%s1191 + $0x6a0] sm:$0xf]
        %v1456 = vld [vmem:[%s1191 + $0x6a4] sm:$0xff]
        %v1457 = vld [vmem:[%s1191 + $0x6ac] sm:$0xff]
        %v1458 = vld [vmem:[%s1191 + $0x6b4] sm:$0xff]
        %v1459 = vld [vmem:[%s1191 + $0x6bc] sm:$0xff]
        %v1460 = vld [vmem:[%s1191 + $0x6c4] sm:$0xff]
        %v1461 = vld [vmem:[%s1191 + $0x6cc] sm:$0xff]
        %v1462 = vld [vmem:[%s1191 + $0x6d4] sm:$0xff]
        %v1463 = vld [vmem:[%s1191 + $0x6dc] sm:$0xff]
        %v1464 = vld [vmem:[%s1191 + $0x6e4] sm:$0xf]
        %v1465 = vld [vmem:[%s1191 + $0x6e8] sm:$0xff]
        %v1466 = vld [vmem:[%s1191 + $0x6f0] sm:$0xff]
        %v1467 = vld [vmem:[%s1191 + $0x6f8] sm:$0xff]
        %v1468 = vld [vmem:[%s1191 + $0x700] sm:$0xff]
        %v1469 = vld [vmem:[%s1191 + $0x708] sm:$0xff]
        %v1470 = vld [vmem:[%s1191 + $0x710] sm:$0xff]
        %v1471 = vld [vmem:[%s1191 + $0x718] sm:$0xff]
        %v1472 = vld [vmem:[%s1191 + $0x720] sm:$0xff]
        %v1473 = vld [vmem:[%s1191 + $0x728] sm:$0xf]
        %v1474 = vld [vmem:[%s1191 + $0x72c] sm:$0xff]
        %v1475 = vld [vmem:[%s1191 + $0x734] sm:$0xff]
        %v1476 = vld [vmem:[%s1191 + $0x73c] sm:$0xff]
        %v1477 = vld [vmem:[%s1191 + $0x744] sm:$0xff]
        %v1478 = vld [vmem:[%s1191 + $0x74c] sm:$0xff]
        %v1479 = vld [vmem:[%s1191 + $0x754] sm:$0xff]
        %v1480 = vld [vmem:[%s1191 + $0x75c] sm:$0xff]
        %v1481 = vld [vmem:[%s1191 + $0x764] sm:$0xff]
        %v1482 = vld [vmem:[%s1191 + $0x76c] sm:$0xf]
        %v1483 = vld [vmem:[%s1191 + $0x770] sm:$0xff]
        %v1484 = vld [vmem:[%s1191 + $0x778] sm:$0xff]
        %v1485 = vld [vmem:[%s1191 + $0x780] sm:$0xff]
        %v1486 = vld [vmem:[%s1191 + $0x788] sm:$0xff]
        %v1487 = vld [vmem:[%s1191 + $0x790] sm:$0xff]
        %v1488 = vld [vmem:[%s1191 + $0x798] sm:$0xff]
        %v1489 = vld [vmem:[%s1191 + $0x7a0] sm:$0xff]
        %v1490 = vld [vmem:[%s1191 + $0x7a8] sm:$0xff]
        %v1491 = vld [vmem:[%s1191 + $0x7b0] sm:$0xf]
        %v1492 = vld [vmem:[%s1191 + $0x7b4] sm:$0xff]
        %v1493 = vld [vmem:[%s1191 + $0x7bc] sm:$0xff]
        %v1494 = vld [vmem:[%s1191 + $0x7c4] sm:$0xff]
        %v1495 = vld [vmem:[%s1191 + $0x7cc] sm:$0xff]
        %v1496 = vld [vmem:[%s1191 + $0x7d4] sm:$0xff]
        %v1497 = vld [vmem:[%s1191 + $0x7dc] sm:$0xff]
        %v1498 = vld [vmem:[%s1191 + $0x7e4] sm:$0xff]
        %v1499 = vld [vmem:[%s1191 + $0x7ec] sm:$0xff]
        %v1500 = vld [vmem:[%s1191 + $0x7f4] sm:$0xf]
        %v1501 = vld [vmem:[%s1191 + $0x7f8] sm:$0xff]
        %v1502 = vld [vmem:[%s1191 + $0x800] sm:$0xff]
        %v1503 = vld [vmem:[%s1191 + $0x808] sm:$0xff]
        %v1504 = vld [vmem:[%s1191 + $0x810] sm:$0xff]
        %v1505 = vld [vmem:[%s1191 + $0x818] sm:$0xff]
        %v1506 = vld [vmem:[%s1191 + $0x820] sm:$0xff]
        %v1507 = vld [vmem:[%s1191 + $0x828] sm:$0xff]
        %v1508 = vld [vmem:[%s1191 + $0x830] sm:$0xff]
        %v1509 = vld [vmem:[%s1191 + $0x838] sm:$0xf]
        %v1510 = vld [vmem:[%s1191 + $0x83c] sm:$0xff]
        %v1511 = vld [vmem:[%s1191 + $0x844] sm:$0xff]
        %v1512 = vld [vmem:[%s1191 + $0x84c] sm:$0xff]
        %v1513 = vld [vmem:[%s1191 + $0x854] sm:$0xff]
        %v1514 = vld [vmem:[%s1191 + $0x85c] sm:$0xff]
        %v1515 = vld [vmem:[%s1191 + $0x864] sm:$0xff]
        %v1516 = vld [vmem:[%s1191 + $0x86c] sm:$0xff]
        %v1517 = vld [vmem:[%s1191 + $0x874] sm:$0xff]
        %v1518 = vld [vmem:[%s1191 + $0x87c] sm:$0xf]
        %v1519 = vld [vmem:[%s1191 + $0x880] sm:$0xff]
        %v1520 = vld [vmem:[%s1191 + $0x888] sm:$0xff]
        %v1521 = vld [vmem:[%s1191 + $0x890] sm:$0xff]
        %v1522 = vld [vmem:[%s1191 + $0x898] sm:$0xff]
        %v1523 = vld [vmem:[%s1191 + $0x8a0] sm:$0xff]
        %v1524 = vld [vmem:[%s1191 + $0x8a8] sm:$0xff]
        %v1525 = vld [vmem:[%s1191 + $0x8b0] sm:$0xff]
        %v1526 = vld [vmem:[%s1191 + $0x8b8] sm:$0xff]
        %v1527 = vld [vmem:[%s1191 + $0x8c0] sm:$0xf]
        %v1528 = vld [vmem:[%s1191 + $0x8c4] sm:$0xff]
        %v1529 = vld [vmem:[%s1191 + $0x8cc] sm:$0xff]
        %v1530 = vld [vmem:[%s1191 + $0x8d4] sm:$0xff]
        %v1531 = vld [vmem:[%s1191 + $0x8dc] sm:$0xff]
        %v1532 = vld [vmem:[%s1191 + $0x8e4] sm:$0xff]
        %v1533 = vld [vmem:[%s1191 + $0x8ec] sm:$0xff]
        %v1534 = vld [vmem:[%s1191 + $0x8f4] sm:$0xff]
        %v1535 = vld [vmem:[%s1191 + $0x8fc] sm:$0xff]
        %v1536 = vld [vmem:[%s1191 + $0x904] sm:$0xf]
        %v1537 = vld [vmem:[%s1191 + $0x908] sm:$0xff]
        %v1538 = vld [vmem:[%s1191 + $0x910] sm:$0xff]
        %v1539 = vld [vmem:[%s1191 + $0x918] sm:$0xff]
        %v1540 = vld [vmem:[%s1191 + $0x920] sm:$0xff]
        %v1541 = vld [vmem:[%s1191 + $0x928] sm:$0xff]
        %v1542 = vld [vmem:[%s1191 + $0x930] sm:$0xff]
        %v1543 = vld [vmem:[%s1191 + $0x938] sm:$0xff]
        %v1544 = vld [vmem:[%s1191 + $0x940] sm:$0xff]
        %v1545 = vld [vmem:[%s1191 + $0x948] sm:$0xf]
        %v1546 = vld [vmem:[%s1191 + $0x94c] sm:$0xff]
        %v1547 = vld [vmem:[%s1191 + $0x954] sm:$0xff]
        %v1548 = vld [vmem:[%s1191 + $0x95c] sm:$0xff]
        %v1549 = vld [vmem:[%s1191 + $0x964] sm:$0xff]
        %v1550 = vld [vmem:[%s1191 + $0x96c] sm:$0xff]
        %v1551 = vld [vmem:[%s1191 + $0x974] sm:$0xff]
        %v1552 = vld [vmem:[%s1191 + $0x97c] sm:$0xff]
        %v1553 = vld [vmem:[%s1191 + $0x984] sm:$0xff]
        %v1554 = vld [vmem:[%s1191 + $0x98c] sm:$0xf]
        %v1555 = vld [vmem:[%s1191 + $0x990] sm:$0xff]
        %v1556 = vld [vmem:[%s1191 + $0x998] sm:$0xff]
        %v1557 = vld [vmem:[%s1191 + $0x9a0] sm:$0xff]
        %v1558 = vld [vmem:[%s1191 + $0x9a8] sm:$0xff]
        %v1559 = vld [vmem:[%s1191 + $0x9b0] sm:$0xff]
        %v1560 = vld [vmem:[%s1191 + $0x9b8] sm:$0xff]
        %v1561 = vld [vmem:[%s1191 + $0x9c0] sm:$0xff]
        %v1562 = vld [vmem:[%s1191 + $0x9c8] sm:$0xff]
        %v1563 = vld [vmem:[%s1191 + $0x9d0] sm:$0xf]
        %v1564 = vld [vmem:[%s1191 + $0x9d4] sm:$0xff]
        %v1565 = vld [vmem:[%s1191 + $0x9dc] sm:$0xff]
        %v1566 = vld [vmem:[%s1191 + $0x9e4] sm:$0xff]
        %v1567 = vld [vmem:[%s1191 + $0x9ec] sm:$0xff]
        %v1568 = vld [vmem:[%s1191 + $0x9f4] sm:$0xff]
        %v1569 = vld [vmem:[%s1191 + $0x9fc] sm:$0xff]
        %v1570 = vld [vmem:[%s1191 + $0xa04] sm:$0xff]
        %v1571 = vld [vmem:[%s1191 + $0xa0c] sm:$0xff]
        %v1572 = vld [vmem:[%s1191 + $0xa14] sm:$0xf]
        %v1573 = vld [vmem:[%s1191 + $0xa18] sm:$0xff]
        %v1574 = vld [vmem:[%s1191 + $0xa20] sm:$0xff]
        %v1575 = vld [vmem:[%s1191 + $0xa28] sm:$0xff]
        %v1576 = vld [vmem:[%s1191 + $0xa30] sm:$0xff]
        %v1577 = vld [vmem:[%s1191 + $0xa38] sm:$0xff]
        %v1578 = vld [vmem:[%s1191 + $0xa40] sm:$0xff]
        %v1579 = vld [vmem:[%s1191 + $0xa48] sm:$0xff]
        %v1580 = vld [vmem:[%s1191 + $0xa50] sm:$0xff]
        %v1581 = vld [vmem:[%s1191 + $0xa58] sm:$0xf]
        %v1582 = vld [vmem:[%s1191 + $0xa5c] sm:$0xff]
        %v1583 = vld [vmem:[%s1191 + $0xa64] sm:$0xff]
        %v1584 = vld [vmem:[%s1191 + $0xa6c] sm:$0xff]
        %v1585 = vld [vmem:[%s1191 + $0xa74] sm:$0xff]
        %v1586 = vld [vmem:[%s1191 + $0xa7c] sm:$0xff]
        %v1587 = vld [vmem:[%s1191 + $0xa84] sm:$0xff]
        %v1588 = vld [vmem:[%s1191 + $0xa8c] sm:$0xff]
        %v1589 = vld [vmem:[%s1191 + $0xa94] sm:$0xff]
        %v1590 = vld [vmem:[%s1191 + $0xa9c] sm:$0xf]
        %v1591 = vld [vmem:[%s1191 + $0xaa0] sm:$0xff]
        %v1592 = vld [vmem:[%s1191 + $0xaa8] sm:$0xff]
        %v1593 = vld [vmem:[%s1191 + $0xab0] sm:$0xff]
        %v1594 = vld [vmem:[%s1191 + $0xab8] sm:$0xff]
        %v1595 = vld [vmem:[%s1191 + $0xac0] sm:$0xff]
        %v1596 = vld [vmem:[%s1191 + $0xac8] sm:$0xff]
        %v1597 = vld [vmem:[%s1191 + $0xad0] sm:$0xff]
        %v1598 = vld [vmem:[%s1191 + $0xad8] sm:$0xff]
        %v1599 = vld [vmem:[%s1191 + $0xae0] sm:$0xf]
        %v1600 = vld [vmem:[%s1191 + $0xae4] sm:$0xff]
        %v1601 = vld [vmem:[%s1191 + $0xaec] sm:$0xff]
        %v1602 = vld [vmem:[%s1191 + $0xaf4] sm:$0xff]
        %v1603 = vld [vmem:[%s1191 + $0xafc] sm:$0xff]
        %v1604 = vld [vmem:[%s1191 + $0xb04] sm:$0xff]
        %v1605 = vld [vmem:[%s1191 + $0xb0c] sm:$0xff]
        %v1606 = vld [vmem:[%s1191 + $0xb14] sm:$0xff]
        %v1607 = vld [vmem:[%s1191 + $0xb1c] sm:$0xff]
        %v1608 = vld [vmem:[%s1191 + $0xb24] sm:$0xf]
        %v1609 = vld [vmem:[%s1191 + $0xb28] sm:$0xff]
        %v1610 = vld [vmem:[%s1191 + $0xb30] sm:$0xff]
        %v1611 = vld [vmem:[%s1191 + $0xb38] sm:$0xff]
        %v1612 = vld [vmem:[%s1191 + $0xb40] sm:$0xff]
        %v1613 = vld [vmem:[%s1191 + $0xb48] sm:$0xff]
        %v1614 = vld [vmem:[%s1191 + $0xb50] sm:$0xff]
        %v1615 = vld [vmem:[%s1191 + $0xb58] sm:$0xff]
        %v1616 = vld [vmem:[%s1191 + $0xb60] sm:$0xff]
        %v1617 = vld [vmem:[%s1191 + $0xb68] sm:$0xf]
        %v1618 = vld [vmem:[%s1191 + $0xb6c] sm:$0xff]
        %v1619 = vld [vmem:[%s1191 + $0xb74] sm:$0xff]
        %v1620 = vld [vmem:[%s1191 + $0xb7c] sm:$0xff]
        %v1621 = vld [vmem:[%s1191 + $0xb84] sm:$0xff]
        %v1622 = vld [vmem:[%s1191 + $0xb8c] sm:$0xff]
        %v1623 = vld [vmem:[%s1191 + $0xb94] sm:$0xff]
        %v1624 = vld [vmem:[%s1191 + $0xb9c] sm:$0xff]
        %v1625 = vld [vmem:[%s1191 + $0xba4] sm:$0xff]
        %v1626 = vld [vmem:[%s1191 + $0xbac] sm:$0xf]
        %v1627 = vld [vmem:[%s1191 + $0xbb0] sm:$0xff]
        %v1628 = vld [vmem:[%s1191 + $0xbb8] sm:$0xff]
        %v1629 = vld [vmem:[%s1191 + $0xbc0] sm:$0xff]
        %v1630 = vld [vmem:[%s1191 + $0xbc8] sm:$0xff]
        %v1631 = vld [vmem:[%s1191 + $0xbd0] sm:$0xff]
        %v1632 = vld [vmem:[%s1191 + $0xbd8] sm:$0xff]
        %v1633 = vld [vmem:[%s1191 + $0xbe0] sm:$0xff]
        %v1634 = vld [vmem:[%s1191 + $0xbe8] sm:$0xff]
        %v1635 = vld [vmem:[%s1191 + $0xbf0] sm:$0xf]
        %v1636 = vld [vmem:[%s1191 + $0xbf4] sm:$0xff]
        %v1637 = vld [vmem:[%s1191 + $0xbfc] sm:$0xff]
        %v1638 = vld [vmem:[%s1191 + $0xc04] sm:$0xff]
        %v1639 = vld [vmem:[%s1191 + $0xc0c] sm:$0xff]
        %v1640 = vld [vmem:[%s1191 + $0xc14] sm:$0xff]
        %v1641 = vld [vmem:[%s1191 + $0xc1c] sm:$0xff]
        %v1642 = vld [vmem:[%s1191 + $0xc24] sm:$0xff]
        %v1643 = vld [vmem:[%s1191 + $0xc2c] sm:$0xff]
        %v1644 = vld [vmem:[%s1191 + $0xc34] sm:$0xf]
        %v1645 = vld [vmem:[%s1191 + $0xc38] sm:$0xff]
        %v1646 = vld [vmem:[%s1191 + $0xc40] sm:$0xff]
        %v1647 = vld [vmem:[%s1191 + $0xc48] sm:$0xff]
        %v1648 = vld [vmem:[%s1191 + $0xc50] sm:$0xff]
        %v1649 = vld [vmem:[%s1191 + $0xc58] sm:$0xff]
        %v1650 = vld [vmem:[%s1191 + $0xc60] sm:$0xff]
        %v1651 = vld [vmem:[%s1191 + $0xc68] sm:$0xff]
        %v1652 = vld [vmem:[%s1191 + $0xc70] sm:$0xff]
        %v1653 = vld [vmem:[%s1191 + $0xc78] sm:$0xf]
        %v1654 = vld [vmem:[%s1191 + $0xc7c] sm:$0xff]
        %v1655 = vld [vmem:[%s1191 + $0xc84] sm:$0xff]
        %v1656 = vld [vmem:[%s1191 + $0xc8c] sm:$0xff]
        %v1657 = vld [vmem:[%s1191 + $0xc94] sm:$0xff]
        %v1658 = vld [vmem:[%s1191 + $0xc9c] sm:$0xff]
        %v1659 = vld [vmem:[%s1191 + $0xca4] sm:$0xff]
        %v1660 = vld [vmem:[%s1191 + $0xcac] sm:$0xff]
        %v1661 = vld [vmem:[%s1191 + $0xcb4] sm:$0xff]
        %v1662 = vld [vmem:[%s1191 + $0xcbc] sm:$0xf]
        %v1663 = vld [vmem:[%s1191 + $0xcc0] sm:$0xff]
        %v1664 = vld [vmem:[%s1191 + $0xcc8] sm:$0xff]
        %v1665 = vld [vmem:[%s1191 + $0xcd0] sm:$0xff]
        %v1666 = vld [vmem:[%s1191 + $0xcd8] sm:$0xff]
        %v1667 = vld [vmem:[%s1191 + $0xce0] sm:$0xff]
        %v1668 = vld [vmem:[%s1191 + $0xce8] sm:$0xff]
        %v1669 = vld [vmem:[%s1191 + $0xcf0] sm:$0xff]
        %v1670 = vld [vmem:[%s1191 + $0xcf8] sm:$0xff]
        %v1671 = vld [vmem:[%s1191 + $0xd00] sm:$0xf]
        %v1672 = vld [vmem:[%s1191 + $0xd04] sm:$0xff]
        %v1673 = vld [vmem:[%s1191 + $0xd0c] sm:$0xff]
        %v1674 = vld [vmem:[%s1191 + $0xd14] sm:$0xff]
        %v1675 = vld [vmem:[%s1191 + $0xd1c] sm:$0xff]
        %v1676 = vld [vmem:[%s1191 + $0xd24] sm:$0xff]
        %v1677 = vld [vmem:[%s1191 + $0xd2c] sm:$0xff]
        %v1678 = vld [vmem:[%s1191 + $0xd34] sm:$0xff]
        %v1679 = vld [vmem:[%s1191 + $0xd3c] sm:$0xff]
        %v1680 = vld [vmem:[%s1191 + $0xd44] sm:$0xf]
        %v1681 = vld [vmem:[%s1191 + $0xd48] sm:$0xff]
        %v1682 = vld [vmem:[%s1191 + $0xd50] sm:$0xff]
        %v1683 = vld [vmem:[%s1191 + $0xd58] sm:$0xff]
        %v1684 = vld [vmem:[%s1191 + $0xd60] sm:$0xff]
        %v1685 = vld [vmem:[%s1191 + $0xd68] sm:$0xff]
        %v1686 = vld [vmem:[%s1191 + $0xd70] sm:$0xff]
        %v1687 = vld [vmem:[%s1191 + $0xd78] sm:$0xff]
        %v1688 = vld [vmem:[%s1191 + $0xd80] sm:$0xff]
        %v1689 = vld [vmem:[%s1191 + $0xd88] sm:$0xf]
        %v1690 = vld [vmem:[%s1191 + $0xd8c] sm:$0xff]
        %v1691 = vld [vmem:[%s1191 + $0xd94] sm:$0xff]
        %v1692 = vld [vmem:[%s1191 + $0xd9c] sm:$0xff]
        %v1693 = vld [vmem:[%s1191 + $0xda4] sm:$0xff]
        %v1694 = vld [vmem:[%s1191 + $0xdac] sm:$0xff]
        %v1695 = vld [vmem:[%s1191 + $0xdb4] sm:$0xff]
        %v1696 = vld [vmem:[%s1191 + $0xdbc] sm:$0xff]
        %v1697 = vld [vmem:[%s1191 + $0xdc4] sm:$0xff]
        %v1698 = vld [vmem:[%s1191 + $0xdcc] sm:$0xf]
        %v1699 = vld [vmem:[%s1191 + $0xdd0] sm:$0xff]
        %v1700 = vld [vmem:[%s1191 + $0xdd8] sm:$0xff]
        %v1701 = vld [vmem:[%s1191 + $0xde0] sm:$0xff]
        %v1702 = vld [vmem:[%s1191 + $0xde8] sm:$0xff]
        %v1703 = vld [vmem:[%s1191 + $0xdf0] sm:$0xff]
        %v1704 = vld [vmem:[%s1191 + $0xdf8] sm:$0xff]
        %v1705 = vld [vmem:[%s1191 + $0xe00] sm:$0xff]
        %v1706 = vld [vmem:[%s1191 + $0xe08] sm:$0xff]
        %v1707 = vld [vmem:[%s1191 + $0xe10] sm:$0xf]
        %v1708 = vld [vmem:[%s1191 + $0xe14] sm:$0xff]
        %v1709 = vld [vmem:[%s1191 + $0xe1c] sm:$0xff]
        %v1710 = vld [vmem:[%s1191 + $0xe24] sm:$0xff]
        %v1711 = vld [vmem:[%s1191 + $0xe2c] sm:$0xff]
        %v1712 = vld [vmem:[%s1191 + $0xe34] sm:$0xff]
        %v1713 = vld [vmem:[%s1191 + $0xe3c] sm:$0xff]
        %v1714 = vld [vmem:[%s1191 + $0xe44] sm:$0xff]
        %v1715 = vld [vmem:[%s1191 + $0xe4c] sm:$0xff]
        %v1716 = vld [vmem:[%s1191 + $0xe54] sm:$0xf]
        %v1717 = vld [vmem:[%s1191 + $0xe58] sm:$0xff]
        %v1718 = vld [vmem:[%s1191 + $0xe60] sm:$0xff]
        %v1719 = vld [vmem:[%s1191 + $0xe68] sm:$0xff]
        %v1720 = vld [vmem:[%s1191 + $0xe70] sm:$0xff]
        %v1721 = vld [vmem:[%s1191 + $0xe78] sm:$0xff]
        %v1722 = vld [vmem:[%s1191 + $0xe80] sm:$0xff]
        %v1723 = vld [vmem:[%s1191 + $0xe88] sm:$0xff]
        %v1724 = vld [vmem:[%s1191 + $0xe90] sm:$0xff]
        %v1725 = vld [vmem:[%s1191 + $0xe98] sm:$0xf]
        %v1726 = vld [vmem:[%s1191 + $0xe9c] sm:$0xff]
        %v1727 = vld [vmem:[%s1191 + $0xea4] sm:$0xff]
        %v1728 = vld [vmem:[%s1191 + $0xeac] sm:$0xff]
        %v1729 = vld [vmem:[%s1191 + $0xeb4] sm:$0xff]
        %v1730 = vld [vmem:[%s1191 + $0xebc] sm:$0xff]
        %v1731 = vld [vmem:[%s1191 + $0xec4] sm:$0xff]
        %v1732 = vld [vmem:[%s1191 + $0xecc] sm:$0xff]
        %v1733 = vld [vmem:[%s1191 + $0xed4] sm:$0xff]
        %v1734 = vld [vmem:[%s1191 + $0xedc] sm:$0xf]
        %v1735 = vld [vmem:[%s1220] sm:$0xff]
        %v1736 = vld [vmem:[%s1220 + $0x8] sm:$0xff]
        %v1737 = vld [vmem:[%s1220 + $0x10] sm:$0x1]
        %v1741 = vlaneseq
        %v1742 = vshrl.u32 %v1741, 7
        %v1743 = vsub.s32 0, %v1742
        %v1744 = vrot.slane %v1735, %v1743
        %v1745 = vlaneseq
        %v1746 = vshrl.u32 %v1745, 7
        %v1747 = vsub.s32 1, %v1746
        %v1748 = vrot.slane %v1735, %v1747
        %v1749 = vlaneseq
        %v1750 = vshrl.u32 %v1749, 7
        %v1751 = vsub.s32 2, %v1750
        %v1752 = vrot.slane %v1735, %v1751
        %v1753 = vlaneseq
        %v1754 = vshrl.u32 %v1753, 7
        %v1755 = vsub.s32 3, %v1754
        %v1756 = vrot.slane %v1735, %v1755
        %v1757 = vlaneseq
        %v1758 = vshrl.u32 %v1757, 7
        %v1759 = vsub.s32 4, %v1758
        %v1760 = vrot.slane %v1735, %v1759
        %v1761 = vlaneseq
        %v1762 = vshrl.u32 %v1761, 7
        %v1763 = vsub.s32 5, %v1762
        %v1764 = vrot.slane %v1735, %v1763
        %v1765 = vlaneseq
        %v1766 = vshrl.u32 %v1765, 7
        %v1767 = vsub.s32 6, %v1766
        %v1768 = vrot.slane %v1735, %v1767
        %v1769 = vlaneseq
        %v1770 = vshrl.u32 %v1769, 7
        %v1771 = vsub.s32 7, %v1770
        %v1772 = vrot.slane %v1735, %v1771
        %v1773 = vlaneseq
        %v1774 = vshrl.u32 %v1773, 7
        %v1775 = vsub.s32 0, %v1774
        %v1776 = vrot.slane %v1736, %v1775
        %v1777 = vlaneseq
        %v1778 = vshrl.u32 %v1777, 7
        %v1779 = vsub.s32 1, %v1778
        %v1780 = vrot.slane %v1736, %v1779
        %v1781 = vlaneseq
        %v1782 = vshrl.u32 %v1781, 7
        %v1783 = vsub.s32 2, %v1782
        %v1784 = vrot.slane %v1736, %v1783
        %v1785 = vlaneseq
        %v1786 = vshrl.u32 %v1785, 7
        %v1787 = vsub.s32 3, %v1786
        %v1788 = vrot.slane %v1736, %v1787
        %v1789 = vlaneseq
        %v1790 = vshrl.u32 %v1789, 7
        %v1791 = vsub.s32 4, %v1790
        %v1792 = vrot.slane %v1736, %v1791
        %v1793 = vlaneseq
        %v1794 = vshrl.u32 %v1793, 7
        %v1795 = vsub.s32 5, %v1794
        %v1796 = vrot.slane %v1736, %v1795
        %v1797 = vlaneseq
        %v1798 = vshrl.u32 %v1797, 7
        %v1799 = vsub.s32 6, %v1798
        %v1800 = vrot.slane %v1736, %v1799
        %v1801 = vlaneseq
        %v1802 = vshrl.u32 %v1801, 7
        %v1803 = vsub.s32 7, %v1802
        %v1804 = vrot.slane %v1736, %v1803
        %v1805 = vlaneseq
        %v1806 = vshrl.u32 %v1805, 7
        %v1807 = vsub.s32 0, %v1806
        %v1808 = vrot.slane %v1737, %v1807
        %v1828 = vunpack.c.l.b16 %v1229
        %v1829 = vunpack.c.h.b16 %v1229
        %v1830 = vunpack.c.l.b16 %v1230
        %v1831 = vunpack.c.h.b16 %v1230
        %v1832 = vpack.c.b16 %v1828, %v1828
        %v1833 = vpack.c.b16 %v1829, %v1829
        %v1834 = vpack.c.b16 %v1830, %v1830
        %v1835 = vpack.c.b16 %v1831, %v1831
        %v2343 = vunpack.c.l.b16 %v1231
        %v2344 = vunpack.c.h.b16 %v1231
        %v2345 = vunpack.c.l.b16 %v1232
        %v2346 = vunpack.c.h.b16 %v1232
        %v2347 = vunpack.c.l.b16 %v1233
        %v2348 = vunpack.c.h.b16 %v1233
        %v2349 = vunpack.c.l.b16 %v1234
        %v2350 = vunpack.c.h.b16 %v1234
        %v2351 = vunpack.c.l.b16 %v1235
        %v2352 = vunpack.c.h.b16 %v1235
        %v2353 = vunpack.c.l.b16 %v1236
        %v2354 = vunpack.c.h.b16 %v1236
        %v2355 = vunpack.c.l.b16 %v1237
        %v2356 = vunpack.c.h.b16 %v1237
        %v2357 = vunpack.c.l.b16 %v1238
        %v2358 = vunpack.c.h.b16 %v1238
        %v2359 = vunpack.c.l.b16 %v1239
        %v2360 = vunpack.c.l.b16 %v1240
        %v2361 = vunpack.c.h.b16 %v1240
        %v2362 = vunpack.c.l.b16 %v1241
        %v2363 = vunpack.c.h.b16 %v1241
        %v2364 = vunpack.c.l.b16 %v1242
        %v2365 = vunpack.c.h.b16 %v1242
        %v2366 = vunpack.c.l.b16 %v1243
        %v2367 = vunpack.c.h.b16 %v1243
        %v2368 = vunpack.c.l.b16 %v1244
        %v2369 = vunpack.c.h.b16 %v1244
        %v2370 = vunpack.c.l.b16 %v1245
        %v2371 = vunpack.c.h.b16 %v1245
        %v2372 = vunpack.c.l.b16 %v1246
        %v2373 = vunpack.c.h.b16 %v1246
        %v2374 = vunpack.c.l.b16 %v1247
        %v2375 = vunpack.c.h.b16 %v1247
        %v2376 = vunpack.c.l.b16 %v1248
        %v2377 = vunpack.c.l.b16 %v1249
        %v2378 = vunpack.c.h.b16 %v1249
        %v2379 = vunpack.c.l.b16 %v1250
        %v2380 = vunpack.c.h.b16 %v1250
        %v2381 = vunpack.c.l.b16 %v1251
        %v2382 = vunpack.c.h.b16 %v1251
        %v2383 = vunpack.c.l.b16 %v1252
        %v2384 = vunpack.c.h.b16 %v1252
        %v2385 = vunpack.c.l.b16 %v1253
        %v2386 = vunpack.c.h.b16 %v1253
        %v2387 = vunpack.c.l.b16 %v1254
        %v2388 = vunpack.c.h.b16 %v1254
        %v2389 = vunpack.c.l.b16 %v1255
        %v2390 = vunpack.c.h.b16 %v1255
        %v2391 = vunpack.c.l.b16 %v1256
        %v2392 = vunpack.c.h.b16 %v1256
        %v2393 = vunpack.c.l.b16 %v1257
        %v2394 = vunpack.c.l.b16 %v1258
        %v2395 = vunpack.c.h.b16 %v1258
        %v2396 = vunpack.c.l.b16 %v1259
        %v2397 = vunpack.c.h.b16 %v1259
        %v2398 = vunpack.c.l.b16 %v1260
        %v2399 = vunpack.c.h.b16 %v1260
        %v2400 = vunpack.c.l.b16 %v1261
        %v2401 = vunpack.c.h.b16 %v1261
        %v2402 = vunpack.c.l.b16 %v1262
        %v2403 = vunpack.c.h.b16 %v1262
        %v2404 = vunpack.c.l.b16 %v1263
        %v2405 = vunpack.c.h.b16 %v1263
        %v2406 = vunpack.c.l.b16 %v1264
        %v2407 = vunpack.c.h.b16 %v1264
        %v2408 = vunpack.c.l.b16 %v1265
        %v2409 = vunpack.c.h.b16 %v1265
        %v2410 = vunpack.c.l.b16 %v1266
        %v2411 = vunpack.c.l.b16 %v1267
        %v2412 = vunpack.c.h.b16 %v1267
        %v2413 = vunpack.c.l.b16 %v1268
        %v2414 = vunpack.c.h.b16 %v1268
        %v2415 = vunpack.c.l.b16 %v1269
        %v2416 = vunpack.c.h.b16 %v1269
        %v2417 = vunpack.c.l.b16 %v1270
        %v2418 = vunpack.c.h.b16 %v1270
        %v2419 = vunpack.c.l.b16 %v1271
        %v2420 = vunpack.c.h.b16 %v1271
        %v2421 = vunpack.c.l.b16 %v1272
        %v2422 = vunpack.c.h.b16 %v1272
        %v2423 = vunpack.c.l.b16 %v1273
        %v2424 = vunpack.c.h.b16 %v1273
        %v2425 = vunpack.c.l.b16 %v1274
        %v2426 = vunpack.c.h.b16 %v1274
        %v2427 = vunpack.c.l.b16 %v1275
        %v2428 = vunpack.c.l.b16 %v1276
        %v2429 = vunpack.c.h.b16 %v1276
        %v2430 = vunpack.c.l.b16 %v1277
        %v2431 = vunpack.c.h.b16 %v1277
        %v2432 = vunpack.c.l.b16 %v1278
        %v2433 = vunpack.c.h.b16 %v1278
        %v2434 = vunpack.c.l.b16 %v1279
        %v2435 = vunpack.c.h.b16 %v1279
        %v2436 = vunpack.c.l.b16 %v1280
        %v2437 = vunpack.c.h.b16 %v1280
        %v2438 = vunpack.c.l.b16 %v1281
        %v2439 = vunpack.c.h.b16 %v1281
        %v2440 = vunpack.c.l.b16 %v1282
        %v2441 = vunpack.c.h.b16 %v1282
        %v2442 = vunpack.c.l.b16 %v1283
        %v2443 = vunpack.c.h.b16 %v1283
        %v2444 = vunpack.c.l.b16 %v1284
        %v2445 = vunpack.c.l.b16 %v1285
        %v2446 = vunpack.c.h.b16 %v1285
        %v2447 = vunpack.c.l.b16 %v1286
        %v2448 = vunpack.c.h.b16 %v1286
        %v2449 = vunpack.c.l.b16 %v1287
        %v2450 = vunpack.c.h.b16 %v1287
        %v2451 = vunpack.c.l.b16 %v1288
        %v2452 = vunpack.c.h.b16 %v1288
        %v2453 = vunpack.c.l.b16 %v1289
        %v2454 = vunpack.c.h.b16 %v1289
        %v2455 = vunpack.c.l.b16 %v1290
        %v2456 = vunpack.c.h.b16 %v1290
        %v2457 = vunpack.c.l.b16 %v1291
        %v2458 = vunpack.c.h.b16 %v1291
        %v2459 = vunpack.c.l.b16 %v1292
        %v2460 = vunpack.c.h.b16 %v1292
        %v2461 = vunpack.c.l.b16 %v1293
        %v2462 = vunpack.c.l.b16 %v1294
        %v2463 = vunpack.c.h.b16 %v1294
        %v2464 = vunpack.c.l.b16 %v1295
        %v2465 = vunpack.c.h.b16 %v1295
        %v2466 = vunpack.c.l.b16 %v1296
        %v2467 = vunpack.c.h.b16 %v1296
        %v2468 = vunpack.c.l.b16 %v1297
        %v2469 = vunpack.c.h.b16 %v1297
        %v2470 = vunpack.c.l.b16 %v1298
        %v2471 = vunpack.c.h.b16 %v1298
        %v2472 = vunpack.c.l.b16 %v1299
        %v2473 = vunpack.c.h.b16 %v1299
        %v2474 = vunpack.c.l.b16 %v1300
        %v2475 = vunpack.c.h.b16 %v1300
        %v2476 = vunpack.c.l.b16 %v1301
        %v2477 = vunpack.c.h.b16 %v1301
        %v2478 = vunpack.c.l.b16 %v1302
        %v2479 = vunpack.c.l.b16 %v1303
        %v2480 = vunpack.c.h.b16 %v1303
        %v2481 = vunpack.c.l.b16 %v1304
        %v2482 = vunpack.c.h.b16 %v1304
        %v2483 = vunpack.c.l.b16 %v1305
        %v2484 = vunpack.c.h.b16 %v1305
        %v2485 = vunpack.c.l.b16 %v1306
        %v2486 = vunpack.c.h.b16 %v1306
        %v2487 = vunpack.c.l.b16 %v1307
        %v2488 = vunpack.c.h.b16 %v1307
        %v2489 = vunpack.c.l.b16 %v1308
        %v2490 = vunpack.c.h.b16 %v1308
        %v2491 = vunpack.c.l.b16 %v1309
        %v2492 = vunpack.c.h.b16 %v1309
        %v2493 = vunpack.c.l.b16 %v1310
        %v2494 = vunpack.c.h.b16 %v1310
        %v2495 = vunpack.c.l.b16 %v1311
        %v2496 = vunpack.c.l.b16 %v1312
        %v2497 = vunpack.c.h.b16 %v1312
        %v2498 = vunpack.c.l.b16 %v1313
        %v2499 = vunpack.c.h.b16 %v1313
        %v2500 = vunpack.c.l.b16 %v1314
        %v2501 = vunpack.c.h.b16 %v1314
        %v2502 = vunpack.c.l.b16 %v1315
        %v2503 = vunpack.c.h.b16 %v1315
        %v2504 = vunpack.c.l.b16 %v1316
        %v2505 = vunpack.c.h.b16 %v1316
        %v2506 = vunpack.c.l.b16 %v1317
        %v2507 = vunpack.c.h.b16 %v1317
        %v2508 = vunpack.c.l.b16 %v1318
        %v2509 = vunpack.c.h.b16 %v1318
        %v2510 = vunpack.c.l.b16 %v1319
        %v2511 = vunpack.c.h.b16 %v1319
        %v2512 = vunpack.c.l.b16 %v1320
        %v2513 = vunpack.c.l.b16 %v1321
        %v2514 = vunpack.c.h.b16 %v1321
        %v2515 = vunpack.c.l.b16 %v1322
        %v2516 = vunpack.c.h.b16 %v1322
        %v2517 = vunpack.c.l.b16 %v1323
        %v2518 = vunpack.c.h.b16 %v1323
        %v2519 = vunpack.c.l.b16 %v1324
        %v2520 = vunpack.c.h.b16 %v1324
        %v2521 = vunpack.c.l.b16 %v1325
        %v2522 = vunpack.c.h.b16 %v1325
        %v2523 = vunpack.c.l.b16 %v1326
        %v2524 = vunpack.c.h.b16 %v1326
        %v2525 = vunpack.c.l.b16 %v1327
        %v2526 = vunpack.c.h.b16 %v1327
        %v2527 = vunpack.c.l.b16 %v1328
        %v2528 = vunpack.c.h.b16 %v1328
        %v2529 = vunpack.c.l.b16 %v1329
        %v2530 = vunpack.c.l.b16 %v1330
        %v2531 = vunpack.c.h.b16 %v1330
        %v2532 = vunpack.c.l.b16 %v1331
        %v2533 = vunpack.c.h.b16 %v1331
        %v2534 = vunpack.c.l.b16 %v1332
        %v2535 = vunpack.c.h.b16 %v1332
        %v2536 = vunpack.c.l.b16 %v1333
        %v2537 = vunpack.c.h.b16 %v1333
        %v2538 = vunpack.c.l.b16 %v1334
        %v2539 = vunpack.c.h.b16 %v1334
        %v2540 = vunpack.c.l.b16 %v1335
        %v2541 = vunpack.c.h.b16 %v1335
        %v2542 = vunpack.c.l.b16 %v1336
        %v2543 = vunpack.c.h.b16 %v1336
        %v2544 = vunpack.c.l.b16 %v1337
        %v2545 = vunpack.c.h.b16 %v1337
        %v2546 = vunpack.c.l.b16 %v1338
        %v2547 = vunpack.c.l.b16 %v1339
        %v2548 = vunpack.c.h.b16 %v1339
        %v2549 = vunpack.c.l.b16 %v1340
        %v2550 = vunpack.c.h.b16 %v1340
        %v2551 = vunpack.c.l.b16 %v1341
        %v2552 = vunpack.c.h.b16 %v1341
        %v2553 = vunpack.c.l.b16 %v1342
        %v2554 = vunpack.c.h.b16 %v1342
        %v2555 = vunpack.c.l.b16 %v1343
        %v2556 = vunpack.c.h.b16 %v1343
        %v2557 = vunpack.c.l.b16 %v1344
        %v2558 = vunpack.c.h.b16 %v1344
        %v2559 = vunpack.c.l.b16 %v1345
        %v2560 = vunpack.c.h.b16 %v1345
        %v2561 = vunpack.c.l.b16 %v1346
        %v2562 = vunpack.c.h.b16 %v1346
        %v2563 = vunpack.c.l.b16 %v1347
        %v2564 = vunpack.c.l.b16 %v1348
        %v2565 = vunpack.c.h.b16 %v1348
        %v2566 = vunpack.c.l.b16 %v1349
        %v2567 = vunpack.c.h.b16 %v1349
        %v2568 = vunpack.c.l.b16 %v1350
        %v2569 = vunpack.c.h.b16 %v1350
        %v2570 = vunpack.c.l.b16 %v1351
        %v2571 = vunpack.c.h.b16 %v1351
        %v2572 = vunpack.c.l.b16 %v1352
        %v2573 = vunpack.c.h.b16 %v1352
        %v2574 = vunpack.c.l.b16 %v1353
        %v2575 = vunpack.c.h.b16 %v1353
        %v2576 = vunpack.c.l.b16 %v1354
        %v2577 = vunpack.c.h.b16 %v1354
        %v2578 = vunpack.c.l.b16 %v1355
        %v2579 = vunpack.c.h.b16 %v1355
        %v2580 = vunpack.c.l.b16 %v1356
        %v2581 = vunpack.c.l.b16 %v1357
        %v2582 = vunpack.c.h.b16 %v1357
        %v2583 = vunpack.c.l.b16 %v1358
        %v2584 = vunpack.c.h.b16 %v1358
        %v2585 = vunpack.c.l.b16 %v1359
        %v2586 = vunpack.c.h.b16 %v1359
        %v2587 = vunpack.c.l.b16 %v1360
        %v2588 = vunpack.c.h.b16 %v1360
        %v2589 = vunpack.c.l.b16 %v1361
        %v2590 = vunpack.c.h.b16 %v1361
        %v2591 = vunpack.c.l.b16 %v1362
        %v2592 = vunpack.c.h.b16 %v1362
        %v2593 = vunpack.c.l.b16 %v1363
        %v2594 = vunpack.c.h.b16 %v1363
        %v2595 = vunpack.c.l.b16 %v1364
        %v2596 = vunpack.c.h.b16 %v1364
        %v2597 = vunpack.c.l.b16 %v1365
        %v2598 = vunpack.c.l.b16 %v1366
        %v2599 = vunpack.c.h.b16 %v1366
        %v2600 = vunpack.c.l.b16 %v1367
        %v2601 = vunpack.c.h.b16 %v1367
        %v2602 = vunpack.c.l.b16 %v1368
        %v2603 = vunpack.c.h.b16 %v1368
        %v2604 = vunpack.c.l.b16 %v1369
        %v2605 = vunpack.c.h.b16 %v1369
        %v2606 = vunpack.c.l.b16 %v1370
        %v2607 = vunpack.c.h.b16 %v1370
        %v2608 = vunpack.c.l.b16 %v1371
        %v2609 = vunpack.c.h.b16 %v1371
        %v2610 = vunpack.c.l.b16 %v1372
        %v2611 = vunpack.c.h.b16 %v1372
        %v2612 = vunpack.c.l.b16 %v1373
        %v2613 = vunpack.c.h.b16 %v1373
        %v2614 = vunpack.c.l.b16 %v1374
        %v2615 = vunpack.c.l.b16 %v1375
        %v2616 = vunpack.c.h.b16 %v1375
        %v2617 = vunpack.c.l.b16 %v1376
        %v2618 = vunpack.c.h.b16 %v1376
        %v2619 = vunpack.c.l.b16 %v1377
        %v2620 = vunpack.c.h.b16 %v1377
        %v2621 = vunpack.c.l.b16 %v1378
        %v2622 = vunpack.c.h.b16 %v1378
        %v2623 = vunpack.c.l.b16 %v1379
        %v2624 = vunpack.c.h.b16 %v1379
        %v2625 = vunpack.c.l.b16 %v1380
        %v2626 = vunpack.c.h.b16 %v1380
        %v2627 = vunpack.c.l.b16 %v1381
        %v2628 = vunpack.c.h.b16 %v1381
        %v2629 = vunpack.c.l.b16 %v1382
        %v2630 = vunpack.c.h.b16 %v1382
        %v2631 = vunpack.c.l.b16 %v1383
        %v2632 = vunpack.c.l.b16 %v1384
        %v2633 = vunpack.c.h.b16 %v1384
        %v2634 = vunpack.c.l.b16 %v1385
        %v2635 = vunpack.c.h.b16 %v1385
        %v2636 = vunpack.c.l.b16 %v1386
        %v2637 = vunpack.c.h.b16 %v1386
        %v2638 = vunpack.c.l.b16 %v1387
        %v2639 = vunpack.c.h.b16 %v1387
        %v2640 = vunpack.c.l.b16 %v1388
        %v2641 = vunpack.c.h.b16 %v1388
        %v2642 = vunpack.c.l.b16 %v1389
        %v2643 = vunpack.c.h.b16 %v1389
        %v2644 = vunpack.c.l.b16 %v1390
        %v2645 = vunpack.c.h.b16 %v1390
        %v2646 = vunpack.c.l.b16 %v1391
        %v2647 = vunpack.c.h.b16 %v1391
        %v2648 = vunpack.c.l.b16 %v1392
        %v2649 = vunpack.c.l.b16 %v1393
        %v2650 = vunpack.c.h.b16 %v1393
        %v2651 = vunpack.c.l.b16 %v1394
        %v2652 = vunpack.c.h.b16 %v1394
        %v2653 = vunpack.c.l.b16 %v1395
        %v2654 = vunpack.c.h.b16 %v1395
        %v2655 = vunpack.c.l.b16 %v1396
        %v2656 = vunpack.c.h.b16 %v1396
        %v2657 = vunpack.c.l.b16 %v1397
        %v2658 = vunpack.c.h.b16 %v1397
        %v2659 = vunpack.c.l.b16 %v1398
        %v2660 = vunpack.c.h.b16 %v1398
        %v2661 = vunpack.c.l.b16 %v1399
        %v2662 = vunpack.c.h.b16 %v1399
        %v2663 = vunpack.c.l.b16 %v1400
        %v2664 = vunpack.c.h.b16 %v1400
        %v2665 = vunpack.c.l.b16 %v1401
        %v2666 = vunpack.c.l.b16 %v1402
        %v2667 = vunpack.c.h.b16 %v1402
        %v2668 = vunpack.c.l.b16 %v1403
        %v2669 = vunpack.c.h.b16 %v1403
        %v2670 = vunpack.c.l.b16 %v1404
        %v2671 = vunpack.c.h.b16 %v1404
        %v2672 = vunpack.c.l.b16 %v1405
        %v2673 = vunpack.c.h.b16 %v1405
        %v2674 = vunpack.c.l.b16 %v1406
        %v2675 = vunpack.c.h.b16 %v1406
        %v2676 = vunpack.c.l.b16 %v1407
        %v2677 = vunpack.c.h.b16 %v1407
        %v2678 = vunpack.c.l.b16 %v1408
        %v2679 = vunpack.c.h.b16 %v1408
        %v2680 = vunpack.c.l.b16 %v1409
        %v2681 = vunpack.c.h.b16 %v1409
        %v2682 = vunpack.c.l.b16 %v1410
        %v2683 = vunpack.c.l.b16 %v1411
        %v2684 = vunpack.c.h.b16 %v1411
        %v2685 = vunpack.c.l.b16 %v1412
        %v2686 = vunpack.c.h.b16 %v1412
        %v2687 = vunpack.c.l.b16 %v1413
        %v2688 = vunpack.c.h.b16 %v1413
        %v2689 = vunpack.c.l.b16 %v1414
        %v2690 = vunpack.c.h.b16 %v1414
        %v2691 = vunpack.c.l.b16 %v1415
        %v2692 = vunpack.c.h.b16 %v1415
        %v2693 = vunpack.c.l.b16 %v1416
        %v2694 = vunpack.c.h.b16 %v1416
        %v2695 = vunpack.c.l.b16 %v1417
        %v2696 = vunpack.c.h.b16 %v1417
        %v2697 = vunpack.c.l.b16 %v1418
        %v2698 = vunpack.c.h.b16 %v1418
        %v2699 = vunpack.c.l.b16 %v1419
        %v2700 = vunpack.c.l.b16 %v1420
        %v2701 = vunpack.c.h.b16 %v1420
        %v2702 = vunpack.c.l.b16 %v1421
        %v2703 = vunpack.c.h.b16 %v1421
        %v2704 = vunpack.c.l.b16 %v1422
        %v2705 = vunpack.c.h.b16 %v1422
        %v2706 = vunpack.c.l.b16 %v1423
        %v2707 = vunpack.c.h.b16 %v1423
        %v2708 = vunpack.c.l.b16 %v1424
        %v2709 = vunpack.c.h.b16 %v1424
        %v2710 = vunpack.c.l.b16 %v1425
        %v2711 = vunpack.c.h.b16 %v1425
        %v2712 = vunpack.c.l.b16 %v1426
        %v2713 = vunpack.c.h.b16 %v1426
        %v2714 = vunpack.c.l.b16 %v1427
        %v2715 = vunpack.c.h.b16 %v1427
        %v2716 = vunpack.c.l.b16 %v1428
        %v2717 = vunpack.c.l.b16 %v1429
        %v2718 = vunpack.c.h.b16 %v1429
        %v2719 = vunpack.c.l.b16 %v1430
        %v2720 = vunpack.c.h.b16 %v1430
        %v2721 = vunpack.c.l.b16 %v1431
        %v2722 = vunpack.c.h.b16 %v1431
        %v2723 = vunpack.c.l.b16 %v1432
        %v2724 = vunpack.c.h.b16 %v1432
        %v2725 = vunpack.c.l.b16 %v1433
        %v2726 = vunpack.c.h.b16 %v1433
        %v2727 = vunpack.c.l.b16 %v1434
        %v2728 = vunpack.c.h.b16 %v1434
        %v2729 = vunpack.c.l.b16 %v1435
        %v2730 = vunpack.c.h.b16 %v1435
        %v2731 = vunpack.c.l.b16 %v1436
        %v2732 = vunpack.c.h.b16 %v1436
        %v2733 = vunpack.c.l.b16 %v1437
        %v2734 = vunpack.c.l.b16 %v1438
        %v2735 = vunpack.c.h.b16 %v1438
        %v2736 = vunpack.c.l.b16 %v1439
        %v2737 = vunpack.c.h.b16 %v1439
        %v2738 = vunpack.c.l.b16 %v1440
        %v2739 = vunpack.c.h.b16 %v1440
        %v2740 = vunpack.c.l.b16 %v1441
        %v2741 = vunpack.c.h.b16 %v1441
        %v2742 = vunpack.c.l.b16 %v1442
        %v2743 = vunpack.c.h.b16 %v1442
        %v2744 = vunpack.c.l.b16 %v1443
        %v2745 = vunpack.c.h.b16 %v1443
        %v2746 = vunpack.c.l.b16 %v1444
        %v2747 = vunpack.c.h.b16 %v1444
        %v2748 = vunpack.c.l.b16 %v1445
        %v2749 = vunpack.c.h.b16 %v1445
        %v2750 = vunpack.c.l.b16 %v1446
        %v2751 = vunpack.c.l.b16 %v1447
        %v2752 = vunpack.c.h.b16 %v1447
        %v2753 = vunpack.c.l.b16 %v1448
        %v2754 = vunpack.c.h.b16 %v1448
        %v2755 = vunpack.c.l.b16 %v1449
        %v2756 = vunpack.c.h.b16 %v1449
        %v2757 = vunpack.c.l.b16 %v1450
        %v2758 = vunpack.c.h.b16 %v1450
        %v2759 = vunpack.c.l.b16 %v1451
        %v2760 = vunpack.c.h.b16 %v1451
        %v2761 = vunpack.c.l.b16 %v1452
        %v2762 = vunpack.c.h.b16 %v1452
        %v2763 = vunpack.c.l.b16 %v1453
        %v2764 = vunpack.c.h.b16 %v1453
        %v2765 = vunpack.c.l.b16 %v1454
        %v2766 = vunpack.c.h.b16 %v1454
        %v2767 = vunpack.c.l.b16 %v1455
        %v2768 = vunpack.c.l.b16 %v1456
        %v2769 = vunpack.c.h.b16 %v1456
        %v2770 = vunpack.c.l.b16 %v1457
        %v2771 = vunpack.c.h.b16 %v1457
        %v2772 = vunpack.c.l.b16 %v1458
        %v2773 = vunpack.c.h.b16 %v1458
        %v2774 = vunpack.c.l.b16 %v1459
        %v2775 = vunpack.c.h.b16 %v1459
        %v2776 = vunpack.c.l.b16 %v1460
        %v2777 = vunpack.c.h.b16 %v1460
        %v2778 = vunpack.c.l.b16 %v1461
        %v2779 = vunpack.c.h.b16 %v1461
        %v2780 = vunpack.c.l.b16 %v1462
        %v2781 = vunpack.c.h.b16 %v1462
        %v2782 = vunpack.c.l.b16 %v1463
        %v2783 = vunpack.c.h.b16 %v1463
        %v2784 = vunpack.c.l.b16 %v1464
        %v2785 = vunpack.c.l.b16 %v1465
        %v2786 = vunpack.c.h.b16 %v1465
        %v2787 = vunpack.c.l.b16 %v1466
        %v2788 = vunpack.c.h.b16 %v1466
        %v2789 = vunpack.c.l.b16 %v1467
        %v2790 = vunpack.c.h.b16 %v1467
        %v2791 = vunpack.c.l.b16 %v1468
        %v2792 = vunpack.c.h.b16 %v1468
        %v2793 = vunpack.c.l.b16 %v1469
        %v2794 = vunpack.c.h.b16 %v1469
        %v2795 = vunpack.c.l.b16 %v1470
        %v2796 = vunpack.c.h.b16 %v1470
        %v2797 = vunpack.c.l.b16 %v1471
        %v2798 = vunpack.c.h.b16 %v1471
        %v2799 = vunpack.c.l.b16 %v1472
        %v2800 = vunpack.c.h.b16 %v1472
        %v2801 = vunpack.c.l.b16 %v1473
        %v2802 = vunpack.c.l.b16 %v1474
        %v2803 = vunpack.c.h.b16 %v1474
        %v2804 = vunpack.c.l.b16 %v1475
        %v2805 = vunpack.c.h.b16 %v1475
        %v2806 = vunpack.c.l.b16 %v1476
        %v2807 = vunpack.c.h.b16 %v1476
        %v2808 = vunpack.c.l.b16 %v1477
        %v2809 = vunpack.c.h.b16 %v1477
        %v2810 = vunpack.c.l.b16 %v1478
        %v2811 = vunpack.c.h.b16 %v1478
        %v2812 = vunpack.c.l.b16 %v1479
        %v2813 = vunpack.c.h.b16 %v1479
        %v2814 = vunpack.c.l.b16 %v1480
        %v2815 = vunpack.c.h.b16 %v1480
        %v2816 = vunpack.c.l.b16 %v1481
        %v2817 = vunpack.c.h.b16 %v1481
        %v2818 = vunpack.c.l.b16 %v1482
        %v2819 = vunpack.c.l.b16 %v1483
        %v2820 = vunpack.c.h.b16 %v1483
        %v2821 = vunpack.c.l.b16 %v1484
        %v2822 = vunpack.c.h.b16 %v1484
        %v2823 = vunpack.c.l.b16 %v1485
        %v2824 = vunpack.c.h.b16 %v1485
        %v2825 = vunpack.c.l.b16 %v1486
        %v2826 = vunpack.c.h.b16 %v1486
        %v2827 = vunpack.c.l.b16 %v1487
        %v2828 = vunpack.c.h.b16 %v1487
        %v2829 = vunpack.c.l.b16 %v1488
        %v2830 = vunpack.c.h.b16 %v1488
        %v2831 = vunpack.c.l.b16 %v1489
        %v2832 = vunpack.c.h.b16 %v1489
        %v2833 = vunpack.c.l.b16 %v1490
        %v2834 = vunpack.c.h.b16 %v1490
        %v2835 = vunpack.c.l.b16 %v1491
        %v2836 = vunpack.c.l.b16 %v1492
        %v2837 = vunpack.c.h.b16 %v1492
        %v2838 = vunpack.c.l.b16 %v1493
        %v2839 = vunpack.c.h.b16 %v1493
        %v2840 = vunpack.c.l.b16 %v1494
        %v2841 = vunpack.c.h.b16 %v1494
        %v2842 = vunpack.c.l.b16 %v1495
        %v2843 = vunpack.c.h.b16 %v1495
        %v2844 = vunpack.c.l.b16 %v1496
        %v2845 = vunpack.c.h.b16 %v1496
        %v2846 = vunpack.c.l.b16 %v1497
        %v2847 = vunpack.c.h.b16 %v1497
        %v2848 = vunpack.c.l.b16 %v1498
        %v2849 = vunpack.c.h.b16 %v1498
        %v2850 = vunpack.c.l.b16 %v1499
        %v2851 = vunpack.c.h.b16 %v1499
        %v2852 = vunpack.c.l.b16 %v1500
        %v2853 = vunpack.c.l.b16 %v1501
        %v2854 = vunpack.c.h.b16 %v1501
        %v2855 = vunpack.c.l.b16 %v1502
        %v2856 = vunpack.c.h.b16 %v1502
        %v2857 = vunpack.c.l.b16 %v1503
        %v2858 = vunpack.c.h.b16 %v1503
        %v2859 = vunpack.c.l.b16 %v1504
        %v2860 = vunpack.c.h.b16 %v1504
        %v2861 = vunpack.c.l.b16 %v1505
        %v2862 = vunpack.c.h.b16 %v1505
        %v2863 = vunpack.c.l.b16 %v1506
        %v2864 = vunpack.c.h.b16 %v1506
        %v2865 = vunpack.c.l.b16 %v1507
        %v2866 = vunpack.c.h.b16 %v1507
        %v2867 = vunpack.c.l.b16 %v1508
        %v2868 = vunpack.c.h.b16 %v1508
        %v2869 = vunpack.c.l.b16 %v1509
        %v2870 = vunpack.c.l.b16 %v1510
        %v2871 = vunpack.c.h.b16 %v1510
        %v2872 = vunpack.c.l.b16 %v1511
        %v2873 = vunpack.c.h.b16 %v1511
        %v2874 = vunpack.c.l.b16 %v1512
        %v2875 = vunpack.c.h.b16 %v1512
        %v2876 = vunpack.c.l.b16 %v1513
        %v2877 = vunpack.c.h.b16 %v1513
        %v2878 = vunpack.c.l.b16 %v1514
        %v2879 = vunpack.c.h.b16 %v1514
        %v2880 = vunpack.c.l.b16 %v1515
        %v2881 = vunpack.c.h.b16 %v1515
        %v2882 = vunpack.c.l.b16 %v1516
        %v2883 = vunpack.c.h.b16 %v1516
        %v2884 = vunpack.c.l.b16 %v1517
        %v2885 = vunpack.c.h.b16 %v1517
        %v2886 = vunpack.c.l.b16 %v1518
        %v2887 = vunpack.c.l.b16 %v1519
        %v2888 = vunpack.c.h.b16 %v1519
        %v2889 = vunpack.c.l.b16 %v1520
        %v2890 = vunpack.c.h.b16 %v1520
        %v2891 = vunpack.c.l.b16 %v1521
        %v2892 = vunpack.c.h.b16 %v1521
        %v2893 = vunpack.c.l.b16 %v1522
        %v2894 = vunpack.c.h.b16 %v1522
        %v2895 = vunpack.c.l.b16 %v1523
        %v2896 = vunpack.c.h.b16 %v1523
        %v2897 = vunpack.c.l.b16 %v1524
        %v2898 = vunpack.c.h.b16 %v1524
        %v2899 = vunpack.c.l.b16 %v1525
        %v2900 = vunpack.c.h.b16 %v1525
        %v2901 = vunpack.c.l.b16 %v1526
        %v2902 = vunpack.c.h.b16 %v1526
        %v2903 = vunpack.c.l.b16 %v1527
        %v2904 = vunpack.c.l.b16 %v1528
        %v2905 = vunpack.c.h.b16 %v1528
        %v2906 = vunpack.c.l.b16 %v1529
        %v2907 = vunpack.c.h.b16 %v1529
        %v2908 = vunpack.c.l.b16 %v1530
        %v2909 = vunpack.c.h.b16 %v1530
        %v2910 = vunpack.c.l.b16 %v1531
        %v2911 = vunpack.c.h.b16 %v1531
        %v2912 = vunpack.c.l.b16 %v1532
        %v2913 = vunpack.c.h.b16 %v1532
        %v2914 = vunpack.c.l.b16 %v1533
        %v2915 = vunpack.c.h.b16 %v1533
        %v2916 = vunpack.c.l.b16 %v1534
        %v2917 = vunpack.c.h.b16 %v1534
        %v2918 = vunpack.c.l.b16 %v1535
        %v2919 = vunpack.c.h.b16 %v1535
        %v2920 = vunpack.c.l.b16 %v1536
        %v2921 = vunpack.c.l.b16 %v1537
        %v2922 = vunpack.c.h.b16 %v1537
        %v2923 = vunpack.c.l.b16 %v1538
        %v2924 = vunpack.c.h.b16 %v1538
        %v2925 = vunpack.c.l.b16 %v1539
        %v2926 = vunpack.c.h.b16 %v1539
        %v2927 = vunpack.c.l.b16 %v1540
        %v2928 = vunpack.c.h.b16 %v1540
        %v2929 = vunpack.c.l.b16 %v1541
        %v2930 = vunpack.c.h.b16 %v1541
        %v2931 = vunpack.c.l.b16 %v1542
        %v2932 = vunpack.c.h.b16 %v1542
        %v2933 = vunpack.c.l.b16 %v1543
        %v2934 = vunpack.c.h.b16 %v1543
        %v2935 = vunpack.c.l.b16 %v1544
        %v2936 = vunpack.c.h.b16 %v1544
        %v2937 = vunpack.c.l.b16 %v1545
        %v2938 = vunpack.c.l.b16 %v1546
        %v2939 = vunpack.c.h.b16 %v1546
        %v2940 = vunpack.c.l.b16 %v1547
        %v2941 = vunpack.c.h.b16 %v1547
        %v2942 = vunpack.c.l.b16 %v1548
        %v2943 = vunpack.c.h.b16 %v1548
        %v2944 = vunpack.c.l.b16 %v1549
        %v2945 = vunpack.c.h.b16 %v1549
        %v2946 = vunpack.c.l.b16 %v1550
        %v2947 = vunpack.c.h.b16 %v1550
        %v2948 = vunpack.c.l.b16 %v1551
        %v2949 = vunpack.c.h.b16 %v1551
        %v2950 = vunpack.c.l.b16 %v1552
        %v2951 = vunpack.c.h.b16 %v1552
        %v2952 = vunpack.c.l.b16 %v1553
        %v2953 = vunpack.c.h.b16 %v1553
        %v2954 = vunpack.c.l.b16 %v1554
        %v2955 = vunpack.c.l.b16 %v1555
        %v2956 = vunpack.c.h.b16 %v1555
        %v2957 = vunpack.c.l.b16 %v1556
        %v2958 = vunpack.c.h.b16 %v1556
        %v2959 = vunpack.c.l.b16 %v1557
        %v2960 = vunpack.c.h.b16 %v1557
        %v2961 = vunpack.c.l.b16 %v1558
        %v2962 = vunpack.c.h.b16 %v1558
        %v2963 = vunpack.c.l.b16 %v1559
        %v2964 = vunpack.c.h.b16 %v1559
        %v2965 = vunpack.c.l.b16 %v1560
        %v2966 = vunpack.c.h.b16 %v1560
        %v2967 = vunpack.c.l.b16 %v1561
        %v2968 = vunpack.c.h.b16 %v1561
        %v2969 = vunpack.c.l.b16 %v1562
        %v2970 = vunpack.c.h.b16 %v1562
        %v2971 = vunpack.c.l.b16 %v1563
        %v2972 = vunpack.c.l.b16 %v1564
        %v2973 = vunpack.c.h.b16 %v1564
        %v2974 = vunpack.c.l.b16 %v1565
        %v2975 = vunpack.c.h.b16 %v1565
        %v2976 = vunpack.c.l.b16 %v1566
        %v2977 = vunpack.c.h.b16 %v1566
        %v2978 = vunpack.c.l.b16 %v1567
        %v2979 = vunpack.c.h.b16 %v1567
        %v2980 = vunpack.c.l.b16 %v1568
        %v2981 = vunpack.c.h.b16 %v1568
        %v2982 = vunpack.c.l.b16 %v1569
        %v2983 = vunpack.c.h.b16 %v1569
        %v2984 = vunpack.c.l.b16 %v1570
        %v2985 = vunpack.c.h.b16 %v1570
        %v2986 = vunpack.c.l.b16 %v1571
        %v2987 = vunpack.c.h.b16 %v1571
        %v2988 = vunpack.c.l.b16 %v1572
        %v2989 = vunpack.c.l.b16 %v1573
        %v2990 = vunpack.c.h.b16 %v1573
        %v2991 = vunpack.c.l.b16 %v1574
        %v2992 = vunpack.c.h.b16 %v1574
        %v2993 = vunpack.c.l.b16 %v1575
        %v2994 = vunpack.c.h.b16 %v1575
        %v2995 = vunpack.c.l.b16 %v1576
        %v2996 = vunpack.c.h.b16 %v1576
        %v2997 = vunpack.c.l.b16 %v1577
        %v2998 = vunpack.c.h.b16 %v1577
        %v2999 = vunpack.c.l.b16 %v1578
        %v3000 = vunpack.c.h.b16 %v1578
        %v3001 = vunpack.c.l.b16 %v1579
        %v3002 = vunpack.c.h.b16 %v1579
        %v3003 = vunpack.c.l.b16 %v1580
        %v3004 = vunpack.c.h.b16 %v1580
        %v3005 = vunpack.c.l.b16 %v1581
        %v3006 = vunpack.c.l.b16 %v1582
        %v3007 = vunpack.c.h.b16 %v1582
        %v3008 = vunpack.c.l.b16 %v1583
        %v3009 = vunpack.c.h.b16 %v1583
        %v3010 = vunpack.c.l.b16 %v1584
        %v3011 = vunpack.c.h.b16 %v1584
        %v3012 = vunpack.c.l.b16 %v1585
        %v3013 = vunpack.c.h.b16 %v1585
        %v3014 = vunpack.c.l.b16 %v1586
        %v3015 = vunpack.c.h.b16 %v1586
        %v3016 = vunpack.c.l.b16 %v1587
        %v3017 = vunpack.c.h.b16 %v1587
        %v3018 = vunpack.c.l.b16 %v1588
        %v3019 = vunpack.c.h.b16 %v1588
        %v3020 = vunpack.c.l.b16 %v1589
        %v3021 = vunpack.c.h.b16 %v1589
        %v3022 = vunpack.c.l.b16 %v1590
        %v3023 = vunpack.c.l.b16 %v1591
        %v3024 = vunpack.c.h.b16 %v1591
        %v3025 = vunpack.c.l.b16 %v1592
        %v3026 = vunpack.c.h.b16 %v1592
        %v3027 = vunpack.c.l.b16 %v1593
        %v3028 = vunpack.c.h.b16 %v1593
        %v3029 = vunpack.c.l.b16 %v1594
        %v3030 = vunpack.c.h.b16 %v1594
        %v3031 = vunpack.c.l.b16 %v1595
        %v3032 = vunpack.c.h.b16 %v1595
        %v3033 = vunpack.c.l.b16 %v1596
        %v3034 = vunpack.c.h.b16 %v1596
        %v3035 = vunpack.c.l.b16 %v1597
        %v3036 = vunpack.c.h.b16 %v1597
        %v3037 = vunpack.c.l.b16 %v1598
        %v3038 = vunpack.c.h.b16 %v1598
        %v3039 = vunpack.c.l.b16 %v1599
        %v3040 = vunpack.c.l.b16 %v1600
        %v3041 = vunpack.c.h.b16 %v1600
        %v3042 = vunpack.c.l.b16 %v1601
        %v3043 = vunpack.c.h.b16 %v1601
        %v3044 = vunpack.c.l.b16 %v1602
        %v3045 = vunpack.c.h.b16 %v1602
        %v3046 = vunpack.c.l.b16 %v1603
        %v3047 = vunpack.c.h.b16 %v1603
        %v3048 = vunpack.c.l.b16 %v1604
        %v3049 = vunpack.c.h.b16 %v1604
        %v3050 = vunpack.c.l.b16 %v1605
        %v3051 = vunpack.c.h.b16 %v1605
        %v3052 = vunpack.c.l.b16 %v1606
        %v3053 = vunpack.c.h.b16 %v1606
        %v3054 = vunpack.c.l.b16 %v1607
        %v3055 = vunpack.c.h.b16 %v1607
        %v3056 = vunpack.c.l.b16 %v1608
        %v3057 = vunpack.c.l.b16 %v1609
        %v3058 = vunpack.c.h.b16 %v1609
        %v3059 = vunpack.c.l.b16 %v1610
        %v3060 = vunpack.c.h.b16 %v1610
        %v3061 = vunpack.c.l.b16 %v1611
        %v3062 = vunpack.c.h.b16 %v1611
        %v3063 = vunpack.c.l.b16 %v1612
        %v3064 = vunpack.c.h.b16 %v1612
        %v3065 = vunpack.c.l.b16 %v1613
        %v3066 = vunpack.c.h.b16 %v1613
        %v3067 = vunpack.c.l.b16 %v1614
        %v3068 = vunpack.c.h.b16 %v1614
        %v3069 = vunpack.c.l.b16 %v1615
        %v3070 = vunpack.c.h.b16 %v1615
        %v3071 = vunpack.c.l.b16 %v1616
        %v3072 = vunpack.c.h.b16 %v1616
        %v3073 = vunpack.c.l.b16 %v1617
        %v3074 = vunpack.c.l.b16 %v1618
        %v3075 = vunpack.c.h.b16 %v1618
        %v3076 = vunpack.c.l.b16 %v1619
        %v3077 = vunpack.c.h.b16 %v1619
        %v3078 = vunpack.c.l.b16 %v1620
        %v3079 = vunpack.c.h.b16 %v1620
        %v3080 = vunpack.c.l.b16 %v1621
        %v3081 = vunpack.c.h.b16 %v1621
        %v3082 = vunpack.c.l.b16 %v1622
        %v3083 = vunpack.c.h.b16 %v1622
        %v3084 = vunpack.c.l.b16 %v1623
        %v3085 = vunpack.c.h.b16 %v1623
        %v3086 = vunpack.c.l.b16 %v1624
        %v3087 = vunpack.c.h.b16 %v1624
        %v3088 = vunpack.c.l.b16 %v1625
        %v3089 = vunpack.c.h.b16 %v1625
        %v3090 = vunpack.c.l.b16 %v1626
        %v3091 = vunpack.c.l.b16 %v1627
        %v3092 = vunpack.c.h.b16 %v1627
        %v3093 = vunpack.c.l.b16 %v1628
        %v3094 = vunpack.c.h.b16 %v1628
        %v3095 = vunpack.c.l.b16 %v1629
        %v3096 = vunpack.c.h.b16 %v1629
        %v3097 = vunpack.c.l.b16 %v1630
        %v3098 = vunpack.c.h.b16 %v1630
        %v3099 = vunpack.c.l.b16 %v1631
        %v3100 = vunpack.c.h.b16 %v1631
        %v3101 = vunpack.c.l.b16 %v1632
        %v3102 = vunpack.c.h.b16 %v1632
        %v3103 = vunpack.c.l.b16 %v1633
        %v3104 = vunpack.c.h.b16 %v1633
        %v3105 = vunpack.c.l.b16 %v1634
        %v3106 = vunpack.c.h.b16 %v1634
        %v3107 = vunpack.c.l.b16 %v1635
        %v3108 = vunpack.c.l.b16 %v1636
        %v3109 = vunpack.c.h.b16 %v1636
        %v3110 = vunpack.c.l.b16 %v1637
        %v3111 = vunpack.c.h.b16 %v1637
        %v3112 = vunpack.c.l.b16 %v1638
        %v3113 = vunpack.c.h.b16 %v1638
        %v3114 = vunpack.c.l.b16 %v1639
        %v3115 = vunpack.c.h.b16 %v1639
        %v3116 = vunpack.c.l.b16 %v1640
        %v3117 = vunpack.c.h.b16 %v1640
        %v3118 = vunpack.c.l.b16 %v1641
        %v3119 = vunpack.c.h.b16 %v1641
        %v3120 = vunpack.c.l.b16 %v1642
        %v3121 = vunpack.c.h.b16 %v1642
        %v3122 = vunpack.c.l.b16 %v1643
        %v3123 = vunpack.c.h.b16 %v1643
        %v3124 = vunpack.c.l.b16 %v1644
        %v3125 = vunpack.c.l.b16 %v1645
        %v3126 = vunpack.c.h.b16 %v1645
        %v3127 = vunpack.c.l.b16 %v1646
        %v3128 = vunpack.c.h.b16 %v1646
        %v3129 = vunpack.c.l.b16 %v1647
        %v3130 = vunpack.c.h.b16 %v1647
        %v3131 = vunpack.c.l.b16 %v1648
        %v3132 = vunpack.c.h.b16 %v1648
        %v3133 = vunpack.c.l.b16 %v1649
        %v3134 = vunpack.c.h.b16 %v1649
        %v3135 = vunpack.c.l.b16 %v1650
        %v3136 = vunpack.c.h.b16 %v1650
        %v3137 = vunpack.c.l.b16 %v1651
        %v3138 = vunpack.c.h.b16 %v1651
        %v3139 = vunpack.c.l.b16 %v1652
        %v3140 = vunpack.c.h.b16 %v1652
        %v3141 = vunpack.c.l.b16 %v1653
        %v3142 = vunpack.c.l.b16 %v1654
        %v3143 = vunpack.c.h.b16 %v1654
        %v3144 = vunpack.c.l.b16 %v1655
        %v3145 = vunpack.c.h.b16 %v1655
        %v3146 = vunpack.c.l.b16 %v1656
        %v3147 = vunpack.c.h.b16 %v1656
        %v3148 = vunpack.c.l.b16 %v1657
        %v3149 = vunpack.c.h.b16 %v1657
        %v3150 = vunpack.c.l.b16 %v1658
        %v3151 = vunpack.c.h.b16 %v1658
        %v3152 = vunpack.c.l.b16 %v1659
        %v3153 = vunpack.c.h.b16 %v1659
        %v3154 = vunpack.c.l.b16 %v1660
        %v3155 = vunpack.c.h.b16 %v1660
        %v3156 = vunpack.c.l.b16 %v1661
        %v3157 = vunpack.c.h.b16 %v1661
        %v3158 = vunpack.c.l.b16 %v1662
        %v3159 = vunpack.c.l.b16 %v1663
        %v3160 = vunpack.c.h.b16 %v1663
        %v3161 = vunpack.c.l.b16 %v1664
        %v3162 = vunpack.c.h.b16 %v1664
        %v3163 = vunpack.c.l.b16 %v1665
        %v3164 = vunpack.c.h.b16 %v1665
        %v3165 = vunpack.c.l.b16 %v1666
        %v3166 = vunpack.c.h.b16 %v1666
        %v3167 = vunpack.c.l.b16 %v1667
        %v3168 = vunpack.c.h.b16 %v1667
        %v3169 = vunpack.c.l.b16 %v1668
        %v3170 = vunpack.c.h.b16 %v1668
        %v3171 = vunpack.c.l.b16 %v1669
        %v3172 = vunpack.c.h.b16 %v1669
        %v3173 = vunpack.c.l.b16 %v1670
        %v3174 = vunpack.c.h.b16 %v1670
        %v3175 = vunpack.c.l.b16 %v1671
        %v3176 = vunpack.c.l.b16 %v1672
        %v3177 = vunpack.c.h.b16 %v1672
        %v3178 = vunpack.c.l.b16 %v1673
        %v3179 = vunpack.c.h.b16 %v1673
        %v3180 = vunpack.c.l.b16 %v1674
        %v3181 = vunpack.c.h.b16 %v1674
        %v3182 = vunpack.c.l.b16 %v1675
        %v3183 = vunpack.c.h.b16 %v1675
        %v3184 = vunpack.c.l.b16 %v1676
        %v3185 = vunpack.c.h.b16 %v1676
        %v3186 = vunpack.c.l.b16 %v1677
        %v3187 = vunpack.c.h.b16 %v1677
        %v3188 = vunpack.c.l.b16 %v1678
        %v3189 = vunpack.c.h.b16 %v1678
        %v3190 = vunpack.c.l.b16 %v1679
        %v3191 = vunpack.c.h.b16 %v1679
        %v3192 = vunpack.c.l.b16 %v1680
        %v3193 = vunpack.c.l.b16 %v1681
        %v3194 = vunpack.c.h.b16 %v1681
        %v3195 = vunpack.c.l.b16 %v1682
        %v3196 = vunpack.c.h.b16 %v1682
        %v3197 = vunpack.c.l.b16 %v1683
        %v3198 = vunpack.c.h.b16 %v1683
        %v3199 = vunpack.c.l.b16 %v1684
        %v3200 = vunpack.c.h.b16 %v1684
        %v3201 = vunpack.c.l.b16 %v1685
        %v3202 = vunpack.c.h.b16 %v1685
        %v3203 = vunpack.c.l.b16 %v1686
        %v3204 = vunpack.c.h.b16 %v1686
        %v3205 = vunpack.c.l.b16 %v1687
        %v3206 = vunpack.c.h.b16 %v1687
        %v3207 = vunpack.c.l.b16 %v1688
        %v3208 = vunpack.c.h.b16 %v1688
        %v3209 = vunpack.c.l.b16 %v1689
        %v3210 = vunpack.c.l.b16 %v1690
        %v3211 = vunpack.c.h.b16 %v1690
        %v3212 = vunpack.c.l.b16 %v1691
        %v3213 = vunpack.c.h.b16 %v1691
        %v3214 = vunpack.c.l.b16 %v1692
        %v3215 = vunpack.c.h.b16 %v1692
        %v3216 = vunpack.c.l.b16 %v1693
        %v3217 = vunpack.c.h.b16 %v1693
        %v3218 = vunpack.c.l.b16 %v1694
        %v3219 = vunpack.c.h.b16 %v1694
        %v3220 = vunpack.c.l.b16 %v1695
        %v3221 = vunpack.c.h.b16 %v1695
        %v3222 = vunpack.c.l.b16 %v1696
        %v3223 = vunpack.c.h.b16 %v1696
        %v3224 = vunpack.c.l.b16 %v1697
        %v3225 = vunpack.c.h.b16 %v1697
        %v3226 = vunpack.c.l.b16 %v1698
        %v3227 = vunpack.c.l.b16 %v1699
        %v3228 = vunpack.c.h.b16 %v1699
        %v3229 = vunpack.c.l.b16 %v1700
        %v3230 = vunpack.c.h.b16 %v1700
        %v3231 = vunpack.c.l.b16 %v1701
        %v3232 = vunpack.c.h.b16 %v1701
        %v3233 = vunpack.c.l.b16 %v1702
        %v3234 = vunpack.c.h.b16 %v1702
        %v3235 = vunpack.c.l.b16 %v1703
        %v3236 = vunpack.c.h.b16 %v1703
        %v3237 = vunpack.c.l.b16 %v1704
        %v3238 = vunpack.c.h.b16 %v1704
        %v3239 = vunpack.c.l.b16 %v1705
        %v3240 = vunpack.c.h.b16 %v1705
        %v3241 = vunpack.c.l.b16 %v1706
        %v3242 = vunpack.c.h.b16 %v1706
        %v3243 = vunpack.c.l.b16 %v1707
        %v3244 = vunpack.c.l.b16 %v1708
        %v3245 = vunpack.c.h.b16 %v1708
        %v3246 = vunpack.c.l.b16 %v1709
        %v3247 = vunpack.c.h.b16 %v1709
        %v3248 = vunpack.c.l.b16 %v1710
        %v3249 = vunpack.c.h.b16 %v1710
        %v3250 = vunpack.c.l.b16 %v1711
        %v3251 = vunpack.c.h.b16 %v1711
        %v3252 = vunpack.c.l.b16 %v1712
        %v3253 = vunpack.c.h.b16 %v1712
        %v3254 = vunpack.c.l.b16 %v1713
        %v3255 = vunpack.c.h.b16 %v1713
        %v3256 = vunpack.c.l.b16 %v1714
        %v3257 = vunpack.c.h.b16 %v1714
        %v3258 = vunpack.c.l.b16 %v1715
        %v3259 = vunpack.c.h.b16 %v1715
        %v3260 = vunpack.c.l.b16 %v1716
        %v3261 = vunpack.c.l.b16 %v1717
        %v3262 = vunpack.c.h.b16 %v1717
        %v3263 = vunpack.c.l.b16 %v1718
        %v3264 = vunpack.c.h.b16 %v1718
        %v3265 = vunpack.c.l.b16 %v1719
        %v3266 = vunpack.c.h.b16 %v1719
        %v3267 = vunpack.c.l.b16 %v1720
        %v3268 = vunpack.c.h.b16 %v1720
        %v3269 = vunpack.c.l.b16 %v1721
        %v3270 = vunpack.c.h.b16 %v1721
        %v3271 = vunpack.c.l.b16 %v1722
        %v3272 = vunpack.c.h.b16 %v1722
        %v3273 = vunpack.c.l.b16 %v1723
        %v3274 = vunpack.c.h.b16 %v1723
        %v3275 = vunpack.c.l.b16 %v1724
        %v3276 = vunpack.c.h.b16 %v1724
        %v3277 = vunpack.c.l.b16 %v1725
        %v3278 = vunpack.c.l.b16 %v1726
        %v3279 = vunpack.c.h.b16 %v1726
        %v3280 = vunpack.c.l.b16 %v1727
        %v3281 = vunpack.c.h.b16 %v1727
        %v3282 = vunpack.c.l.b16 %v1728
        %v3283 = vunpack.c.h.b16 %v1728
        %v3284 = vunpack.c.l.b16 %v1729
        %v3285 = vunpack.c.h.b16 %v1729
        %v3286 = vunpack.c.l.b16 %v1730
        %v3287 = vunpack.c.h.b16 %v1730
        %v3288 = vunpack.c.l.b16 %v1731
        %v3289 = vunpack.c.h.b16 %v1731
        %v3290 = vunpack.c.l.b16 %v1732
        %v3291 = vunpack.c.h.b16 %v1732
        %v3292 = vunpack.c.l.b16 %v1733
        %v3293 = vunpack.c.h.b16 %v1733
        %v3294 = vunpack.c.l.b16 %v1734
        %v3295 = vpack.c.b16 %v2360, %v2343
        %v3296 = vpack.c.b16 %v2361, %v2344
        %v3297 = vpack.c.b16 %v2362, %v2345
        %v3298 = vpack.c.b16 %v2363, %v2346
        %v3299 = vpack.c.b16 %v2364, %v2347
        %v3300 = vpack.c.b16 %v2365, %v2348
        %v3301 = vpack.c.b16 %v2366, %v2349
        %v3302 = vpack.c.b16 %v2367, %v2350
        %v3303 = vpack.c.b16 %v2368, %v2351
        %v3304 = vpack.c.b16 %v2369, %v2352
        %v3305 = vpack.c.b16 %v2370, %v2353
        %v3306 = vpack.c.b16 %v2371, %v2354
        %v3307 = vpack.c.b16 %v2372, %v2355
        %v3308 = vpack.c.b16 %v2373, %v2356
        %v3309 = vpack.c.b16 %v2374, %v2357
        %v3310 = vpack.c.b16 %v2375, %v2358
        %v3311 = vpack.c.b16 %v2376, %v2359
        %v3312 = vpack.c.b16 %v2394, %v2377
        %v3313 = vpack.c.b16 %v2395, %v2378
        %v3314 = vpack.c.b16 %v2396, %v2379
        %v3315 = vpack.c.b16 %v2397, %v2380
        %v3316 = vpack.c.b16 %v2398, %v2381
        %v3317 = vpack.c.b16 %v2399, %v2382
        %v3318 = vpack.c.b16 %v2400, %v2383
        %v3319 = vpack.c.b16 %v2401, %v2384
        %v3320 = vpack.c.b16 %v2402, %v2385
        %v3321 = vpack.c.b16 %v2403, %v2386
        %v3322 = vpack.c.b16 %v2404, %v2387
        %v3323 = vpack.c.b16 %v2405, %v2388
        %v3324 = vpack.c.b16 %v2406, %v2389
        %v3325 = vpack.c.b16 %v2407, %v2390
        %v3326 = vpack.c.b16 %v2408, %v2391
        %v3327 = vpack.c.b16 %v2409, %v2392
        %v3328 = vpack.c.b16 %v2410, %v2393
        %v3329 = vpack.c.b16 %v2428, %v2411
        %v3330 = vpack.c.b16 %v2429, %v2412
        %v3331 = vpack.c.b16 %v2430, %v2413
        %v3332 = vpack.c.b16 %v2431, %v2414
        %v3333 = vpack.c.b16 %v2432, %v2415
        %v3334 = vpack.c.b16 %v2433, %v2416
        %v3335 = vpack.c.b16 %v2434, %v2417
        %v3336 = vpack.c.b16 %v2435, %v2418
        %v3337 = vpack.c.b16 %v2436, %v2419
        %v3338 = vpack.c.b16 %v2437, %v2420
        %v3339 = vpack.c.b16 %v2438, %v2421
        %v3340 = vpack.c.b16 %v2439, %v2422
        %v3341 = vpack.c.b16 %v2440, %v2423
        %v3342 = vpack.c.b16 %v2441, %v2424
        %v3343 = vpack.c.b16 %v2442, %v2425
        %v3344 = vpack.c.b16 %v2443, %v2426
        %v3345 = vpack.c.b16 %v2444, %v2427
        %v3346 = vpack.c.b16 %v2462, %v2445
        %v3347 = vpack.c.b16 %v2463, %v2446
        %v3348 = vpack.c.b16 %v2464, %v2447
        %v3349 = vpack.c.b16 %v2465, %v2448
        %v3350 = vpack.c.b16 %v2466, %v2449
        %v3351 = vpack.c.b16 %v2467, %v2450
        %v3352 = vpack.c.b16 %v2468, %v2451
        %v3353 = vpack.c.b16 %v2469, %v2452
        %v3354 = vpack.c.b16 %v2470, %v2453
        %v3355 = vpack.c.b16 %v2471, %v2454
        %v3356 = vpack.c.b16 %v2472, %v2455
        %v3357 = vpack.c.b16 %v2473, %v2456
        %v3358 = vpack.c.b16 %v2474, %v2457
        %v3359 = vpack.c.b16 %v2475, %v2458
        %v3360 = vpack.c.b16 %v2476, %v2459
        %v3361 = vpack.c.b16 %v2477, %v2460
        %v3362 = vpack.c.b16 %v2478, %v2461
        %v3363 = vpack.c.b16 %v2496, %v2479
        %v3364 = vpack.c.b16 %v2497, %v2480
        %v3365 = vpack.c.b16 %v2498, %v2481
        %v3366 = vpack.c.b16 %v2499, %v2482
        %v3367 = vpack.c.b16 %v2500, %v2483
        %v3368 = vpack.c.b16 %v2501, %v2484
        %v3369 = vpack.c.b16 %v2502, %v2485
        %v3370 = vpack.c.b16 %v2503, %v2486
        %v3371 = vpack.c.b16 %v2504, %v2487
        %v3372 = vpack.c.b16 %v2505, %v2488
        %v3373 = vpack.c.b16 %v2506, %v2489
        %v3374 = vpack.c.b16 %v2507, %v2490
        %v3375 = vpack.c.b16 %v2508, %v2491
        %v3376 = vpack.c.b16 %v2509, %v2492
        %v3377 = vpack.c.b16 %v2510, %v2493
        %v3378 = vpack.c.b16 %v2511, %v2494
        %v3379 = vpack.c.b16 %v2512, %v2495
        %v3380 = vpack.c.b16 %v2530, %v2513
        %v3381 = vpack.c.b16 %v2531, %v2514
        %v3382 = vpack.c.b16 %v2532, %v2515
        %v3383 = vpack.c.b16 %v2533, %v2516
        %v3384 = vpack.c.b16 %v2534, %v2517
        %v3385 = vpack.c.b16 %v2535, %v2518
        %v3386 = vpack.c.b16 %v2536, %v2519
        %v3387 = vpack.c.b16 %v2537, %v2520
        %v3388 = vpack.c.b16 %v2538, %v2521
        %v3389 = vpack.c.b16 %v2539, %v2522
        %v3390 = vpack.c.b16 %v2540, %v2523
        %v3391 = vpack.c.b16 %v2541, %v2524
        %v3392 = vpack.c.b16 %v2542, %v2525
        %v3393 = vpack.c.b16 %v2543, %v2526
        %v3394 = vpack.c.b16 %v2544, %v2527
        %v3395 = vpack.c.b16 %v2545, %v2528
        %v3396 = vpack.c.b16 %v2546, %v2529
        %v3397 = vpack.c.b16 %v2564, %v2547
        %v3398 = vpack.c.b16 %v2565, %v2548
        %v3399 = vpack.c.b16 %v2566, %v2549
        %v3400 = vpack.c.b16 %v2567, %v2550
        %v3401 = vpack.c.b16 %v2568, %v2551
        %v3402 = vpack.c.b16 %v2569, %v2552
        %v3403 = vpack.c.b16 %v2570, %v2553
        %v3404 = vpack.c.b16 %v2571, %v2554
        %v3405 = vpack.c.b16 %v2572, %v2555
        %v3406 = vpack.c.b16 %v2573, %v2556
        %v3407 = vpack.c.b16 %v2574, %v2557
        %v3408 = vpack.c.b16 %v2575, %v2558
        %v3409 = vpack.c.b16 %v2576, %v2559
        %v3410 = vpack.c.b16 %v2577, %v2560
        %v3411 = vpack.c.b16 %v2578, %v2561
        %v3412 = vpack.c.b16 %v2579, %v2562
        %v3413 = vpack.c.b16 %v2580, %v2563
        %v3414 = vpack.c.b16 %v2598, %v2581
        %v3415 = vpack.c.b16 %v2599, %v2582
        %v3416 = vpack.c.b16 %v2600, %v2583
        %v3417 = vpack.c.b16 %v2601, %v2584
        %v3418 = vpack.c.b16 %v2602, %v2585
        %v3419 = vpack.c.b16 %v2603, %v2586
        %v3420 = vpack.c.b16 %v2604, %v2587
        %v3421 = vpack.c.b16 %v2605, %v2588
        %v3422 = vpack.c.b16 %v2606, %v2589
        %v3423 = vpack.c.b16 %v2607, %v2590
        %v3424 = vpack.c.b16 %v2608, %v2591
        %v3425 = vpack.c.b16 %v2609, %v2592
        %v3426 = vpack.c.b16 %v2610, %v2593
        %v3427 = vpack.c.b16 %v2611, %v2594
        %v3428 = vpack.c.b16 %v2612, %v2595
        %v3429 = vpack.c.b16 %v2613, %v2596
        %v3430 = vpack.c.b16 %v2614, %v2597
        %v3431 = vpack.c.b16 %v2632, %v2615
        %v3432 = vpack.c.b16 %v2633, %v2616
        %v3433 = vpack.c.b16 %v2634, %v2617
        %v3434 = vpack.c.b16 %v2635, %v2618
        %v3435 = vpack.c.b16 %v2636, %v2619
        %v3436 = vpack.c.b16 %v2637, %v2620
        %v3437 = vpack.c.b16 %v2638, %v2621
        %v3438 = vpack.c.b16 %v2639, %v2622
        %v3439 = vpack.c.b16 %v2640, %v2623
        %v3440 = vpack.c.b16 %v2641, %v2624
        %v3441 = vpack.c.b16 %v2642, %v2625
        %v3442 = vpack.c.b16 %v2643, %v2626
        %v3443 = vpack.c.b16 %v2644, %v2627
        %v3444 = vpack.c.b16 %v2645, %v2628
        %v3445 = vpack.c.b16 %v2646, %v2629
        %v3446 = vpack.c.b16 %v2647, %v2630
        %v3447 = vpack.c.b16 %v2648, %v2631
        %v3448 = vpack.c.b16 %v2666, %v2649
        %v3449 = vpack.c.b16 %v2667, %v2650
        %v3450 = vpack.c.b16 %v2668, %v2651
        %v3451 = vpack.c.b16 %v2669, %v2652
        %v3452 = vpack.c.b16 %v2670, %v2653
        %v3453 = vpack.c.b16 %v2671, %v2654
        %v3454 = vpack.c.b16 %v2672, %v2655
        %v3455 = vpack.c.b16 %v2673, %v2656
        %v3456 = vpack.c.b16 %v2674, %v2657
        %v3457 = vpack.c.b16 %v2675, %v2658
        %v3458 = vpack.c.b16 %v2676, %v2659
        %v3459 = vpack.c.b16 %v2677, %v2660
        %v3460 = vpack.c.b16 %v2678, %v2661
        %v3461 = vpack.c.b16 %v2679, %v2662
        %v3462 = vpack.c.b16 %v2680, %v2663
        %v3463 = vpack.c.b16 %v2681, %v2664
        %v3464 = vpack.c.b16 %v2682, %v2665
        %v3465 = vpack.c.b16 %v2700, %v2683
        %v3466 = vpack.c.b16 %v2701, %v2684
        %v3467 = vpack.c.b16 %v2702, %v2685
        %v3468 = vpack.c.b16 %v2703, %v2686
        %v3469 = vpack.c.b16 %v2704, %v2687
        %v3470 = vpack.c.b16 %v2705, %v2688
        %v3471 = vpack.c.b16 %v2706, %v2689
        %v3472 = vpack.c.b16 %v2707, %v2690
        %v3473 = vpack.c.b16 %v2708, %v2691
        %v3474 = vpack.c.b16 %v2709, %v2692
        %v3475 = vpack.c.b16 %v2710, %v2693
        %v3476 = vpack.c.b16 %v2711, %v2694
        %v3477 = vpack.c.b16 %v2712, %v2695
        %v3478 = vpack.c.b16 %v2713, %v2696
        %v3479 = vpack.c.b16 %v2714, %v2697
        %v3480 = vpack.c.b16 %v2715, %v2698
        %v3481 = vpack.c.b16 %v2716, %v2699
        %v3482 = vpack.c.b16 %v2734, %v2717
        %v3483 = vpack.c.b16 %v2735, %v2718
        %v3484 = vpack.c.b16 %v2736, %v2719
        %v3485 = vpack.c.b16 %v2737, %v2720
        %v3486 = vpack.c.b16 %v2738, %v2721
        %v3487 = vpack.c.b16 %v2739, %v2722
        %v3488 = vpack.c.b16 %v2740, %v2723
        %v3489 = vpack.c.b16 %v2741, %v2724
        %v3490 = vpack.c.b16 %v2742, %v2725
        %v3491 = vpack.c.b16 %v2743, %v2726
        %v3492 = vpack.c.b16 %v2744, %v2727
        %v3493 = vpack.c.b16 %v2745, %v2728
        %v3494 = vpack.c.b16 %v2746, %v2729
        %v3495 = vpack.c.b16 %v2747, %v2730
        %v3496 = vpack.c.b16 %v2748, %v2731
        %v3497 = vpack.c.b16 %v2749, %v2732
        %v3498 = vpack.c.b16 %v2750, %v2733
        %v3499 = vpack.c.b16 %v2768, %v2751
        %v3500 = vpack.c.b16 %v2769, %v2752
        %v3501 = vpack.c.b16 %v2770, %v2753
        %v3502 = vpack.c.b16 %v2771, %v2754
        %v3503 = vpack.c.b16 %v2772, %v2755
        %v3504 = vpack.c.b16 %v2773, %v2756
        %v3505 = vpack.c.b16 %v2774, %v2757
        %v3506 = vpack.c.b16 %v2775, %v2758
        %v3507 = vpack.c.b16 %v2776, %v2759
        %v3508 = vpack.c.b16 %v2777, %v2760
        %v3509 = vpack.c.b16 %v2778, %v2761
        %v3510 = vpack.c.b16 %v2779, %v2762
        %v3511 = vpack.c.b16 %v2780, %v2763
        %v3512 = vpack.c.b16 %v2781, %v2764
        %v3513 = vpack.c.b16 %v2782, %v2765
        %v3514 = vpack.c.b16 %v2783, %v2766
        %v3515 = vpack.c.b16 %v2784, %v2767
        %v3516 = vpack.c.b16 %v2802, %v2785
        %v3517 = vpack.c.b16 %v2803, %v2786
        %v3518 = vpack.c.b16 %v2804, %v2787
        %v3519 = vpack.c.b16 %v2805, %v2788
        %v3520 = vpack.c.b16 %v2806, %v2789
        %v3521 = vpack.c.b16 %v2807, %v2790
        %v3522 = vpack.c.b16 %v2808, %v2791
        %v3523 = vpack.c.b16 %v2809, %v2792
        %v3524 = vpack.c.b16 %v2810, %v2793
        %v3525 = vpack.c.b16 %v2811, %v2794
        %v3526 = vpack.c.b16 %v2812, %v2795
        %v3527 = vpack.c.b16 %v2813, %v2796
        %v3528 = vpack.c.b16 %v2814, %v2797
        %v3529 = vpack.c.b16 %v2815, %v2798
        %v3530 = vpack.c.b16 %v2816, %v2799
        %v3531 = vpack.c.b16 %v2817, %v2800
        %v3532 = vpack.c.b16 %v2818, %v2801
        %v3533 = vpack.c.b16 %v2836, %v2819
        %v3534 = vpack.c.b16 %v2837, %v2820
        %v3535 = vpack.c.b16 %v2838, %v2821
        %v3536 = vpack.c.b16 %v2839, %v2822
        %v3537 = vpack.c.b16 %v2840, %v2823
        %v3538 = vpack.c.b16 %v2841, %v2824
        %v3539 = vpack.c.b16 %v2842, %v2825
        %v3540 = vpack.c.b16 %v2843, %v2826
        %v3541 = vpack.c.b16 %v2844, %v2827
        %v3542 = vpack.c.b16 %v2845, %v2828
        %v3543 = vpack.c.b16 %v2846, %v2829
        %v3544 = vpack.c.b16 %v2847, %v2830
        %v3545 = vpack.c.b16 %v2848, %v2831
        %v3546 = vpack.c.b16 %v2849, %v2832
        %v3547 = vpack.c.b16 %v2850, %v2833
        %v3548 = vpack.c.b16 %v2851, %v2834
        %v3549 = vpack.c.b16 %v2852, %v2835
        %v3550 = vpack.c.b16 %v2870, %v2853
        %v3551 = vpack.c.b16 %v2871, %v2854
        %v3552 = vpack.c.b16 %v2872, %v2855
        %v3553 = vpack.c.b16 %v2873, %v2856
        %v3554 = vpack.c.b16 %v2874, %v2857
        %v3555 = vpack.c.b16 %v2875, %v2858
        %v3556 = vpack.c.b16 %v2876, %v2859
        %v3557 = vpack.c.b16 %v2877, %v2860
        %v3558 = vpack.c.b16 %v2878, %v2861
        %v3559 = vpack.c.b16 %v2879, %v2862
        %v3560 = vpack.c.b16 %v2880, %v2863
        %v3561 = vpack.c.b16 %v2881, %v2864
        %v3562 = vpack.c.b16 %v2882, %v2865
        %v3563 = vpack.c.b16 %v2883, %v2866
        %v3564 = vpack.c.b16 %v2884, %v2867
        %v3565 = vpack.c.b16 %v2885, %v2868
        %v3566 = vpack.c.b16 %v2886, %v2869
        %v3567 = vpack.c.b16 %v2904, %v2887
        %v3568 = vpack.c.b16 %v2905, %v2888
        %v3569 = vpack.c.b16 %v2906, %v2889
        %v3570 = vpack.c.b16 %v2907, %v2890
        %v3571 = vpack.c.b16 %v2908, %v2891
        %v3572 = vpack.c.b16 %v2909, %v2892
        %v3573 = vpack.c.b16 %v2910, %v2893
        %v3574 = vpack.c.b16 %v2911, %v2894
        %v3575 = vpack.c.b16 %v2912, %v2895
        %v3576 = vpack.c.b16 %v2913, %v2896
        %v3577 = vpack.c.b16 %v2914, %v2897
        %v3578 = vpack.c.b16 %v2915, %v2898
        %v3579 = vpack.c.b16 %v2916, %v2899
        %v3580 = vpack.c.b16 %v2917, %v2900
        %v3581 = vpack.c.b16 %v2918, %v2901
        %v3582 = vpack.c.b16 %v2919, %v2902
        %v3583 = vpack.c.b16 %v2920, %v2903
        %v3584 = vpack.c.b16 %v2938, %v2921
        %v3585 = vpack.c.b16 %v2939, %v2922
        %v3586 = vpack.c.b16 %v2940, %v2923
        %v3587 = vpack.c.b16 %v2941, %v2924
        %v3588 = vpack.c.b16 %v2942, %v2925
        %v3589 = vpack.c.b16 %v2943, %v2926
        %v3590 = vpack.c.b16 %v2944, %v2927
        %v3591 = vpack.c.b16 %v2945, %v2928
        %v3592 = vpack.c.b16 %v2946, %v2929
        %v3593 = vpack.c.b16 %v2947, %v2930
        %v3594 = vpack.c.b16 %v2948, %v2931
        %v3595 = vpack.c.b16 %v2949, %v2932
        %v3596 = vpack.c.b16 %v2950, %v2933
        %v3597 = vpack.c.b16 %v2951, %v2934
        %v3598 = vpack.c.b16 %v2952, %v2935
        %v3599 = vpack.c.b16 %v2953, %v2936
        %v3600 = vpack.c.b16 %v2954, %v2937
        %v3601 = vpack.c.b16 %v2972, %v2955
        %v3602 = vpack.c.b16 %v2973, %v2956
        %v3603 = vpack.c.b16 %v2974, %v2957
        %v3604 = vpack.c.b16 %v2975, %v2958
        %v3605 = vpack.c.b16 %v2976, %v2959
        %v3606 = vpack.c.b16 %v2977, %v2960
        %v3607 = vpack.c.b16 %v2978, %v2961
        %v3608 = vpack.c.b16 %v2979, %v2962
        %v3609 = vpack.c.b16 %v2980, %v2963
        %v3610 = vpack.c.b16 %v2981, %v2964
        %v3611 = vpack.c.b16 %v2982, %v2965
        %v3612 = vpack.c.b16 %v2983, %v2966
        %v3613 = vpack.c.b16 %v2984, %v2967
        %v3614 = vpack.c.b16 %v2985, %v2968
        %v3615 = vpack.c.b16 %v2986, %v2969
        %v3616 = vpack.c.b16 %v2987, %v2970
        %v3617 = vpack.c.b16 %v2988, %v2971
        %v3618 = vpack.c.b16 %v3006, %v2989
        %v3619 = vpack.c.b16 %v3007, %v2990
        %v3620 = vpack.c.b16 %v3008, %v2991
        %v3621 = vpack.c.b16 %v3009, %v2992
        %v3622 = vpack.c.b16 %v3010, %v2993
        %v3623 = vpack.c.b16 %v3011, %v2994
        %v3624 = vpack.c.b16 %v3012, %v2995
        %v3625 = vpack.c.b16 %v3013, %v2996
        %v3626 = vpack.c.b16 %v3014, %v2997
        %v3627 = vpack.c.b16 %v3015, %v2998
        %v3628 = vpack.c.b16 %v3016, %v2999
        %v3629 = vpack.c.b16 %v3017, %v3000
        %v3630 = vpack.c.b16 %v3018, %v3001
        %v3631 = vpack.c.b16 %v3019, %v3002
        %v3632 = vpack.c.b16 %v3020, %v3003
        %v3633 = vpack.c.b16 %v3021, %v3004
        %v3634 = vpack.c.b16 %v3022, %v3005
        %v3635 = vpack.c.b16 %v3040, %v3023
        %v3636 = vpack.c.b16 %v3041, %v3024
        %v3637 = vpack.c.b16 %v3042, %v3025
        %v3638 = vpack.c.b16 %v3043, %v3026
        %v3639 = vpack.c.b16 %v3044, %v3027
        %v3640 = vpack.c.b16 %v3045, %v3028
        %v3641 = vpack.c.b16 %v3046, %v3029
        %v3642 = vpack.c.b16 %v3047, %v3030
        %v3643 = vpack.c.b16 %v3048, %v3031
        %v3644 = vpack.c.b16 %v3049, %v3032
        %v3645 = vpack.c.b16 %v3050, %v3033
        %v3646 = vpack.c.b16 %v3051, %v3034
        %v3647 = vpack.c.b16 %v3052, %v3035
        %v3648 = vpack.c.b16 %v3053, %v3036
        %v3649 = vpack.c.b16 %v3054, %v3037
        %v3650 = vpack.c.b16 %v3055, %v3038
        %v3651 = vpack.c.b16 %v3056, %v3039
        %v3652 = vpack.c.b16 %v3074, %v3057
        %v3653 = vpack.c.b16 %v3075, %v3058
        %v3654 = vpack.c.b16 %v3076, %v3059
        %v3655 = vpack.c.b16 %v3077, %v3060
        %v3656 = vpack.c.b16 %v3078, %v3061
        %v3657 = vpack.c.b16 %v3079, %v3062
        %v3658 = vpack.c.b16 %v3080, %v3063
        %v3659 = vpack.c.b16 %v3081, %v3064
        %v3660 = vpack.c.b16 %v3082, %v3065
        %v3661 = vpack.c.b16 %v3083, %v3066
        %v3662 = vpack.c.b16 %v3084, %v3067
        %v3663 = vpack.c.b16 %v3085, %v3068
        %v3664 = vpack.c.b16 %v3086, %v3069
        %v3665 = vpack.c.b16 %v3087, %v3070
        %v3666 = vpack.c.b16 %v3088, %v3071
        %v3667 = vpack.c.b16 %v3089, %v3072
        %v3668 = vpack.c.b16 %v3090, %v3073
        %v3669 = vpack.c.b16 %v3108, %v3091
        %v3670 = vpack.c.b16 %v3109, %v3092
        %v3671 = vpack.c.b16 %v3110, %v3093
        %v3672 = vpack.c.b16 %v3111, %v3094
        %v3673 = vpack.c.b16 %v3112, %v3095
        %v3674 = vpack.c.b16 %v3113, %v3096
        %v3675 = vpack.c.b16 %v3114, %v3097
        %v3676 = vpack.c.b16 %v3115, %v3098
        %v3677 = vpack.c.b16 %v3116, %v3099
        %v3678 = vpack.c.b16 %v3117, %v3100
        %v3679 = vpack.c.b16 %v3118, %v3101
        %v3680 = vpack.c.b16 %v3119, %v3102
        %v3681 = vpack.c.b16 %v3120, %v3103
        %v3682 = vpack.c.b16 %v3121, %v3104
        %v3683 = vpack.c.b16 %v3122, %v3105
        %v3684 = vpack.c.b16 %v3123, %v3106
        %v3685 = vpack.c.b16 %v3124, %v3107
        %v3686 = vpack.c.b16 %v3142, %v3125
        %v3687 = vpack.c.b16 %v3143, %v3126
        %v3688 = vpack.c.b16 %v3144, %v3127
        %v3689 = vpack.c.b16 %v3145, %v3128
        %v3690 = vpack.c.b16 %v3146, %v3129
        %v3691 = vpack.c.b16 %v3147, %v3130
        %v3692 = vpack.c.b16 %v3148, %v3131
        %v3693 = vpack.c.b16 %v3149, %v3132
        %v3694 = vpack.c.b16 %v3150, %v3133
        %v3695 = vpack.c.b16 %v3151, %v3134
        %v3696 = vpack.c.b16 %v3152, %v3135
        %v3697 = vpack.c.b16 %v3153, %v3136
        %v3698 = vpack.c.b16 %v3154, %v3137
        %v3699 = vpack.c.b16 %v3155, %v3138
        %v3700 = vpack.c.b16 %v3156, %v3139
        %v3701 = vpack.c.b16 %v3157, %v3140
        %v3702 = vpack.c.b16 %v3158, %v3141
        %v3703 = vpack.c.b16 %v3176, %v3159
        %v3704 = vpack.c.b16 %v3177, %v3160
        %v3705 = vpack.c.b16 %v3178, %v3161
        %v3706 = vpack.c.b16 %v3179, %v3162
        %v3707 = vpack.c.b16 %v3180, %v3163
        %v3708 = vpack.c.b16 %v3181, %v3164
        %v3709 = vpack.c.b16 %v3182, %v3165
        %v3710 = vpack.c.b16 %v3183, %v3166
        %v3711 = vpack.c.b16 %v3184, %v3167
        %v3712 = vpack.c.b16 %v3185, %v3168
        %v3713 = vpack.c.b16 %v3186, %v3169
        %v3714 = vpack.c.b16 %v3187, %v3170
        %v3715 = vpack.c.b16 %v3188, %v3171
        %v3716 = vpack.c.b16 %v3189, %v3172
        %v3717 = vpack.c.b16 %v3190, %v3173
        %v3718 = vpack.c.b16 %v3191, %v3174
        %v3719 = vpack.c.b16 %v3192, %v3175
        %v3720 = vpack.c.b16 %v3210, %v3193
        %v3721 = vpack.c.b16 %v3211, %v3194
        %v3722 = vpack.c.b16 %v3212, %v3195
        %v3723 = vpack.c.b16 %v3213, %v3196
        %v3724 = vpack.c.b16 %v3214, %v3197
        %v3725 = vpack.c.b16 %v3215, %v3198
        %v3726 = vpack.c.b16 %v3216, %v3199
        %v3727 = vpack.c.b16 %v3217, %v3200
        %v3728 = vpack.c.b16 %v3218, %v3201
        %v3729 = vpack.c.b16 %v3219, %v3202
        %v3730 = vpack.c.b16 %v3220, %v3203
        %v3731 = vpack.c.b16 %v3221, %v3204
        %v3732 = vpack.c.b16 %v3222, %v3205
        %v3733 = vpack.c.b16 %v3223, %v3206
        %v3734 = vpack.c.b16 %v3224, %v3207
        %v3735 = vpack.c.b16 %v3225, %v3208
        %v3736 = vpack.c.b16 %v3226, %v3209
        %v3737 = vpack.c.b16 %v3244, %v3227
        %v3738 = vpack.c.b16 %v3245, %v3228
        %v3739 = vpack.c.b16 %v3246, %v3229
        %v3740 = vpack.c.b16 %v3247, %v3230
        %v3741 = vpack.c.b16 %v3248, %v3231
        %v3742 = vpack.c.b16 %v3249, %v3232
        %v3743 = vpack.c.b16 %v3250, %v3233
        %v3744 = vpack.c.b16 %v3251, %v3234
        %v3745 = vpack.c.b16 %v3252, %v3235
        %v3746 = vpack.c.b16 %v3253, %v3236
        %v3747 = vpack.c.b16 %v3254, %v3237
        %v3748 = vpack.c.b16 %v3255, %v3238
        %v3749 = vpack.c.b16 %v3256, %v3239
        %v3750 = vpack.c.b16 %v3257, %v3240
        %v3751 = vpack.c.b16 %v3258, %v3241
        %v3752 = vpack.c.b16 %v3259, %v3242
        %v3753 = vpack.c.b16 %v3260, %v3243
        %v3754 = vpack.c.b16 %v3278, %v3261
        %v3755 = vpack.c.b16 %v3279, %v3262
        %v3756 = vpack.c.b16 %v3280, %v3263
        %v3757 = vpack.c.b16 %v3281, %v3264
        %v3758 = vpack.c.b16 %v3282, %v3265
        %v3759 = vpack.c.b16 %v3283, %v3266
        %v3760 = vpack.c.b16 %v3284, %v3267
        %v3761 = vpack.c.b16 %v3285, %v3268
        %v3762 = vpack.c.b16 %v3286, %v3269
        %v3763 = vpack.c.b16 %v3287, %v3270
        %v3764 = vpack.c.b16 %v3288, %v3271
        %v3765 = vpack.c.b16 %v3289, %v3272
        %v3766 = vpack.c.b16 %v3290, %v3273
        %v3767 = vpack.c.b16 %v3291, %v3274
        %v3768 = vpack.c.b16 %v3292, %v3275
        %v3769 = vpack.c.b16 %v3293, %v3276
        %v3770 = vpack.c.b16 %v3294, %v3277
        %vm4247 = vcmask 523264
        %v4249 = vsel %vm4247, %v1835, 0
        %4251 = vmatprep.subr.bf16.mxu0 %v3415
        %4252 = vmatpush1.bf16.msra.mxu0 %v3414
        %4253 = vmatprep.subr.bf16.mxu0 %v3398
        %4254 = vmatpush1.bf16.msra.mxu0 %v3397
        %4255 = vmatprep.subr.bf16.mxu0 %v3381
        %4256 = vmatpush1.bf16.msra.mxu0 %v3380
        %4257 = vmatprep.subr.bf16.mxu0 %v3364
        %4258 = vmatpush1.bf16.msra.mxu0 %v3363
        %4259 = vmatprep.subr.bf16.mxu0 %v3347
        %4260 = vmatpush1.bf16.msra.mxu0 %v3346
        %4261 = vmatprep.subr.bf16.mxu0 %v3330
        %4262 = vmatpush1.bf16.msra.mxu0 %v3329
        %4263 = vmatprep.subr.bf16.mxu0 %v3313
        %4264 = vmatpush1.bf16.msra.mxu0 %v3312
        %4265 = vmatprep.subr.bf16.mxu0 %v3296
        %4266 = vmatpush1.bf16.msra.mxu0 %v3295
        %4267 = vmatprep.subr.bf16.mxu0 %v3551
        %4268 = vmatpush2.bf16.msra.mxu0 %v3550
        %4269 = vmatprep.subr.bf16.mxu0 %v3534
        %4270 = vmatpush2.bf16.msra.mxu0 %v3533
        %4271 = vmatprep.subr.bf16.mxu0 %v3517
        %4272 = vmatpush2.bf16.msra.mxu0 %v3516
        %4273 = vmatprep.subr.bf16.mxu0 %v3500
        %4274 = vmatpush2.bf16.msra.mxu0 %v3499
        %4275 = vmatprep.subr.bf16.mxu0 %v3483
        %4276 = vmatpush2.bf16.msra.mxu0 %v3482
        %4277 = vmatprep.subr.bf16.mxu0 %v3466
        %4278 = vmatpush2.bf16.msra.mxu0 %v3465
        %4279 = vmatprep.subr.bf16.mxu0 %v3449
        %4280 = vmatpush2.bf16.msra.mxu0 %v3448
        %4281 = vmatprep.subr.bf16.mxu0 %v3432
        %4282 = vmatpush2.bf16.msra.mxu0 %v3431
        %4283 = vmatprep.mubr.bf16.mxu0 %v1833
        %4284 = vmatmul.mubr.bf16.gmra.mxu0 %v1832
        %v4285 = vpop.f32.mrf.mxu0
        %v4286 = vadd.f32 %v1744, %v4285
        %v4287 = vpop.f32.mrf.mxu0
        %v4288 = vadd.f32 %v1748, %v4287
        %v4289 = vpop.f32.mrf.mxu0
        %v4290 = vpop.f32.mrf.mxu0
        %4291 = vdwg.mxu0
        %4292 = vmatprep.subr.bf16.mxu0 %v3687
        %4293 = vmatpush1.bf16.msra.mxu0 %v3686
        %4294 = vmatprep.subr.bf16.mxu0 %v3670
        %4295 = vmatpush1.bf16.msra.mxu0 %v3669
        %4296 = vmatprep.subr.bf16.mxu0 %v3653
        %4297 = vmatpush1.bf16.msra.mxu0 %v3652
        %4298 = vmatprep.subr.bf16.mxu0 %v3636
        %4299 = vmatpush1.bf16.msra.mxu0 %v3635
        %4300 = vmatprep.subr.bf16.mxu0 %v3619
        %4301 = vmatpush1.bf16.msra.mxu0 %v3618
        %4302 = vmatprep.subr.bf16.mxu0 %v3602
        %4303 = vmatpush1.bf16.msra.mxu0 %v3601
        %4304 = vmatprep.subr.bf16.mxu0 %v3585
        %4305 = vmatpush1.bf16.msra.mxu0 %v3584
        %4306 = vmatprep.subr.bf16.mxu0 %v3568
        %4307 = vmatpush1.bf16.msra.mxu0 %v3567
        %4308 = vmatprep.subr.bf16.mxu0 0
        %4309 = vmatpush2.bf16.msra.mxu0 0
        %4310 = vmatprep.subr.bf16.mxu0 0
        %4311 = vmatpush2.bf16.msra.mxu0 0
        %4312 = vmatprep.subr.bf16.mxu0 0
        %4313 = vmatpush2.bf16.msra.mxu0 0
        %4314 = vmatprep.subr.bf16.mxu0 0
        %4315 = vmatpush2.bf16.msra.mxu0 0
        %4316 = vmatprep.subr.bf16.mxu0 %v3755
        %4317 = vmatpush2.bf16.msra.mxu0 %v3754
        %4318 = vmatprep.subr.bf16.mxu0 %v3738
        %4319 = vmatpush2.bf16.msra.mxu0 %v3737
        %4320 = vmatprep.subr.bf16.mxu0 %v3721
        %4321 = vmatpush2.bf16.msra.mxu0 %v3720
        %4322 = vmatprep.subr.bf16.mxu0 %v3704
        %4323 = vmatpush2.bf16.msra.mxu0 %v3703
        %4324 = vmatprep.mubr.bf16.mxu0 %v4249
        %4325 = vmatmul.mubr.bf16.gmra.mxu0 %v1834
        %v4326 = vpop.f32.mrf.mxu0
        %v4327 = vadd.f32 %v4286, %v4326
        %v4328 = vpop.f32.mrf.mxu0
        %v4329 = vadd.f32 %v4288, %v4328
        %v4330 = vpop.f32.mrf.mxu0
        %v4331 = vpop.f32.mrf.mxu0
        %4332 = vdwg.mxu0
        %4333 = vmatprep.subr.bf16.mxu0 %v3417
        %4334 = vmatpush1.bf16.msra.mxu0 %v3416
        %4335 = vmatprep.subr.bf16.mxu0 %v3400
        %4336 = vmatpush1.bf16.msra.mxu0 %v3399
        %4337 = vmatprep.subr.bf16.mxu0 %v3383
        %4338 = vmatpush1.bf16.msra.mxu0 %v3382
        %4339 = vmatprep.subr.bf16.mxu0 %v3366
        %4340 = vmatpush1.bf16.msra.mxu0 %v3365
        %4341 = vmatprep.subr.bf16.mxu0 %v3349
        %4342 = vmatpush1.bf16.msra.mxu0 %v3348
        %4343 = vmatprep.subr.bf16.mxu0 %v3332
        %4344 = vmatpush1.bf16.msra.mxu0 %v3331
        %4345 = vmatprep.subr.bf16.mxu0 %v3315
        %4346 = vmatpush1.bf16.msra.mxu0 %v3314
        %4347 = vmatprep.subr.bf16.mxu0 %v3298
        %4348 = vmatpush1.bf16.msra.mxu0 %v3297
        %4349 = vmatprep.subr.bf16.mxu0 %v3553
        %4350 = vmatpush2.bf16.msra.mxu0 %v3552
        %4351 = vmatprep.subr.bf16.mxu0 %v3536
        %4352 = vmatpush2.bf16.msra.mxu0 %v3535
        %4353 = vmatprep.subr.bf16.mxu0 %v3519
        %4354 = vmatpush2.bf16.msra.mxu0 %v3518
        %4355 = vmatprep.subr.bf16.mxu0 %v3502
        %4356 = vmatpush2.bf16.msra.mxu0 %v3501
        %4357 = vmatprep.subr.bf16.mxu0 %v3485
        %4358 = vmatpush2.bf16.msra.mxu0 %v3484
        %4359 = vmatprep.subr.bf16.mxu0 %v3468
        %4360 = vmatpush2.bf16.msra.mxu0 %v3467
        %4361 = vmatprep.subr.bf16.mxu0 %v3451
        %4362 = vmatpush2.bf16.msra.mxu0 %v3450
        %4363 = vmatprep.subr.bf16.mxu0 %v3434
        %4364 = vmatpush2.bf16.msra.mxu0 %v3433
        %4365 = vmatprep.mubr.bf16.mxu0 %v1833
        %4366 = vmatmul.mubr.bf16.gmra.mxu0 %v1832
        %v4367 = vpop.f32.mrf.mxu0
        %v4368 = vadd.f32 %v1752, %v4367
        %v4369 = vpop.f32.mrf.mxu0
        %v4370 = vadd.f32 %v1756, %v4369
        %v4371 = vpop.f32.mrf.mxu0
        %v4372 = vpop.f32.mrf.mxu0
        %4373 = vdwg.mxu0
        %4374 = vmatprep.subr.bf16.mxu0 %v3689
        %4375 = vmatpush1.bf16.msra.mxu0 %v3688
        %4376 = vmatprep.subr.bf16.mxu0 %v3672
        %4377 = vmatpush1.bf16.msra.mxu0 %v3671
        %4378 = vmatprep.subr.bf16.mxu0 %v3655
        %4379 = vmatpush1.bf16.msra.mxu0 %v3654
        %4380 = vmatprep.subr.bf16.mxu0 %v3638
        %4381 = vmatpush1.bf16.msra.mxu0 %v3637
        %4382 = vmatprep.subr.bf16.mxu0 %v3621
        %4383 = vmatpush1.bf16.msra.mxu0 %v3620
        %4384 = vmatprep.subr.bf16.mxu0 %v3604
        %4385 = vmatpush1.bf16.msra.mxu0 %v3603
        %4386 = vmatprep.subr.bf16.mxu0 %v3587
        %4387 = vmatpush1.bf16.msra.mxu0 %v3586
        %4388 = vmatprep.subr.bf16.mxu0 %v3570
        %4389 = vmatpush1.bf16.msra.mxu0 %v3569
        %4390 = vmatprep.subr.bf16.mxu0 0
        %4391 = vmatpush2.bf16.msra.mxu0 0
        %4392 = vmatprep.subr.bf16.mxu0 0
        %4393 = vmatpush2.bf16.msra.mxu0 0
        %4394 = vmatprep.subr.bf16.mxu0 0
        %4395 = vmatpush2.bf16.msra.mxu0 0
        %4396 = vmatprep.subr.bf16.mxu0 0
        %4397 = vmatpush2.bf16.msra.mxu0 0
        %4398 = vmatprep.subr.bf16.mxu0 %v3757
        %4399 = vmatpush2.bf16.msra.mxu0 %v3756
        %4400 = vmatprep.subr.bf16.mxu0 %v3740
        %4401 = vmatpush2.bf16.msra.mxu0 %v3739
        %4402 = vmatprep.subr.bf16.mxu0 %v3723
        %4403 = vmatpush2.bf16.msra.mxu0 %v3722
        %4404 = vmatprep.subr.bf16.mxu0 %v3706
        %4405 = vmatpush2.bf16.msra.mxu0 %v3705
        %4406 = vmatprep.mubr.bf16.mxu0 %v4249
        %4407 = vmatmul.mubr.bf16.gmra.mxu0 %v1834
        %v4408 = vpop.f32.mrf.mxu0
        %v4409 = vadd.f32 %v4368, %v4408
        %v4410 = vpop.f32.mrf.mxu0
        %v4411 = vadd.f32 %v4370, %v4410
        %v4412 = vpop.f32.mrf.mxu0
        %v4413 = vpop.f32.mrf.mxu0
        %4414 = vdwg.mxu0
        %4415 = vmatprep.subr.bf16.mxu0 %v3419
        %4416 = vmatpush1.bf16.msra.mxu0 %v3418
        %4417 = vmatprep.subr.bf16.mxu0 %v3402
        %4418 = vmatpush1.bf16.msra.mxu0 %v3401
        %4419 = vmatprep.subr.bf16.mxu0 %v3385
        %4420 = vmatpush1.bf16.msra.mxu0 %v3384
        %4421 = vmatprep.subr.bf16.mxu0 %v3368
        %4422 = vmatpush1.bf16.msra.mxu0 %v3367
        %4423 = vmatprep.subr.bf16.mxu0 %v3351
        %4424 = vmatpush1.bf16.msra.mxu0 %v3350
        %4425 = vmatprep.subr.bf16.mxu0 %v3334
        %4426 = vmatpush1.bf16.msra.mxu0 %v3333
        %4427 = vmatprep.subr.bf16.mxu0 %v3317
        %4428 = vmatpush1.bf16.msra.mxu0 %v3316
        %4429 = vmatprep.subr.bf16.mxu0 %v3300
        %4430 = vmatpush1.bf16.msra.mxu0 %v3299
        %4431 = vmatprep.subr.bf16.mxu0 %v3555
        %4432 = vmatpush2.bf16.msra.mxu0 %v3554
        %4433 = vmatprep.subr.bf16.mxu0 %v3538
        %4434 = vmatpush2.bf16.msra.mxu0 %v3537
        %4435 = vmatprep.subr.bf16.mxu0 %v3521
        %4436 = vmatpush2.bf16.msra.mxu0 %v3520
        %4437 = vmatprep.subr.bf16.mxu0 %v3504
        %4438 = vmatpush2.bf16.msra.mxu0 %v3503
        %4439 = vmatprep.subr.bf16.mxu0 %v3487
        %4440 = vmatpush2.bf16.msra.mxu0 %v3486
        %4441 = vmatprep.subr.bf16.mxu0 %v3470
        %4442 = vmatpush2.bf16.msra.mxu0 %v3469
        %4443 = vmatprep.subr.bf16.mxu0 %v3453
        %4444 = vmatpush2.bf16.msra.mxu0 %v3452
        %4445 = vmatprep.subr.bf16.mxu0 %v3436
        %4446 = vmatpush2.bf16.msra.mxu0 %v3435
        %4447 = vmatprep.mubr.bf16.mxu0 %v1833
        %4448 = vmatmul.mubr.bf16.gmra.mxu0 %v1832
        %v4449 = vpop.f32.mrf.mxu0
        %v4450 = vadd.f32 %v1760, %v4449
        %v4451 = vpop.f32.mrf.mxu0
        %v4452 = vadd.f32 %v1764, %v4451
        %v4453 = vpop.f32.mrf.mxu0
        %v4454 = vpop.f32.mrf.mxu0
        %4455 = vdwg.mxu0
        %4456 = vmatprep.subr.bf16.mxu0 %v3691
        %4457 = vmatpush1.bf16.msra.mxu0 %v3690
        %4458 = vmatprep.subr.bf16.mxu0 %v3674
        %4459 = vmatpush1.bf16.msra.mxu0 %v3673
        %4460 = vmatprep.subr.bf16.mxu0 %v3657
        %4461 = vmatpush1.bf16.msra.mxu0 %v3656
        %4462 = vmatprep.subr.bf16.mxu0 %v3640
        %4463 = vmatpush1.bf16.msra.mxu0 %v3639
        %4464 = vmatprep.subr.bf16.mxu0 %v3623
        %4465 = vmatpush1.bf16.msra.mxu0 %v3622
        %4466 = vmatprep.subr.bf16.mxu0 %v3606
        %4467 = vmatpush1.bf16.msra.mxu0 %v3605
        %4468 = vmatprep.subr.bf16.mxu0 %v3589
        %4469 = vmatpush1.bf16.msra.mxu0 %v3588
        %4470 = vmatprep.subr.bf16.mxu0 %v3572
        %4471 = vmatpush1.bf16.msra.mxu0 %v3571
        %4472 = vmatprep.subr.bf16.mxu0 0
        %4473 = vmatpush2.bf16.msra.mxu0 0
        %4474 = vmatprep.subr.bf16.mxu0 0
        %4475 = vmatpush2.bf16.msra.mxu0 0
        %4476 = vmatprep.subr.bf16.mxu0 0
        %4477 = vmatpush2.bf16.msra.mxu0 0
        %4478 = vmatprep.subr.bf16.mxu0 0
        %4479 = vmatpush2.bf16.msra.mxu0 0
        %4480 = vmatprep.subr.bf16.mxu0 %v3759
        %4481 = vmatpush2.bf16.msra.mxu0 %v3758
        %4482 = vmatprep.subr.bf16.mxu0 %v3742
        %4483 = vmatpush2.bf16.msra.mxu0 %v3741
        %4484 = vmatprep.subr.bf16.mxu0 %v3725
        %4485 = vmatpush2.bf16.msra.mxu0 %v3724
        %4486 = vmatprep.subr.bf16.mxu0 %v3708
        %4487 = vmatpush2.bf16.msra.mxu0 %v3707
        %4488 = vmatprep.mubr.bf16.mxu0 %v4249
        %4489 = vmatmul.mubr.bf16.gmra.mxu0 %v1834
        %v4490 = vpop.f32.mrf.mxu0
        %v4491 = vadd.f32 %v4450, %v4490
        %v4492 = vpop.f32.mrf.mxu0
        %v4493 = vadd.f32 %v4452, %v4492
        %v4494 = vpop.f32.mrf.mxu0
        %v4495 = vpop.f32.mrf.mxu0
        %4496 = vdwg.mxu0
        %4497 = vmatprep.subr.bf16.mxu0 %v3421
        %4498 = vmatpush1.bf16.msra.mxu0 %v3420
        %4499 = vmatprep.subr.bf16.mxu0 %v3404
        %4500 = vmatpush1.bf16.msra.mxu0 %v3403
        %4501 = vmatprep.subr.bf16.mxu0 %v3387
        %4502 = vmatpush1.bf16.msra.mxu0 %v3386
        %4503 = vmatprep.subr.bf16.mxu0 %v3370
        %4504 = vmatpush1.bf16.msra.mxu0 %v3369
        %4505 = vmatprep.subr.bf16.mxu0 %v3353
        %4506 = vmatpush1.bf16.msra.mxu0 %v3352
        %4507 = vmatprep.subr.bf16.mxu0 %v3336
        %4508 = vmatpush1.bf16.msra.mxu0 %v3335
        %4509 = vmatprep.subr.bf16.mxu0 %v3319
        %4510 = vmatpush1.bf16.msra.mxu0 %v3318
        %4511 = vmatprep.subr.bf16.mxu0 %v3302
        %4512 = vmatpush1.bf16.msra.mxu0 %v3301
        %4513 = vmatprep.subr.bf16.mxu0 %v3557
        %4514 = vmatpush2.bf16.msra.mxu0 %v3556
        %4515 = vmatprep.subr.bf16.mxu0 %v3540
        %4516 = vmatpush2.bf16.msra.mxu0 %v3539
        %4517 = vmatprep.subr.bf16.mxu0 %v3523
        %4518 = vmatpush2.bf16.msra.mxu0 %v3522
        %4519 = vmatprep.subr.bf16.mxu0 %v3506
        %4520 = vmatpush2.bf16.msra.mxu0 %v3505
        %4521 = vmatprep.subr.bf16.mxu0 %v3489
        %4522 = vmatpush2.bf16.msra.mxu0 %v3488
        %4523 = vmatprep.subr.bf16.mxu0 %v3472
        %4524 = vmatpush2.bf16.msra.mxu0 %v3471
        %4525 = vmatprep.subr.bf16.mxu0 %v3455
        %4526 = vmatpush2.bf16.msra.mxu0 %v3454
        %4527 = vmatprep.subr.bf16.mxu0 %v3438
        %4528 = vmatpush2.bf16.msra.mxu0 %v3437
        %4529 = vmatprep.mubr.bf16.mxu0 %v1833
        %4530 = vmatmul.mubr.bf16.gmra.mxu0 %v1832
        %v4531 = vpop.f32.mrf.mxu0
        %v4532 = vadd.f32 %v1768, %v4531
        %v4533 = vpop.f32.mrf.mxu0
        %v4534 = vadd.f32 %v1772, %v4533
        %v4535 = vpop.f32.mrf.mxu0
        %v4536 = vpop.f32.mrf.mxu0
        %4537 = vdwg.mxu0
        %4538 = vmatprep.subr.bf16.mxu0 %v3693
        %4539 = vmatpush1.bf16.msra.mxu0 %v3692
        %4540 = vmatprep.subr.bf16.mxu0 %v3676
        %4541 = vmatpush1.bf16.msra.mxu0 %v3675
        %4542 = vmatprep.subr.bf16.mxu0 %v3659
        %4543 = vmatpush1.bf16.msra.mxu0 %v3658
        %4544 = vmatprep.subr.bf16.mxu0 %v3642
        %4545 = vmatpush1.bf16.msra.mxu0 %v3641
        %4546 = vmatprep.subr.bf16.mxu0 %v3625
        %4547 = vmatpush1.bf16.msra.mxu0 %v3624
        %4548 = vmatprep.subr.bf16.mxu0 %v3608
        %4549 = vmatpush1.bf16.msra.mxu0 %v3607
        %4550 = vmatprep.subr.bf16.mxu0 %v3591
        %4551 = vmatpush1.bf16.msra.mxu0 %v3590
        %4552 = vmatprep.subr.bf16.mxu0 %v3574
        %4553 = vmatpush1.bf16.msra.mxu0 %v3573
        %4554 = vmatprep.subr.bf16.mxu0 0
        %4555 = vmatpush2.bf16.msra.mxu0 0
        %4556 = vmatprep.subr.bf16.mxu0 0
        %4557 = vmatpush2.bf16.msra.mxu0 0
        %4558 = vmatprep.subr.bf16.mxu0 0
        %4559 = vmatpush2.bf16.msra.mxu0 0
        %4560 = vmatprep.subr.bf16.mxu0 0
        %4561 = vmatpush2.bf16.msra.mxu0 0
        %4562 = vmatprep.subr.bf16.mxu0 %v3761
        %4563 = vmatpush2.bf16.msra.mxu0 %v3760
        %4564 = vmatprep.subr.bf16.mxu0 %v3744
        %4565 = vmatpush2.bf16.msra.mxu0 %v3743
        %4566 = vmatprep.subr.bf16.mxu0 %v3727
        %4567 = vmatpush2.bf16.msra.mxu0 %v3726
        %4568 = vmatprep.subr.bf16.mxu0 %v3710
        %4569 = vmatpush2.bf16.msra.mxu0 %v3709
        %4570 = vmatprep.mubr.bf16.mxu0 %v4249
        %4571 = vmatmul.mubr.bf16.gmra.mxu0 %v1834
        %v4572 = vpop.f32.mrf.mxu0
        %v4573 = vadd.f32 %v4532, %v4572
        %v4574 = vpop.f32.mrf.mxu0
        %v4575 = vadd.f32 %v4534, %v4574
        %v4576 = vpop.f32.mrf.mxu0
        %v4577 = vpop.f32.mrf.mxu0
        %4578 = vdwg.mxu0
        %4579 = vmatprep.subr.bf16.mxu0 %v3423
        %4580 = vmatpush1.bf16.msra.mxu0 %v3422
        %4581 = vmatprep.subr.bf16.mxu0 %v3406
        %4582 = vmatpush1.bf16.msra.mxu0 %v3405
        %4583 = vmatprep.subr.bf16.mxu0 %v3389
        %4584 = vmatpush1.bf16.msra.mxu0 %v3388
        %4585 = vmatprep.subr.bf16.mxu0 %v3372
        %4586 = vmatpush1.bf16.msra.mxu0 %v3371
        %4587 = vmatprep.subr.bf16.mxu0 %v3355
        %4588 = vmatpush1.bf16.msra.mxu0 %v3354
        %4589 = vmatprep.subr.bf16.mxu0 %v3338
        %4590 = vmatpush1.bf16.msra.mxu0 %v3337
        %4591 = vmatprep.subr.bf16.mxu0 %v3321
        %4592 = vmatpush1.bf16.msra.mxu0 %v3320
        %4593 = vmatprep.subr.bf16.mxu0 %v3304
        %4594 = vmatpush1.bf16.msra.mxu0 %v3303
        %4595 = vmatprep.subr.bf16.mxu0 %v3559
        %4596 = vmatpush2.bf16.msra.mxu0 %v3558
        %4597 = vmatprep.subr.bf16.mxu0 %v3542
        %4598 = vmatpush2.bf16.msra.mxu0 %v3541
        %4599 = vmatprep.subr.bf16.mxu0 %v3525
        %4600 = vmatpush2.bf16.msra.mxu0 %v3524
        %4601 = vmatprep.subr.bf16.mxu0 %v3508
        %4602 = vmatpush2.bf16.msra.mxu0 %v3507
        %4603 = vmatprep.subr.bf16.mxu0 %v3491
        %4604 = vmatpush2.bf16.msra.mxu0 %v3490
        %4605 = vmatprep.subr.bf16.mxu0 %v3474
        %4606 = vmatpush2.bf16.msra.mxu0 %v3473
        %4607 = vmatprep.subr.bf16.mxu0 %v3457
        %4608 = vmatpush2.bf16.msra.mxu0 %v3456
        %4609 = vmatprep.subr.bf16.mxu0 %v3440
        %4610 = vmatpush2.bf16.msra.mxu0 %v3439
        %4611 = vmatprep.mubr.bf16.mxu0 %v1833
        %4612 = vmatmul.mubr.bf16.gmra.mxu0 %v1832
        %v4613 = vpop.f32.mrf.mxu0
        %v4614 = vadd.f32 %v1776, %v4613
        %v4615 = vpop.f32.mrf.mxu0
        %v4616 = vadd.f32 %v1780, %v4615
        %v4617 = vpop.f32.mrf.mxu0
        %v4618 = vpop.f32.mrf.mxu0
        %4619 = vdwg.mxu0
        %4620 = vmatprep.subr.bf16.mxu0 %v3695
        %4621 = vmatpush1.bf16.msra.mxu0 %v3694
        %4622 = vmatprep.subr.bf16.mxu0 %v3678
        %4623 = vmatpush1.bf16.msra.mxu0 %v3677
        %4624 = vmatprep.subr.bf16.mxu0 %v3661
        %4625 = vmatpush1.bf16.msra.mxu0 %v3660
        %4626 = vmatprep.subr.bf16.mxu0 %v3644
        %4627 = vmatpush1.bf16.msra.mxu0 %v3643
        %4628 = vmatprep.subr.bf16.mxu0 %v3627
        %4629 = vmatpush1.bf16.msra.mxu0 %v3626
        %4630 = vmatprep.subr.bf16.mxu0 %v3610
        %4631 = vmatpush1.bf16.msra.mxu0 %v3609
        %4632 = vmatprep.subr.bf16.mxu0 %v3593
        %4633 = vmatpush1.bf16.msra.mxu0 %v3592
        %4634 = vmatprep.subr.bf16.mxu0 %v3576
        %4635 = vmatpush1.bf16.msra.mxu0 %v3575
        %4636 = vmatprep.subr.bf16.mxu0 0
        %4637 = vmatpush2.bf16.msra.mxu0 0
        %4638 = vmatprep.subr.bf16.mxu0 0
        %4639 = vmatpush2.bf16.msra.mxu0 0
        %4640 = vmatprep.subr.bf16.mxu0 0
        %4641 = vmatpush2.bf16.msra.mxu0 0
        %4642 = vmatprep.subr.bf16.mxu0 0
        %4643 = vmatpush2.bf16.msra.mxu0 0
        %4644 = vmatprep.subr.bf16.mxu0 %v3763
        %4645 = vmatpush2.bf16.msra.mxu0 %v3762
        %4646 = vmatprep.subr.bf16.mxu0 %v3746
        %4647 = vmatpush2.bf16.msra.mxu0 %v3745
        %4648 = vmatprep.subr.bf16.mxu0 %v3729
        %4649 = vmatpush2.bf16.msra.mxu0 %v3728
        %4650 = vmatprep.subr.bf16.mxu0 %v3712
        %4651 = vmatpush2.bf16.msra.mxu0 %v3711
        %4652 = vmatprep.mubr.bf16.mxu0 %v4249
        %4653 = vmatmul.mubr.bf16.gmra.mxu0 %v1834
        %v4654 = vpop.f32.mrf.mxu0
        %v4655 = vadd.f32 %v4614, %v4654
        %v4656 = vpop.f32.mrf.mxu0
        %v4657 = vadd.f32 %v4616, %v4656
        %v4658 = vpop.f32.mrf.mxu0
        %v4659 = vpop.f32.mrf.mxu0
        %4660 = vdwg.mxu0
        %4661 = vmatprep.subr.bf16.mxu0 %v3425
        %4662 = vmatpush1.bf16.msra.mxu0 %v3424
        %4663 = vmatprep.subr.bf16.mxu0 %v3408
        %4664 = vmatpush1.bf16.msra.mxu0 %v3407
        %4665 = vmatprep.subr.bf16.mxu0 %v3391
        %4666 = vmatpush1.bf16.msra.mxu0 %v3390
        %4667 = vmatprep.subr.bf16.mxu0 %v3374
        %4668 = vmatpush1.bf16.msra.mxu0 %v3373
        %4669 = vmatprep.subr.bf16.mxu0 %v3357
        %4670 = vmatpush1.bf16.msra.mxu0 %v3356
        %4671 = vmatprep.subr.bf16.mxu0 %v3340
        %4672 = vmatpush1.bf16.msra.mxu0 %v3339
        %4673 = vmatprep.subr.bf16.mxu0 %v3323
        %4674 = vmatpush1.bf16.msra.mxu0 %v3322
        %4675 = vmatprep.subr.bf16.mxu0 %v3306
        %4676 = vmatpush1.bf16.msra.mxu0 %v3305
        %4677 = vmatprep.subr.bf16.mxu0 %v3561
        %4678 = vmatpush2.bf16.msra.mxu0 %v3560
        %4679 = vmatprep.subr.bf16.mxu0 %v3544
        %4680 = vmatpush2.bf16.msra.mxu0 %v3543
        %4681 = vmatprep.subr.bf16.mxu0 %v3527
        %4682 = vmatpush2.bf16.msra.mxu0 %v3526
        %4683 = vmatprep.subr.bf16.mxu0 %v3510
        %4684 = vmatpush2.bf16.msra.mxu0 %v3509
        %4685 = vmatprep.subr.bf16.mxu0 %v3493
        %4686 = vmatpush2.bf16.msra.mxu0 %v3492
        %4687 = vmatprep.subr.bf16.mxu0 %v3476
        %4688 = vmatpush2.bf16.msra.mxu0 %v3475
        %4689 = vmatprep.subr.bf16.mxu0 %v3459
        %4690 = vmatpush2.bf16.msra.mxu0 %v3458
        %4691 = vmatprep.subr.bf16.mxu0 %v3442
        %4692 = vmatpush2.bf16.msra.mxu0 %v3441
        %4693 = vmatprep.mubr.bf16.mxu0 %v1833
        %4694 = vmatmul.mubr.bf16.gmra.mxu0 %v1832
        %v4695 = vpop.f32.mrf.mxu0
        %v4696 = vadd.f32 %v1784, %v4695
        %v4697 = vpop.f32.mrf.mxu0
        %v4698 = vadd.f32 %v1788, %v4697
        %v4699 = vpop.f32.mrf.mxu0
        %v4700 = vpop.f32.mrf.mxu0
        %4701 = vdwg.mxu0
        %4702 = vmatprep.subr.bf16.mxu0 %v3697
        %4703 = vmatpush1.bf16.msra.mxu0 %v3696
        %4704 = vmatprep.subr.bf16.mxu0 %v3680
        %4705 = vmatpush1.bf16.msra.mxu0 %v3679
        %4706 = vmatprep.subr.bf16.mxu0 %v3663
        %4707 = vmatpush1.bf16.msra.mxu0 %v3662
        %4708 = vmatprep.subr.bf16.mxu0 %v3646
        %4709 = vmatpush1.bf16.msra.mxu0 %v3645
        %4710 = vmatprep.subr.bf16.mxu0 %v3629
        %4711 = vmatpush1.bf16.msra.mxu0 %v3628
        %4712 = vmatprep.subr.bf16.mxu0 %v3612
        %4713 = vmatpush1.bf16.msra.mxu0 %v3611
        %4714 = vmatprep.subr.bf16.mxu0 %v3595
        %4715 = vmatpush1.bf16.msra.mxu0 %v3594
        %4716 = vmatprep.subr.bf16.mxu0 %v3578
        %4717 = vmatpush1.bf16.msra.mxu0 %v3577
        %4718 = vmatprep.subr.bf16.mxu0 0
        %4719 = vmatpush2.bf16.msra.mxu0 0
        %4720 = vmatprep.subr.bf16.mxu0 0
        %4721 = vmatpush2.bf16.msra.mxu0 0
        %4722 = vmatprep.subr.bf16.mxu0 0
        %4723 = vmatpush2.bf16.msra.mxu0 0
        %4724 = vmatprep.subr.bf16.mxu0 0
        %4725 = vmatpush2.bf16.msra.mxu0 0
        %4726 = vmatprep.subr.bf16.mxu0 %v3765
        %4727 = vmatpush2.bf16.msra.mxu0 %v3764
        %4728 = vmatprep.subr.bf16.mxu0 %v3748
        %4729 = vmatpush2.bf16.msra.mxu0 %v3747
        %4730 = vmatprep.subr.bf16.mxu0 %v3731
        %4731 = vmatpush2.bf16.msra.mxu0 %v3730
        %4732 = vmatprep.subr.bf16.mxu0 %v3714
        %4733 = vmatpush2.bf16.msra.mxu0 %v3713
        %4734 = vmatprep.mubr.bf16.mxu0 %v4249
        %4735 = vmatmul.mubr.bf16.gmra.mxu0 %v1834
        %v4736 = vpop.f32.mrf.mxu0
        %v4737 = vadd.f32 %v4696, %v4736
        %v4738 = vpop.f32.mrf.mxu0
        %v4739 = vadd.f32 %v4698, %v4738
        %v4740 = vpop.f32.mrf.mxu0
        %v4741 = vpop.f32.mrf.mxu0
        %4742 = vdwg.mxu0
        %4743 = vmatprep.subr.bf16.mxu0 %v3427
        %4744 = vmatpush1.bf16.msra.mxu0 %v3426
        %4745 = vmatprep.subr.bf16.mxu0 %v3410
        %4746 = vmatpush1.bf16.msra.mxu0 %v3409
        %4747 = vmatprep.subr.bf16.mxu0 %v3393
        %4748 = vmatpush1.bf16.msra.mxu0 %v3392
        %4749 = vmatprep.subr.bf16.mxu0 %v3376
        %4750 = vmatpush1.bf16.msra.mxu0 %v3375
        %4751 = vmatprep.subr.bf16.mxu0 %v3359
        %4752 = vmatpush1.bf16.msra.mxu0 %v3358
        %4753 = vmatprep.subr.bf16.mxu0 %v3342
        %4754 = vmatpush1.bf16.msra.mxu0 %v3341
        %4755 = vmatprep.subr.bf16.mxu0 %v3325
        %4756 = vmatpush1.bf16.msra.mxu0 %v3324
        %4757 = vmatprep.subr.bf16.mxu0 %v3308
        %4758 = vmatpush1.bf16.msra.mxu0 %v3307
        %4759 = vmatprep.subr.bf16.mxu0 %v3563
        %4760 = vmatpush2.bf16.msra.mxu0 %v3562
        %4761 = vmatprep.subr.bf16.mxu0 %v3546
        %4762 = vmatpush2.bf16.msra.mxu0 %v3545
        %4763 = vmatprep.subr.bf16.mxu0 %v3529
        %4764 = vmatpush2.bf16.msra.mxu0 %v3528
        %4765 = vmatprep.subr.bf16.mxu0 %v3512
        %4766 = vmatpush2.bf16.msra.mxu0 %v3511
        %4767 = vmatprep.subr.bf16.mxu0 %v3495
        %4768 = vmatpush2.bf16.msra.mxu0 %v3494
        %4769 = vmatprep.subr.bf16.mxu0 %v3478
        %4770 = vmatpush2.bf16.msra.mxu0 %v3477
        %4771 = vmatprep.subr.bf16.mxu0 %v3461
        %4772 = vmatpush2.bf16.msra.mxu0 %v3460
        %4773 = vmatprep.subr.bf16.mxu0 %v3444
        %4774 = vmatpush2.bf16.msra.mxu0 %v3443
        %4775 = vmatprep.mubr.bf16.mxu0 %v1833
        %4776 = vmatmul.mubr.bf16.gmra.mxu0 %v1832
        %v4777 = vpop.f32.mrf.mxu0
        %v4778 = vadd.f32 %v1792, %v4777
        %v4779 = vpop.f32.mrf.mxu0
        %v4780 = vadd.f32 %v1796, %v4779
        %v4781 = vpop.f32.mrf.mxu0
        %v4782 = vpop.f32.mrf.mxu0
        %4783 = vdwg.mxu0
        %4784 = vmatprep.subr.bf16.mxu0 %v3699
        %4785 = vmatpush1.bf16.msra.mxu0 %v3698
        %4786 = vmatprep.subr.bf16.mxu0 %v3682
        %4787 = vmatpush1.bf16.msra.mxu0 %v3681
        %4788 = vmatprep.subr.bf16.mxu0 %v3665
        %4789 = vmatpush1.bf16.msra.mxu0 %v3664
        %4790 = vmatprep.subr.bf16.mxu0 %v3648
        %4791 = vmatpush1.bf16.msra.mxu0 %v3647
        %4792 = vmatprep.subr.bf16.mxu0 %v3631
        %4793 = vmatpush1.bf16.msra.mxu0 %v3630
        %4794 = vmatprep.subr.bf16.mxu0 %v3614
        %4795 = vmatpush1.bf16.msra.mxu0 %v3613
        %4796 = vmatprep.subr.bf16.mxu0 %v3597
        %4797 = vmatpush1.bf16.msra.mxu0 %v3596
        %4798 = vmatprep.subr.bf16.mxu0 %v3580
        %4799 = vmatpush1.bf16.msra.mxu0 %v3579
        %4800 = vmatprep.subr.bf16.mxu0 0
        %4801 = vmatpush2.bf16.msra.mxu0 0
        %4802 = vmatprep.subr.bf16.mxu0 0
        %4803 = vmatpush2.bf16.msra.mxu0 0
        %4804 = vmatprep.subr.bf16.mxu0 0
        %4805 = vmatpush2.bf16.msra.mxu0 0
        %4806 = vmatprep.subr.bf16.mxu0 0
        %4807 = vmatpush2.bf16.msra.mxu0 0
        %4808 = vmatprep.subr.bf16.mxu0 %v3767
        %4809 = vmatpush2.bf16.msra.mxu0 %v3766
        %4810 = vmatprep.subr.bf16.mxu0 %v3750
        %4811 = vmatpush2.bf16.msra.mxu0 %v3749
        %4812 = vmatprep.subr.bf16.mxu0 %v3733
        %4813 = vmatpush2.bf16.msra.mxu0 %v3732
        %4814 = vmatprep.subr.bf16.mxu0 %v3716
        %4815 = vmatpush2.bf16.msra.mxu0 %v3715
        %4816 = vmatprep.mubr.bf16.mxu0 %v4249
        %4817 = vmatmul.mubr.bf16.gmra.mxu0 %v1834
        %v4818 = vpop.f32.mrf.mxu0
        %v4819 = vadd.f32 %v4778, %v4818
        %v4820 = vpop.f32.mrf.mxu0
        %v4821 = vadd.f32 %v4780, %v4820
        %v4822 = vpop.f32.mrf.mxu0
        %v4823 = vpop.f32.mrf.mxu0
        %4824 = vdwg.mxu0
        %4825 = vmatprep.subr.bf16.mxu0 %v3429
        %4826 = vmatpush1.bf16.msra.mxu0 %v3428
        %4827 = vmatprep.subr.bf16.mxu0 %v3412
        %4828 = vmatpush1.bf16.msra.mxu0 %v3411
        %4829 = vmatprep.subr.bf16.mxu0 %v3395
        %4830 = vmatpush1.bf16.msra.mxu0 %v3394
        %4831 = vmatprep.subr.bf16.mxu0 %v3378
        %4832 = vmatpush1.bf16.msra.mxu0 %v3377
        %4833 = vmatprep.subr.bf16.mxu0 %v3361
        %4834 = vmatpush1.bf16.msra.mxu0 %v3360
        %4835 = vmatprep.subr.bf16.mxu0 %v3344
        %4836 = vmatpush1.bf16.msra.mxu0 %v3343
        %4837 = vmatprep.subr.bf16.mxu0 %v3327
        %4838 = vmatpush1.bf16.msra.mxu0 %v3326
        %4839 = vmatprep.subr.bf16.mxu0 %v3310
        %4840 = vmatpush1.bf16.msra.mxu0 %v3309
        %4841 = vmatprep.subr.bf16.mxu0 %v3565
        %4842 = vmatpush2.bf16.msra.mxu0 %v3564
        %4843 = vmatprep.subr.bf16.mxu0 %v3548
        %4844 = vmatpush2.bf16.msra.mxu0 %v3547
        %4845 = vmatprep.subr.bf16.mxu0 %v3531
        %4846 = vmatpush2.bf16.msra.mxu0 %v3530
        %4847 = vmatprep.subr.bf16.mxu0 %v3514
        %4848 = vmatpush2.bf16.msra.mxu0 %v3513
        %4849 = vmatprep.subr.bf16.mxu0 %v3497
        %4850 = vmatpush2.bf16.msra.mxu0 %v3496
        %4851 = vmatprep.subr.bf16.mxu0 %v3480
        %4852 = vmatpush2.bf16.msra.mxu0 %v3479
        %4853 = vmatprep.subr.bf16.mxu0 %v3463
        %4854 = vmatpush2.bf16.msra.mxu0 %v3462
        %4855 = vmatprep.subr.bf16.mxu0 %v3446
        %4856 = vmatpush2.bf16.msra.mxu0 %v3445
        %4857 = vmatprep.mubr.bf16.mxu0 %v1833
        %4858 = vmatmul.mubr.bf16.gmra.mxu0 %v1832
        %v4859 = vpop.f32.mrf.mxu0
        %v4860 = vadd.f32 %v1800, %v4859
        %v4861 = vpop.f32.mrf.mxu0
        %v4862 = vadd.f32 %v1804, %v4861
        %v4863 = vpop.f32.mrf.mxu0
        %v4864 = vpop.f32.mrf.mxu0
        %4865 = vdwg.mxu0
        %4866 = vmatprep.subr.bf16.mxu0 %v3701
        %4867 = vmatpush1.bf16.msra.mxu0 %v3700
        %4868 = vmatprep.subr.bf16.mxu0 %v3684
        %4869 = vmatpush1.bf16.msra.mxu0 %v3683
        %4870 = vmatprep.subr.bf16.mxu0 %v3667
        %4871 = vmatpush1.bf16.msra.mxu0 %v3666
        %4872 = vmatprep.subr.bf16.mxu0 %v3650
        %4873 = vmatpush1.bf16.msra.mxu0 %v3649
        %4874 = vmatprep.subr.bf16.mxu0 %v3633
        %4875 = vmatpush1.bf16.msra.mxu0 %v3632
        %4876 = vmatprep.subr.bf16.mxu0 %v3616
        %4877 = vmatpush1.bf16.msra.mxu0 %v3615
        %4878 = vmatprep.subr.bf16.mxu0 %v3599
        %4879 = vmatpush1.bf16.msra.mxu0 %v3598
        %4880 = vmatprep.subr.bf16.mxu0 %v3582
        %4881 = vmatpush1.bf16.msra.mxu0 %v3581
        %4882 = vmatprep.subr.bf16.mxu0 0
        %4883 = vmatpush2.bf16.msra.mxu0 0
        %4884 = vmatprep.subr.bf16.mxu0 0
        %4885 = vmatpush2.bf16.msra.mxu0 0
        %4886 = vmatprep.subr.bf16.mxu0 0
        %4887 = vmatpush2.bf16.msra.mxu0 0
        %4888 = vmatprep.subr.bf16.mxu0 0
        %4889 = vmatpush2.bf16.msra.mxu0 0
        %4890 = vmatprep.subr.bf16.mxu0 %v3769
        %4891 = vmatpush2.bf16.msra.mxu0 %v3768
        %4892 = vmatprep.subr.bf16.mxu0 %v3752
        %4893 = vmatpush2.bf16.msra.mxu0 %v3751
        %4894 = vmatprep.subr.bf16.mxu0 %v3735
        %4895 = vmatpush2.bf16.msra.mxu0 %v3734
        %4896 = vmatprep.subr.bf16.mxu0 %v3718
        %4897 = vmatpush2.bf16.msra.mxu0 %v3717
        %4898 = vmatprep.mubr.bf16.mxu0 %v4249
        %4899 = vmatmul.mubr.bf16.gmra.mxu0 %v1834
        %v4900 = vpop.f32.mrf.mxu0
        %v4901 = vadd.f32 %v4860, %v4900
        %v4902 = vpop.f32.mrf.mxu0
        %v4903 = vadd.f32 %v4862, %v4902
        %v4904 = vpop.f32.mrf.mxu0
        %v4905 = vpop.f32.mrf.mxu0
        %4906 = vdwg.mxu0
        %4907 = vmatprep.subr.bf16.mxu0 0
        %4908 = vmatpush1.bf16.msra.mxu0 %v3430
        %4909 = vmatprep.subr.bf16.mxu0 0
        %4910 = vmatpush1.bf16.msra.mxu0 %v3413
        %4911 = vmatprep.subr.bf16.mxu0 0
        %4912 = vmatpush1.bf16.msra.mxu0 %v3396
        %4913 = vmatprep.subr.bf16.mxu0 0
        %4914 = vmatpush1.bf16.msra.mxu0 %v3379
        %4915 = vmatprep.subr.bf16.mxu0 0
        %4916 = vmatpush1.bf16.msra.mxu0 %v3362
        %4917 = vmatprep.subr.bf16.mxu0 0
        %4918 = vmatpush1.bf16.msra.mxu0 %v3345
        %4919 = vmatprep.subr.bf16.mxu0 0
        %4920 = vmatpush1.bf16.msra.mxu0 %v3328
        %4921 = vmatprep.subr.bf16.mxu0 0
        %4922 = vmatpush1.bf16.msra.mxu0 %v3311
        %4923 = vmatprep.subr.bf16.mxu0 0
        %4924 = vmatpush2.bf16.msra.mxu0 %v3566
        %4925 = vmatprep.subr.bf16.mxu0 0
        %4926 = vmatpush2.bf16.msra.mxu0 %v3549
        %4927 = vmatprep.subr.bf16.mxu0 0
        %4928 = vmatpush2.bf16.msra.mxu0 %v3532
        %4929 = vmatprep.subr.bf16.mxu0 0
        %4930 = vmatpush2.bf16.msra.mxu0 %v3515
        %4931 = vmatprep.subr.bf16.mxu0 0
        %4932 = vmatpush2.bf16.msra.mxu0 %v3498
        %4933 = vmatprep.subr.bf16.mxu0 0
        %4934 = vmatpush2.bf16.msra.mxu0 %v3481
        %4935 = vmatprep.subr.bf16.mxu0 0
        %4936 = vmatpush2.bf16.msra.mxu0 %v3464
        %4937 = vmatprep.subr.bf16.mxu0 0
        %4938 = vmatpush2.bf16.msra.mxu0 %v3447
        %4939 = vmatprep.mubr.bf16.mxu0 %v1833
        %4940 = vmatmul.mubr.bf16.gmra.mxu0 %v1832
        %v4941 = vpop.f32.mrf.mxu0
        %v4942 = vadd.f32 %v1808, %v4941
        %v4943 = vpop.f32.mrf.mxu0
        %v4944 = vpop.f32.mrf.mxu0
        %v4945 = vpop.f32.mrf.mxu0
        %4946 = vdwg.mxu0
        %4947 = vmatprep.subr.bf16.mxu0 0
        %4948 = vmatpush1.bf16.msra.mxu0 %v3702
        %4949 = vmatprep.subr.bf16.mxu0 0
        %4950 = vmatpush1.bf16.msra.mxu0 %v3685
        %4951 = vmatprep.subr.bf16.mxu0 0
        %4952 = vmatpush1.bf16.msra.mxu0 %v3668
        %4953 = vmatprep.subr.bf16.mxu0 0
        %4954 = vmatpush1.bf16.msra.mxu0 %v3651
        %4955 = vmatprep.subr.bf16.mxu0 0
        %4956 = vmatpush1.bf16.msra.mxu0 %v3634
        %4957 = vmatprep.subr.bf16.mxu0 0
        %4958 = vmatpush1.bf16.msra.mxu0 %v3617
        %4959 = vmatprep.subr.bf16.mxu0 0
        %4960 = vmatpush1.bf16.msra.mxu0 %v3600
        %4961 = vmatprep.subr.bf16.mxu0 0
        %4962 = vmatpush1.bf16.msra.mxu0 %v3583
        %4963 = vmatprep.subr.bf16.mxu0 0
        %4964 = vmatpush2.bf16.msra.mxu0 0
        %4965 = vmatprep.subr.bf16.mxu0 0
        %4966 = vmatpush2.bf16.msra.mxu0 0
        %4967 = vmatprep.subr.bf16.mxu0 0
        %4968 = vmatpush2.bf16.msra.mxu0 0
        %4969 = vmatprep.subr.bf16.mxu0 0
        %4970 = vmatpush2.bf16.msra.mxu0 0
        %4971 = vmatprep.subr.bf16.mxu0 0
        %4972 = vmatpush2.bf16.msra.mxu0 %v3770
        %4973 = vmatprep.subr.bf16.mxu0 0
        %4974 = vmatpush2.bf16.msra.mxu0 %v3753
        %4975 = vmatprep.subr.bf16.mxu0 0
        %4976 = vmatpush2.bf16.msra.mxu0 %v3736
        %4977 = vmatprep.subr.bf16.mxu0 0
        %4978 = vmatpush2.bf16.msra.mxu0 %v3719
        %4979 = vmatprep.mubr.bf16.mxu0 %v4249
        %4980 = vmatmul.mubr.bf16.gmra.mxu0 %v1834
        %v4981 = vpop.f32.mrf.mxu0
        %v4982 = vadd.f32 %v4942, %v4981
        %v4983 = vpop.f32.mrf.mxu0
        %v4984 = vpop.f32.mrf.mxu0
        %v4985 = vpop.f32.mrf.mxu0
        %4986 = vdwg.mxu0
        %4987 = vst [vmem:[%s1226] sm:$0xff] %v4327
        %4988 = vst [vmem:[%s1226 + $0x8] sm:$0xff] %v4329
        %4989 = vst [vmem:[%s1226 + $0x10] sm:$0xff] %v4409
        %4990 = vst [vmem:[%s1226 + $0x18] sm:$0xff] %v4411
        %4991 = vst [vmem:[%s1226 + $0x20] sm:$0xff] %v4491
        %4992 = vst [vmem:[%s1226 + $0x28] sm:$0xff] %v4493
        %4993 = vst [vmem:[%s1226 + $0x30] sm:$0xff] %v4573
        %4994 = vst [vmem:[%s1226 + $0x38] sm:$0xff] %v4575
        %4995 = vst [vmem:[%s1226 + $0x40] sm:$0xff] %v4655
        %4996 = vst [vmem:[%s1226 + $0x48] sm:$0xff] %v4657
        %4997 = vst [vmem:[%s1226 + $0x50] sm:$0xff] %v4737
        %4998 = vst [vmem:[%s1226 + $0x58] sm:$0xff] %v4739
        %4999 = vst [vmem:[%s1226 + $0x60] sm:$0xff] %v4819
        %5000 = vst [vmem:[%s1226 + $0x68] sm:$0xff] %v4821
        %5001 = vst [vmem:[%s1226 + $0x70] sm:$0xff] %v4901
        %5002 = vst [vmem:[%s1226 + $0x78] sm:$0xff] %v4903
        %5003 = vst [vmem:[%s1226 + $0x80] sm:$0xff] %v4982
        %s5004 = smul.u32 17, %s14
        %p5005 = scmp.lt.s32.totalorder %s5004, 67
        %s5006 = scalar_select %p5005, %s5004, 67
        %s5007 = smul.addr %s5006, 8
        %s5008 = scalar_lea.vmem %s3, %s5007
        // Predicated region
        $region59: #{metro_body_forward.3} parent=53 // pred_check
          %p5009 = pneg %p105
        $region60: #{metro_body_forward.3} parent=53 // pred_check_branch
          %5011 = sbr.rel (%p5009) target = $region62
        $region61: #{metro_body_forward.3} parent=53 // pred_region
          %s5012 = smul.u32 17, %s14
        $region62: #{metro_body_forward.3} parent=53 // pred_fallthru
          _
      $region54: #{metro_body_forward.3} parent=5 // pred_fallthru
        _
      %p5013 = scmp.le.s32.totalorder 2, %s9
      // Predicated region
      $region63: #{metro_body_forward.3} parent=5 // pred_check
        %p5014 = pneg %p5013
      $region64: #{metro_body_forward.3} parent=5 // pred_check_branch
        %5016 = sbr.rel (%p5014) target = $region66
      $region65: #{metro_body_forward.3} parent=5 // pred_region
        %s5017 = ssub.s32 %s9, 2
        // Predicated region
        $region67: #{metro_body_forward.3} parent=65 // pred_check
          %p5018 = pneg %p111
        $region68: #{metro_body_forward.3} parent=65 // pred_check_branch
          %5020 = sbr.rel (%p5018) target = $region70
        $region69: #{metro_body_forward.3} parent=65 // pred_region
          %s5021 = smul.u32 17, %s15
          %p5022 = scmp.lt.s32.totalorder %s5021, 67
          %s5023 = scalar_select %p5022, %s5021, 67
          %s5024 = smul.addr %s5023, 8
          %s5025 = scalar_lea.vmem %s3, %s5024
        $region70: #{metro_body_forward.3} parent=65 // pred_fallthru
          _
      $region66: #{metro_body_forward.3} parent=5 // pred_fallthru
        _
    $region6: #{metro_body_forward.3} parent=1 // loop_footer
      %s13 = sadd.s32 1, %s9
    $region7: #{metro_body_forward.3} parent=1 // loop_footer_branch
      %8 = sbr.rel target = $region3
    $region8: #{metro_body_forward.3} parent=1 // loop_exit
      _

// kernel: metro_body_forward.2
$region0: #{metro_body_forward.2}
  #allocation0 [shape = 'u32[]', space=smem, size = 0x4, offset = 0x4, fixed_abs, tag = 'smem constant byte address 0x4 - core index']
  #allocation1 [shape = 'u32[144,128]{1,0:T(1,128)}', space=vmem, size = 0x12000, scoped, tag = 'internal scratch']
  %s0 = inlined_call_operand.vmem [shape: bf16[2,64,2048], index: 0, kind: input, shape index: {}]
  %s1 = inlined_call_operand.vmem [shape: bf16[2048,64], index: 1, kind: input, shape index: {}]
  %s2 = inlined_call_operand.vmem [shape: bf16[448,64], index: 2, kind: input, shape index: {}]
  %s3 = inlined_call_operand.vmem [shape: f32[448,64], index: 3, kind: input, shape index: {}]
  %s4 = inlined_call_operand.hbm [shape: bf16[64,128], index: 4, kind: input, shape index: {}]
  %s5 = inlined_call_operand.hbm [shape: f32[1,128], index: 5, kind: input, shape index: {}]
  %s6 = inlined_call_operand.vmem [shape: f32[2,448,128], index: 6, kind: output, shape index: {}]
  %s7 = sld [smem:[#allocation0]]
  $region65: #{metro_body_forward.2} parent=0
    _
  %s9 = ssub.s32 1, %s7
  %s10 = scalar_select 0, %s9, %s7
  $region1: #{metro_body_forward.2} parent=0
    #allocation2 [shape = 'u8[16384]{0}', space=vmem, size = 0x4000, scoped, tag = 'input window, operand 4, single buffered']
    #allocation3 [shape = 's32[2]{0}', space=sflag, size = 0x8, scoped, tag = 'scoped memory for metro_body_forward.2']
    #allocation4 [shape = 'u8[512]{0}', space=vmem, size = 0x400, scoped, tag = 'input window, operand 5, single buffered']
    #allocation5 [shape = 's32[1]{0}', space=sflag, size = 0x4, scoped, tag = 'scoped memory for metro_body_forward.2']
    %11 = vsyncpa [#allocation3], 0
    %12 = vsyncpa [#allocation5], 0
    loop: start=0, step=1, limit=4
    $region2: #{metro_body_forward.2} parent=1 // loop_pre_header
      _
    $region3: #{metro_body_forward.2} parent=1 // loop_header
      %s14 = sphi 0, %s18
      %p15 = scmp.ge.s32.totalorder %s14, 4
      %s24 = sphi 0, %s26
      %s27 = sphi 0, %s24
      %s28 = sphi 0, %s27
      %s44 = sphi 0, %s28
      %s48 = sphi 0, %s48
      %s50 = sphi 0, %s48
      %s51 = sphi 0, %s50
      %s65 = sphi 0, %s51
      %s69 = sphi 0, %s69
      %s71 = sphi 0, %s69
      %s72 = sphi 0, %s71
      %s86 = sphi 0, %s72
      %s90 = sphi 0, %s90
      %s92 = sphi 0, %s90
      %s93 = sphi 0, %s92
      %s107 = sphi 0, %s93
      %s111 = sphi 0, %s111
      %s113 = sphi 0, %s111
      %s114 = sphi 0, %s113
      %s128 = sphi 0, %s114
      %s132 = sphi 0, %s132
      %s134 = sphi 0, %s132
      %s135 = sphi 0, %s134
      %s149 = sphi 0, %s135
      %s155 = sphi 0, %s157
      %s158 = sphi 0, %s155
      %s159 = sphi 0, %s158
      %s175 = sphi 0, %s159
    $region4: #{metro_body_forward.2} parent=1 // loop_header_branch
      %17 = sbr.rel (%p15) target = $region8
    $region5: #{metro_body_forward.2} parent=1 // loop_body
      %s19 = ssub.s32 %s14, 1
      %s20 = ssub.s32 %s14, 2
      %s21 = sadd.s32 %s14, 1
      %s22 = ssub.s32 %s14, %s21
      %p23 = scmp.eq.s32.totalorder %s22, 0
      %s25 = sadd.s32 %s24, 1
      %s26 = scalar_select %p23, %s24, %s25
      %p29 = pneg %p23
      %p30 = scmp.eq.s32.totalorder %s14, 1
      %p31 = por %p29, %p30
      %p32 = scmp.ne.s32.totalorder %s24, %s27
      %p33 = scmp.eq.s32.totalorder %s14, 0
      %p34 = por %p32, %p33
      %p35 = scmp.ne.s32.totalorder %s24, %s27
      %p36 = scmp.eq.s32.totalorder %s19, 1
      %p37 = por %p35, %p36
      %p38 = scmp.ne.s32.totalorder %s27, %s28
      %p39 = scmp.eq.s32.totalorder %s19, 0
      %p40 = por %p38, %p39
      %p41 = scmp.ne.s32.totalorder %s27, %s28
      %p42 = scmp.eq.s32.totalorder %s20, 1
      %p43 = por %p41, %p42
      %p45 = scmp.ne.s32.totalorder %s28, %s44
      %p46 = scmp.eq.s32.totalorder %s20, 0
      %p47 = por %p45, %p46
      %s49 = sadd.s32 %s48, 1
      %p52 = scmp.eq.s32.totalorder %s14, 1
      %p53 = scmp.ne.s32.totalorder %s48, %s50
      %p54 = scmp.eq.s32.totalorder %s14, 0
      %p55 = por %p53, %p54
      %p56 = scmp.ne.s32.totalorder %s48, %s50
      %p57 = scmp.eq.s32.totalorder %s19, 1
      %p58 = por %p56, %p57
      %p59 = scmp.ne.s32.totalorder %s50, %s51
      %p60 = scmp.eq.s32.totalorder %s19, 0
      %p61 = por %p59, %p60
      %p62 = scmp.ne.s32.totalorder %s50, %s51
      %p63 = scmp.eq.s32.totalorder %s20, 1
      %p64 = por %p62, %p63
      %p66 = scmp.ne.s32.totalorder %s51, %s65
      %p67 = scmp.eq.s32.totalorder %s20, 0
      %p68 = por %p66, %p67
      %s70 = sadd.s32 %s69, 1
      %p73 = scmp.eq.s32.totalorder %s14, 1
      %p74 = scmp.ne.s32.totalorder %s69, %s71
      %p75 = scmp.eq.s32.totalorder %s14, 0
      %p76 = por %p74, %p75
      %p77 = scmp.ne.s32.totalorder %s69, %s71
      %p78 = scmp.eq.s32.totalorder %s19, 1
      %p79 = por %p77, %p78
      %p80 = scmp.ne.s32.totalorder %s71, %s72
      %p81 = scmp.eq.s32.totalorder %s19, 0
      %p82 = por %p80, %p81
      %p83 = scmp.ne.s32.totalorder %s71, %s72
      %p84 = scmp.eq.s32.totalorder %s20, 1
      %p85 = por %p83, %p84
      %p87 = scmp.ne.s32.totalorder %s72, %s86
      %p88 = scmp.eq.s32.totalorder %s20, 0
      %p89 = por %p87, %p88
      %s91 = sadd.s32 %s90, 1
      %p94 = scmp.eq.s32.totalorder %s14, 1
      %p95 = scmp.ne.s32.totalorder %s90, %s92
      %p96 = scmp.eq.s32.totalorder %s14, 0
      %p97 = por %p95, %p96
      %p98 = scmp.ne.s32.totalorder %s90, %s92
      %p99 = scmp.eq.s32.totalorder %s19, 1
      %p100 = por %p98, %p99
      %p101 = scmp.ne.s32.totalorder %s92, %s93
      %p102 = scmp.eq.s32.totalorder %s19, 0
      %p103 = por %p101, %p102
      %p104 = scmp.ne.s32.totalorder %s92, %s93
      %p105 = scmp.eq.s32.totalorder %s20, 1
      %p106 = por %p104, %p105
      %p108 = scmp.ne.s32.totalorder %s93, %s107
      %p109 = scmp.eq.s32.totalorder %s20, 0
      %p110 = por %p108, %p109
      %s112 = sadd.s32 %s111, 1
      %p115 = scmp.eq.s32.totalorder %s14, 1
      %p116 = scmp.ne.s32.totalorder %s111, %s113
      %p117 = scmp.eq.s32.totalorder %s14, 0
      %p118 = por %p116, %p117
      %p119 = scmp.ne.s32.totalorder %s111, %s113
      %p120 = scmp.eq.s32.totalorder %s19, 1
      %p121 = por %p119, %p120
      %p122 = scmp.ne.s32.totalorder %s113, %s114
      %p123 = scmp.eq.s32.totalorder %s19, 0
      %p124 = por %p122, %p123
      %p125 = scmp.ne.s32.totalorder %s113, %s114
      %p126 = scmp.eq.s32.totalorder %s20, 1
      %p127 = por %p125, %p126
      %p129 = scmp.ne.s32.totalorder %s114, %s128
      %p130 = scmp.eq.s32.totalorder %s20, 0
      %p131 = por %p129, %p130
      %s133 = sadd.s32 %s132, 1
      %p136 = scmp.eq.s32.totalorder %s14, 1
      %p137 = scmp.ne.s32.totalorder %s132, %s134
      %p138 = scmp.eq.s32.totalorder %s14, 0
      %p139 = por %p137, %p138
      %p140 = scmp.ne.s32.totalorder %s132, %s134
      %p141 = scmp.eq.s32.totalorder %s19, 1
      %p142 = por %p140, %p141
      %p143 = scmp.ne.s32.totalorder %s134, %s135
      %p144 = scmp.eq.s32.totalorder %s19, 0
      %p145 = por %p143, %p144
      %p146 = scmp.ne.s32.totalorder %s134, %s135
      %p147 = scmp.eq.s32.totalorder %s20, 1
      %p148 = por %p146, %p147
      %p150 = scmp.ne.s32.totalorder %s135, %s149
      %p151 = scmp.eq.s32.totalorder %s20, 0
      %p152 = por %p150, %p151
      %s153 = ssub.s32 %s14, %s21
      %p154 = scmp.eq.s32.totalorder %s153, 0
      %s156 = sadd.s32 %s155, 1
      %s157 = scalar_select %p154, %s155, %s156
      %p160 = pneg %p154
      %p161 = scmp.eq.s32.totalorder %s14, 1
      %p162 = por %p160, %p161
      %p163 = scmp.ne.s32.totalorder %s155, %s158
      %p164 = scmp.eq.s32.totalorder %s14, 0
      %p165 = por %p163, %p164
      %p166 = scmp.ne.s32.totalorder %s155, %s158
      %p167 = scmp.eq.s32.totalorder %s19, 1
      %p168 = por %p166, %p167
      %p169 = scmp.ne.s32.totalorder %s158, %s159
      %p170 = scmp.eq.s32.totalorder %s19, 0
      %p171 = por %p169, %p170
      %p172 = scmp.ne.s32.totalorder %s158, %s159
      %p173 = scmp.eq.s32.totalorder %s20, 1
      %p174 = por %p172, %p173
      %p176 = scmp.ne.s32.totalorder %s159, %s175
      %p177 = scmp.eq.s32.totalorder %s20, 0
      %p178 = por %p176, %p177
      %p179 = scmp.le.s32.totalorder 1, %s14
      %p180 = scmp.lt.s32.totalorder %s14, 3
      %p181 = pnand %p179, %p180
      %p182 = pneg %p181
      // Predicated region
      $region9: #{metro_body_forward.2} parent=5 // pred_check
        _
      $region10: #{metro_body_forward.2} parent=5 // pred_check_branch
        %184 = sbr.rel (%p181) target = $region12
      $region11: #{metro_body_forward.2} parent=5 // pred_region
        %s185 = ssub.s32 %s14, 1
        // Predicated region
        $region13: #{metro_body_forward.2} parent=11 // pred_check
          %p186 = pneg %p61
        $region14: #{metro_body_forward.2} parent=11 // pred_check_branch
          %188 = sbr.rel (%p186) target = $region16
        $region15: #{metro_body_forward.2} parent=11 // pred_region
          _
        $region16: #{metro_body_forward.2} parent=11 // pred_fallthru
          _
        // Predicated region
        $region17: #{metro_body_forward.2} parent=11 // pred_check
          %p189 = pneg %p82
        $region18: #{metro_body_forward.2} parent=11 // pred_check_branch
          %191 = sbr.rel (%p189) target = $region20
        $region19: #{metro_body_forward.2} parent=11 // pred_region
          _
        $region20: #{metro_body_forward.2} parent=11 // pred_fallthru
          _
        // Predicated region
        $region21: #{metro_body_forward.2} parent=11 // pred_check
          %p192 = pneg %p103
        $region22: #{metro_body_forward.2} parent=11 // pred_check_branch
          %194 = sbr.rel (%p192) target = $region24
        $region23: #{metro_body_forward.2} parent=11 // pred_region
          _
        $region24: #{metro_body_forward.2} parent=11 // pred_fallthru
          _
        // Predicated region
        $region25: #{metro_body_forward.2} parent=11 // pred_check
          %p195 = pneg %p124
        $region26: #{metro_body_forward.2} parent=11 // pred_check_branch
          %197 = sbr.rel (%p195) target = $region28
        $region27: #{metro_body_forward.2} parent=11 // pred_region
          %s199 = ssub.s32 512, 512
          %200 = vsyncadd [#allocation3], %s199
          %s201 = sshll.u32 [#allocation2], 4
          %s202 = int_to_ptr.vmem [resolvable:$true] %s201
          %207 = dma.hbm_to_vmem [thread:$0]  %s4, 512, %s202, [#allocation3], 64, 64, 4
        $region28: #{metro_body_forward.2} parent=11 // pred_fallthru
          _
        // Predicated region
        $region29: #{metro_body_forward.2} parent=11 // pred_check
          %p208 = pneg %p145
        $region30: #{metro_body_forward.2} parent=11 // pred_check_branch
          %210 = sbr.rel (%p208) target = $region32
        $region31: #{metro_body_forward.2} parent=11 // pred_region
          %s212 = ssub.s32 16, 16
          %213 = vsyncadd [#allocation5], %s212
          %s215 = sshll.u32 [#allocation4], 4
          %s216 = int_to_ptr.vmem [resolvable:$true] %s215
          %218 = dma.hbm_to_vmem [thread:$0]  %s5, 16, %s216, [#allocation5]
        $region32: #{metro_body_forward.2} parent=11 // pred_fallthru
          _
      $region12: #{metro_body_forward.2} parent=5 // pred_fallthru
        _
      %p219 = scmp.lt.s32.totalorder %s14, 2
      // Predicated region
      $region33: #{metro_body_forward.2} parent=5 // pred_check
        %p220 = pneg %p219
      $region34: #{metro_body_forward.2} parent=5 // pred_check_branch
        %222 = sbr.rel (%p220) target = $region36
      $region35: #{metro_body_forward.2} parent=5 // pred_region
        // Predicated region
        $region37: #{metro_body_forward.2} parent=35 // pred_check
          %p223 = pneg %p34
        $region38: #{metro_body_forward.2} parent=35 // pred_check_branch
          %225 = sbr.rel (%p223) target = $region40
        $region39: #{metro_body_forward.2} parent=35 // pred_region
          %p226 = scmp.lt.s32.totalorder %s14, 1
          %s227 = scalar_select %p226, %s14, 1
          %s228 = smul.addr %s227, 128
          %s229 = smul.addr %s228, 4
          %s230 = scalar_lea.vmem %s0, %s229
        $region40: #{metro_body_forward.2} parent=35 // pred_fallthru
          _
      $region36: #{metro_body_forward.2} parent=5 // pred_fallthru
        _
      %p231 = scmp.le.s32.totalorder 1, %s14
      %p232 = scmp.lt.s32.totalorder %s14, 3
      %p233 = pnand %p231, %p232
      %p234 = pneg %p233
      // Predicated region
      $region41: #{metro_body_forward.2} parent=5 // pred_check
        _
      $region42: #{metro_body_forward.2} parent=5 // pred_check_branch
        %236 = sbr.rel (%p233) target = $region44
      $region43: #{metro_body_forward.2} parent=5 // pred_region
        %s237 = ssub.s32 %s14, 1
        // Predicated region
        $region45: #{metro_body_forward.2} parent=43 // pred_check
          %p238 = pneg %p124
        $region46: #{metro_body_forward.2} parent=43 // pred_check_branch
          %240 = sbr.rel (%p238) target = $region48
        $region47: #{metro_body_forward.2} parent=43 // pred_region
          %241 = dma.done [#allocation3], 512
        $region48: #{metro_body_forward.2} parent=43 // pred_fallthru
          _
        // Predicated region
        $region49: #{metro_body_forward.2} parent=43 // pred_check
          %p242 = pneg %p145
        $region50: #{metro_body_forward.2} parent=43 // pred_check_branch
          %244 = sbr.rel (%p242) target = $region52
        $region51: #{metro_body_forward.2} parent=43 // pred_region
          %245 = dma.done [#allocation5], 16
        $region52: #{metro_body_forward.2} parent=43 // pred_fallthru
          _
        %p246 = scmp.lt.s32.totalorder %s19, 1
        %s247 = scalar_select %p246, %s19, 1
        %s248 = smul.addr %s247, 128
        %s249 = smul.addr %s248, 4
        %s250 = scalar_lea.vmem %s0, %s249
        %p251 = pneg %p40
        %p252 = pneg %p37
        %p253 = pneg %p61
        %p254 = pneg %p58
        %p255 = pneg %p82
        %p256 = pneg %p79
        %p257 = pneg %p103
        %p258 = pneg %p100
        %p259 = pneg %p124
        %p260 = pneg %p121
        %p261 = pneg %p145
        %p262 = pneg %p142
        %p263 = pneg %p171
        %p264 = pneg %p168
        %p265 = scmp.lt.s32.totalorder %s19, 1
        %s266 = scalar_select %p265, %s19, 1
        %s267 = smul.addr %s266, 56
        %s268 = smul.addr %s267, 8
        %s269 = scalar_lea.vmem %s6, %s268
        %p270 = scmp.lt.s32.totalorder %s19, 1
        %s271 = scalar_select %p270, %s19, 1
        %s272 = smul.addr %s271, 128
        %s273 = smul.addr %s272, 4
        %s274 = scalar_lea.vmem %s0, %s273
        %p275 = scmp.lt.s32.totalorder %s19, 1
        %s276 = scalar_select %p275, %s19, 1
        %s277 = smul.addr %s276, 56
        %s278 = smul.addr %s277, 8
        %s279 = scalar_lea.vmem %s6, %s278
        %v281 = vld [vmem:[%s274] sm:$0xff]
        %v282 = vld [vmem:[%s274 + $0x8] sm:$0xff]
        %v283 = vld [vmem:[%s274 + $0x10] sm:$0xff]
        %v284 = vld [vmem:[%s274 + $0x18] sm:$0xff]
        %v285 = vld [vmem:[%s274 + $0x20] sm:$0xff]
        %v286 = vld [vmem:[%s274 + $0x28] sm:$0xff]
        %v287 = vld [vmem:[%s274 + $0x30] sm:$0xff]
        %v288 = vld [vmem:[%s274 + $0x38] sm:$0xff]
        %v289 = vld [vmem:[%s274 + $0x40] sm:$0xff]
        %v290 = vld [vmem:[%s274 + $0x48] sm:$0xff]
        %v291 = vld [vmem:[%s274 + $0x50] sm:$0xff]
        %v292 = vld [vmem:[%s274 + $0x58] sm:$0xff]
        %v293 = vld [vmem:[%s274 + $0x60] sm:$0xff]
        %v294 = vld [vmem:[%s274 + $0x68] sm:$0xff]
        %v295 = vld [vmem:[%s274 + $0x70] sm:$0xff]
        %v296 = vld [vmem:[%s274 + $0x78] sm:$0xff]
        %v297 = vld [vmem:[%s274 + $0x80] sm:$0xff]
        %v298 = vld [vmem:[%s274 + $0x88] sm:$0xff]
        %v299 = vld [vmem:[%s274 + $0x90] sm:$0xff]
        %v300 = vld [vmem:[%s274 + $0x98] sm:$0xff]
        %v301 = vld [vmem:[%s274 + $0xa0] sm:$0xff]
        %v302 = vld [vmem:[%s274 + $0xa8] sm:$0xff]
        %v303 = vld [vmem:[%s274 + $0xb0] sm:$0xff]
        %v304 = vld [vmem:[%s274 + $0xb8] sm:$0xff]
        %v305 = vld [vmem:[%s274 + $0xc0] sm:$0xff]
        %v306 = vld [vmem:[%s274 + $0xc8] sm:$0xff]
        %v307 = vld [vmem:[%s274 + $0xd0] sm:$0xff]
        %v308 = vld [vmem:[%s274 + $0xd8] sm:$0xff]
        %v309 = vld [vmem:[%s274 + $0xe0] sm:$0xff]
        %v310 = vld [vmem:[%s274 + $0xe8] sm:$0xff]
        %v311 = vld [vmem:[%s274 + $0xf0] sm:$0xff]
        %v312 = vld [vmem:[%s274 + $0xf8] sm:$0xff]
        %v313 = vld [vmem:[%s274 + $0x100] sm:$0xff]
        %v314 = vld [vmem:[%s274 + $0x108] sm:$0xff]
        %v315 = vld [vmem:[%s274 + $0x110] sm:$0xff]
        %v316 = vld [vmem:[%s274 + $0x118] sm:$0xff]
        %v317 = vld [vmem:[%s274 + $0x120] sm:$0xff]
        %v318 = vld [vmem:[%s274 + $0x128] sm:$0xff]
        %v319 = vld [vmem:[%s274 + $0x130] sm:$0xff]
        %v320 = vld [vmem:[%s274 + $0x138] sm:$0xff]
        %v321 = vld [vmem:[%s274 + $0x140] sm:$0xff]
        %v322 = vld [vmem:[%s274 + $0x148] sm:$0xff]
        %v323 = vld [vmem:[%s274 + $0x150] sm:$0xff]
        %v324 = vld [vmem:[%s274 + $0x158] sm:$0xff]
        %v325 = vld [vmem:[%s274 + $0x160] sm:$0xff]
        %v326 = vld [vmem:[%s274 + $0x168] sm:$0xff]
        %v327 = vld [vmem:[%s274 + $0x170] sm:$0xff]
        %v328 = vld [vmem:[%s274 + $0x178] sm:$0xff]
        %v329 = vld [vmem:[%s274 + $0x180] sm:$0xff]
        %v330 = vld [vmem:[%s274 + $0x188] sm:$0xff]
        %v331 = vld [vmem:[%s274 + $0x190] sm:$0xff]
        %v332 = vld [vmem:[%s274 + $0x198] sm:$0xff]
        %v333 = vld [vmem:[%s274 + $0x1a0] sm:$0xff]
        %v334 = vld [vmem:[%s274 + $0x1a8] sm:$0xff]
        %v335 = vld [vmem:[%s274 + $0x1b0] sm:$0xff]
        %v336 = vld [vmem:[%s274 + $0x1b8] sm:$0xff]
        %v337 = vld [vmem:[%s274 + $0x1c0] sm:$0xff]
        %v338 = vld [vmem:[%s274 + $0x1c8] sm:$0xff]
        %v339 = vld [vmem:[%s274 + $0x1d0] sm:$0xff]
        %v340 = vld [vmem:[%s274 + $0x1d8] sm:$0xff]
        %v341 = vld [vmem:[%s274 + $0x1e0] sm:$0xff]
        %v342 = vld [vmem:[%s274 + $0x1e8] sm:$0xff]
        %v343 = vld [vmem:[%s274 + $0x1f0] sm:$0xff]
        %v344 = vld [vmem:[%s274 + $0x1f8] sm:$0xff]
        %v345 = vld [vmem:[%s1] sm:$0xf]
        %v346 = vld [vmem:[%s1 + $0x4] sm:$0xf]
        %v347 = vld [vmem:[%s1 + $0x8] sm:$0xf]
        %v348 = vld [vmem:[%s1 + $0xc] sm:$0xf]
        %v349 = vld [vmem:[%s1 + $0x10] sm:$0xf]
        %v350 = vld [vmem:[%s1 + $0x14] sm:$0xf]
        %v351 = vld [vmem:[%s1 + $0x18] sm:$0xf]
        %v352 = vld [vmem:[%s1 + $0x1c] sm:$0xf]
        %v353 = vld [vmem:[%s1 + $0x20] sm:$0xf]
        %v354 = vld [vmem:[%s1 + $0x24] sm:$0xf]
        %v355 = vld [vmem:[%s1 + $0x28] sm:$0xf]
        %v356 = vld [vmem:[%s1 + $0x2c] sm:$0xf]
        %v357 = vld [vmem:[%s1 + $0x30] sm:$0xf]
        %v358 = vld [vmem:[%s1 + $0x34] sm:$0xf]
        %v359 = vld [vmem:[%s1 + $0x38] sm:$0xf]
        %v360 = vld [vmem:[%s1 + $0x3c] sm:$0xf]
        %v361 = vld [vmem:[%s1 + $0x40] sm:$0xf]
        %v362 = vld [vmem:[%s1 + $0x44] sm:$0xf]
        %v363 = vld [vmem:[%s1 + $0x48] sm:$0xf]
        %v364 = vld [vmem:[%s1 + $0x4c] sm:$0xf]
        %v365 = vld [vmem:[%s1 + $0x50] sm:$0xf]
        %v366 = vld [vmem:[%s1 + $0x54] sm:$0xf]
        %v367 = vld [vmem:[%s1 + $0x58] sm:$0xf]
        %v368 = vld [vmem:[%s1 + $0x5c] sm:$0xf]
        %v369 = vld [vmem:[%s1 + $0x60] sm:$0xf]
        %v370 = vld [vmem:[%s1 + $0x64] sm:$0xf]
        %v371 = vld [vmem:[%s1 + $0x68] sm:$0xf]
        %v372 = vld [vmem:[%s1 + $0x6c] sm:$0xf]
        %v373 = vld [vmem:[%s1 + $0x70] sm:$0xf]
        %v374 = vld [vmem:[%s1 + $0x74] sm:$0xf]
        %v375 = vld [vmem:[%s1 + $0x78] sm:$0xf]
        %v376 = vld [vmem:[%s1 + $0x7c] sm:$0xf]
        %v377 = vld [vmem:[%s1 + $0x80] sm:$0xf]
        %v378 = vld [vmem:[%s1 + $0x84] sm:$0xf]
        %v379 = vld [vmem:[%s1 + $0x88] sm:$0xf]
        %v380 = vld [vmem:[%s1 + $0x8c] sm:$0xf]
        %v381 = vld [vmem:[%s1 + $0x90] sm:$0xf]
        %v382 = vld [vmem:[%s1 + $0x94] sm:$0xf]
        %v383 = vld [vmem:[%s1 + $0x98] sm:$0xf]
        %v384 = vld [vmem:[%s1 + $0x9c] sm:$0xf]
        %v385 = vld [vmem:[%s1 + $0xa0] sm:$0xf]
        %v386 = vld [vmem:[%s1 + $0xa4] sm:$0xf]
        %v387 = vld [vmem:[%s1 + $0xa8] sm:$0xf]
        %v388 = vld [vmem:[%s1 + $0xac] sm:$0xf]
        %v389 = vld [vmem:[%s1 + $0xb0] sm:$0xf]
        %v390 = vld [vmem:[%s1 + $0xb4] sm:$0xf]
        %v391 = vld [vmem:[%s1 + $0xb8] sm:$0xf]
        %v392 = vld [vmem:[%s1 + $0xbc] sm:$0xf]
        %v393 = vld [vmem:[%s1 + $0xc0] sm:$0xf]
        %v394 = vld [vmem:[%s1 + $0xc4] sm:$0xf]
        %v395 = vld [vmem:[%s1 + $0xc8] sm:$0xf]
        %v396 = vld [vmem:[%s1 + $0xcc] sm:$0xf]
        %v397 = vld [vmem:[%s1 + $0xd0] sm:$0xf]
        %v398 = vld [vmem:[%s1 + $0xd4] sm:$0xf]
        %v399 = vld [vmem:[%s1 + $0xd8] sm:$0xf]
        %v400 = vld [vmem:[%s1 + $0xdc] sm:$0xf]
        %v401 = vld [vmem:[%s1 + $0xe0] sm:$0xf]
        %v402 = vld [vmem:[%s1 + $0xe4] sm:$0xf]
        %v403 = vld [vmem:[%s1 + $0xe8] sm:$0xf]
        %v404 = vld [vmem:[%s1 + $0xec] sm:$0xf]
        %v405 = vld [vmem:[%s1 + $0xf0] sm:$0xf]
        %v406 = vld [vmem:[%s1 + $0xf4] sm:$0xf]
        %v407 = vld [vmem:[%s1 + $0xf8] sm:$0xf]
        %v408 = vld [vmem:[%s1 + $0xfc] sm:$0xf]
        %v409 = vld [vmem:[%s1 + $0x100] sm:$0xf]
        %v410 = vld [vmem:[%s1 + $0x104] sm:$0xf]
        %v411 = vld [vmem:[%s1 + $0x108] sm:$0xf]
        %v412 = vld [vmem:[%s1 + $0x10c] sm:$0xf]
        %v413 = vld [vmem:[%s1 + $0x110] sm:$0xf]
        %v414 = vld [vmem:[%s1 + $0x114] sm:$0xf]
        %v415 = vld [vmem:[%s1 + $0x118] sm:$0xf]
        %v416 = vld [vmem:[%s1 + $0x11c] sm:$0xf]
        %v417 = vld [vmem:[%s1 + $0x120] sm:$0xf]
        %v418 = vld [vmem:[%s1 + $0x124] sm:$0xf]
        %v419 = vld [vmem:[%s1 + $0x128] sm:$0xf]
        %v420 = vld [vmem:[%s1 + $0x12c] sm:$0xf]
        %v421 = vld [vmem:[%s1 + $0x130] sm:$0xf]
        %v422 = vld [vmem:[%s1 + $0x134] sm:$0xf]
        %v423 = vld [vmem:[%s1 + $0x138] sm:$0xf]
        %v424 = vld [vmem:[%s1 + $0x13c] sm:$0xf]
        %v425 = vld [vmem:[%s1 + $0x140] sm:$0xf]
        %v426 = vld [vmem:[%s1 + $0x144] sm:$0xf]
        %v427 = vld [vmem:[%s1 + $0x148] sm:$0xf]
        %v428 = vld [vmem:[%s1 + $0x14c] sm:$0xf]
        %v429 = vld [vmem:[%s1 + $0x150] sm:$0xf]
        %v430 = vld [vmem:[%s1 + $0x154] sm:$0xf]
        %v431 = vld [vmem:[%s1 + $0x158] sm:$0xf]
        %v432 = vld [vmem:[%s1 + $0x15c] sm:$0xf]
        %v433 = vld [vmem:[%s1 + $0x160] sm:$0xf]
        %v434 = vld [vmem:[%s1 + $0x164] sm:$0xf]
        %v435 = vld [vmem:[%s1 + $0x168] sm:$0xf]
        %v436 = vld [vmem:[%s1 + $0x16c] sm:$0xf]
        %v437 = vld [vmem:[%s1 + $0x170] sm:$0xf]
        %v438 = vld [vmem:[%s1 + $0x174] sm:$0xf]
        %v439 = vld [vmem:[%s1 + $0x178] sm:$0xf]
        %v440 = vld [vmem:[%s1 + $0x17c] sm:$0xf]
        %v441 = vld [vmem:[%s1 + $0x180] sm:$0xf]
        %v442 = vld [vmem:[%s1 + $0x184] sm:$0xf]
        %v443 = vld [vmem:[%s1 + $0x188] sm:$0xf]
        %v444 = vld [vmem:[%s1 + $0x18c] sm:$0xf]
        %v445 = vld [vmem:[%s1 + $0x190] sm:$0xf]
        %v446 = vld [vmem:[%s1 + $0x194] sm:$0xf]
        %v447 = vld [vmem:[%s1 + $0x198] sm:$0xf]
        %v448 = vld [vmem:[%s1 + $0x19c] sm:$0xf]
        %v449 = vld [vmem:[%s1 + $0x1a0] sm:$0xf]
        %v450 = vld [vmem:[%s1 + $0x1a4] sm:$0xf]
        %v451 = vld [vmem:[%s1 + $0x1a8] sm:$0xf]
        %v452 = vld [vmem:[%s1 + $0x1ac] sm:$0xf]
        %v453 = vld [vmem:[%s1 + $0x1b0] sm:$0xf]
        %v454 = vld [vmem:[%s1 + $0x1b4] sm:$0xf]
        %v455 = vld [vmem:[%s1 + $0x1b8] sm:$0xf]
        %v456 = vld [vmem:[%s1 + $0x1bc] sm:$0xf]
        %v457 = vld [vmem:[%s1 + $0x1c0] sm:$0xf]
        %v458 = vld [vmem:[%s1 + $0x1c4] sm:$0xf]
        %v459 = vld [vmem:[%s1 + $0x1c8] sm:$0xf]
        %v460 = vld [vmem:[%s1 + $0x1cc] sm:$0xf]
        %v461 = vld [vmem:[%s1 + $0x1d0] sm:$0xf]
        %v462 = vld [vmem:[%s1 + $0x1d4] sm:$0xf]
        %v463 = vld [vmem:[%s1 + $0x1d8] sm:$0xf]
        %v464 = vld [vmem:[%s1 + $0x1dc] sm:$0xf]
        %v465 = vld [vmem:[%s1 + $0x1e0] sm:$0xf]
        %v466 = vld [vmem:[%s1 + $0x1e4] sm:$0xf]
        %v467 = vld [vmem:[%s1 + $0x1e8] sm:$0xf]
        %v468 = vld [vmem:[%s1 + $0x1ec] sm:$0xf]
        %v469 = vld [vmem:[%s1 + $0x1f0] sm:$0xf]
        %v470 = vld [vmem:[%s1 + $0x1f4] sm:$0xf]
        %v471 = vld [vmem:[%s1 + $0x1f8] sm:$0xf]
        %v472 = vld [vmem:[%s1 + $0x1fc] sm:$0xf]
        %v473 = vld [vmem:[%s1 + $0x200] sm:$0xf]
        %v474 = vld [vmem:[%s1 + $0x204] sm:$0xf]
        %v475 = vld [vmem:[%s1 + $0x208] sm:$0xf]
        %v476 = vld [vmem:[%s1 + $0x20c] sm:$0xf]
        %v477 = vld [vmem:[%s1 + $0x210] sm:$0xf]
        %v478 = vld [vmem:[%s1 + $0x214] sm:$0xf]
        %v479 = vld [vmem:[%s1 + $0x218] sm:$0xf]
        %v480 = vld [vmem:[%s1 + $0x21c] sm:$0xf]
        %v481 = vld [vmem:[%s1 + $0x220] sm:$0xf]
        %v482 = vld [vmem:[%s1 + $0x224] sm:$0xf]
        %v483 = vld [vmem:[%s1 + $0x228] sm:$0xf]
        %v484 = vld [vmem:[%s1 + $0x22c] sm:$0xf]
        %v485 = vld [vmem:[%s1 + $0x230] sm:$0xf]
        %v486 = vld [vmem:[%s1 + $0x234] sm:$0xf]
        %v487 = vld [vmem:[%s1 + $0x238] sm:$0xf]
        %v488 = vld [vmem:[%s1 + $0x23c] sm:$0xf]
        %v489 = vld [vmem:[%s1 + $0x240] sm:$0xf]
        %v490 = vld [vmem:[%s1 + $0x244] sm:$0xf]
        %v491 = vld [vmem:[%s1 + $0x248] sm:$0xf]
        %v492 = vld [vmem:[%s1 + $0x24c] sm:$0xf]
        %v493 = vld [vmem:[%s1 + $0x250] sm:$0xf]
        %v494 = vld [vmem:[%s1 + $0x254] sm:$0xf]
        %v495 = vld [vmem:[%s1 + $0x258] sm:$0xf]
        %v496 = vld [vmem:[%s1 + $0x25c] sm:$0xf]
        %v497 = vld [vmem:[%s1 + $0x260] sm:$0xf]
        %v498 = vld [vmem:[%s1 + $0x264] sm:$0xf]
        %v499 = vld [vmem:[%s1 + $0x268] sm:$0xf]
        %v500 = vld [vmem:[%s1 + $0x26c] sm:$0xf]
        %v501 = vld [vmem:[%s1 + $0x270] sm:$0xf]
        %v502 = vld [vmem:[%s1 + $0x274] sm:$0xf]
        %v503 = vld [vmem:[%s1 + $0x278] sm:$0xf]
        %v504 = vld [vmem:[%s1 + $0x27c] sm:$0xf]
        %v505 = vld [vmem:[%s1 + $0x280] sm:$0xf]
        %v506 = vld [vmem:[%s1 + $0x284] sm:$0xf]
        %v507 = vld [vmem:[%s1 + $0x288] sm:$0xf]
        %v508 = vld [vmem:[%s1 + $0x28c] sm:$0xf]
        %v509 = vld [vmem:[%s1 + $0x290] sm:$0xf]
        %v510 = vld [vmem:[%s1 + $0x294] sm:$0xf]
        %v511 = vld [vmem:[%s1 + $0x298] sm:$0xf]
        %v512 = vld [vmem:[%s1 + $0x29c] sm:$0xf]
        %v513 = vld [vmem:[%s1 + $0x2a0] sm:$0xf]
        %v514 = vld [vmem:[%s1 + $0x2a4] sm:$0xf]
        %v515 = vld [vmem:[%s1 + $0x2a8] sm:$0xf]
        %v516 = vld [vmem:[%s1 + $0x2ac] sm:$0xf]
        %v517 = vld [vmem:[%s1 + $0x2b0] sm:$0xf]
        %v518 = vld [vmem:[%s1 + $0x2b4] sm:$0xf]
        %v519 = vld [vmem:[%s1 + $0x2b8] sm:$0xf]
        %v520 = vld [vmem:[%s1 + $0x2bc] sm:$0xf]
        %v521 = vld [vmem:[%s1 + $0x2c0] sm:$0xf]
        %v522 = vld [vmem:[%s1 + $0x2c4] sm:$0xf]
        %v523 = vld [vmem:[%s1 + $0x2c8] sm:$0xf]
        %v524 = vld [vmem:[%s1 + $0x2cc] sm:$0xf]
        %v525 = vld [vmem:[%s1 + $0x2d0] sm:$0xf]
        %v526 = vld [vmem:[%s1 + $0x2d4] sm:$0xf]
        %v527 = vld [vmem:[%s1 + $0x2d8] sm:$0xf]
        %v528 = vld [vmem:[%s1 + $0x2dc] sm:$0xf]
        %v529 = vld [vmem:[%s1 + $0x2e0] sm:$0xf]
        %v530 = vld [vmem:[%s1 + $0x2e4] sm:$0xf]
        %v531 = vld [vmem:[%s1 + $0x2e8] sm:$0xf]
        %v532 = vld [vmem:[%s1 + $0x2ec] sm:$0xf]
        %v533 = vld [vmem:[%s1 + $0x2f0] sm:$0xf]
        %v534 = vld [vmem:[%s1 + $0x2f4] sm:$0xf]
        %v535 = vld [vmem:[%s1 + $0x2f8] sm:$0xf]
        %v536 = vld [vmem:[%s1 + $0x2fc] sm:$0xf]
        %v537 = vld [vmem:[%s1 + $0x300] sm:$0xf]
        %v538 = vld [vmem:[%s1 + $0x304] sm:$0xf]
        %v539 = vld [vmem:[%s1 + $0x308] sm:$0xf]
        %v540 = vld [vmem:[%s1 + $0x30c] sm:$0xf]
        %v541 = vld [vmem:[%s1 + $0x310] sm:$0xf]
        %v542 = vld [vmem:[%s1 + $0x314] sm:$0xf]
        %v543 = vld [vmem:[%s1 + $0x318] sm:$0xf]
        %v544 = vld [vmem:[%s1 + $0x31c] sm:$0xf]
        %v545 = vld [vmem:[%s1 + $0x320] sm:$0xf]
        %v546 = vld [vmem:[%s1 + $0x324] sm:$0xf]
        %v547 = vld [vmem:[%s1 + $0x328] sm:$0xf]
        %v548 = vld [vmem:[%s1 + $0x32c] sm:$0xf]
        %v549 = vld [vmem:[%s1 + $0x330] sm:$0xf]
        %v550 = vld [vmem:[%s1 + $0x334] sm:$0xf]
        %v551 = vld [vmem:[%s1 + $0x338] sm:$0xf]
        %v552 = vld [vmem:[%s1 + $0x33c] sm:$0xf]
        %v553 = vld [vmem:[%s1 + $0x340] sm:$0xf]
        %v554 = vld [vmem:[%s1 + $0x344] sm:$0xf]
        %v555 = vld [vmem:[%s1 + $0x348] sm:$0xf]
        %v556 = vld [vmem:[%s1 + $0x34c] sm:$0xf]
        %v557 = vld [vmem:[%s1 + $0x350] sm:$0xf]
        %v558 = vld [vmem:[%s1 + $0x354] sm:$0xf]
        %v559 = vld [vmem:[%s1 + $0x358] sm:$0xf]
        %v560 = vld [vmem:[%s1 + $0x35c] sm:$0xf]
        %v561 = vld [vmem:[%s1 + $0x360] sm:$0xf]
        %v562 = vld [vmem:[%s1 + $0x364] sm:$0xf]
        %v563 = vld [vmem:[%s1 + $0x368] sm:$0xf]
        %v564 = vld [vmem:[%s1 + $0x36c] sm:$0xf]
        %v565 = vld [vmem:[%s1 + $0x370] sm:$0xf]
        %v566 = vld [vmem:[%s1 + $0x374] sm:$0xf]
        %v567 = vld [vmem:[%s1 + $0x378] sm:$0xf]
        %v568 = vld [vmem:[%s1 + $0x37c] sm:$0xf]
        %v569 = vld [vmem:[%s1 + $0x380] sm:$0xf]
        %v570 = vld [vmem:[%s1 + $0x384] sm:$0xf]
        %v571 = vld [vmem:[%s1 + $0x388] sm:$0xf]
        %v572 = vld [vmem:[%s1 + $0x38c] sm:$0xf]
        %v573 = vld [vmem:[%s1 + $0x390] sm:$0xf]
        %v574 = vld [vmem:[%s1 + $0x394] sm:$0xf]
        %v575 = vld [vmem:[%s1 + $0x398] sm:$0xf]
        %v576 = vld [vmem:[%s1 + $0x39c] sm:$0xf]
        %v577 = vld [vmem:[%s1 + $0x3a0] sm:$0xf]
        %v578 = vld [vmem:[%s1 + $0x3a4] sm:$0xf]
        %v579 = vld [vmem:[%s1 + $0x3a8] sm:$0xf]
        %v580 = vld [vmem:[%s1 + $0x3ac] sm:$0xf]
        %v581 = vld [vmem:[%s1 + $0x3b0] sm:$0xf]
        %v582 = vld [vmem:[%s1 + $0x3b4] sm:$0xf]
        %v583 = vld [vmem:[%s1 + $0x3b8] sm:$0xf]
        %v584 = vld [vmem:[%s1 + $0x3bc] sm:$0xf]
        %v585 = vld [vmem:[%s1 + $0x3c0] sm:$0xf]
        %v586 = vld [vmem:[%s1 + $0x3c4] sm:$0xf]
        %v587 = vld [vmem:[%s1 + $0x3c8] sm:$0xf]
        %v588 = vld [vmem:[%s1 + $0x3cc] sm:$0xf]
        %v589 = vld [vmem:[%s1 + $0x3d0] sm:$0xf]
        %v590 = vld [vmem:[%s1 + $0x3d4] sm:$0xf]
        %v591 = vld [vmem:[%s1 + $0x3d8] sm:$0xf]
        %v592 = vld [vmem:[%s1 + $0x3dc] sm:$0xf]
        %v593 = vld [vmem:[%s1 + $0x3e0] sm:$0xf]
        %v594 = vld [vmem:[%s1 + $0x3e4] sm:$0xf]
        %v595 = vld [vmem:[%s1 + $0x3e8] sm:$0xf]
        %v596 = vld [vmem:[%s1 + $0x3ec] sm:$0xf]
        %v597 = vld [vmem:[%s1 + $0x3f0] sm:$0xf]
        %v598 = vld [vmem:[%s1 + $0x3f4] sm:$0xf]
        %v599 = vld [vmem:[%s1 + $0x3f8] sm:$0xf]
        %v600 = vld [vmem:[%s1 + $0x3fc] sm:$0xf]
        %v665 = vunpack.c.l.b16 %v281
        %v666 = vunpack.c.h.b16 %v281
        %v667 = vunpack.c.l.b16 %v282
        %v668 = vunpack.c.h.b16 %v282
        %v669 = vunpack.c.l.b16 %v283
        %v670 = vunpack.c.h.b16 %v283
        %v671 = vunpack.c.l.b16 %v284
        %v672 = vunpack.c.h.b16 %v284
        %v673 = vunpack.c.l.b16 %v285
        %v674 = vunpack.c.h.b16 %v285
        %v675 = vunpack.c.l.b16 %v286
        %v676 = vunpack.c.h.b16 %v286
        %v677 = vunpack.c.l.b16 %v287
        %v678 = vunpack.c.h.b16 %v287
        %v679 = vunpack.c.l.b16 %v288
        %v680 = vunpack.c.h.b16 %v288
        %v681 = vunpack.c.l.b16 %v289
        %v682 = vunpack.c.h.b16 %v289
        %v683 = vunpack.c.l.b16 %v290
        %v684 = vunpack.c.h.b16 %v290
        %v685 = vunpack.c.l.b16 %v291
        %v686 = vunpack.c.h.b16 %v291
        %v687 = vunpack.c.l.b16 %v292
        %v688 = vunpack.c.h.b16 %v292
        %v689 = vunpack.c.l.b16 %v293
        %v690 = vunpack.c.h.b16 %v293
        %v691 = vunpack.c.l.b16 %v294
        %v692 = vunpack.c.h.b16 %v294
        %v693 = vunpack.c.l.b16 %v295
        %v694 = vunpack.c.h.b16 %v295
        %v695 = vunpack.c.l.b16 %v296
        %v696 = vunpack.c.h.b16 %v296
        %v697 = vunpack.c.l.b16 %v297
        %v698 = vunpack.c.h.b16 %v297
        %v699 = vunpack.c.l.b16 %v298
        %v700 = vunpack.c.h.b16 %v298
        %v701 = vunpack.c.l.b16 %v299
        %v702 = vunpack.c.h.b16 %v299
        %v703 = vunpack.c.l.b16 %v300
        %v704 = vunpack.c.h.b16 %v300
        %v705 = vunpack.c.l.b16 %v301
        %v706 = vunpack.c.h.b16 %v301
        %v707 = vunpack.c.l.b16 %v302
        %v708 = vunpack.c.h.b16 %v302
        %v709 = vunpack.c.l.b16 %v303
        %v710 = vunpack.c.h.b16 %v303
        %v711 = vunpack.c.l.b16 %v304
        %v712 = vunpack.c.h.b16 %v304
        %v713 = vunpack.c.l.b16 %v305
        %v714 = vunpack.c.h.b16 %v305
        %v715 = vunpack.c.l.b16 %v306
        %v716 = vunpack.c.h.b16 %v306
        %v717 = vunpack.c.l.b16 %v307
        %v718 = vunpack.c.h.b16 %v307
        %v719 = vunpack.c.l.b16 %v308
        %v720 = vunpack.c.h.b16 %v308
        %v721 = vunpack.c.l.b16 %v309
        %v722 = vunpack.c.h.b16 %v309
        %v723 = vunpack.c.l.b16 %v310
        %v724 = vunpack.c.h.b16 %v310
        %v725 = vunpack.c.l.b16 %v311
        %v726 = vunpack.c.h.b16 %v311
        %v727 = vunpack.c.l.b16 %v312
        %v728 = vunpack.c.h.b16 %v312
        %v729 = vunpack.c.l.b16 %v313
        %v730 = vunpack.c.h.b16 %v313
        %v731 = vunpack.c.l.b16 %v314
        %v732 = vunpack.c.h.b16 %v314
        %v733 = vunpack.c.l.b16 %v315
        %v734 = vunpack.c.h.b16 %v315
        %v735 = vunpack.c.l.b16 %v316
        %v736 = vunpack.c.h.b16 %v316
        %v737 = vunpack.c.l.b16 %v317
        %v738 = vunpack.c.h.b16 %v317
        %v739 = vunpack.c.l.b16 %v318
        %v740 = vunpack.c.h.b16 %v318
        %v741 = vunpack.c.l.b16 %v319
        %v742 = vunpack.c.h.b16 %v319
        %v743 = vunpack.c.l.b16 %v320
        %v744 = vunpack.c.h.b16 %v320
        %v745 = vunpack.c.l.b16 %v321
        %v746 = vunpack.c.h.b16 %v321
        %v747 = vunpack.c.l.b16 %v322
        %v748 = vunpack.c.h.b16 %v322
        %v749 = vunpack.c.l.b16 %v323
        %v750 = vunpack.c.h.b16 %v323
        %v751 = vunpack.c.l.b16 %v324
        %v752 = vunpack.c.h.b16 %v324
        %v753 = vunpack.c.l.b16 %v325
        %v754 = vunpack.c.h.b16 %v325
        %v755 = vunpack.c.l.b16 %v326
        %v756 = vunpack.c.h.b16 %v326
        %v757 = vunpack.c.l.b16 %v327
        %v758 = vunpack.c.h.b16 %v327
        %v759 = vunpack.c.l.b16 %v328
        %v760 = vunpack.c.h.b16 %v328
        %v761 = vunpack.c.l.b16 %v329
        %v762 = vunpack.c.h.b16 %v329
        %v763 = vunpack.c.l.b16 %v330
        %v764 = vunpack.c.h.b16 %v330
        %v765 = vunpack.c.l.b16 %v331
        %v766 = vunpack.c.h.b16 %v331
        %v767 = vunpack.c.l.b16 %v332
        %v768 = vunpack.c.h.b16 %v332
        %v769 = vunpack.c.l.b16 %v333
        %v770 = vunpack.c.h.b16 %v333
        %v771 = vunpack.c.l.b16 %v334
        %v772 = vunpack.c.h.b16 %v334
        %v773 = vunpack.c.l.b16 %v335
        %v774 = vunpack.c.h.b16 %v335
        %v775 = vunpack.c.l.b16 %v336
        %v776 = vunpack.c.h.b16 %v336
        %v777 = vunpack.c.l.b16 %v337
        %v778 = vunpack.c.h.b16 %v337
        %v779 = vunpack.c.l.b16 %v338
        %v780 = vunpack.c.h.b16 %v338
        %v781 = vunpack.c.l.b16 %v339
        %v782 = vunpack.c.h.b16 %v339
        %v783 = vunpack.c.l.b16 %v340
        %v784 = vunpack.c.h.b16 %v340
        %v785 = vunpack.c.l.b16 %v341
        %v786 = vunpack.c.h.b16 %v341
        %v787 = vunpack.c.l.b16 %v342
        %v788 = vunpack.c.h.b16 %v342
        %v789 = vunpack.c.l.b16 %v343
        %v790 = vunpack.c.h.b16 %v343
        %v791 = vunpack.c.l.b16 %v344
        %v792 = vunpack.c.h.b16 %v344
        %v793 = vpack.c.b16 %v681, %v665
        %v794 = vpack.c.b16 %v682, %v666
        %v795 = vpack.c.b16 %v683, %v667
        %v796 = vpack.c.b16 %v684, %v668
        %v797 = vpack.c.b16 %v685, %v669
        %v798 = vpack.c.b16 %v686, %v670
        %v799 = vpack.c.b16 %v687, %v671
        %v800 = vpack.c.b16 %v688, %v672
        %v801 = vpack.c.b16 %v689, %v673
        %v802 = vpack.c.b16 %v690, %v674
        %v803 = vpack.c.b16 %v691, %v675
        %v804 = vpack.c.b16 %v692, %v676
        %v805 = vpack.c.b16 %v693, %v677
        %v806 = vpack.c.b16 %v694, %v678
        %v807 = vpack.c.b16 %v695, %v679
        %v808 = vpack.c.b16 %v696, %v680
        %v809 = vpack.c.b16 %v713, %v697
        %v810 = vpack.c.b16 %v714, %v698
        %v811 = vpack.c.b16 %v715, %v699
        %v812 = vpack.c.b16 %v716, %v700
        %v813 = vpack.c.b16 %v717, %v701
        %v814 = vpack.c.b16 %v718, %v702
        %v815 = vpack.c.b16 %v719, %v703
        %v816 = vpack.c.b16 %v720, %v704
        %v817 = vpack.c.b16 %v721, %v705
        %v818 = vpack.c.b16 %v722, %v706
        %v819 = vpack.c.b16 %v723, %v707
        %v820 = vpack.c.b16 %v724, %v708
        %v821 = vpack.c.b16 %v725, %v709
        %v822 = vpack.c.b16 %v726, %v710
        %v823 = vpack.c.b16 %v727, %v711
        %v824 = vpack.c.b16 %v728, %v712
        %v825 = vpack.c.b16 %v745, %v729
        %v826 = vpack.c.b16 %v746, %v730
        %v827 = vpack.c.b16 %v747, %v731
        %v828 = vpack.c.b16 %v748, %v732
        %v829 = vpack.c.b16 %v749, %v733
        %v830 = vpack.c.b16 %v750, %v734
        %v831 = vpack.c.b16 %v751, %v735
        %v832 = vpack.c.b16 %v752, %v736
        %v833 = vpack.c.b16 %v753, %v737
        %v834 = vpack.c.b16 %v754, %v738
        %v835 = vpack.c.b16 %v755, %v739
        %v836 = vpack.c.b16 %v756, %v740
        %v837 = vpack.c.b16 %v757, %v741
        %v838 = vpack.c.b16 %v758, %v742
        %v839 = vpack.c.b16 %v759, %v743
        %v840 = vpack.c.b16 %v760, %v744
        %v841 = vpack.c.b16 %v777, %v761
        %v842 = vpack.c.b16 %v778, %v762
        %v843 = vpack.c.b16 %v779, %v763
        %v844 = vpack.c.b16 %v780, %v764
        %v845 = vpack.c.b16 %v781, %v765
        %v846 = vpack.c.b16 %v782, %v766
        %v847 = vpack.c.b16 %v783, %v767
        %v848 = vpack.c.b16 %v784, %v768
        %v849 = vpack.c.b16 %v785, %v769
        %v850 = vpack.c.b16 %v786, %v770
        %v851 = vpack.c.b16 %v787, %v771
        %v852 = vpack.c.b16 %v788, %v772
        %v853 = vpack.c.b16 %v789, %v773
        %v854 = vpack.c.b16 %v790, %v774
        %v855 = vpack.c.b16 %v791, %v775
        %v856 = vpack.c.b16 %v792, %v776
        %v1177 = vunpack.c.l.b16 %v345
        %v1178 = vunpack.c.l.b16 %v346
        %v1179 = vunpack.c.l.b16 %v347
        %v1180 = vunpack.c.l.b16 %v348
        %v1181 = vunpack.c.l.b16 %v349
        %v1182 = vunpack.c.l.b16 %v350
        %v1183 = vunpack.c.l.b16 %v351
        %v1184 = vunpack.c.l.b16 %v352
        %v1185 = vunpack.c.l.b16 %v353
        %v1186 = vunpack.c.l.b16 %v354
        %v1187 = vunpack.c.l.b16 %v355
        %v1188 = vunpack.c.l.b16 %v356
        %v1189 = vunpack.c.l.b16 %v357
        %v1190 = vunpack.c.l.b16 %v358
        %v1191 = vunpack.c.l.b16 %v359
        %v1192 = vunpack.c.l.b16 %v360
        %v1193 = vunpack.c.l.b16 %v361
        %v1194 = vunpack.c.l.b16 %v362
        %v1195 = vunpack.c.l.b16 %v363
        %v1196 = vunpack.c.l.b16 %v364
        %v1197 = vunpack.c.l.b16 %v365
        %v1198 = vunpack.c.l.b16 %v366
        %v1199 = vunpack.c.l.b16 %v367
        %v1200 = vunpack.c.l.b16 %v368
        %v1201 = vunpack.c.l.b16 %v369
        %v1202 = vunpack.c.l.b16 %v370
        %v1203 = vunpack.c.l.b16 %v371
        %v1204 = vunpack.c.l.b16 %v372
        %v1205 = vunpack.c.l.b16 %v373
        %v1206 = vunpack.c.l.b16 %v374
        %v1207 = vunpack.c.l.b16 %v375
        %v1208 = vunpack.c.l.b16 %v376
        %v1209 = vunpack.c.l.b16 %v377
        %v1210 = vunpack.c.l.b16 %v378
        %v1211 = vunpack.c.l.b16 %v379
        %v1212 = vunpack.c.l.b16 %v380
        %v1213 = vunpack.c.l.b16 %v381
        %v1214 = vunpack.c.l.b16 %v382
        %v1215 = vunpack.c.l.b16 %v383
        %v1216 = vunpack.c.l.b16 %v384
        %v1217 = vunpack.c.l.b16 %v385
        %v1218 = vunpack.c.l.b16 %v386
        %v1219 = vunpack.c.l.b16 %v387
        %v1220 = vunpack.c.l.b16 %v388
        %v1221 = vunpack.c.l.b16 %v389
        %v1222 = vunpack.c.l.b16 %v390
        %v1223 = vunpack.c.l.b16 %v391
        %v1224 = vunpack.c.l.b16 %v392
        %v1225 = vunpack.c.l.b16 %v393
        %v1226 = vunpack.c.l.b16 %v394
        %v1227 = vunpack.c.l.b16 %v395
        %v1228 = vunpack.c.l.b16 %v396
        %v1229 = vunpack.c.l.b16 %v397
        %v1230 = vunpack.c.l.b16 %v398
        %v1231 = vunpack.c.l.b16 %v399
        %v1232 = vunpack.c.l.b16 %v400
        %v1233 = vunpack.c.l.b16 %v401
        %v1234 = vunpack.c.l.b16 %v402
        %v1235 = vunpack.c.l.b16 %v403
        %v1236 = vunpack.c.l.b16 %v404
        %v1237 = vunpack.c.l.b16 %v405
        %v1238 = vunpack.c.l.b16 %v406
        %v1239 = vunpack.c.l.b16 %v407
        %v1240 = vunpack.c.l.b16 %v408
        %v1241 = vunpack.c.l.b16 %v409
        %v1242 = vunpack.c.l.b16 %v410
        %v1243 = vunpack.c.l.b16 %v411
        %v1244 = vunpack.c.l.b16 %v412
        %v1245 = vunpack.c.l.b16 %v413
        %v1246 = vunpack.c.l.b16 %v414
        %v1247 = vunpack.c.l.b16 %v415
        %v1248 = vunpack.c.l.b16 %v416
        %v1249 = vunpack.c.l.b16 %v417
        %v1250 = vunpack.c.l.b16 %v418
        %v1251 = vunpack.c.l.b16 %v419
        %v1252 = vunpack.c.l.b16 %v420
        %v1253 = vunpack.c.l.b16 %v421
        %v1254 = vunpack.c.l.b16 %v422
        %v1255 = vunpack.c.l.b16 %v423
        %v1256 = vunpack.c.l.b16 %v424
        %v1257 = vunpack.c.l.b16 %v425
        %v1258 = vunpack.c.l.b16 %v426
        %v1259 = vunpack.c.l.b16 %v427
        %v1260 = vunpack.c.l.b16 %v428
        %v1261 = vunpack.c.l.b16 %v429
        %v1262 = vunpack.c.l.b16 %v430
        %v1263 = vunpack.c.l.b16 %v431
        %v1264 = vunpack.c.l.b16 %v432
        %v1265 = vunpack.c.l.b16 %v433
        %v1266 = vunpack.c.l.b16 %v434
        %v1267 = vunpack.c.l.b16 %v435
        %v1268 = vunpack.c.l.b16 %v436
        %v1269 = vunpack.c.l.b16 %v437
        %v1270 = vunpack.c.l.b16 %v438
        %v1271 = vunpack.c.l.b16 %v439
        %v1272 = vunpack.c.l.b16 %v440
        %v1273 = vunpack.c.l.b16 %v441
        %v1274 = vunpack.c.l.b16 %v442
        %v1275 = vunpack.c.l.b16 %v443
        %v1276 = vunpack.c.l.b16 %v444
        %v1277 = vunpack.c.l.b16 %v445
        %v1278 = vunpack.c.l.b16 %v446
        %v1279 = vunpack.c.l.b16 %v447
        %v1280 = vunpack.c.l.b16 %v448
        %v1281 = vunpack.c.l.b16 %v449
        %v1282 = vunpack.c.l.b16 %v450
        %v1283 = vunpack.c.l.b16 %v451
        %v1284 = vunpack.c.l.b16 %v452
        %v1285 = vunpack.c.l.b16 %v453
        %v1286 = vunpack.c.l.b16 %v454
        %v1287 = vunpack.c.l.b16 %v455
        %v1288 = vunpack.c.l.b16 %v456
        %v1289 = vunpack.c.l.b16 %v457
        %v1290 = vunpack.c.l.b16 %v458
        %v1291 = vunpack.c.l.b16 %v459
        %v1292 = vunpack.c.l.b16 %v460
        %v1293 = vunpack.c.l.b16 %v461
        %v1294 = vunpack.c.l.b16 %v462
        %v1295 = vunpack.c.l.b16 %v463
        %v1296 = vunpack.c.l.b16 %v464
        %v1297 = vunpack.c.l.b16 %v465
        %v1298 = vunpack.c.l.b16 %v466
        %v1299 = vunpack.c.l.b16 %v467
        %v1300 = vunpack.c.l.b16 %v468
        %v1301 = vunpack.c.l.b16 %v469
        %v1302 = vunpack.c.l.b16 %v470
        %v1303 = vunpack.c.l.b16 %v471
        %v1304 = vunpack.c.l.b16 %v472
        %v1305 = vunpack.c.l.b16 %v473
        %v1306 = vunpack.c.l.b16 %v474
        %v1307 = vunpack.c.l.b16 %v475
        %v1308 = vunpack.c.l.b16 %v476
        %v1309 = vunpack.c.l.b16 %v477
        %v1310 = vunpack.c.l.b16 %v478
        %v1311 = vunpack.c.l.b16 %v479
        %v1312 = vunpack.c.l.b16 %v480
        %v1313 = vunpack.c.l.b16 %v481
        %v1314 = vunpack.c.l.b16 %v482
        %v1315 = vunpack.c.l.b16 %v483
        %v1316 = vunpack.c.l.b16 %v484
        %v1317 = vunpack.c.l.b16 %v485
        %v1318 = vunpack.c.l.b16 %v486
        %v1319 = vunpack.c.l.b16 %v487
        %v1320 = vunpack.c.l.b16 %v488
        %v1321 = vunpack.c.l.b16 %v489
        %v1322 = vunpack.c.l.b16 %v490
        %v1323 = vunpack.c.l.b16 %v491
        %v1324 = vunpack.c.l.b16 %v492
        %v1325 = vunpack.c.l.b16 %v493
        %v1326 = vunpack.c.l.b16 %v494
        %v1327 = vunpack.c.l.b16 %v495
        %v1328 = vunpack.c.l.b16 %v496
        %v1329 = vunpack.c.l.b16 %v497
        %v1330 = vunpack.c.l.b16 %v498
        %v1331 = vunpack.c.l.b16 %v499
        %v1332 = vunpack.c.l.b16 %v500
        %v1333 = vunpack.c.l.b16 %v501
        %v1334 = vunpack.c.l.b16 %v502
        %v1335 = vunpack.c.l.b16 %v503
        %v1336 = vunpack.c.l.b16 %v504
        %v1337 = vunpack.c.l.b16 %v505
        %v1338 = vunpack.c.l.b16 %v506
        %v1339 = vunpack.c.l.b16 %v507
        %v1340 = vunpack.c.l.b16 %v508
        %v1341 = vunpack.c.l.b16 %v509
        %v1342 = vunpack.c.l.b16 %v510
        %v1343 = vunpack.c.l.b16 %v511
        %v1344 = vunpack.c.l.b16 %v512
        %v1345 = vunpack.c.l.b16 %v513
        %v1346 = vunpack.c.l.b16 %v514
        %v1347 = vunpack.c.l.b16 %v515
        %v1348 = vunpack.c.l.b16 %v516
        %v1349 = vunpack.c.l.b16 %v517
        %v1350 = vunpack.c.l.b16 %v518
        %v1351 = vunpack.c.l.b16 %v519
        %v1352 = vunpack.c.l.b16 %v520
        %v1353 = vunpack.c.l.b16 %v521
        %v1354 = vunpack.c.l.b16 %v522
        %v1355 = vunpack.c.l.b16 %v523
        %v1356 = vunpack.c.l.b16 %v524
        %v1357 = vunpack.c.l.b16 %v525
        %v1358 = vunpack.c.l.b16 %v526
        %v1359 = vunpack.c.l.b16 %v527
        %v1360 = vunpack.c.l.b16 %v528
        %v1361 = vunpack.c.l.b16 %v529
        %v1362 = vunpack.c.l.b16 %v530
        %v1363 = vunpack.c.l.b16 %v531
        %v1364 = vunpack.c.l.b16 %v532
        %v1365 = vunpack.c.l.b16 %v533
        %v1366 = vunpack.c.l.b16 %v534
        %v1367 = vunpack.c.l.b16 %v535
        %v1368 = vunpack.c.l.b16 %v536
        %v1369 = vunpack.c.l.b16 %v537
        %v1370 = vunpack.c.l.b16 %v538
        %v1371 = vunpack.c.l.b16 %v539
        %v1372 = vunpack.c.l.b16 %v540
        %v1373 = vunpack.c.l.b16 %v541
        %v1374 = vunpack.c.l.b16 %v542
        %v1375 = vunpack.c.l.b16 %v543
        %v1376 = vunpack.c.l.b16 %v544
        %v1377 = vunpack.c.l.b16 %v545
        %v1378 = vunpack.c.l.b16 %v546
        %v1379 = vunpack.c.l.b16 %v547
        %v1380 = vunpack.c.l.b16 %v548
        %v1381 = vunpack.c.l.b16 %v549
        %v1382 = vunpack.c.l.b16 %v550
        %v1383 = vunpack.c.l.b16 %v551
        %v1384 = vunpack.c.l.b16 %v552
        %v1385 = vunpack.c.l.b16 %v553
        %v1386 = vunpack.c.l.b16 %v554
        %v1387 = vunpack.c.l.b16 %v555
        %v1388 = vunpack.c.l.b16 %v556
        %v1389 = vunpack.c.l.b16 %v557
        %v1390 = vunpack.c.l.b16 %v558
        %v1391 = vunpack.c.l.b16 %v559
        %v1392 = vunpack.c.l.b16 %v560
        %v1393 = vunpack.c.l.b16 %v561
        %v1394 = vunpack.c.l.b16 %v562
        %v1395 = vunpack.c.l.b16 %v563
        %v1396 = vunpack.c.l.b16 %v564
        %v1397 = vunpack.c.l.b16 %v565
        %v1398 = vunpack.c.l.b16 %v566
        %v1399 = vunpack.c.l.b16 %v567
        %v1400 = vunpack.c.l.b16 %v568
        %v1401 = vunpack.c.l.b16 %v569
        %v1402 = vunpack.c.l.b16 %v570
        %v1403 = vunpack.c.l.b16 %v571
        %v1404 = vunpack.c.l.b16 %v572
        %v1405 = vunpack.c.l.b16 %v573
        %v1406 = vunpack.c.l.b16 %v574
        %v1407 = vunpack.c.l.b16 %v575
        %v1408 = vunpack.c.l.b16 %v576
        %v1409 = vunpack.c.l.b16 %v577
        %v1410 = vunpack.c.l.b16 %v578
        %v1411 = vunpack.c.l.b16 %v579
        %v1412 = vunpack.c.l.b16 %v580
        %v1413 = vunpack.c.l.b16 %v581
        %v1414 = vunpack.c.l.b16 %v582
        %v1415 = vunpack.c.l.b16 %v583
        %v1416 = vunpack.c.l.b16 %v584
        %v1417 = vunpack.c.l.b16 %v585
        %v1418 = vunpack.c.l.b16 %v586
        %v1419 = vunpack.c.l.b16 %v587
        %v1420 = vunpack.c.l.b16 %v588
        %v1421 = vunpack.c.l.b16 %v589
        %v1422 = vunpack.c.l.b16 %v590
        %v1423 = vunpack.c.l.b16 %v591
        %v1424 = vunpack.c.l.b16 %v592
        %v1425 = vunpack.c.l.b16 %v593
        %v1426 = vunpack.c.l.b16 %v594
        %v1427 = vunpack.c.l.b16 %v595
        %v1428 = vunpack.c.l.b16 %v596
        %v1429 = vunpack.c.l.b16 %v597
        %v1430 = vunpack.c.l.b16 %v598
        %v1431 = vunpack.c.l.b16 %v599
        %v1432 = vunpack.c.l.b16 %v600
        %v1433 = vpack.c.b16 %v1178, %v1177
        %v1434 = vpack.c.b16 %v1180, %v1179
        %v1435 = vpack.c.b16 %v1182, %v1181
        %v1436 = vpack.c.b16 %v1184, %v1183
        %v1437 = vpack.c.b16 %v1186, %v1185
        %v1438 = vpack.c.b16 %v1188, %v1187
        %v1439 = vpack.c.b16 %v1190, %v1189
        %v1440 = vpack.c.b16 %v1192, %v1191
        %v1441 = vpack.c.b16 %v1194, %v1193
        %v1442 = vpack.c.b16 %v1196, %v1195
        %v1443 = vpack.c.b16 %v1198, %v1197
        %v1444 = vpack.c.b16 %v1200, %v1199
        %v1445 = vpack.c.b16 %v1202, %v1201
        %v1446 = vpack.c.b16 %v1204, %v1203
        %v1447 = vpack.c.b16 %v1206, %v1205
        %v1448 = vpack.c.b16 %v1208, %v1207
        %v1449 = vpack.c.b16 %v1210, %v1209
        %v1450 = vpack.c.b16 %v1212, %v1211
        %v1451 = vpack.c.b16 %v1214, %v1213
        %v1452 = vpack.c.b16 %v1216, %v1215
        %v1453 = vpack.c.b16 %v1218, %v1217
        %v1454 = vpack.c.b16 %v1220, %v1219
        %v1455 = vpack.c.b16 %v1222, %v1221
        %v1456 = vpack.c.b16 %v1224, %v1223
        %v1457 = vpack.c.b16 %v1226, %v1225
        %v1458 = vpack.c.b16 %v1228, %v1227
        %v1459 = vpack.c.b16 %v1230, %v1229
        %v1460 = vpack.c.b16 %v1232, %v1231
        %v1461 = vpack.c.b16 %v1234, %v1233
        %v1462 = vpack.c.b16 %v1236, %v1235
        %v1463 = vpack.c.b16 %v1238, %v1237
        %v1464 = vpack.c.b16 %v1240, %v1239
        %v1465 = vpack.c.b16 %v1242, %v1241
        %v1466 = vpack.c.b16 %v1244, %v1243
        %v1467 = vpack.c.b16 %v1246, %v1245
        %v1468 = vpack.c.b16 %v1248, %v1247
        %v1469 = vpack.c.b16 %v1250, %v1249
        %v1470 = vpack.c.b16 %v1252, %v1251
        %v1471 = vpack.c.b16 %v1254, %v1253
        %v1472 = vpack.c.b16 %v1256, %v1255
        %v1473 = vpack.c.b16 %v1258, %v1257
        %v1474 = vpack.c.b16 %v1260, %v1259
        %v1475 = vpack.c.b16 %v1262, %v1261
        %v1476 = vpack.c.b16 %v1264, %v1263
        %v1477 = vpack.c.b16 %v1266, %v1265
        %v1478 = vpack.c.b16 %v1268, %v1267
        %v1479 = vpack.c.b16 %v1270, %v1269
        %v1480 = vpack.c.b16 %v1272, %v1271
        %v1481 = vpack.c.b16 %v1274, %v1273
        %v1482 = vpack.c.b16 %v1276, %v1275
        %v1483 = vpack.c.b16 %v1278, %v1277
        %v1484 = vpack.c.b16 %v1280, %v1279
        %v1485 = vpack.c.b16 %v1282, %v1281
        %v1486 = vpack.c.b16 %v1284, %v1283
        %v1487 = vpack.c.b16 %v1286, %v1285
        %v1488 = vpack.c.b16 %v1288, %v1287
        %v1489 = vpack.c.b16 %v1290, %v1289
        %v1490 = vpack.c.b16 %v1292, %v1291
        %v1491 = vpack.c.b16 %v1294, %v1293
        %v1492 = vpack.c.b16 %v1296, %v1295
        %v1493 = vpack.c.b16 %v1298, %v1297
        %v1494 = vpack.c.b16 %v1300, %v1299
        %v1495 = vpack.c.b16 %v1302, %v1301
        %v1496 = vpack.c.b16 %v1304, %v1303
        %v1497 = vpack.c.b16 %v1306, %v1305
        %v1498 = vpack.c.b16 %v1308, %v1307
        %v1499 = vpack.c.b16 %v1310, %v1309
        %v1500 = vpack.c.b16 %v1312, %v1311
        %v1501 = vpack.c.b16 %v1314, %v1313
        %v1502 = vpack.c.b16 %v1316, %v1315
        %v1503 = vpack.c.b16 %v1318, %v1317
        %v1504 = vpack.c.b16 %v1320, %v1319
        %v1505 = vpack.c.b16 %v1322, %v1321
        %v1506 = vpack.c.b16 %v1324, %v1323
        %v1507 = vpack.c.b16 %v1326, %v1325
        %v1508 = vpack.c.b16 %v1328, %v1327
        %v1509 = vpack.c.b16 %v1330, %v1329
        %v1510 = vpack.c.b16 %v1332, %v1331
        %v1511 = vpack.c.b16 %v1334, %v1333
        %v1512 = vpack.c.b16 %v1336, %v1335
        %v1513 = vpack.c.b16 %v1338, %v1337
        %v1514 = vpack.c.b16 %v1340, %v1339
        %v1515 = vpack.c.b16 %v1342, %v1341
        %v1516 = vpack.c.b16 %v1344, %v1343
        %v1517 = vpack.c.b16 %v1346, %v1345
        %v1518 = vpack.c.b16 %v1348, %v1347
        %v1519 = vpack.c.b16 %v1350, %v1349
        %v1520 = vpack.c.b16 %v1352, %v1351
        %v1521 = vpack.c.b16 %v1354, %v1353
        %v1522 = vpack.c.b16 %v1356, %v1355
        %v1523 = vpack.c.b16 %v1358, %v1357
        %v1524 = vpack.c.b16 %v1360, %v1359
        %v1525 = vpack.c.b16 %v1362, %v1361
        %v1526 = vpack.c.b16 %v1364, %v1363
        %v1527 = vpack.c.b16 %v1366, %v1365
        %v1528 = vpack.c.b16 %v1368, %v1367
        %v1529 = vpack.c.b16 %v1370, %v1369
        %v1530 = vpack.c.b16 %v1372, %v1371
        %v1531 = vpack.c.b16 %v1374, %v1373
        %v1532 = vpack.c.b16 %v1376, %v1375
        %v1533 = vpack.c.b16 %v1378, %v1377
        %v1534 = vpack.c.b16 %v1380, %v1379
        %v1535 = vpack.c.b16 %v1382, %v1381
        %v1536 = vpack.c.b16 %v1384, %v1383
        %v1537 = vpack.c.b16 %v1386, %v1385
        %v1538 = vpack.c.b16 %v1388, %v1387
        %v1539 = vpack.c.b16 %v1390, %v1389
        %v1540 = vpack.c.b16 %v1392, %v1391
        %v1541 = vpack.c.b16 %v1394, %v1393
        %v1542 = vpack.c.b16 %v1396, %v1395
        %v1543 = vpack.c.b16 %v1398, %v1397
        %v1544 = vpack.c.b16 %v1400, %v1399
        %v1545 = vpack.c.b16 %v1402, %v1401
        %v1546 = vpack.c.b16 %v1404, %v1403
        %v1547 = vpack.c.b16 %v1406, %v1405
        %v1548 = vpack.c.b16 %v1408, %v1407
        %v1549 = vpack.c.b16 %v1410, %v1409
        %v1550 = vpack.c.b16 %v1412, %v1411
        %v1551 = vpack.c.b16 %v1414, %v1413
        %v1552 = vpack.c.b16 %v1416, %v1415
        %v1553 = vpack.c.b16 %v1418, %v1417
        %v1554 = vpack.c.b16 %v1420, %v1419
        %v1555 = vpack.c.b16 %v1422, %v1421
        %v1556 = vpack.c.b16 %v1424, %v1423
        %v1557 = vpack.c.b16 %v1426, %v1425
        %v1558 = vpack.c.b16 %v1428, %v1427
        %v1559 = vpack.c.b16 %v1430, %v1429
        %v1560 = vpack.c.b16 %v1432, %v1431
        %1689 = vmatprep.subr.bf16.mxu0 0
        %1690 = vmatpush1.bf16.msra.mxu0 %v1440
        %1691 = vmatprep.subr.bf16.mxu0 0
        %1692 = vmatpush1.bf16.msra.mxu0 %v1439
        %1693 = vmatprep.subr.bf16.mxu0 0
        %1694 = vmatpush1.bf16.msra.mxu0 %v1438
        %1695 = vmatprep.subr.bf16.mxu0 0
        %1696 = vmatpush1.bf16.msra.mxu0 %v1437
        %1697 = vmatprep.subr.bf16.mxu0 0
        %1698 = vmatpush1.bf16.msra.mxu0 %v1436
        %1699 = vmatprep.subr.bf16.mxu0 0
        %1700 = vmatpush1.bf16.msra.mxu0 %v1435
        %1701 = vmatprep.subr.bf16.mxu0 0
        %1702 = vmatpush1.bf16.msra.mxu0 %v1434
        %1703 = vmatprep.subr.bf16.mxu0 0
        %1704 = vmatpush1.bf16.msra.mxu0 %v1433
        %1705 = vmatprep.subr.bf16.mxu0 0
        %1706 = vmatpush2.bf16.msra.mxu0 %v1448
        %1707 = vmatprep.subr.bf16.mxu0 0
        %1708 = vmatpush2.bf16.msra.mxu0 %v1447
        %1709 = vmatprep.subr.bf16.mxu0 0
        %1710 = vmatpush2.bf16.msra.mxu0 %v1446
        %1711 = vmatprep.subr.bf16.mxu0 0
        %1712 = vmatpush2.bf16.msra.mxu0 %v1445
        %1713 = vmatprep.subr.bf16.mxu0 0
        %1714 = vmatpush2.bf16.msra.mxu0 %v1444
        %1715 = vmatprep.subr.bf16.mxu0 0
        %1716 = vmatpush2.bf16.msra.mxu0 %v1443
        %1717 = vmatprep.subr.bf16.mxu0 0
        %1718 = vmatpush2.bf16.msra.mxu0 %v1442
        %1719 = vmatprep.subr.bf16.mxu0 0
        %1720 = vmatpush2.bf16.msra.mxu0 %v1441
        %1721 = vmatprep.mubr.bf16.mxu0 %v794
        %1722 = vmatmul.mubr.bf16.gmra.mxu0 %v793
        %v1723 = vpop.f32.mrf.mxu0
        %v1724 = vadd.f32 0.0, %v1723
        %v1725 = vpop.f32.mrf.mxu0
        %v1726 = vpop.f32.mrf.mxu0
        %v1727 = vadd.f32 0.0, %v1726
        %v1728 = vpop.f32.mrf.mxu0
        %1729 = vmatprep.mubr.bf16.mxu0 %v810
        %1730 = vmatmul.mubr.bf16.gmra.mxu0 %v809
        %v1731 = vpop.f32.mrf.mxu0
        %v1732 = vadd.f32 0.0, %v1731
        %v1733 = vpop.f32.mrf.mxu0
        %v1734 = vpop.f32.mrf.mxu0
        %v1735 = vadd.f32 0.0, %v1734
        %v1736 = vpop.f32.mrf.mxu0
        %1737 = vmatprep.mubr.bf16.mxu0 %v826
        %1738 = vmatmul.mubr.bf16.gmra.mxu0 %v825
        %v1739 = vpop.f32.mrf.mxu0
        %v1740 = vadd.f32 0.0, %v1739
        %v1741 = vpop.f32.mrf.mxu0
        %v1742 = vpop.f32.mrf.mxu0
        %v1743 = vadd.f32 0.0, %v1742
        %v1744 = vpop.f32.mrf.mxu0
        %1745 = vmatprep.mubr.bf16.mxu0 %v842
        %1746 = vmatmul.mubr.bf16.gmra.mxu0 %v841
        %v1747 = vpop.f32.mrf.mxu0
        %v1748 = vadd.f32 0.0, %v1747
        %v1749 = vpop.f32.mrf.mxu0
        %v1750 = vpop.f32.mrf.mxu0
        %v1751 = vadd.f32 0.0, %v1750
        %v1752 = vpop.f32.mrf.mxu0
        %1753 = vdwg.mxu0
        %1754 = vmatprep.subr.bf16.mxu0 0
        %1755 = vmatpush1.bf16.msra.mxu0 %v1456
        %1756 = vmatprep.subr.bf16.mxu0 0
        %1757 = vmatpush1.bf16.msra.mxu0 %v1455
        %1758 = vmatprep.subr.bf16.mxu0 0
        %1759 = vmatpush1.bf16.msra.mxu0 %v1454
        %1760 = vmatprep.subr.bf16.mxu0 0
        %1761 = vmatpush1.bf16.msra.mxu0 %v1453
        %1762 = vmatprep.subr.bf16.mxu0 0
        %1763 = vmatpush1.bf16.msra.mxu0 %v1452
        %1764 = vmatprep.subr.bf16.mxu0 0
        %1765 = vmatpush1.bf16.msra.mxu0 %v1451
        %1766 = vmatprep.subr.bf16.mxu0 0
        %1767 = vmatpush1.bf16.msra.mxu0 %v1450
        %1768 = vmatprep.subr.bf16.mxu0 0
        %1769 = vmatpush1.bf16.msra.mxu0 %v1449
        %1770 = vmatprep.subr.bf16.mxu0 0
        %1771 = vmatpush2.bf16.msra.mxu0 %v1464
        %1772 = vmatprep.subr.bf16.mxu0 0
        %1773 = vmatpush2.bf16.msra.mxu0 %v1463
        %1774 = vmatprep.subr.bf16.mxu0 0
        %1775 = vmatpush2.bf16.msra.mxu0 %v1462
        %1776 = vmatprep.subr.bf16.mxu0 0
        %1777 = vmatpush2.bf16.msra.mxu0 %v1461
        %1778 = vmatprep.subr.bf16.mxu0 0
        %1779 = vmatpush2.bf16.msra.mxu0 %v1460
        %1780 = vmatprep.subr.bf16.mxu0 0
        %1781 = vmatpush2.bf16.msra.mxu0 %v1459
        %1782 = vmatprep.subr.bf16.mxu0 0
        %1783 = vmatpush2.bf16.msra.mxu0 %v1458
        %1784 = vmatprep.subr.bf16.mxu0 0
        %1785 = vmatpush2.bf16.msra.mxu0 %v1457
        %1786 = vmatprep.mubr.bf16.mxu0 %v796
        %1787 = vmatmul.mubr.bf16.gmra.mxu0 %v795
        %v1788 = vpop.f32.mrf.mxu0
        %v1789 = vadd.f32 %v1724, %v1788
        %v1790 = vpop.f32.mrf.mxu0
        %v1791 = vpop.f32.mrf.mxu0
        %v1792 = vadd.f32 %v1727, %v1791
        %v1793 = vpop.f32.mrf.mxu0
        %1794 = vmatprep.mubr.bf16.mxu0 %v812
        %1795 = vmatmul.mubr.bf16.gmra.mxu0 %v811
        %v1796 = vpop.f32.mrf.mxu0
        %v1797 = vadd.f32 %v1732, %v1796
        %v1798 = vpop.f32.mrf.mxu0
        %v1799 = vpop.f32.mrf.mxu0
        %v1800 = vadd.f32 %v1735, %v1799
        %v1801 = vpop.f32.mrf.mxu0
        %1802 = vmatprep.mubr.bf16.mxu0 %v828
        %1803 = vmatmul.mubr.bf16.gmra.mxu0 %v827
        %v1804 = vpop.f32.mrf.mxu0
        %v1805 = vadd.f32 %v1740, %v1804
        %v1806 = vpop.f32.mrf.mxu0
        %v1807 = vpop.f32.mrf.mxu0
        %v1808 = vadd.f32 %v1743, %v1807
        %v1809 = vpop.f32.mrf.mxu0
        %1810 = vmatprep.mubr.bf16.mxu0 %v844
        %1811 = vmatmul.mubr.bf16.gmra.mxu0 %v843
        %v1812 = vpop.f32.mrf.mxu0
        %v1813 = vadd.f32 %v1748, %v1812
        %v1814 = vpop.f32.mrf.mxu0
        %v1815 = vpop.f32.mrf.mxu0
        %v1816 = vadd.f32 %v1751, %v1815
        %v1817 = vpop.f32.mrf.mxu0
        %1818 = vdwg.mxu0
        %1819 = vmatprep.subr.bf16.mxu0 0
        %1820 = vmatpush1.bf16.msra.mxu0 %v1472
        %1821 = vmatprep.subr.bf16.mxu0 0
        %1822 = vmatpush1.bf16.msra.mxu0 %v1471
        %1823 = vmatprep.subr.bf16.mxu0 0
        %1824 = vmatpush1.bf16.msra.mxu0 %v1470
        %1825 = vmatprep.subr.bf16.mxu0 0
        %1826 = vmatpush1.bf16.msra.mxu0 %v1469
        %1827 = vmatprep.subr.bf16.mxu0 0
        %1828 = vmatpush1.bf16.msra.mxu0 %v1468
        %1829 = vmatprep.subr.bf16.mxu0 0
        %1830 = vmatpush1.bf16.msra.mxu0 %v1467
        %1831 = vmatprep.subr.bf16.mxu0 0
        %1832 = vmatpush1.bf16.msra.mxu0 %v1466
        %1833 = vmatprep.subr.bf16.mxu0 0
        %1834 = vmatpush1.bf16.msra.mxu0 %v1465
        %1835 = vmatprep.subr.bf16.mxu0 0
        %1836 = vmatpush2.bf16.msra.mxu0 %v1480
        %1837 = vmatprep.subr.bf16.mxu0 0
        %1838 = vmatpush2.bf16.msra.mxu0 %v1479
        %1839 = vmatprep.subr.bf16.mxu0 0
        %1840 = vmatpush2.bf16.msra.mxu0 %v1478
        %1841 = vmatprep.subr.bf16.mxu0 0
        %1842 = vmatpush2.bf16.msra.mxu0 %v1477
        %1843 = vmatprep.subr.bf16.mxu0 0
        %1844 = vmatpush2.bf16.msra.mxu0 %v1476
        %1845 = vmatprep.subr.bf16.mxu0 0
        %1846 = vmatpush2.bf16.msra.mxu0 %v1475
        %1847 = vmatprep.subr.bf16.mxu0 0
        %1848 = vmatpush2.bf16.msra.mxu0 %v1474
        %1849 = vmatprep.subr.bf16.mxu0 0
        %1850 = vmatpush2.bf16.msra.mxu0 %v1473
        %1851 = vmatprep.mubr.bf16.mxu0 %v798
        %1852 = vmatmul.mubr.bf16.gmra.mxu0 %v797
        %v1853 = vpop.f32.mrf.mxu0
        %v1854 = vadd.f32 %v1789, %v1853
        %v1855 = vpop.f32.mrf.mxu0
        %v1856 = vpop.f32.mrf.mxu0
        %v1857 = vadd.f32 %v1792, %v1856
        %v1858 = vpop.f32.mrf.mxu0
        %1859 = vmatprep.mubr.bf16.mxu0 %v814
        %1860 = vmatmul.mubr.bf16.gmra.mxu0 %v813
        %v1861 = vpop.f32.mrf.mxu0
        %v1862 = vadd.f32 %v1797, %v1861
        %v1863 = vpop.f32.mrf.mxu0
        %v1864 = vpop.f32.mrf.mxu0
        %v1865 = vadd.f32 %v1800, %v1864
        %v1866 = vpop.f32.mrf.mxu0
        %1867 = vmatprep.mubr.bf16.mxu0 %v830
        %1868 = vmatmul.mubr.bf16.gmra.mxu0 %v829
        %v1869 = vpop.f32.mrf.mxu0
        %v1870 = vadd.f32 %v1805, %v1869
        %v1871 = vpop.f32.mrf.mxu0
        %v1872 = vpop.f32.mrf.mxu0
        %v1873 = vadd.f32 %v1808, %v1872
        %v1874 = vpop.f32.mrf.mxu0
        %1875 = vmatprep.mubr.bf16.mxu0 %v846
        %1876 = vmatmul.mubr.bf16.gmra.mxu0 %v845
        %v1877 = vpop.f32.mrf.mxu0
        %v1878 = vadd.f32 %v1813, %v1877
        %v1879 = vpop.f32.mrf.mxu0
        %v1880 = vpop.f32.mrf.mxu0
        %v1881 = vadd.f32 %v1816, %v1880
        %v1882 = vpop.f32.mrf.mxu0
        %1883 = vdwg.mxu0
        %1884 = vmatprep.subr.bf16.mxu0 0
        %1885 = vmatpush1.bf16.msra.mxu0 %v1488
        %1886 = vmatprep.subr.bf16.mxu0 0
        %1887 = vmatpush1.bf16.msra.mxu0 %v1487
        %1888 = vmatprep.subr.bf16.mxu0 0
        %1889 = vmatpush1.bf16.msra.mxu0 %v1486
        %1890 = vmatprep.subr.bf16.mxu0 0
        %1891 = vmatpush1.bf16.msra.mxu0 %v1485
        %1892 = vmatprep.subr.bf16.mxu0 0
        %1893 = vmatpush1.bf16.msra.mxu0 %v1484
        %1894 = vmatprep.subr.bf16.mxu0 0
        %1895 = vmatpush1.bf16.msra.mxu0 %v1483
        %1896 = vmatprep.subr.bf16.mxu0 0
        %1897 = vmatpush1.bf16.msra.mxu0 %v1482
        %1898 = vmatprep.subr.bf16.mxu0 0
        %1899 = vmatpush1.bf16.msra.mxu0 %v1481
        %1900 = vmatprep.subr.bf16.mxu0 0
        %1901 = vmatpush2.bf16.msra.mxu0 %v1496
        %1902 = vmatprep.subr.bf16.mxu0 0
        %1903 = vmatpush2.bf16.msra.mxu0 %v1495
        %1904 = vmatprep.subr.bf16.mxu0 0
        %1905 = vmatpush2.bf16.msra.mxu0 %v1494
        %1906 = vmatprep.subr.bf16.mxu0 0
        %1907 = vmatpush2.bf16.msra.mxu0 %v1493
        %1908 = vmatprep.subr.bf16.mxu0 0
        %1909 = vmatpush2.bf16.msra.mxu0 %v1492
        %1910 = vmatprep.subr.bf16.mxu0 0
        %1911 = vmatpush2.bf16.msra.mxu0 %v1491
        %1912 = vmatprep.subr.bf16.mxu0 0
        %1913 = vmatpush2.bf16.msra.mxu0 %v1490
        %1914 = vmatprep.subr.bf16.mxu0 0
        %1915 = vmatpush2.bf16.msra.mxu0 %v1489
        %1916 = vmatprep.mubr.bf16.mxu0 %v800
        %1917 = vmatmul.mubr.bf16.gmra.mxu0 %v799
        %v1918 = vpop.f32.mrf.mxu0
        %v1919 = vadd.f32 %v1854, %v1918
        %v1920 = vpop.f32.mrf.mxu0
        %v1921 = vpop.f32.mrf.mxu0
        %v1922 = vadd.f32 %v1857, %v1921
        %v1923 = vpop.f32.mrf.mxu0
        %1924 = vmatprep.mubr.bf16.mxu0 %v816
        %1925 = vmatmul.mubr.bf16.gmra.mxu0 %v815
        %v1926 = vpop.f32.mrf.mxu0
        %v1927 = vadd.f32 %v1862, %v1926
        %v1928 = vpop.f32.mrf.mxu0
        %v1929 = vpop.f32.mrf.mxu0
        %v1930 = vadd.f32 %v1865, %v1929
        %v1931 = vpop.f32.mrf.mxu0
        %1932 = vmatprep.mubr.bf16.mxu0 %v832
        %1933 = vmatmul.mubr.bf16.gmra.mxu0 %v831
        %v1934 = vpop.f32.mrf.mxu0
        %v1935 = vadd.f32 %v1870, %v1934
        %v1936 = vpop.f32.mrf.mxu0
        %v1937 = vpop.f32.mrf.mxu0
        %v1938 = vadd.f32 %v1873, %v1937
        %v1939 = vpop.f32.mrf.mxu0
        %1940 = vmatprep.mubr.bf16.mxu0 %v848
        %1941 = vmatmul.mubr.bf16.gmra.mxu0 %v847
        %v1942 = vpop.f32.mrf.mxu0
        %v1943 = vadd.f32 %v1878, %v1942
        %v1944 = vpop.f32.mrf.mxu0
        %v1945 = vpop.f32.mrf.mxu0
        %v1946 = vadd.f32 %v1881, %v1945
        %v1947 = vpop.f32.mrf.mxu0
        %1948 = vdwg.mxu0
        %1949 = vmatprep.subr.bf16.mxu0 0
        %1950 = vmatpush1.bf16.msra.mxu0 %v1504
        %1951 = vmatprep.subr.bf16.mxu0 0
        %1952 = vmatpush1.bf16.msra.mxu0 %v1503
        %1953 = vmatprep.subr.bf16.mxu0 0
        %1954 = vmatpush1.bf16.msra.mxu0 %v1502
        %1955 = vmatprep.subr.bf16.mxu0 0
        %1956 = vmatpush1.bf16.msra.mxu0 %v1501
        %1957 = vmatprep.subr.bf16.mxu0 0
        %1958 = vmatpush1.bf16.msra.mxu0 %v1500
        %1959 = vmatprep.subr.bf16.mxu0 0
        %1960 = vmatpush1.bf16.msra.mxu0 %v1499
        %1961 = vmatprep.subr.bf16.mxu0 0
        %1962 = vmatpush1.bf16.msra.mxu0 %v1498
        %1963 = vmatprep.subr.bf16.mxu0 0
        %1964 = vmatpush1.bf16.msra.mxu0 %v1497
        %1965 = vmatprep.subr.bf16.mxu0 0
        %1966 = vmatpush2.bf16.msra.mxu0 %v1512
        %1967 = vmatprep.subr.bf16.mxu0 0
        %1968 = vmatpush2.bf16.msra.mxu0 %v1511
        %1969 = vmatprep.subr.bf16.mxu0 0
        %1970 = vmatpush2.bf16.msra.mxu0 %v1510
        %1971 = vmatprep.subr.bf16.mxu0 0
        %1972 = vmatpush2.bf16.msra.mxu0 %v1509
        %1973 = vmatprep.subr.bf16.mxu0 0
        %1974 = vmatpush2.bf16.msra.mxu0 %v1508
        %1975 = vmatprep.subr.bf16.mxu0 0
        %1976 = vmatpush2.bf16.msra.mxu0 %v1507
        %1977 = vmatprep.subr.bf16.mxu0 0
        %1978 = vmatpush2.bf16.msra.mxu0 %v1506
        %1979 = vmatprep.subr.bf16.mxu0 0
        %1980 = vmatpush2.bf16.msra.mxu0 %v1505
        %1981 = vmatprep.mubr.bf16.mxu0 %v802
        %1982 = vmatmul.mubr.bf16.gmra.mxu0 %v801
        %v1983 = vpop.f32.mrf.mxu0
        %v1984 = vadd.f32 %v1919, %v1983
        %v1985 = vpop.f32.mrf.mxu0
        %v1986 = vpop.f32.mrf.mxu0
        %v1987 = vadd.f32 %v1922, %v1986
        %v1988 = vpop.f32.mrf.mxu0
        %1989 = vmatprep.mubr.bf16.mxu0 %v818
        %1990 = vmatmul.mubr.bf16.gmra.mxu0 %v817
        %v1991 = vpop.f32.mrf.mxu0
        %v1992 = vadd.f32 %v1927, %v1991
        %v1993 = vpop.f32.mrf.mxu0
        %v1994 = vpop.f32.mrf.mxu0
        %v1995 = vadd.f32 %v1930, %v1994
        %v1996 = vpop.f32.mrf.mxu0
        %1997 = vmatprep.mubr.bf16.mxu0 %v834
        %1998 = vmatmul.mubr.bf16.gmra.mxu0 %v833
        %v1999 = vpop.f32.mrf.mxu0
        %v2000 = vadd.f32 %v1935, %v1999
        %v2001 = vpop.f32.mrf.mxu0
        %v2002 = vpop.f32.mrf.mxu0
        %v2003 = vadd.f32 %v1938, %v2002
        %v2004 = vpop.f32.mrf.mxu0
        %2005 = vmatprep.mubr.bf16.mxu0 %v850
        %2006 = vmatmul.mubr.bf16.gmra.mxu0 %v849
        %v2007 = vpop.f32.mrf.mxu0
        %v2008 = vadd.f32 %v1943, %v2007
        %v2009 = vpop.f32.mrf.mxu0
        %v2010 = vpop.f32.mrf.mxu0
        %v2011 = vadd.f32 %v1946, %v2010
        %v2012 = vpop.f32.mrf.mxu0
        %2013 = vdwg.mxu0
        %2014 = vmatprep.subr.bf16.mxu0 0
        %2015 = vmatpush1.bf16.msra.mxu0 %v1520
        %2016 = vmatprep.subr.bf16.mxu0 0
        %2017 = vmatpush1.bf16.msra.mxu0 %v1519
        %2018 = vmatprep.subr.bf16.mxu0 0
        %2019 = vmatpush1.bf16.msra.mxu0 %v1518
        %2020 = vmatprep.subr.bf16.mxu0 0
        %2021 = vmatpush1.bf16.msra.mxu0 %v1517
        %2022 = vmatprep.subr.bf16.mxu0 0
        %2023 = vmatpush1.bf16.msra.mxu0 %v1516
        %2024 = vmatprep.subr.bf16.mxu0 0
        %2025 = vmatpush1.bf16.msra.mxu0 %v1515
        %2026 = vmatprep.subr.bf16.mxu0 0
        %2027 = vmatpush1.bf16.msra.mxu0 %v1514
        %2028 = vmatprep.subr.bf16.mxu0 0
        %2029 = vmatpush1.bf16.msra.mxu0 %v1513
        %2030 = vmatprep.subr.bf16.mxu0 0
        %2031 = vmatpush2.bf16.msra.mxu0 %v1528
        %2032 = vmatprep.subr.bf16.mxu0 0
        %2033 = vmatpush2.bf16.msra.mxu0 %v1527
        %2034 = vmatprep.subr.bf16.mxu0 0
        %2035 = vmatpush2.bf16.msra.mxu0 %v1526
        %2036 = vmatprep.subr.bf16.mxu0 0
        %2037 = vmatpush2.bf16.msra.mxu0 %v1525
        %2038 = vmatprep.subr.bf16.mxu0 0
        %2039 = vmatpush2.bf16.msra.mxu0 %v1524
        %2040 = vmatprep.subr.bf16.mxu0 0
        %2041 = vmatpush2.bf16.msra.mxu0 %v1523
        %2042 = vmatprep.subr.bf16.mxu0 0
        %2043 = vmatpush2.bf16.msra.mxu0 %v1522
        %2044 = vmatprep.subr.bf16.mxu0 0
        %2045 = vmatpush2.bf16.msra.mxu0 %v1521
        %2046 = vmatprep.mubr.bf16.mxu0 %v804
        %2047 = vmatmul.mubr.bf16.gmra.mxu0 %v803
        %v2048 = vpop.f32.mrf.mxu0
        %v2049 = vadd.f32 %v1984, %v2048
        %v2050 = vpop.f32.mrf.mxu0
        %v2051 = vpop.f32.mrf.mxu0
        %v2052 = vadd.f32 %v1987, %v2051
        %v2053 = vpop.f32.mrf.mxu0
        %2054 = vmatprep.mubr.bf16.mxu0 %v820
        %2055 = vmatmul.mubr.bf16.gmra.mxu0 %v819
        %v2056 = vpop.f32.mrf.mxu0
        %v2057 = vadd.f32 %v1992, %v2056
        %v2058 = vpop.f32.mrf.mxu0
        %v2059 = vpop.f32.mrf.mxu0
        %v2060 = vadd.f32 %v1995, %v2059
        %v2061 = vpop.f32.mrf.mxu0
        %2062 = vmatprep.mubr.bf16.mxu0 %v836
        %2063 = vmatmul.mubr.bf16.gmra.mxu0 %v835
        %v2064 = vpop.f32.mrf.mxu0
        %v2065 = vadd.f32 %v2000, %v2064
        %v2066 = vpop.f32.mrf.mxu0
        %v2067 = vpop.f32.mrf.mxu0
        %v2068 = vadd.f32 %v2003, %v2067
        %v2069 = vpop.f32.mrf.mxu0
        %2070 = vmatprep.mubr.bf16.mxu0 %v852
        %2071 = vmatmul.mubr.bf16.gmra.mxu0 %v851
        %v2072 = vpop.f32.mrf.mxu0
        %v2073 = vadd.f32 %v2008, %v2072
        %v2074 = vpop.f32.mrf.mxu0
        %v2075 = vpop.f32.mrf.mxu0
        %v2076 = vadd.f32 %v2011, %v2075
        %v2077 = vpop.f32.mrf.mxu0
        %2078 = vdwg.mxu0
        %2079 = vmatprep.subr.bf16.mxu0 0
        %2080 = vmatpush1.bf16.msra.mxu0 %v1536
        %2081 = vmatprep.subr.bf16.mxu0 0
        %2082 = vmatpush1.bf16.msra.mxu0 %v1535
        %2083 = vmatprep.subr.bf16.mxu0 0
        %2084 = vmatpush1.bf16.msra.mxu0 %v1534
        %2085 = vmatprep.subr.bf16.mxu0 0
        %2086 = vmatpush1.bf16.msra.mxu0 %v1533
        %2087 = vmatprep.subr.bf16.mxu0 0
        %2088 = vmatpush1.bf16.msra.mxu0 %v1532
        %2089 = vmatprep.subr.bf16.mxu0 0
        %2090 = vmatpush1.bf16.msra.mxu0 %v1531
        %2091 = vmatprep.subr.bf16.mxu0 0
        %2092 = vmatpush1.bf16.msra.mxu0 %v1530
        %2093 = vmatprep.subr.bf16.mxu0 0
        %2094 = vmatpush1.bf16.msra.mxu0 %v1529
        %2095 = vmatprep.subr.bf16.mxu0 0
        %2096 = vmatpush2.bf16.msra.mxu0 %v1544
        %2097 = vmatprep.subr.bf16.mxu0 0
        %2098 = vmatpush2.bf16.msra.mxu0 %v1543
        %2099 = vmatprep.subr.bf16.mxu0 0
        %2100 = vmatpush2.bf16.msra.mxu0 %v1542
        %2101 = vmatprep.subr.bf16.mxu0 0
        %2102 = vmatpush2.bf16.msra.mxu0 %v1541
        %2103 = vmatprep.subr.bf16.mxu0 0
        %2104 = vmatpush2.bf16.msra.mxu0 %v1540
        %2105 = vmatprep.subr.bf16.mxu0 0
        %2106 = vmatpush2.bf16.msra.mxu0 %v1539
        %2107 = vmatprep.subr.bf16.mxu0 0
        %2108 = vmatpush2.bf16.msra.mxu0 %v1538
        %2109 = vmatprep.subr.bf16.mxu0 0
        %2110 = vmatpush2.bf16.msra.mxu0 %v1537
        %2111 = vmatprep.mubr.bf16.mxu0 %v806
        %2112 = vmatmul.mubr.bf16.gmra.mxu0 %v805
        %v2113 = vpop.f32.mrf.mxu0
        %v2114 = vadd.f32 %v2049, %v2113
        %v2115 = vpop.f32.mrf.mxu0
        %v2116 = vpop.f32.mrf.mxu0
        %v2117 = vadd.f32 %v2052, %v2116
        %v2118 = vpop.f32.mrf.mxu0
        %2119 = vmatprep.mubr.bf16.mxu0 %v822
        %2120 = vmatmul.mubr.bf16.gmra.mxu0 %v821
        %v2121 = vpop.f32.mrf.mxu0
        %v2122 = vadd.f32 %v2057, %v2121
        %v2123 = vpop.f32.mrf.mxu0
        %v2124 = vpop.f32.mrf.mxu0
        %v2125 = vadd.f32 %v2060, %v2124
        %v2126 = vpop.f32.mrf.mxu0
        %2127 = vmatprep.mubr.bf16.mxu0 %v838
        %2128 = vmatmul.mubr.bf16.gmra.mxu0 %v837
        %v2129 = vpop.f32.mrf.mxu0
        %v2130 = vadd.f32 %v2065, %v2129
        %v2131 = vpop.f32.mrf.mxu0
        %v2132 = vpop.f32.mrf.mxu0
        %v2133 = vadd.f32 %v2068, %v2132
        %v2134 = vpop.f32.mrf.mxu0
        %2135 = vmatprep.mubr.bf16.mxu0 %v854
        %2136 = vmatmul.mubr.bf16.gmra.mxu0 %v853
        %v2137 = vpop.f32.mrf.mxu0
        %v2138 = vadd.f32 %v2073, %v2137
        %v2139 = vpop.f32.mrf.mxu0
        %v2140 = vpop.f32.mrf.mxu0
        %v2141 = vadd.f32 %v2076, %v2140
        %v2142 = vpop.f32.mrf.mxu0
        %2143 = vdwg.mxu0
        %2144 = vmatprep.subr.bf16.mxu0 0
        %2145 = vmatpush1.bf16.msra.mxu0 %v1552
        %2146 = vmatprep.subr.bf16.mxu0 0
        %2147 = vmatpush1.bf16.msra.mxu0 %v1551
        %2148 = vmatprep.subr.bf16.mxu0 0
        %2149 = vmatpush1.bf16.msra.mxu0 %v1550
        %2150 = vmatprep.subr.bf16.mxu0 0
        %2151 = vmatpush1.bf16.msra.mxu0 %v1549
        %2152 = vmatprep.subr.bf16.mxu0 0
        %2153 = vmatpush1.bf16.msra.mxu0 %v1548
        %2154 = vmatprep.subr.bf16.mxu0 0
        %2155 = vmatpush1.bf16.msra.mxu0 %v1547
        %2156 = vmatprep.subr.bf16.mxu0 0
        %2157 = vmatpush1.bf16.msra.mxu0 %v1546
        %2158 = vmatprep.subr.bf16.mxu0 0
        %2159 = vmatpush1.bf16.msra.mxu0 %v1545
        %2160 = vmatprep.subr.bf16.mxu0 0
        %2161 = vmatpush2.bf16.msra.mxu0 %v1560
        %2162 = vmatprep.subr.bf16.mxu0 0
        %2163 = vmatpush2.bf16.msra.mxu0 %v1559
        %2164 = vmatprep.subr.bf16.mxu0 0
        %2165 = vmatpush2.bf16.msra.mxu0 %v1558
        %2166 = vmatprep.subr.bf16.mxu0 0
        %2167 = vmatpush2.bf16.msra.mxu0 %v1557
        %2168 = vmatprep.subr.bf16.mxu0 0
        %2169 = vmatpush2.bf16.msra.mxu0 %v1556
        %2170 = vmatprep.subr.bf16.mxu0 0
        %2171 = vmatpush2.bf16.msra.mxu0 %v1555
        %2172 = vmatprep.subr.bf16.mxu0 0
        %2173 = vmatpush2.bf16.msra.mxu0 %v1554
        %2174 = vmatprep.subr.bf16.mxu0 0
        %2175 = vmatpush2.bf16.msra.mxu0 %v1553
        %2176 = vmatprep.mubr.bf16.mxu0 %v808
        %2177 = vmatmul.mubr.bf16.gmra.mxu0 %v807
        %v2178 = vpop.f32.mrf.mxu0
        %v2179 = vadd.f32 %v2114, %v2178
        %v2180 = vpop.f32.mrf.mxu0
        %v2181 = vpop.f32.mrf.mxu0
        %v2182 = vadd.f32 %v2117, %v2181
        %v2183 = vpop.f32.mrf.mxu0
        %2184 = vmatprep.mubr.bf16.mxu0 %v824
        %2185 = vmatmul.mubr.bf16.gmra.mxu0 %v823
        %v2186 = vpop.f32.mrf.mxu0
        %v2187 = vadd.f32 %v2122, %v2186
        %v2188 = vpop.f32.mrf.mxu0
        %v2189 = vpop.f32.mrf.mxu0
        %v2190 = vadd.f32 %v2125, %v2189
        %v2191 = vpop.f32.mrf.mxu0
        %2192 = vmatprep.mubr.bf16.mxu0 %v840
        %2193 = vmatmul.mubr.bf16.gmra.mxu0 %v839
        %v2194 = vpop.f32.mrf.mxu0
        %v2195 = vadd.f32 %v2130, %v2194
        %v2196 = vpop.f32.mrf.mxu0
        %v2197 = vpop.f32.mrf.mxu0
        %v2198 = vadd.f32 %v2133, %v2197
        %v2199 = vpop.f32.mrf.mxu0
        %2200 = vmatprep.mubr.bf16.mxu0 %v856
        %2201 = vmatmul.mubr.bf16.gmra.mxu0 %v855
        %v2202 = vpop.f32.mrf.mxu0
        %v2203 = vadd.f32 %v2138, %v2202
        %v2204 = vpop.f32.mrf.mxu0
        %v2205 = vpop.f32.mrf.mxu0
        %v2206 = vadd.f32 %v2141, %v2205
        %v2207 = vpop.f32.mrf.mxu0
        %2208 = vdwg.mxu0
        %v2209 = vld [vmem:[%s3] sm:$0xff]
        %v2210 = vld [vmem:[%s3 + $0x8] sm:$0xff]
        %v2211 = vld [vmem:[%s3 + $0x10] sm:$0xff]
        %v2212 = vld [vmem:[%s3 + $0x18] sm:$0xff]
        %v2213 = vld [vmem:[%s3 + $0x20] sm:$0xff]
        %v2214 = vld [vmem:[%s3 + $0x28] sm:$0xff]
        %v2215 = vld [vmem:[%s3 + $0x30] sm:$0xff]
        %v2216 = vld [vmem:[%s3 + $0x38] sm:$0xff]
        %v2217 = vld [vmem:[%s3 + $0x40] sm:$0xff]
        %v2218 = vld [vmem:[%s3 + $0x48] sm:$0xff]
        %v2219 = vld [vmem:[%s3 + $0x50] sm:$0xff]
        %v2220 = vld [vmem:[%s3 + $0x58] sm:$0xff]
        %v2221 = vld [vmem:[%s3 + $0x60] sm:$0xff]
        %v2222 = vld [vmem:[%s3 + $0x68] sm:$0xff]
        %v2223 = vld [vmem:[%s3 + $0x70] sm:$0xff]
        %v2224 = vld [vmem:[%s3 + $0x78] sm:$0xff]
        %v2225 = vld [vmem:[%s3 + $0x80] sm:$0xff]
        %v2226 = vld [vmem:[%s3 + $0x88] sm:$0xff]
        %v2227 = vld [vmem:[%s3 + $0x90] sm:$0xff]
        %v2228 = vld [vmem:[%s3 + $0x98] sm:$0xff]
        %v2229 = vld [vmem:[%s3 + $0xa0] sm:$0xff]
        %v2230 = vld [vmem:[%s3 + $0xa8] sm:$0xff]
        %v2231 = vld [vmem:[%s3 + $0xb0] sm:$0xff]
        %v2232 = vld [vmem:[%s3 + $0xb8] sm:$0xff]
        %v2233 = vld [vmem:[%s3 + $0xc0] sm:$0xff]
        %v2234 = vld [vmem:[%s3 + $0xc8] sm:$0xff]
        %v2235 = vld [vmem:[%s3 + $0xd0] sm:$0xff]
        %v2236 = vld [vmem:[%s3 + $0xd8] sm:$0xff]
        %v2237 = vld [vmem:[%s3 + $0xe0] sm:$0xff]
        %v2238 = vld [vmem:[%s3 + $0xe8] sm:$0xff]
        %v2239 = vld [vmem:[%s3 + $0xf0] sm:$0xff]
        %v2240 = vld [vmem:[%s3 + $0xf8] sm:$0xff]
        %v2241 = vld [vmem:[%s3 + $0x100] sm:$0xff]
        %v2242 = vld [vmem:[%s3 + $0x108] sm:$0xff]
        %v2243 = vld [vmem:[%s3 + $0x110] sm:$0xff]
        %v2244 = vld [vmem:[%s3 + $0x118] sm:$0xff]
        %v2245 = vld [vmem:[%s3 + $0x120] sm:$0xff]
        %v2246 = vld [vmem:[%s3 + $0x128] sm:$0xff]
        %v2247 = vld [vmem:[%s3 + $0x130] sm:$0xff]
        %v2248 = vld [vmem:[%s3 + $0x138] sm:$0xff]
        %v2249 = vld [vmem:[%s3 + $0x140] sm:$0xff]
        %v2250 = vld [vmem:[%s3 + $0x148] sm:$0xff]
        %v2251 = vld [vmem:[%s3 + $0x150] sm:$0xff]
        %v2252 = vld [vmem:[%s3 + $0x158] sm:$0xff]
        %v2253 = vld [vmem:[%s3 + $0x160] sm:$0xff]
        %v2254 = vld [vmem:[%s3 + $0x168] sm:$0xff]
        %v2255 = vld [vmem:[%s3 + $0x170] sm:$0xff]
        %v2256 = vld [vmem:[%s3 + $0x178] sm:$0xff]
        %v2257 = vld [vmem:[%s3 + $0x180] sm:$0xff]
        %v2258 = vld [vmem:[%s3 + $0x188] sm:$0xff]
        %v2259 = vld [vmem:[%s3 + $0x190] sm:$0xff]
        %v2260 = vld [vmem:[%s3 + $0x198] sm:$0xff]
        %v2261 = vld [vmem:[%s3 + $0x1a0] sm:$0xff]
        %v2262 = vld [vmem:[%s3 + $0x1a8] sm:$0xff]
        %v2263 = vld [vmem:[%s3 + $0x1b0] sm:$0xff]
        %v2264 = vld [vmem:[%s3 + $0x1b8] sm:$0xff]
        %v2265 = vld [vmem:[%s2] sm:$0xf]
        %v2266 = vld [vmem:[%s2 + $0x4] sm:$0xf]
        %v2267 = vld [vmem:[%s2 + $0x8] sm:$0xf]
        %v2268 = vld [vmem:[%s2 + $0xc] sm:$0xf]
        %v2269 = vld [vmem:[%s2 + $0x10] sm:$0xf]
        %v2270 = vld [vmem:[%s2 + $0x14] sm:$0xf]
        %v2271 = vld [vmem:[%s2 + $0x18] sm:$0xf]
        %v2272 = vld [vmem:[%s2 + $0x1c] sm:$0xf]
        %v2273 = vld [vmem:[%s2 + $0x20] sm:$0xf]
        %v2274 = vld [vmem:[%s2 + $0x24] sm:$0xf]
        %v2275 = vld [vmem:[%s2 + $0x28] sm:$0xf]
        %v2276 = vld [vmem:[%s2 + $0x2c] sm:$0xf]
        %v2277 = vld [vmem:[%s2 + $0x30] sm:$0xf]
        %v2278 = vld [vmem:[%s2 + $0x34] sm:$0xf]
        %v2279 = vld [vmem:[%s2 + $0x38] sm:$0xf]
        %v2280 = vld [vmem:[%s2 + $0x3c] sm:$0xf]
        %v2281 = vld [vmem:[%s2 + $0x40] sm:$0xf]
        %v2282 = vld [vmem:[%s2 + $0x44] sm:$0xf]
        %v2283 = vld [vmem:[%s2 + $0x48] sm:$0xf]
        %v2284 = vld [vmem:[%s2 + $0x4c] sm:$0xf]
        %v2285 = vld [vmem:[%s2 + $0x50] sm:$0xf]
        %v2286 = vld [vmem:[%s2 + $0x54] sm:$0xf]
        %v2287 = vld [vmem:[%s2 + $0x58] sm:$0xf]
        %v2288 = vld [vmem:[%s2 + $0x5c] sm:$0xf]
        %v2289 = vld [vmem:[%s2 + $0x60] sm:$0xf]
        %v2290 = vld [vmem:[%s2 + $0x64] sm:$0xf]
        %v2291 = vld [vmem:[%s2 + $0x68] sm:$0xf]
        %v2292 = vld [vmem:[%s2 + $0x6c] sm:$0xf]
        %v2293 = vld [vmem:[%s2 + $0x70] sm:$0xf]
        %v2294 = vld [vmem:[%s2 + $0x74] sm:$0xf]
        %v2295 = vld [vmem:[%s2 + $0x78] sm:$0xf]
        %v2296 = vld [vmem:[%s2 + $0x7c] sm:$0xf]
        %v2297 = vld [vmem:[%s2 + $0x80] sm:$0xf]
        %v2298 = vld [vmem:[%s2 + $0x84] sm:$0xf]
        %v2299 = vld [vmem:[%s2 + $0x88] sm:$0xf]
        %v2300 = vld [vmem:[%s2 + $0x8c] sm:$0xf]
        %v2301 = vld [vmem:[%s2 + $0x90] sm:$0xf]
        %v2302 = vld [vmem:[%s2 + $0x94] sm:$0xf]
        %v2303 = vld [vmem:[%s2 + $0x98] sm:$0xf]
        %v2304 = vld [vmem:[%s2 + $0x9c] sm:$0xf]
        %v2305 = vld [vmem:[%s2 + $0xa0] sm:$0xf]
        %v2306 = vld [vmem:[%s2 + $0xa4] sm:$0xf]
        %v2307 = vld [vmem:[%s2 + $0xa8] sm:$0xf]
        %v2308 = vld [vmem:[%s2 + $0xac] sm:$0xf]
        %v2309 = vld [vmem:[%s2 + $0xb0] sm:$0xf]
        %v2310 = vld [vmem:[%s2 + $0xb4] sm:$0xf]
        %v2311 = vld [vmem:[%s2 + $0xb8] sm:$0xf]
        %v2312 = vld [vmem:[%s2 + $0xbc] sm:$0xf]
        %v2313 = vld [vmem:[%s2 + $0xc0] sm:$0xf]
        %v2314 = vld [vmem:[%s2 + $0xc4] sm:$0xf]
        %v2315 = vld [vmem:[%s2 + $0xc8] sm:$0xf]
        %v2316 = vld [vmem:[%s2 + $0xcc] sm:$0xf]
        %v2317 = vld [vmem:[%s2 + $0xd0] sm:$0xf]
        %v2318 = vld [vmem:[%s2 + $0xd4] sm:$0xf]
        %v2319 = vld [vmem:[%s2 + $0xd8] sm:$0xf]
        %v2320 = vld [vmem:[%s2 + $0xdc] sm:$0xf]
        %v2321 = vpack.c.bf16 %v2182, %v2179
        %v2322 = vpack.c.bf16 %v2190, %v2187
        %v2323 = vpack.c.bf16 %v2198, %v2195
        %v2324 = vpack.c.bf16 %v2206, %v2203
        %v2381 = vunpack.c.l.b16 %v2265
        %v2382 = vunpack.c.l.b16 %v2266
        %v2383 = vunpack.c.l.b16 %v2267
        %v2384 = vunpack.c.l.b16 %v2268
        %v2385 = vunpack.c.l.b16 %v2269
        %v2386 = vunpack.c.l.b16 %v2270
        %v2387 = vunpack.c.l.b16 %v2271
        %v2388 = vunpack.c.l.b16 %v2272
        %v2389 = vunpack.c.l.b16 %v2273
        %v2390 = vunpack.c.l.b16 %v2274
        %v2391 = vunpack.c.l.b16 %v2275
        %v2392 = vunpack.c.l.b16 %v2276
        %v2393 = vunpack.c.l.b16 %v2277
        %v2394 = vunpack.c.l.b16 %v2278
        %v2395 = vunpack.c.l.b16 %v2279
        %v2396 = vunpack.c.l.b16 %v2280
        %v2397 = vunpack.c.l.b16 %v2281
        %v2398 = vunpack.c.l.b16 %v2282
        %v2399 = vunpack.c.l.b16 %v2283
        %v2400 = vunpack.c.l.b16 %v2284
        %v2401 = vunpack.c.l.b16 %v2285
        %v2402 = vunpack.c.l.b16 %v2286
        %v2403 = vunpack.c.l.b16 %v2287
        %v2404 = vunpack.c.l.b16 %v2288
        %v2405 = vunpack.c.l.b16 %v2289
        %v2406 = vunpack.c.l.b16 %v2290
        %v2407 = vunpack.c.l.b16 %v2291
        %v2408 = vunpack.c.l.b16 %v2292
        %v2409 = vunpack.c.l.b16 %v2293
        %v2410 = vunpack.c.l.b16 %v2294
        %v2411 = vunpack.c.l.b16 %v2295
        %v2412 = vunpack.c.l.b16 %v2296
        %v2413 = vunpack.c.l.b16 %v2297
        %v2414 = vunpack.c.l.b16 %v2298
        %v2415 = vunpack.c.l.b16 %v2299
        %v2416 = vunpack.c.l.b16 %v2300
        %v2417 = vunpack.c.l.b16 %v2301
        %v2418 = vunpack.c.l.b16 %v2302
        %v2419 = vunpack.c.l.b16 %v2303
        %v2420 = vunpack.c.l.b16 %v2304
        %v2421 = vunpack.c.l.b16 %v2305
        %v2422 = vunpack.c.l.b16 %v2306
        %v2423 = vunpack.c.l.b16 %v2307
        %v2424 = vunpack.c.l.b16 %v2308
        %v2425 = vunpack.c.l.b16 %v2309
        %v2426 = vunpack.c.l.b16 %v2310
        %v2427 = vunpack.c.l.b16 %v2311
        %v2428 = vunpack.c.l.b16 %v2312
        %v2429 = vunpack.c.l.b16 %v2313
        %v2430 = vunpack.c.l.b16 %v2314
        %v2431 = vunpack.c.l.b16 %v2315
        %v2432 = vunpack.c.l.b16 %v2316
        %v2433 = vunpack.c.l.b16 %v2317
        %v2434 = vunpack.c.l.b16 %v2318
        %v2435 = vunpack.c.l.b16 %v2319
        %v2436 = vunpack.c.l.b16 %v2320
        %v2437 = vpack.c.b16 %v2382, %v2381
        %v2438 = vpack.c.b16 %v2384, %v2383
        %v2439 = vpack.c.b16 %v2386, %v2385
        %v2440 = vpack.c.b16 %v2388, %v2387
        %v2441 = vpack.c.b16 %v2390, %v2389
        %v2442 = vpack.c.b16 %v2392, %v2391
        %v2443 = vpack.c.b16 %v2394, %v2393
        %v2444 = vpack.c.b16 %v2396, %v2395
        %v2445 = vpack.c.b16 %v2398, %v2397
        %v2446 = vpack.c.b16 %v2400, %v2399
        %v2447 = vpack.c.b16 %v2402, %v2401
        %v2448 = vpack.c.b16 %v2404, %v2403
        %v2449 = vpack.c.b16 %v2406, %v2405
        %v2450 = vpack.c.b16 %v2408, %v2407
        %v2451 = vpack.c.b16 %v2410, %v2409
        %v2452 = vpack.c.b16 %v2412, %v2411
        %v2453 = vpack.c.b16 %v2414, %v2413
        %v2454 = vpack.c.b16 %v2416, %v2415
        %v2455 = vpack.c.b16 %v2418, %v2417
        %v2456 = vpack.c.b16 %v2420, %v2419
        %v2457 = vpack.c.b16 %v2422, %v2421
        %v2458 = vpack.c.b16 %v2424, %v2423
        %v2459 = vpack.c.b16 %v2426, %v2425
        %v2460 = vpack.c.b16 %v2428, %v2427
        %v2461 = vpack.c.b16 %v2430, %v2429
        %v2462 = vpack.c.b16 %v2432, %v2431
        %v2463 = vpack.c.b16 %v2434, %v2433
        %v2464 = vpack.c.b16 %v2436, %v2435
        %vm2465 = vcmask 523264
        %v2467 = vsel %vm2465, %v2437, 0
        %v2470 = vsel %vm2465, %v2438, 0
        %v2473 = vsel %vm2465, %v2439, 0
        %v2476 = vsel %vm2465, %v2440, 0
        %v2479 = vsel %vm2465, %v2441, 0
        %v2482 = vsel %vm2465, %v2442, 0
        %v2485 = vsel %vm2465, %v2443, 0
        %v2488 = vsel %vm2465, %v2444, 0
        %v2491 = vsel %vm2465, %v2445, 0
        %v2494 = vsel %vm2465, %v2446, 0
        %v2497 = vsel %vm2465, %v2447, 0
        %v2500 = vsel %vm2465, %v2448, 0
        %v2503 = vsel %vm2465, %v2449, 0
        %v2506 = vsel %vm2465, %v2450, 0
        %v2509 = vsel %vm2465, %v2451, 0
        %v2512 = vsel %vm2465, %v2452, 0
        %v2515 = vsel %vm2465, %v2453, 0
        %v2518 = vsel %vm2465, %v2454, 0
        %v2521 = vsel %vm2465, %v2455, 0
        %v2524 = vsel %vm2465, %v2456, 0
        %v2527 = vsel %vm2465, %v2457, 0
        %v2530 = vsel %vm2465, %v2458, 0
        %v2533 = vsel %vm2465, %v2459, 0
        %v2536 = vsel %vm2465, %v2460, 0
        %v2539 = vsel %vm2465, %v2461, 0
        %v2542 = vsel %vm2465, %v2462, 0
        %v2545 = vsel %vm2465, %v2463, 0
        %v2548 = vsel %vm2465, %v2464, 0
        %2550 = vmatprep.subr.bf16.mxu0 0
        %2551 = vmatpush1.bf16.msra.mxu0 0
        %2552 = vmatprep.subr.bf16.mxu0 0
        %2553 = vmatpush1.bf16.msra.mxu0 0
        %2554 = vmatprep.subr.bf16.mxu0 0
        %2555 = vmatpush1.bf16.msra.mxu0 0
        %2556 = vmatprep.subr.bf16.mxu0 0
        %2557 = vmatpush1.bf16.msra.mxu0 0
        %2558 = vmatprep.subr.bf16.mxu0 0
        %2559 = vmatpush1.bf16.msra.mxu0 %v2324
        %2560 = vmatprep.subr.bf16.mxu0 0
        %2561 = vmatpush1.bf16.msra.mxu0 %v2323
        %2562 = vmatprep.subr.bf16.mxu0 0
        %2563 = vmatpush1.bf16.msra.mxu0 %v2322
        %2564 = vmatprep.subr.bf16.mxu0 0
        %2565 = vmatpush1.bf16.msra.mxu0 %v2321
        %2566 = vmatprep.subr.bf16.mxu0 0
        %2567 = vmatpush2.bf16.msra.mxu0 0
        %2568 = vmatprep.subr.bf16.mxu0 0
        %2569 = vmatpush2.bf16.msra.mxu0 0
        %2570 = vmatprep.subr.bf16.mxu0 0
        %2571 = vmatpush2.bf16.msra.mxu0 0
        %2572 = vmatprep.subr.bf16.mxu0 0
        %2573 = vmatpush2.bf16.msra.mxu0 0
        %2574 = vmatprep.subr.bf16.mxu0 0
        %2575 = vmatpush2.bf16.msra.mxu0 0
        %2576 = vmatprep.subr.bf16.mxu0 0
        %2577 = vmatpush2.bf16.msra.mxu0 0
        %2578 = vmatprep.subr.bf16.mxu0 0
        %2579 = vmatpush2.bf16.msra.mxu0 0
        %2580 = vmatprep.subr.bf16.mxu0 0
        %2581 = vmatpush2.bf16.msra.mxu0 0
        %2582 = vmatprep.mubr.bf16.mxu0 0
        %2583 = vmatmul.mubr.bf16.gmra.mxu0 %v2467
        %v2584 = vpop.f32.mrf.mxu0
        %v2585 = vadd.f32 0.0, %v2584
        %v2586 = vpop.f32.mrf.mxu0
        %v2587 = vpop.f32.mrf.mxu0
        %v2588 = vadd.f32 0.0, %v2587
        %v2589 = vpop.f32.mrf.mxu0
        %2590 = vmatprep.mubr.bf16.mxu0 0
        %2591 = vmatmul.mubr.bf16.gmra.mxu0 %v2470
        %v2592 = vpop.f32.mrf.mxu0
        %v2593 = vadd.f32 0.0, %v2592
        %v2594 = vpop.f32.mrf.mxu0
        %v2595 = vpop.f32.mrf.mxu0
        %v2596 = vadd.f32 0.0, %v2595
        %v2597 = vpop.f32.mrf.mxu0
        %2598 = vmatprep.mubr.bf16.mxu0 0
        %2599 = vmatmul.mubr.bf16.gmra.mxu0 %v2473
        %v2600 = vpop.f32.mrf.mxu0
        %v2601 = vadd.f32 0.0, %v2600
        %v2602 = vpop.f32.mrf.mxu0
        %v2603 = vpop.f32.mrf.mxu0
        %v2604 = vadd.f32 0.0, %v2603
        %v2605 = vpop.f32.mrf.mxu0
        %2606 = vmatprep.mubr.bf16.mxu0 0
        %2607 = vmatmul.mubr.bf16.gmra.mxu0 %v2476
        %v2608 = vpop.f32.mrf.mxu0
        %v2609 = vadd.f32 0.0, %v2608
        %v2610 = vpop.f32.mrf.mxu0
        %v2611 = vpop.f32.mrf.mxu0
        %v2612 = vadd.f32 0.0, %v2611
        %v2613 = vpop.f32.mrf.mxu0
        %2614 = vmatprep.mubr.bf16.mxu0 0
        %2615 = vmatmul.mubr.bf16.gmra.mxu0 %v2479
        %v2616 = vpop.f32.mrf.mxu0
        %v2617 = vadd.f32 0.0, %v2616
        %v2618 = vpop.f32.mrf.mxu0
        %v2619 = vpop.f32.mrf.mxu0
        %v2620 = vadd.f32 0.0, %v2619
        %v2621 = vpop.f32.mrf.mxu0
        %2622 = vmatprep.mubr.bf16.mxu0 0
        %2623 = vmatmul.mubr.bf16.gmra.mxu0 %v2482
        %v2624 = vpop.f32.mrf.mxu0
        %v2625 = vadd.f32 0.0, %v2624
        %v2626 = vpop.f32.mrf.mxu0
        %v2627 = vpop.f32.mrf.mxu0
        %v2628 = vadd.f32 0.0, %v2627
        %v2629 = vpop.f32.mrf.mxu0
        %2630 = vmatprep.mubr.bf16.mxu0 0
        %2631 = vmatmul.mubr.bf16.gmra.mxu0 %v2485
        %v2632 = vpop.f32.mrf.mxu0
        %v2633 = vadd.f32 0.0, %v2632
        %v2634 = vpop.f32.mrf.mxu0
        %v2635 = vpop.f32.mrf.mxu0
        %v2636 = vadd.f32 0.0, %v2635
        %v2637 = vpop.f32.mrf.mxu0
        %2638 = vmatprep.mubr.bf16.mxu0 0
        %2639 = vmatmul.mubr.bf16.gmra.mxu0 %v2488
        %v2640 = vpop.f32.mrf.mxu0
        %v2641 = vadd.f32 0.0, %v2640
        %v2642 = vpop.f32.mrf.mxu0
        %v2643 = vpop.f32.mrf.mxu0
        %v2644 = vadd.f32 0.0, %v2643
        %v2645 = vpop.f32.mrf.mxu0
        %2646 = vmatprep.mubr.bf16.mxu0 0
        %2647 = vmatmul.mubr.bf16.gmra.mxu0 %v2491
        %v2648 = vpop.f32.mrf.mxu0
        %v2649 = vadd.f32 0.0, %v2648
        %v2650 = vpop.f32.mrf.mxu0
        %v2651 = vpop.f32.mrf.mxu0
        %v2652 = vadd.f32 0.0, %v2651
        %v2653 = vpop.f32.mrf.mxu0
        %2654 = vmatprep.mubr.bf16.mxu0 0
        %2655 = vmatmul.mubr.bf16.gmra.mxu0 %v2494
        %v2656 = vpop.f32.mrf.mxu0
        %v2657 = vadd.f32 0.0, %v2656
        %v2658 = vpop.f32.mrf.mxu0
        %v2659 = vpop.f32.mrf.mxu0
        %v2660 = vadd.f32 0.0, %v2659
        %v2661 = vpop.f32.mrf.mxu0
        %2662 = vmatprep.mubr.bf16.mxu0 0
        %2663 = vmatmul.mubr.bf16.gmra.mxu0 %v2497
        %v2664 = vpop.f32.mrf.mxu0
        %v2665 = vadd.f32 0.0, %v2664
        %v2666 = vpop.f32.mrf.mxu0
        %v2667 = vpop.f32.mrf.mxu0
        %v2668 = vadd.f32 0.0, %v2667
        %v2669 = vpop.f32.mrf.mxu0
        %2670 = vmatprep.mubr.bf16.mxu0 0
        %2671 = vmatmul.mubr.bf16.gmra.mxu0 %v2500
        %v2672 = vpop.f32.mrf.mxu0
        %v2673 = vadd.f32 0.0, %v2672
        %v2674 = vpop.f32.mrf.mxu0
        %v2675 = vpop.f32.mrf.mxu0
        %v2676 = vadd.f32 0.0, %v2675
        %v2677 = vpop.f32.mrf.mxu0
        %2678 = vmatprep.mubr.bf16.mxu0 0
        %2679 = vmatmul.mubr.bf16.gmra.mxu0 %v2503
        %v2680 = vpop.f32.mrf.mxu0
        %v2681 = vadd.f32 0.0, %v2680
        %v2682 = vpop.f32.mrf.mxu0
        %v2683 = vpop.f32.mrf.mxu0
        %v2684 = vadd.f32 0.0, %v2683
        %v2685 = vpop.f32.mrf.mxu0
        %2686 = vmatprep.mubr.bf16.mxu0 0
        %2687 = vmatmul.mubr.bf16.gmra.mxu0 %v2506
        %v2688 = vpop.f32.mrf.mxu0
        %v2689 = vadd.f32 0.0, %v2688
        %v2690 = vpop.f32.mrf.mxu0
        %v2691 = vpop.f32.mrf.mxu0
        %v2692 = vadd.f32 0.0, %v2691
        %v2693 = vpop.f32.mrf.mxu0
        %2694 = vmatprep.mubr.bf16.mxu0 0
        %2695 = vmatmul.mubr.bf16.gmra.mxu0 %v2509
        %v2696 = vpop.f32.mrf.mxu0
        %v2697 = vadd.f32 0.0, %v2696
        %v2698 = vpop.f32.mrf.mxu0
        %v2699 = vpop.f32.mrf.mxu0
        %v2700 = vadd.f32 0.0, %v2699
        %v2701 = vpop.f32.mrf.mxu0
        %2702 = vmatprep.mubr.bf16.mxu0 0
        %2703 = vmatmul.mubr.bf16.gmra.mxu0 %v2512
        %v2704 = vpop.f32.mrf.mxu0
        %v2705 = vadd.f32 0.0, %v2704
        %v2706 = vpop.f32.mrf.mxu0
        %v2707 = vpop.f32.mrf.mxu0
        %v2708 = vadd.f32 0.0, %v2707
        %v2709 = vpop.f32.mrf.mxu0
        %2710 = vmatprep.mubr.bf16.mxu0 0
        %2711 = vmatmul.mubr.bf16.gmra.mxu0 %v2515
        %v2712 = vpop.f32.mrf.mxu0
        %v2713 = vadd.f32 0.0, %v2712
        %v2714 = vpop.f32.mrf.mxu0
        %v2715 = vpop.f32.mrf.mxu0
        %v2716 = vadd.f32 0.0, %v2715
        %v2717 = vpop.f32.mrf.mxu0
        %2718 = vmatprep.mubr.bf16.mxu0 0
        %2719 = vmatmul.mubr.bf16.gmra.mxu0 %v2518
        %v2720 = vpop.f32.mrf.mxu0
        %v2721 = vadd.f32 0.0, %v2720
        %v2722 = vpop.f32.mrf.mxu0
        %v2723 = vpop.f32.mrf.mxu0
        %v2724 = vadd.f32 0.0, %v2723
        %v2725 = vpop.f32.mrf.mxu0
        %2726 = vmatprep.mubr.bf16.mxu0 0
        %2727 = vmatmul.mubr.bf16.gmra.mxu0 %v2521
        %v2728 = vpop.f32.mrf.mxu0
        %v2729 = vadd.f32 0.0, %v2728
        %v2730 = vpop.f32.mrf.mxu0
        %v2731 = vpop.f32.mrf.mxu0
        %v2732 = vadd.f32 0.0, %v2731
        %v2733 = vpop.f32.mrf.mxu0
        %2734 = vmatprep.mubr.bf16.mxu0 0
        %2735 = vmatmul.mubr.bf16.gmra.mxu0 %v2524
        %v2736 = vpop.f32.mrf.mxu0
        %v2737 = vadd.f32 0.0, %v2736
        %v2738 = vpop.f32.mrf.mxu0
        %v2739 = vpop.f32.mrf.mxu0
        %v2740 = vadd.f32 0.0, %v2739
        %v2741 = vpop.f32.mrf.mxu0
        %2742 = vmatprep.mubr.bf16.mxu0 0
        %2743 = vmatmul.mubr.bf16.gmra.mxu0 %v2527
        %v2744 = vpop.f32.mrf.mxu0
        %v2745 = vadd.f32 0.0, %v2744
        %v2746 = vpop.f32.mrf.mxu0
        %v2747 = vpop.f32.mrf.mxu0
        %v2748 = vadd.f32 0.0, %v2747
        %v2749 = vpop.f32.mrf.mxu0
        %2750 = vmatprep.mubr.bf16.mxu0 0
        %2751 = vmatmul.mubr.bf16.gmra.mxu0 %v2530
        %v2752 = vpop.f32.mrf.mxu0
        %v2753 = vadd.f32 0.0, %v2752
        %v2754 = vpop.f32.mrf.mxu0
        %v2755 = vpop.f32.mrf.mxu0
        %v2756 = vadd.f32 0.0, %v2755
        %v2757 = vpop.f32.mrf.mxu0
        %2758 = vmatprep.mubr.bf16.mxu0 0
        %2759 = vmatmul.mubr.bf16.gmra.mxu0 %v2533
        %v2760 = vpop.f32.mrf.mxu0
        %v2761 = vadd.f32 0.0, %v2760
        %v2762 = vpop.f32.mrf.mxu0
        %v2763 = vpop.f32.mrf.mxu0
        %v2764 = vadd.f32 0.0, %v2763
        %v2765 = vpop.f32.mrf.mxu0
        %2766 = vmatprep.mubr.bf16.mxu0 0
        %2767 = vmatmul.mubr.bf16.gmra.mxu0 %v2536
        %v2768 = vpop.f32.mrf.mxu0
        %v2769 = vadd.f32 0.0, %v2768
        %v2770 = vpop.f32.mrf.mxu0
        %v2771 = vpop.f32.mrf.mxu0
        %v2772 = vadd.f32 0.0, %v2771
        %v2773 = vpop.f32.mrf.mxu0
        %2774 = vmatprep.mubr.bf16.mxu0 0
        %2775 = vmatmul.mubr.bf16.gmra.mxu0 %v2539
        %v2776 = vpop.f32.mrf.mxu0
        %v2777 = vadd.f32 0.0, %v2776
        %v2778 = vpop.f32.mrf.mxu0
        %v2779 = vpop.f32.mrf.mxu0
        %v2780 = vadd.f32 0.0, %v2779
        %v2781 = vpop.f32.mrf.mxu0
        %2782 = vmatprep.mubr.bf16.mxu0 0
        %2783 = vmatmul.mubr.bf16.gmra.mxu0 %v2542
        %v2784 = vpop.f32.mrf.mxu0
        %v2785 = vadd.f32 0.0, %v2784
        %v2786 = vpop.f32.mrf.mxu0
        %v2787 = vpop.f32.mrf.mxu0
        %v2788 = vadd.f32 0.0, %v2787
        %v2789 = vpop.f32.mrf.mxu0
        %2790 = vmatprep.mubr.bf16.mxu0 0
        %2791 = vmatmul.mubr.bf16.gmra.mxu0 %v2545
        %v2792 = vpop.f32.mrf.mxu0
        %v2793 = vadd.f32 0.0, %v2792
        %v2794 = vpop.f32.mrf.mxu0
        %v2795 = vpop.f32.mrf.mxu0
        %v2796 = vadd.f32 0.0, %v2795
        %v2797 = vpop.f32.mrf.mxu0
        %2798 = vmatprep.mubr.bf16.mxu0 0
        %2799 = vmatmul.mubr.bf16.gmra.mxu0 %v2548
        %v2800 = vpop.f32.mrf.mxu0
        %v2801 = vadd.f32 0.0, %v2800
        %v2802 = vpop.f32.mrf.mxu0
        %v2803 = vpop.f32.mrf.mxu0
        %v2804 = vadd.f32 0.0, %v2803
        %v2805 = vpop.f32.mrf.mxu0
        %2806 = vdwg.mxu0
        %v2807 = vadd.f32 %v2209, %v2585
        %v2808 = vadd.f32 %v2210, %v2588
        %v2809 = vadd.f32 %v2211, %v2593
        %v2810 = vadd.f32 %v2212, %v2596
        %v2811 = vadd.f32 %v2213, %v2601
        %v2812 = vadd.f32 %v2214, %v2604
        %v2813 = vadd.f32 %v2215, %v2609
        %v2814 = vadd.f32 %v2216, %v2612
        %v2815 = vadd.f32 %v2217, %v2617
        %v2816 = vadd.f32 %v2218, %v2620
        %v2817 = vadd.f32 %v2219, %v2625
        %v2818 = vadd.f32 %v2220, %v2628
        %v2819 = vadd.f32 %v2221, %v2633
        %v2820 = vadd.f32 %v2222, %v2636
        %v2821 = vadd.f32 %v2223, %v2641
        %v2822 = vadd.f32 %v2224, %v2644
        %v2823 = vadd.f32 %v2225, %v2649
        %v2824 = vadd.f32 %v2226, %v2652
        %v2825 = vadd.f32 %v2227, %v2657
        %v2826 = vadd.f32 %v2228, %v2660
        %v2827 = vadd.f32 %v2229, %v2665
        %v2828 = vadd.f32 %v2230, %v2668
        %v2829 = vadd.f32 %v2231, %v2673
        %v2830 = vadd.f32 %v2232, %v2676
        %v2831 = vadd.f32 %v2233, %v2681
        %v2832 = vadd.f32 %v2234, %v2684
        %v2833 = vadd.f32 %v2235, %v2689
        %v2834 = vadd.f32 %v2236, %v2692
        %v2835 = vadd.f32 %v2237, %v2697
        %v2836 = vadd.f32 %v2238, %v2700
        %v2837 = vadd.f32 %v2239, %v2705
        %v2838 = vadd.f32 %v2240, %v2708
        %v2839 = vadd.f32 %v2241, %v2713
        %v2840 = vadd.f32 %v2242, %v2716
        %v2841 = vadd.f32 %v2243, %v2721
        %v2842 = vadd.f32 %v2244, %v2724
        %v2843 = vadd.f32 %v2245, %v2729
        %v2844 = vadd.f32 %v2246, %v2732
        %v2845 = vadd.f32 %v2247, %v2737
        %v2846 = vadd.f32 %v2248, %v2740
        %v2847 = vadd.f32 %v2249, %v2745
        %v2848 = vadd.f32 %v2250, %v2748
        %v2849 = vadd.f32 %v2251, %v2753
        %v2850 = vadd.f32 %v2252, %v2756
        %v2851 = vadd.f32 %v2253, %v2761
        %v2852 = vadd.f32 %v2254, %v2764
        %v2853 = vadd.f32 %v2255, %v2769
        %v2854 = vadd.f32 %v2256, %v2772
        %v2855 = vadd.f32 %v2257, %v2777
        %v2856 = vadd.f32 %v2258, %v2780
        %v2857 = vadd.f32 %v2259, %v2785
        %v2858 = vadd.f32 %v2260, %v2788
        %v2859 = vadd.f32 %v2261, %v2793
        %v2860 = vadd.f32 %v2262, %v2796
        %v2861 = vadd.f32 %v2263, %v2801
        %v2862 = vadd.f32 %v2264, %v2804
        %v2863 = vmax.f32 %v2807, 0.0
        %v2864 = vmax.f32 %v2808, 0.0
        %v2865 = vmax.f32 %v2809, 0.0
        %v2866 = vmax.f32 %v2810, 0.0
        %v2867 = vmax.f32 %v2811, 0.0
        %v2868 = vmax.f32 %v2812, 0.0
        %v2869 = vmax.f32 %v2813, 0.0
        %v2870 = vmax.f32 %v2814, 0.0
        %v2871 = vmax.f32 %v2815, 0.0
        %v2872 = vmax.f32 %v2816, 0.0
        %v2873 = vmax.f32 %v2817, 0.0
        %v2874 = vmax.f32 %v2818, 0.0
        %v2875 = vmax.f32 %v2819, 0.0
        %v2876 = vmax.f32 %v2820, 0.0
        %v2877 = vmax.f32 %v2821, 0.0
        %v2878 = vmax.f32 %v2822, 0.0
        %v2879 = vmax.f32 %v2823, 0.0
        %v2880 = vmax.f32 %v2824, 0.0
        %v2881 = vmax.f32 %v2825, 0.0
        %v2882 = vmax.f32 %v2826, 0.0
        %v2883 = vmax.f32 %v2827, 0.0
        %v2884 = vmax.f32 %v2828, 0.0
        %v2885 = vmax.f32 %v2829, 0.0
        %v2886 = vmax.f32 %v2830, 0.0
        %v2887 = vmax.f32 %v2831, 0.0
        %v2888 = vmax.f32 %v2832, 0.0
        %v2889 = vmax.f32 %v2833, 0.0
        %v2890 = vmax.f32 %v2834, 0.0
        %v2891 = vmax.f32 %v2835, 0.0
        %v2892 = vmax.f32 %v2836, 0.0
        %v2893 = vmax.f32 %v2837, 0.0
        %v2894 = vmax.f32 %v2838, 0.0
        %v2895 = vmax.f32 %v2839, 0.0
        %v2896 = vmax.f32 %v2840, 0.0
        %v2897 = vmax.f32 %v2841, 0.0
        %v2898 = vmax.f32 %v2842, 0.0
        %v2899 = vmax.f32 %v2843, 0.0
        %v2900 = vmax.f32 %v2844, 0.0
        %v2901 = vmax.f32 %v2845, 0.0
        %v2902 = vmax.f32 %v2846, 0.0
        %v2903 = vmax.f32 %v2847, 0.0
        %v2904 = vmax.f32 %v2848, 0.0
        %v2905 = vmax.f32 %v2849, 0.0
        %v2906 = vmax.f32 %v2850, 0.0
        %v2907 = vmax.f32 %v2851, 0.0
        %v2908 = vmax.f32 %v2852, 0.0
        %v2909 = vmax.f32 %v2853, 0.0
        %v2910 = vmax.f32 %v2854, 0.0
        %v2911 = vmax.f32 %v2855, 0.0
        %v2912 = vmax.f32 %v2856, 0.0
        %v2913 = vmax.f32 %v2857, 0.0
        %v2914 = vmax.f32 %v2858, 0.0
        %v2915 = vmax.f32 %v2859, 0.0
        %v2916 = vmax.f32 %v2860, 0.0
        %v2917 = vmax.f32 %v2861, 0.0
        %v2918 = vmax.f32 %v2862, 0.0
        %v2919 = vpack.c.bf16 %v2864, %v2863
        %v2920 = vpack.c.bf16 %v2866, %v2865
        %v2921 = vpack.c.bf16 %v2868, %v2867
        %v2922 = vpack.c.bf16 %v2870, %v2869
        %v2923 = vpack.c.bf16 %v2872, %v2871
        %v2924 = vpack.c.bf16 %v2874, %v2873
        %v2925 = vpack.c.bf16 %v2876, %v2875
        %v2926 = vpack.c.bf16 %v2878, %v2877
        %v2927 = vpack.c.bf16 %v2880, %v2879
        %v2928 = vpack.c.bf16 %v2882, %v2881
        %v2929 = vpack.c.bf16 %v2884, %v2883
        %v2930 = vpack.c.bf16 %v2886, %v2885
        %v2931 = vpack.c.bf16 %v2888, %v2887
        %v2932 = vpack.c.bf16 %v2890, %v2889
        %v2933 = vpack.c.bf16 %v2892, %v2891
        %v2934 = vpack.c.bf16 %v2894, %v2893
        %v2935 = vpack.c.bf16 %v2896, %v2895
        %v2936 = vpack.c.bf16 %v2898, %v2897
        %v2937 = vpack.c.bf16 %v2900, %v2899
        %v2938 = vpack.c.bf16 %v2902, %v2901
        %v2939 = vpack.c.bf16 %v2904, %v2903
        %v2940 = vpack.c.bf16 %v2906, %v2905
        %v2941 = vpack.c.bf16 %v2908, %v2907
        %v2942 = vpack.c.bf16 %v2910, %v2909
        %v2943 = vpack.c.bf16 %v2912, %v2911
        %v2944 = vpack.c.bf16 %v2914, %v2913
        %v2945 = vpack.c.bf16 %v2916, %v2915
        %v2946 = vpack.c.bf16 %v2918, %v2917
        %v2947 = vld [vmem:[#allocation2] sm:$0xf]
        %v2948 = vld [vmem:[#allocation2 + $0x4] sm:$0xf]
        %v2949 = vld [vmem:[#allocation2 + $0x8] sm:$0xf]
        %v2950 = vld [vmem:[#allocation2 + $0xc] sm:$0xf]
        %v2951 = vld [vmem:[#allocation2 + $0x10] sm:$0xf]
        %v2952 = vld [vmem:[#allocation2 + $0x14] sm:$0xf]
        %v2953 = vld [vmem:[#allocation2 + $0x18] sm:$0xf]
        %v2954 = vld [vmem:[#allocation2 + $0x1c] sm:$0xf]
        %v2955 = vld [vmem:[#allocation4] sm:$0x1]
        %v2957 = vlaneseq
        %v2958 = vshrl.u32 %v2957, 7
        %v2959 = vsub.s32 0, %v2958
        %v2960 = vrot.slane %v2955, %v2959
        %v2970 = vunpack.c.l.b16 %v2947
        %v2971 = vunpack.c.l.b16 %v2948
        %v2972 = vunpack.c.l.b16 %v2949
        %v2973 = vunpack.c.l.b16 %v2950
        %v2974 = vunpack.c.l.b16 %v2951
        %v2975 = vunpack.c.l.b16 %v2952
        %v2976 = vunpack.c.l.b16 %v2953
        %v2977 = vunpack.c.l.b16 %v2954
        %v2978 = vpack.c.b16 %v2971, %v2970
        %v2979 = vpack.c.b16 %v2973, %v2972
        %v2980 = vpack.c.b16 %v2975, %v2974
        %v2981 = vpack.c.b16 %v2977, %v2976
        %v2987 = vsel %vm2465, %v2919, 0
        %v2990 = vsel %vm2465, %v2920, 0
        %v2993 = vsel %vm2465, %v2921, 0
        %v2996 = vsel %vm2465, %v2922, 0
        %v2999 = vsel %vm2465, %v2923, 0
        %v3002 = vsel %vm2465, %v2924, 0
        %v3005 = vsel %vm2465, %v2925, 0
        %v3008 = vsel %vm2465, %v2926, 0
        %v3011 = vsel %vm2465, %v2927, 0
        %v3014 = vsel %vm2465, %v2928, 0
        %v3017 = vsel %vm2465, %v2929, 0
        %v3020 = vsel %vm2465, %v2930, 0
        %v3023 = vsel %vm2465, %v2931, 0
        %v3026 = vsel %vm2465, %v2932, 0
        %v3029 = vsel %vm2465, %v2933, 0
        %v3032 = vsel %vm2465, %v2934, 0
        %v3035 = vsel %vm2465, %v2935, 0
        %v3038 = vsel %vm2465, %v2936, 0
        %v3041 = vsel %vm2465, %v2937, 0
        %v3044 = vsel %vm2465, %v2938, 0
        %v3047 = vsel %vm2465, %v2939, 0
        %v3050 = vsel %vm2465, %v2940, 0
        %v3053 = vsel %vm2465, %v2941, 0
        %v3056 = vsel %vm2465, %v2942, 0
        %v3059 = vsel %vm2465, %v2943, 0
        %v3062 = vsel %vm2465, %v2944, 0
        %v3065 = vsel %vm2465, %v2945, 0
        %v3068 = vsel %vm2465, %v2946, 0
        %3070 = vmatprep.subr.bf16.mxu0 0
        %3071 = vmatpush1.bf16.msra.mxu0 0
        %3072 = vmatprep.subr.bf16.mxu0 0
        %3073 = vmatpush1.bf16.msra.mxu0 0
        %3074 = vmatprep.subr.bf16.mxu0 0
        %3075 = vmatpush1.bf16.msra.mxu0 0
        %3076 = vmatprep.subr.bf16.mxu0 0
        %3077 = vmatpush1.bf16.msra.mxu0 0
        %3078 = vmatprep.subr.bf16.mxu0 0
        %3079 = vmatpush1.bf16.msra.mxu0 %v2981
        %3080 = vmatprep.subr.bf16.mxu0 0
        %3081 = vmatpush1.bf16.msra.mxu0 %v2980
        %3082 = vmatprep.subr.bf16.mxu0 0
        %3083 = vmatpush1.bf16.msra.mxu0 %v2979
        %3084 = vmatprep.subr.bf16.mxu0 0
        %3085 = vmatpush1.bf16.msra.mxu0 %v2978
        %3086 = vmatprep.subr.bf16.mxu0 0
        %3087 = vmatpush2.bf16.msra.mxu0 0
        %3088 = vmatprep.subr.bf16.mxu0 0
        %3089 = vmatpush2.bf16.msra.mxu0 0
        %3090 = vmatprep.subr.bf16.mxu0 0
        %3091 = vmatpush2.bf16.msra.mxu0 0
        %3092 = vmatprep.subr.bf16.mxu0 0
        %3093 = vmatpush2.bf16.msra.mxu0 0
        %3094 = vmatprep.subr.bf16.mxu0 0
        %3095 = vmatpush2.bf16.msra.mxu0 0
        %3096 = vmatprep.subr.bf16.mxu0 0
        %3097 = vmatpush2.bf16.msra.mxu0 0
        %3098 = vmatprep.subr.bf16.mxu0 0
        %3099 = vmatpush2.bf16.msra.mxu0 0
        %3100 = vmatprep.subr.bf16.mxu0 0
        %3101 = vmatpush2.bf16.msra.mxu0 0
        %3102 = vmatprep.mubr.bf16.mxu0 0
        %3103 = vmatmul.mubr.bf16.gmra.mxu0 %v2987
        %v3104 = vpop.f32.mrf.mxu0
        %v3105 = vadd.f32 %v2960, %v3104
        %v3106 = vpop.f32.mrf.mxu0
        %v3107 = vpop.f32.mrf.mxu0
        %v3108 = vadd.f32 %v2960, %v3107
        %v3109 = vpop.f32.mrf.mxu0
        %3110 = vmatprep.mubr.bf16.mxu0 0
        %3111 = vmatmul.mubr.bf16.gmra.mxu0 %v2990
        %v3112 = vpop.f32.mrf.mxu0
        %v3113 = vadd.f32 %v2960, %v3112
        %v3114 = vpop.f32.mrf.mxu0
        %v3115 = vpop.f32.mrf.mxu0
        %v3116 = vadd.f32 %v2960, %v3115
        %v3117 = vpop.f32.mrf.mxu0
        %3118 = vmatprep.mubr.bf16.mxu0 0
        %3119 = vmatmul.mubr.bf16.gmra.mxu0 %v2993
        %v3120 = vpop.f32.mrf.mxu0
        %v3121 = vadd.f32 %v2960, %v3120
        %v3122 = vpop.f32.mrf.mxu0
        %v3123 = vpop.f32.mrf.mxu0
        %v3124 = vadd.f32 %v2960, %v3123
        %v3125 = vpop.f32.mrf.mxu0
        %3126 = vmatprep.mubr.bf16.mxu0 0
        %3127 = vmatmul.mubr.bf16.gmra.mxu0 %v2996
        %v3128 = vpop.f32.mrf.mxu0
        %v3129 = vadd.f32 %v2960, %v3128
        %v3130 = vpop.f32.mrf.mxu0
        %v3131 = vpop.f32.mrf.mxu0
        %v3132 = vadd.f32 %v2960, %v3131
        %v3133 = vpop.f32.mrf.mxu0
        %3134 = vmatprep.mubr.bf16.mxu0 0
        %3135 = vmatmul.mubr.bf16.gmra.mxu0 %v2999
        %v3136 = vpop.f32.mrf.mxu0
        %v3137 = vadd.f32 %v2960, %v3136
        %v3138 = vpop.f32.mrf.mxu0
        %v3139 = vpop.f32.mrf.mxu0
        %v3140 = vadd.f32 %v2960, %v3139
        %v3141 = vpop.f32.mrf.mxu0
        %3142 = vmatprep.mubr.bf16.mxu0 0
        %3143 = vmatmul.mubr.bf16.gmra.mxu0 %v3002
        %v3144 = vpop.f32.mrf.mxu0
        %v3145 = vadd.f32 %v2960, %v3144
        %v3146 = vpop.f32.mrf.mxu0
        %v3147 = vpop.f32.mrf.mxu0
        %v3148 = vadd.f32 %v2960, %v3147
        %v3149 = vpop.f32.mrf.mxu0
        %3150 = vmatprep.mubr.bf16.mxu0 0
        %3151 = vmatmul.mubr.bf16.gmra.mxu0 %v3005
        %v3152 = vpop.f32.mrf.mxu0
        %v3153 = vadd.f32 %v2960, %v3152
        %v3154 = vpop.f32.mrf.mxu0
        %v3155 = vpop.f32.mrf.mxu0
        %v3156 = vadd.f32 %v2960, %v3155
        %v3157 = vpop.f32.mrf.mxu0
        %3158 = vmatprep.mubr.bf16.mxu0 0
        %3159 = vmatmul.mubr.bf16.gmra.mxu0 %v3008
        %v3160 = vpop.f32.mrf.mxu0
        %v3161 = vadd.f32 %v2960, %v3160
        %v3162 = vpop.f32.mrf.mxu0
        %v3163 = vpop.f32.mrf.mxu0
        %v3164 = vadd.f32 %v2960, %v3163
        %v3165 = vpop.f32.mrf.mxu0
        %3166 = vmatprep.mubr.bf16.mxu0 0
        %3167 = vmatmul.mubr.bf16.gmra.mxu0 %v3011
        %v3168 = vpop.f32.mrf.mxu0
        %v3169 = vadd.f32 %v2960, %v3168
        %v3170 = vpop.f32.mrf.mxu0
        %v3171 = vpop.f32.mrf.mxu0
        %v3172 = vadd.f32 %v2960, %v3171
        %v3173 = vpop.f32.mrf.mxu0
        %3174 = vmatprep.mubr.bf16.mxu0 0
        %3175 = vmatmul.mubr.bf16.gmra.mxu0 %v3014
        %v3176 = vpop.f32.mrf.mxu0
        %v3177 = vadd.f32 %v2960, %v3176
        %v3178 = vpop.f32.mrf.mxu0
        %v3179 = vpop.f32.mrf.mxu0
        %v3180 = vadd.f32 %v2960, %v3179
        %v3181 = vpop.f32.mrf.mxu0
        %3182 = vmatprep.mubr.bf16.mxu0 0
        %3183 = vmatmul.mubr.bf16.gmra.mxu0 %v3017
        %v3184 = vpop.f32.mrf.mxu0
        %v3185 = vadd.f32 %v2960, %v3184
        %v3186 = vpop.f32.mrf.mxu0
        %v3187 = vpop.f32.mrf.mxu0
        %v3188 = vadd.f32 %v2960, %v3187
        %v3189 = vpop.f32.mrf.mxu0
        %3190 = vmatprep.mubr.bf16.mxu0 0
        %3191 = vmatmul.mubr.bf16.gmra.mxu0 %v3020
        %v3192 = vpop.f32.mrf.mxu0
        %v3193 = vadd.f32 %v2960, %v3192
        %v3194 = vpop.f32.mrf.mxu0
        %v3195 = vpop.f32.mrf.mxu0
        %v3196 = vadd.f32 %v2960, %v3195
        %v3197 = vpop.f32.mrf.mxu0
        %3198 = vmatprep.mubr.bf16.mxu0 0
        %3199 = vmatmul.mubr.bf16.gmra.mxu0 %v3023
        %v3200 = vpop.f32.mrf.mxu0
        %v3201 = vadd.f32 %v2960, %v3200
        %v3202 = vpop.f32.mrf.mxu0
        %v3203 = vpop.f32.mrf.mxu0
        %v3204 = vadd.f32 %v2960, %v3203
        %v3205 = vpop.f32.mrf.mxu0
        %3206 = vmatprep.mubr.bf16.mxu0 0
        %3207 = vmatmul.mubr.bf16.gmra.mxu0 %v3026
        %v3208 = vpop.f32.mrf.mxu0
        %v3209 = vadd.f32 %v2960, %v3208
        %v3210 = vpop.f32.mrf.mxu0
        %v3211 = vpop.f32.mrf.mxu0
        %v3212 = vadd.f32 %v2960, %v3211
        %v3213 = vpop.f32.mrf.mxu0
        %3214 = vmatprep.mubr.bf16.mxu0 0
        %3215 = vmatmul.mubr.bf16.gmra.mxu0 %v3029
        %v3216 = vpop.f32.mrf.mxu0
        %v3217 = vadd.f32 %v2960, %v3216
        %v3218 = vpop.f32.mrf.mxu0
        %v3219 = vpop.f32.mrf.mxu0
        %v3220 = vadd.f32 %v2960, %v3219
        %v3221 = vpop.f32.mrf.mxu0
        %3222 = vmatprep.mubr.bf16.mxu0 0
        %3223 = vmatmul.mubr.bf16.gmra.mxu0 %v3032
        %v3224 = vpop.f32.mrf.mxu0
        %v3225 = vadd.f32 %v2960, %v3224
        %v3226 = vpop.f32.mrf.mxu0
        %v3227 = vpop.f32.mrf.mxu0
        %v3228 = vadd.f32 %v2960, %v3227
        %v3229 = vpop.f32.mrf.mxu0
        %3230 = vmatprep.mubr.bf16.mxu0 0
        %3231 = vmatmul.mubr.bf16.gmra.mxu0 %v3035
        %v3232 = vpop.f32.mrf.mxu0
        %v3233 = vadd.f32 %v2960, %v3232
        %v3234 = vpop.f32.mrf.mxu0
        %v3235 = vpop.f32.mrf.mxu0
        %v3236 = vadd.f32 %v2960, %v3235
        %v3237 = vpop.f32.mrf.mxu0
        %3238 = vmatprep.mubr.bf16.mxu0 0
        %3239 = vmatmul.mubr.bf16.gmra.mxu0 %v3038
        %v3240 = vpop.f32.mrf.mxu0
        %v3241 = vadd.f32 %v2960, %v3240
        %v3242 = vpop.f32.mrf.mxu0
        %v3243 = vpop.f32.mrf.mxu0
        %v3244 = vadd.f32 %v2960, %v3243
        %v3245 = vpop.f32.mrf.mxu0
        %3246 = vmatprep.mubr.bf16.mxu0 0
        %3247 = vmatmul.mubr.bf16.gmra.mxu0 %v3041
        %v3248 = vpop.f32.mrf.mxu0
        %v3249 = vadd.f32 %v2960, %v3248
        %v3250 = vpop.f32.mrf.mxu0
        %v3251 = vpop.f32.mrf.mxu0
        %v3252 = vadd.f32 %v2960, %v3251
        %v3253 = vpop.f32.mrf.mxu0
        %3254 = vmatprep.mubr.bf16.mxu0 0
        %3255 = vmatmul.mubr.bf16.gmra.mxu0 %v3044
        %v3256 = vpop.f32.mrf.mxu0
        %v3257 = vadd.f32 %v2960, %v3256
        %v3258 = vpop.f32.mrf.mxu0
        %v3259 = vpop.f32.mrf.mxu0
        %v3260 = vadd.f32 %v2960, %v3259
        %v3261 = vpop.f32.mrf.mxu0
        %3262 = vmatprep.mubr.bf16.mxu0 0
        %3263 = vmatmul.mubr.bf16.gmra.mxu0 %v3047
        %v3264 = vpop.f32.mrf.mxu0
        %v3265 = vadd.f32 %v2960, %v3264
        %v3266 = vpop.f32.mrf.mxu0
        %v3267 = vpop.f32.mrf.mxu0
        %v3268 = vadd.f32 %v2960, %v3267
        %v3269 = vpop.f32.mrf.mxu0
        %3270 = vmatprep.mubr.bf16.mxu0 0
        %3271 = vmatmul.mubr.bf16.gmra.mxu0 %v3050
        %v3272 = vpop.f32.mrf.mxu0
        %v3273 = vadd.f32 %v2960, %v3272
        %v3274 = vpop.f32.mrf.mxu0
        %v3275 = vpop.f32.mrf.mxu0
        %v3276 = vadd.f32 %v2960, %v3275
        %v3277 = vpop.f32.mrf.mxu0
        %3278 = vmatprep.mubr.bf16.mxu0 0
        %3279 = vmatmul.mubr.bf16.gmra.mxu0 %v3053
        %v3280 = vpop.f32.mrf.mxu0
        %v3281 = vadd.f32 %v2960, %v3280
        %v3282 = vpop.f32.mrf.mxu0
        %v3283 = vpop.f32.mrf.mxu0
        %v3284 = vadd.f32 %v2960, %v3283
        %v3285 = vpop.f32.mrf.mxu0
        %3286 = vmatprep.mubr.bf16.mxu0 0
        %3287 = vmatmul.mubr.bf16.gmra.mxu0 %v3056
        %v3288 = vpop.f32.mrf.mxu0
        %v3289 = vadd.f32 %v2960, %v3288
        %v3290 = vpop.f32.mrf.mxu0
        %v3291 = vpop.f32.mrf.mxu0
        %v3292 = vadd.f32 %v2960, %v3291
        %v3293 = vpop.f32.mrf.mxu0
        %3294 = vmatprep.mubr.bf16.mxu0 0
        %3295 = vmatmul.mubr.bf16.gmra.mxu0 %v3059
        %v3296 = vpop.f32.mrf.mxu0
        %v3297 = vadd.f32 %v2960, %v3296
        %v3298 = vpop.f32.mrf.mxu0
        %v3299 = vpop.f32.mrf.mxu0
        %v3300 = vadd.f32 %v2960, %v3299
        %v3301 = vpop.f32.mrf.mxu0
        %3302 = vmatprep.mubr.bf16.mxu0 0
        %3303 = vmatmul.mubr.bf16.gmra.mxu0 %v3062
        %v3304 = vpop.f32.mrf.mxu0
        %v3305 = vadd.f32 %v2960, %v3304
        %v3306 = vpop.f32.mrf.mxu0
        %v3307 = vpop.f32.mrf.mxu0
        %v3308 = vadd.f32 %v2960, %v3307
        %v3309 = vpop.f32.mrf.mxu0
        %3310 = vmatprep.mubr.bf16.mxu0 0
        %3311 = vmatmul.mubr.bf16.gmra.mxu0 %v3065
        %v3312 = vpop.f32.mrf.mxu0
        %v3313 = vadd.f32 %v2960, %v3312
        %v3314 = vpop.f32.mrf.mxu0
        %v3315 = vpop.f32.mrf.mxu0
        %v3316 = vadd.f32 %v2960, %v3315
        %v3317 = vpop.f32.mrf.mxu0
        %3318 = vmatprep.mubr.bf16.mxu0 0
        %3319 = vmatmul.mubr.bf16.gmra.mxu0 %v3068
        %v3320 = vpop.f32.mrf.mxu0
        %v3321 = vadd.f32 %v2960, %v3320
        %v3322 = vpop.f32.mrf.mxu0
        %v3323 = vpop.f32.mrf.mxu0
        %v3324 = vadd.f32 %v2960, %v3323
        %v3325 = vpop.f32.mrf.mxu0
        %3326 = vdwg.mxu0
        %3327 = vst [vmem:[%s279] sm:$0xff] %v3105
        %3328 = vst [vmem:[%s279 + $0x8] sm:$0xff] %v3108
        %3329 = vst [vmem:[%s279 + $0x10] sm:$0xff] %v3113
        %3330 = vst [vmem:[%s279 + $0x18] sm:$0xff] %v3116
        %3331 = vst [vmem:[%s279 + $0x20] sm:$0xff] %v3121
        %3332 = vst [vmem:[%s279 + $0x28] sm:$0xff] %v3124
        %3333 = vst [vmem:[%s279 + $0x30] sm:$0xff] %v3129
        %3334 = vst [vmem:[%s279 + $0x38] sm:$0xff] %v3132
        %3335 = vst [vmem:[%s279 + $0x40] sm:$0xff] %v3137
        %3336 = vst [vmem:[%s279 + $0x48] sm:$0xff] %v3140
        %3337 = vst [vmem:[%s279 + $0x50] sm:$0xff] %v3145
        %3338 = vst [vmem:[%s279 + $0x58] sm:$0xff] %v3148
        %3339 = vst [vmem:[%s279 + $0x60] sm:$0xff] %v3153
        %3340 = vst [vmem:[%s279 + $0x68] sm:$0xff] %v3156
        %3341 = vst [vmem:[%s279 + $0x70] sm:$0xff] %v3161
        %3342 = vst [vmem:[%s279 + $0x78] sm:$0xff] %v3164
        %3343 = vst [vmem:[%s279 + $0x80] sm:$0xff] %v3169
        %3344 = vst [vmem:[%s279 + $0x88] sm:$0xff] %v3172
        %3345 = vst [vmem:[%s279 + $0x90] sm:$0xff] %v3177
        %3346 = vst [vmem:[%s279 + $0x98] sm:$0xff] %v3180
        %3347 = vst [vmem:[%s279 + $0xa0] sm:$0xff] %v3185
        %3348 = vst [vmem:[%s279 + $0xa8] sm:$0xff] %v3188
        %3349 = vst [vmem:[%s279 + $0xb0] sm:$0xff] %v3193
        %3350 = vst [vmem:[%s279 + $0xb8] sm:$0xff] %v3196
        %3351 = vst [vmem:[%s279 + $0xc0] sm:$0xff] %v3201
        %3352 = vst [vmem:[%s279 + $0xc8] sm:$0xff] %v3204
        %3353 = vst [vmem:[%s279 + $0xd0] sm:$0xff] %v3209
        %3354 = vst [vmem:[%s279 + $0xd8] sm:$0xff] %v3212
        %3355 = vst [vmem:[%s279 + $0xe0] sm:$0xff] %v3217
        %3356 = vst [vmem:[%s279 + $0xe8] sm:$0xff] %v3220
        %3357 = vst [vmem:[%s279 + $0xf0] sm:$0xff] %v3225
        %3358 = vst [vmem:[%s279 + $0xf8] sm:$0xff] %v3228
        %3359 = vst [vmem:[%s279 + $0x100] sm:$0xff] %v3233
        %3360 = vst [vmem:[%s279 + $0x108] sm:$0xff] %v3236
        %3361 = vst [vmem:[%s279 + $0x110] sm:$0xff] %v3241
        %3362 = vst [vmem:[%s279 + $0x118] sm:$0xff] %v3244
        %3363 = vst [vmem:[%s279 + $0x120] sm:$0xff] %v3249
        %3364 = vst [vmem:[%s279 + $0x128] sm:$0xff] %v3252
        %3365 = vst [vmem:[%s279 + $0x130] sm:$0xff] %v3257
        %3366 = vst [vmem:[%s279 + $0x138] sm:$0xff] %v3260
        %3367 = vst [vmem:[%s279 + $0x140] sm:$0xff] %v3265
        %3368 = vst [vmem:[%s279 + $0x148] sm:$0xff] %v3268
        %3369 = vst [vmem:[%s279 + $0x150] sm:$0xff] %v3273
        %3370 = vst [vmem:[%s279 + $0x158] sm:$0xff] %v3276
        %3371 = vst [vmem:[%s279 + $0x160] sm:$0xff] %v3281
        %3372 = vst [vmem:[%s279 + $0x168] sm:$0xff] %v3284
        %3373 = vst [vmem:[%s279 + $0x170] sm:$0xff] %v3289
        %3374 = vst [vmem:[%s279 + $0x178] sm:$0xff] %v3292
        %3375 = vst [vmem:[%s279 + $0x180] sm:$0xff] %v3297
        %3376 = vst [vmem:[%s279 + $0x188] sm:$0xff] %v3300
        %3377 = vst [vmem:[%s279 + $0x190] sm:$0xff] %v3305
        %3378 = vst [vmem:[%s279 + $0x198] sm:$0xff] %v3308
        %3379 = vst [vmem:[%s279 + $0x1a0] sm:$0xff] %v3313
        %3380 = vst [vmem:[%s279 + $0x1a8] sm:$0xff] %v3316
        %3381 = vst [vmem:[%s279 + $0x1b0] sm:$0xff] %v3321
        %3382 = vst [vmem:[%s279 + $0x1b8] sm:$0xff] %v3324
        %p3383 = scmp.lt.s32.totalorder %s19, 1
        %s3384 = scalar_select %p3383, %s19, 1
        %s3385 = smul.addr %s3384, 56
        %s3386 = smul.addr %s3385, 8
        %s3387 = scalar_lea.vmem %s6, %s3386
        // Predicated region
        $region53: #{metro_body_forward.2} parent=43 // pred_check
          %p3388 = pneg %p168
        $region54: #{metro_body_forward.2} parent=43 // pred_check_branch
          %3390 = sbr.rel (%p3388) target = $region56
        $region55: #{metro_body_forward.2} parent=43 // pred_region
          _
        $region56: #{metro_body_forward.2} parent=43 // pred_fallthru
          _
      $region44: #{metro_body_forward.2} parent=5 // pred_fallthru
        _
      %p3391 = scmp.le.s32.totalorder 2, %s14
      // Predicated region
      $region57: #{metro_body_forward.2} parent=5 // pred_check
        %p3392 = pneg %p3391
      $region58: #{metro_body_forward.2} parent=5 // pred_check_branch
        %3394 = sbr.rel (%p3392) target = $region60
      $region59: #{metro_body_forward.2} parent=5 // pred_region
        %s3395 = ssub.s32 %s14, 2
        // Predicated region
        $region61: #{metro_body_forward.2} parent=59 // pred_check
          %p3396 = pneg %p174
        $region62: #{metro_body_forward.2} parent=59 // pred_check_branch
          %3398 = sbr.rel (%p3396) target = $region64
        $region63: #{metro_body_forward.2} parent=59 // pred_region
          %p3399 = scmp.lt.s32.totalorder %s20, 1
          %s3400 = scalar_select %p3399, %s20, 1
          %s3401 = smul.addr %s3400, 56
          %s3402 = smul.addr %s3401, 8
          %s3403 = scalar_lea.vmem %s6, %s3402
        $region64: #{metro_body_forward.2} parent=59 // pred_fallthru
          _
      $region60: #{metro_body_forward.2} parent=5 // pred_fallthru
        _
    $region6: #{metro_body_forward.2} parent=1 // loop_footer
      %s18 = sadd.s32 1, %s14
    $region7: #{metro_body_forward.2} parent=1 // loop_footer_branch
      %13 = sbr.rel target = $region3
    $region8: #{metro_body_forward.2} parent=1 // loop_exit
      _
    %3404 = vsyncpa [#allocation3], 1
    %s3405 = scalar_lea.sflag [#allocation3], 1
    %3406 = vsyncpa %s3405, 1
    %3407 = vsyncpa [#allocation5], 1

</llo_original>
